<compile_context>
chip_gen: v7x
topology: tpu7x:2x2x1
jax: 0.10.0
libtpu: 0.0.40
codegen_flags: <defaults>
</compile_context>

<pallas_src>
import jax
import jax.numpy as jnp
from jax.experimental import pallas as pl
from jax.experimental.pallas import tpu as pltpu

EPS = 1e-5
_NEG = jnp.finfo(jnp.float32).min


# ----------------------------------------------------------------------------
# Fused cell kernel
# ----------------------------------------------------------------------------
def _cell_kernel(s0e_ref, s0o_ref, s1e_ref, s1o_ref,
                 pre0w_ref, pre1w_ref, pregb_ref,
                 w1_ref, w2_ref, wc_ref, b1gb_ref, b2gb_ref,
                 o_ref):
    N, Ho, Wo, C4 = o_ref.shape
    C = C4 // 4
    H = 2 * Ho
    R = N * H * Wo          # rows of one half-width (even or odd) plane
    Rr = N * Ho * Wo        # rows of one reduced (Ho x Wo) plane

    # wo index of every element of a (N, H, Wo, C) plane (hoisted, reused).
    wo_iota = jax.lax.broadcasted_iota(jnp.int32, (N, H, Wo, C), 2)

    # ---------------- helpers ----------------
    def bn_moments(parts, count):
        """One-pass BN statistics (mean, rsqrt(var+eps)) over (rows, C) parts."""
        s = parts[0].sum(axis=0, keepdims=True)
        ss = (parts[0] * parts[0]).sum(axis=0, keepdims=True)
        for p in parts[1:]:
            s = s + p.sum(axis=0, keepdims=True)
            ss = ss + (p * p).sum(axis=0, keepdims=True)
        inv = 1.0 / count
        mean = s * inv
        var = jnp.maximum(ss * inv - mean * mean, 0.0)
        return mean, jax.lax.rsqrt(var + EPS)

    def mmC(a, w):
        """Channel-contraction matmul on a (..., C)-shaped value."""
        sh = a.shape
        y = jnp.dot(a.reshape(-1, sh[-1]), w, preferred_element_type=jnp.float32)
        return y.reshape(sh[:-1] + (w.shape[1],))

    def shift_w(plane_2d, fill):
        """x[.., wo] -> x[.., wo-1] with `fill` at wo == 0.

        plane_2d is (R, C) with rows ordered (n, h, wo): the shift is a sublane
        rotate by 1 (pltpu.roll, jnp.roll convention) + first-column mask; rows
        that bleed across (n, h) boundaries are exactly the masked wo==0 rows.
        """
        rolled = pltpu.roll(plane_2d, 1, 0).reshape(N, H, Wo, C)
        return jnp.where(wo_iota == 0, fill, rolled)

    # ---------------- preprocess{0,1}: ReLU -> 1x1 conv -> BN ----------------
    def preprocess(xe_ref, xo_ref, w_ref, gamma, beta):
        xe = jnp.maximum(xe_ref[...], 0.0)
        xo = jnp.maximum(xo_ref[...], 0.0)
        ye = jnp.dot(xe, w_ref[...], preferred_element_type=jnp.float32)
        yo = jnp.dot(xo, w_ref[...], preferred_element_type=jnp.float32)
        mean, rstd = bn_moments([ye, yo], 2.0 * R)     # stats over all N*H*W pixels
        scale = gamma * rstd
        shift = beta - mean * scale
        return ye * scale + shift, yo * scale + shift  # (R, C) each

    p0e, p0o = preprocess(s0e_ref, s0o_ref, pre0w_ref,
                          pregb_ref[0, 0], pregb_ref[0, 1])
    p1e, p1o = preprocess(s1e_ref, s1o_ref, pre1w_ref,
                          pregb_ref[1, 0], pregb_ref[1, 1])

    # ---------------- shared prep for branch_a1 / branch_b1 (both use p0) ----
    re_ = jnp.maximum(p0e, 0.0).reshape(N, H, Wo, C)   # tap x[2w]
    ro_ = jnp.maximum(p0o, 0.0).reshape(N, H, Wo, C)   # tap x[2w+1]
    rsh = shift_w(jnp.maximum(p0o, 0.0), 0.0)          # tap x[2w-1] (conv zero pad)

    def branch1(idx):
        w1 = w1_ref[idx]                 # (3, C, C) dense per-tap (block-diagonal)
        w2 = w2_ref[idx]                 # (3, C, C)
        wc = wc_ref[idx]                 # (C, C)
        g1 = b1gb_ref[idx, 0]
        b1 = b1gb_ref[idx, 1]
        bc = b1gb_ref[idx, 2]
        g2 = b1gb_ref[idx, 3]
        b2 = b1gb_ref[idx, 4]

        # grouped conv (1,3), stride (1,2), pad (0,1)
        y1 = mmC(rsh, w1[0]) + mmC(re_, w1[1]) + mmC(ro_, w1[2])   # (N,H,Wo,C)
        # grouped conv (3,1), stride (2,1), pad (1,0): even/odd split along H
        y1r = y1.reshape(N, Ho, 2, Wo, C)
        y1e = y1r[:, :, 0]
        y1o = y1r[:, :, 1]
        y1o_sh = jnp.concatenate(
            [jnp.zeros((N, 1, Wo, C), jnp.float32), y1o[:, :-1]], axis=1)
        y2 = mmC(y1o_sh, w2[0]) + mmC(y1e, w2[1]) + mmC(y1o, w2[2])
        y2 = y2.reshape(-1, C)                                      # (Rr, C)

        # BN -> ReLU -> 1x1 conv (+bias) -> BN
        m1, r1 = bn_moments([y2], float(Rr))
        y3 = jnp.maximum((y2 - m1) * (r1 * g1) + b1, 0.0)
        y4 = jnp.dot(y3, wc, preferred_element_type=jnp.float32) + bc
        m2, r2 = bn_moments([y4], float(Rr))
        return (y4 - m2) * (r2 * g2) + b2                           # (Rr, C)

    x0 = branch1(0)                                                 # branch_a1
    x2 = branch1(1)                                                 # branch_b1

    # ---------------- branch_a2 / branch_b2: one maxpool + stats, two affines
    m_e = p1e.reshape(N, H, Wo, C)
    m_o = p1o.reshape(N, H, Wo, C)
    m_sh = shift_w(p1o, _NEG)                          # maxpool padding = -inf
    mw = jnp.maximum(jnp.maximum(m_sh, m_e), m_o)      # 3-wide window over W (strided)
    mwr = mw.reshape(N, Ho, 2, Wo, C)
    me = mwr[:, :, 0]
    mo = mwr[:, :, 1]
    mo_sh = jnp.concatenate(
        [jnp.full((N, 1, Wo, C), _NEG, jnp.float32), mo[:, :-1]], axis=1)
    mp = jnp.maximum(jnp.maximum(mo_sh, me), mo).reshape(-1, C)     # (Rr, C)

    pm, pr = bn_moments([mp], float(Rr))
    x1 = (mp - pm) * (pr * b2gb_ref[0, 0]) + b2gb_ref[0, 1]         # branch_a2
    x3 = (mp - pm) * (pr * b2gb_ref[1, 0]) + b2gb_ref[1, 1]         # branch_b2

    # ---------------- channel concat, single lane-denser store ----------------
    out = jnp.concatenate([x0, x1, x2, x3], axis=-1)                # (Rr, 4C)
    o_ref[...] = out.reshape(N, Ho, Wo, C4)


# ----------------------------------------------------------------------------
# pallas_call glue
# ----------------------------------------------------------------------------
def _zero_map(ndim):
    return lambda i: (0,) * ndim


def _run_cell(inputs, out_shape):
    return pl.pallas_call(
        _cell_kernel,
        grid=(1,),
        in_specs=[pl.BlockSpec(a.shape, _zero_map(a.ndim)) for a in inputs],
        out_specs=pl.BlockSpec(out_shape.shape, _zero_map(len(out_shape.shape))),
        out_shape=out_shape,
        compiler_params=pltpu.CompilerParams(
            dimension_semantics=("arbitrary",)),
    )(*inputs)


# ----------------------------------------------------------------------------
# Parameter setup (plain JAX, deterministic)
# ----------------------------------------------------------------------------
def _densify_group_conv(w, groups):
    """w: (C_out, C_in_per_group, K) -> (K, C_in, C_out) block-diagonal dense."""
    Cout, Cg, K = w.shape
    Cin = Cg * groups
    out_per_group = Cout // groups
    dense = jnp.zeros((K, Cin, Cout), jnp.float32)
    co = jnp.arange(Cout)
    g = co // out_per_group
    for k in range(K):
        for j in range(Cg):
            ci = g * Cg + j
            dense = dense.at[k, ci, co].set(w[:, j, k])
    return dense


def init_params(key, C_pp, C_p, C, groups=8):
    ks = iter(jax.random.split(key, 40))

    def nrm(shape, scale=0.1):
        return scale * jax.random.normal(next(ks), shape, jnp.float32)

    p = {}
    p["pre0_w"] = nrm((C_pp, C))
    p["pre1_w"] = nrm((C_p, C))
    p["pre_gb"] = jnp.stack([
        jnp.stack([1.0 + nrm((1, C)), nrm((1, C))]),
        jnp.stack([1.0 + nrm((1, C)), nrm((1, C))]),
    ])                                                     # (2, 2, 1, C)

    w1s, w2s, wcs, gbs = [], [], [], []
    for _ in range(2):                                     # a-branch, b-branch
        w1s.append(_densify_group_conv(nrm((C, C // groups, 3)), groups))
        w2s.append(_densify_group_conv(nrm((C, C // groups, 3)), groups))
        wcs.append(nrm((C, C)))
        gbs.append(jnp.stack([1.0 + nrm((1, C)),           # BN1 gamma
                              nrm((1, C), 0.05),           # BN1 beta
                              nrm((1, C), 0.05),           # 1x1 conv bias
                              1.0 + nrm((1, C)),           # BN2 gamma
                              nrm((1, C), 0.05)]))         # BN2 beta
    p["b1_w1"] = jnp.stack(w1s)                            # (2, 3, C, C)
    p["b1_w2"] = jnp.stack(w2s)                            # (2, 3, C, C)
    p["b1_wc"] = jnp.stack(wcs)                            # (2, C, C)
    p["b1_gb"] = jnp.stack(gbs)                            # (2, 5, 1, C)

    p["b2_gb"] = jnp.stack([
        jnp.stack([1.0 + nrm((1, C)), nrm((1, C), 0.05)]),
        jnp.stack([1.0 + nrm((1, C)), nrm((1, C), 0.05)]),
    ])                                                     # (2, 2, 1, C)
    return p


# ----------------------------------------------------------------------------
# Forward pass
# ----------------------------------------------------------------------------
def _split_even_odd_width(x_nhwc):
    """Even/odd width planes as 2D (N*H*Wo, Cin) — fuses with the input transpose."""
    N, H, W, Cin = x_nhwc.shape
    Wo = W // 2
    xr = x_nhwc.reshape(N, H, Wo, 2, Cin)
    xe = xr[:, :, :, 0, :].reshape(N * H * Wo, Cin)
    xo = xr[:, :, :, 1, :].reshape(N * H * Wo, Cin)
    return xe, xo


def reduction_cell(params, s0_nchw, s1_nchw, C):
    s0 = jnp.transpose(s0_nchw, (0, 2, 3, 1)).astype(jnp.float32)   # NCHW -> NHWC
    s1 = jnp.transpose(s1_nchw, (0, 2, 3, 1)).astype(jnp.float32)
    N, H, W, _ = s0.shape
    Ho, Wo = H // 2, W // 2

    s0e, s0o = _split_even_odd_width(s0)
    s1e, s1o = _split_even_odd_width(s1)

    inputs = (s0e, s0o, s1e, s1o,
              params["pre0_w"], params["pre1_w"], params["pre_gb"],
              params["b1_w1"], params["b1_w2"], params["b1_wc"],
              params["b1_gb"], params["b2_gb"])
    out_shape = jax.ShapeDtypeStruct((N, Ho, Wo, 4 * C), jnp.float32)

    out = _run_cell(inputs, out_shape)                     # (N, Ho, Wo, 4C) NHWC
    return jnp.transpose(out, (0, 3, 1, 2))                # back to NCHW


# ----------------------------------------------------------------------------
if __name__ == "__main__":
    N, C_pp, C_p, C, H, W = 2, 24, 32, 16, 16, 16

    key = jax.random.PRNGKey(0)
    k0, k1, kp = jax.random.split(key, 3)
    s0 = jax.random.normal(k0, (N, C_pp, H, W), jnp.float32)   # NCHW
    s1 = jax.random.normal(k1, (N, C_p, H, W), jnp.float32)    # NCHW

    params = init_params(kp, C_pp, C_p, C)

    fwd = jax.jit(lambda p, a, b: reduction_cell(p, a, b, C))
    out = fwd(params, s0, s1)
    jax.block_until_ready(out)

    assert out.shape == (N, 4 * C, H // 2, W // 2), out.shape
    assert bool(jnp.all(jnp.isfinite(out)))
    print("KERNEL_OK")
</pallas_src>

<mosaic_0001>
module attributes {stable_mosaic.version = 11 : i64} {
  func.func @_cell_kernel(%arg0: i32, %arg1: memref<256x24xf32, #tpu.memory_space<vmem>>, %arg2: memref<256x24xf32, #tpu.memory_space<vmem>>, %arg3: memref<256x32xf32, #tpu.memory_space<vmem>>, %arg4: memref<256x32xf32, #tpu.memory_space<vmem>>, %arg5: memref<24x16xf32, #tpu.memory_space<vmem>>, %arg6: memref<32x16xf32, #tpu.memory_space<vmem>>, %arg7: memref<2x2x1x16xf32, #tpu.memory_space<vmem>>, %arg8: memref<2x3x16x16xf32, #tpu.memory_space<vmem>>, %arg9: memref<2x3x16x16xf32, #tpu.memory_space<vmem>>, %arg10: memref<2x16x16xf32, #tpu.memory_space<vmem>>, %arg11: memref<2x5x1x16xf32, #tpu.memory_space<vmem>>, %arg12: memref<2x2x1x16xf32, #tpu.memory_space<vmem>>, %arg13: memref<2x8x8x64xf32, #tpu.memory_space<vmem>>) attributes {dimension_semantics = [#tpu.dimension_semantics<arbitrary>], iteration_bounds = array<i64: 1>, scalar_prefetch = 0 : i64, scratch_operands = 0 : i64, tpu.core_type = #tpu.core_type<tc>, window_params = [{pipeline_mode = #tpu.pipeline_mode<synchronous>, transform_indices = @transform_0, window_bounds = array<i64: 256, 24>}, {pipeline_mode = #tpu.pipeline_mode<synchronous>, transform_indices = @transform_1, window_bounds = array<i64: 256, 24>}, {pipeline_mode = #tpu.pipeline_mode<synchronous>, transform_indices = @transform_2, window_bounds = array<i64: 256, 32>}, {pipeline_mode = #tpu.pipeline_mode<synchronous>, transform_indices = @transform_3, window_bounds = array<i64: 256, 32>}, {pipeline_mode = #tpu.pipeline_mode<synchronous>, transform_indices = @transform_4, window_bounds = array<i64: 24, 16>}, {pipeline_mode = #tpu.pipeline_mode<synchronous>, transform_indices = @transform_5, window_bounds = array<i64: 32, 16>}, {pipeline_mode = #tpu.pipeline_mode<synchronous>, transform_indices = @transform_6, window_bounds = array<i64: 2, 2, 1, 16>}, {pipeline_mode = #tpu.pipeline_mode<synchronous>, transform_indices = @transform_7, window_bounds = array<i64: 2, 3, 16, 16>}, {pipeline_mode = #tpu.pipeline_mode<synchronous>, transform_indices = @transform_8, window_bounds = array<i64: 2, 3, 16, 16>}, {pipeline_mode = #tpu.pipeline_mode<synchronous>, transform_indices = @transform_9, window_bounds = array<i64: 2, 16, 16>}, {pipeline_mode = #tpu.pipeline_mode<synchronous>, transform_indices = @transform_10, window_bounds = array<i64: 2, 5, 1, 16>}, {pipeline_mode = #tpu.pipeline_mode<synchronous>, transform_indices = @transform_11, window_bounds = array<i64: 2, 2, 1, 16>}, {pipeline_mode = #tpu.pipeline_mode<synchronous>, transform_indices = @transform_12, window_bounds = array<i64: 2, 8, 8, 64>}]} {
    %0 = tpu.iota {dimensions = array<i32: 2>} : vector<2x16x8x16xi32>
    %c0 = arith.constant 0 : index
    %c0_0 = arith.constant 0 : index
    %c0_1 = arith.constant 0 : index
    %c0_2 = arith.constant 0 : index
    %1 = vector.load %arg7[%c0, %c0_0, %c0_1, %c0_2] : memref<2x2x1x16xf32, #tpu.memory_space<vmem>>, vector<1x1x1x16xf32>
    %2 = vector.shape_cast %1 : vector<1x1x1x16xf32> to vector<1x16xf32>
    %c0_3 = arith.constant 0 : index
    %c1 = arith.constant 1 : index
    %c0_4 = arith.constant 0 : index
    %c0_5 = arith.constant 0 : index
    %3 = vector.load %arg7[%c0_3, %c1, %c0_4, %c0_5] : memref<2x2x1x16xf32, #tpu.memory_space<vmem>>, vector<1x1x1x16xf32>
    %4 = vector.shape_cast %3 : vector<1x1x1x16xf32> to vector<1x16xf32>
    %c0_6 = arith.constant 0 : index
    %c0_7 = arith.constant 0 : index
    %5 = vector.load %arg1[%c0_6, %c0_7] : memref<256x24xf32, #tpu.memory_space<vmem>>, vector<256x24xf32>
    %cst = arith.constant 0.000000e+00 : f32
    %6 = vector.broadcast %cst : f32 to vector<256x24xf32>
    %7 = arith.maximumf %5, %6 : vector<256x24xf32>
    %c0_8 = arith.constant 0 : index
    %c0_9 = arith.constant 0 : index
    %8 = vector.load %arg2[%c0_8, %c0_9] : memref<256x24xf32, #tpu.memory_space<vmem>>, vector<256x24xf32>
    %cst_10 = arith.constant 0.000000e+00 : f32
    %9 = vector.broadcast %cst_10 : f32 to vector<256x24xf32>
    %10 = arith.maximumf %8, %9 : vector<256x24xf32>
    %c0_11 = arith.constant 0 : index
    %c0_12 = arith.constant 0 : index
    %11 = vector.load %arg5[%c0_11, %c0_12] : memref<24x16xf32, #tpu.memory_space<vmem>>, vector<24x16xf32>
    %cst_13 = arith.constant dense<0.000000e+00> : vector<256x16xf32>
    %12 = tpu.matmul %7, %11, %cst_13 {dimension_numbers = #tpu.dot_dimension_numbers<[1], [0], [0], [1], [0, 0, 1, 1], [], []>} : vector<256x24xf32>, vector<24x16xf32>, vector<256x16xf32> -> vector<256x16xf32>
    %c0_14 = arith.constant 0 : index
    %c0_15 = arith.constant 0 : index
    %13 = vector.load %arg5[%c0_14, %c0_15] : memref<24x16xf32, #tpu.memory_space<vmem>>, vector<24x16xf32>
    %cst_16 = arith.constant dense<0.000000e+00> : vector<256x16xf32>
    %14 = tpu.matmul %10, %13, %cst_16 {dimension_numbers = #tpu.dot_dimension_numbers<[1], [0], [0], [1], [0, 0, 1, 1], [], []>} : vector<256x24xf32>, vector<24x16xf32>, vector<256x16xf32> -> vector<256x16xf32>
    %cst_17 = arith.constant dense<0.000000e+00> : vector<16xf32>
    %15 = vector.multi_reduction <add>, %12, %cst_17 [0] : vector<256x16xf32> to vector<16xf32>
    %16 = vector.shape_cast %15 : vector<16xf32> to vector<1x16xf32>
    %17 = arith.mulf %12, %12 : vector<256x16xf32>
    %cst_18 = arith.constant dense<0.000000e+00> : vector<16xf32>
    %18 = vector.multi_reduction <add>, %17, %cst_18 [0] : vector<256x16xf32> to vector<16xf32>
    %19 = vector.shape_cast %18 : vector<16xf32> to vector<1x16xf32>
    %cst_19 = arith.constant dense<0.000000e+00> : vector<16xf32>
    %20 = vector.multi_reduction <add>, %14, %cst_19 [0] : vector<256x16xf32> to vector<16xf32>
    %21 = vector.shape_cast %20 : vector<16xf32> to vector<1x16xf32>
    %22 = arith.addf %16, %21 : vector<1x16xf32>
    %23 = arith.mulf %14, %14 : vector<256x16xf32>
    %cst_20 = arith.constant dense<0.000000e+00> : vector<16xf32>
    %24 = vector.multi_reduction <add>, %23, %cst_20 [0] : vector<256x16xf32> to vector<16xf32>
    %25 = vector.shape_cast %24 : vector<16xf32> to vector<1x16xf32>
    %26 = arith.addf %19, %25 : vector<1x16xf32>
    %cst_21 = arith.constant 0.001953125 : f32
    %27 = vector.broadcast %cst_21 : f32 to vector<1x16xf32>
    %28 = arith.mulf %22, %27 : vector<1x16xf32>
    %cst_22 = arith.constant 0.001953125 : f32
    %29 = vector.broadcast %cst_22 : f32 to vector<1x16xf32>
    %30 = arith.mulf %26, %29 : vector<1x16xf32>
    %31 = arith.mulf %28, %28 : vector<1x16xf32>
    %32 = arith.subf %30, %31 : vector<1x16xf32>
    %cst_23 = arith.constant 0.000000e+00 : f32
    %33 = vector.broadcast %cst_23 : f32 to vector<1x16xf32>
    %34 = arith.maximumf %32, %33 : vector<1x16xf32>
    %cst_24 = arith.constant 9.99999974E-6 : f32
    %35 = vector.broadcast %cst_24 : f32 to vector<1x16xf32>
    %36 = arith.addf %34, %35 : vector<1x16xf32>
    %37 = math.rsqrt %36 : vector<1x16xf32>
    %38 = arith.mulf %2, %37 : vector<1x16xf32>
    %39 = arith.mulf %28, %38 : vector<1x16xf32>
    %40 = arith.subf %4, %39 : vector<1x16xf32>
    %41 = vector.broadcast %38 : vector<1x16xf32> to vector<256x16xf32>
    %42 = arith.mulf %12, %41 : vector<256x16xf32>
    %43 = vector.broadcast %40 : vector<1x16xf32> to vector<256x16xf32>
    %44 = arith.addf %42, %43 : vector<256x16xf32>
    %45 = vector.broadcast %38 : vector<1x16xf32> to vector<256x16xf32>
    %46 = arith.mulf %14, %45 : vector<256x16xf32>
    %47 = vector.broadcast %40 : vector<1x16xf32> to vector<256x16xf32>
    %48 = arith.addf %46, %47 : vector<256x16xf32>
    %c1_25 = arith.constant 1 : index
    %c0_26 = arith.constant 0 : index
    %c0_27 = arith.constant 0 : index
    %c0_28 = arith.constant 0 : index
    %49 = vector.load %arg7[%c1_25, %c0_26, %c0_27, %c0_28] : memref<2x2x1x16xf32, #tpu.memory_space<vmem>>, vector<1x1x1x16xf32>
    %50 = vector.shape_cast %49 : vector<1x1x1x16xf32> to vector<1x16xf32>
    %c1_29 = arith.constant 1 : index
    %c1_30 = arith.constant 1 : index
    %c0_31 = arith.constant 0 : index
    %c0_32 = arith.constant 0 : index
    %51 = vector.load %arg7[%c1_29, %c1_30, %c0_31, %c0_32] : memref<2x2x1x16xf32, #tpu.memory_space<vmem>>, vector<1x1x1x16xf32>
    %52 = vector.shape_cast %51 : vector<1x1x1x16xf32> to vector<1x16xf32>
    %c0_33 = arith.constant 0 : index
    %c0_34 = arith.constant 0 : index
    %53 = vector.load %arg3[%c0_33, %c0_34] : memref<256x32xf32, #tpu.memory_space<vmem>>, vector<256x32xf32>
    %cst_35 = arith.constant 0.000000e+00 : f32
    %54 = vector.broadcast %cst_35 : f32 to vector<256x32xf32>
    %55 = arith.maximumf %53, %54 : vector<256x32xf32>
    %c0_36 = arith.constant 0 : index
    %c0_37 = arith.constant 0 : index
    %56 = vector.load %arg4[%c0_36, %c0_37] : memref<256x32xf32, #tpu.memory_space<vmem>>, vector<256x32xf32>
    %cst_38 = arith.constant 0.000000e+00 : f32
    %57 = vector.broadcast %cst_38 : f32 to vector<256x32xf32>
    %58 = arith.maximumf %56, %57 : vector<256x32xf32>
    %c0_39 = arith.constant 0 : index
    %c0_40 = arith.constant 0 : index
    %59 = vector.load %arg6[%c0_39, %c0_40] : memref<32x16xf32, #tpu.memory_space<vmem>>, vector<32x16xf32>
    %cst_41 = arith.constant dense<0.000000e+00> : vector<256x16xf32>
    %60 = tpu.matmul %55, %59, %cst_41 {dimension_numbers = #tpu.dot_dimension_numbers<[1], [0], [0], [1], [0, 0, 1, 1], [], []>} : vector<256x32xf32>, vector<32x16xf32>, vector<256x16xf32> -> vector<256x16xf32>
    %c0_42 = arith.constant 0 : index
    %c0_43 = arith.constant 0 : index
    %61 = vector.load %arg6[%c0_42, %c0_43] : memref<32x16xf32, #tpu.memory_space<vmem>>, vector<32x16xf32>
    %cst_44 = arith.constant dense<0.000000e+00> : vector<256x16xf32>
    %62 = tpu.matmul %58, %61, %cst_44 {dimension_numbers = #tpu.dot_dimension_numbers<[1], [0], [0], [1], [0, 0, 1, 1], [], []>} : vector<256x32xf32>, vector<32x16xf32>, vector<256x16xf32> -> vector<256x16xf32>
    %cst_45 = arith.constant dense<0.000000e+00> : vector<16xf32>
    %63 = vector.multi_reduction <add>, %60, %cst_45 [0] : vector<256x16xf32> to vector<16xf32>
    %64 = vector.shape_cast %63 : vector<16xf32> to vector<1x16xf32>
    %65 = arith.mulf %60, %60 : vector<256x16xf32>
    %cst_46 = arith.constant dense<0.000000e+00> : vector<16xf32>
    %66 = vector.multi_reduction <add>, %65, %cst_46 [0] : vector<256x16xf32> to vector<16xf32>
    %67 = vector.shape_cast %66 : vector<16xf32> to vector<1x16xf32>
    %cst_47 = arith.constant dense<0.000000e+00> : vector<16xf32>
    %68 = vector.multi_reduction <add>, %62, %cst_47 [0] : vector<256x16xf32> to vector<16xf32>
    %69 = vector.shape_cast %68 : vector<16xf32> to vector<1x16xf32>
    %70 = arith.addf %64, %69 : vector<1x16xf32>
    %71 = arith.mulf %62, %62 : vector<256x16xf32>
    %cst_48 = arith.constant dense<0.000000e+00> : vector<16xf32>
    %72 = vector.multi_reduction <add>, %71, %cst_48 [0] : vector<256x16xf32> to vector<16xf32>
    %73 = vector.shape_cast %72 : vector<16xf32> to vector<1x16xf32>
    %74 = arith.addf %67, %73 : vector<1x16xf32>
    %cst_49 = arith.constant 0.001953125 : f32
    %75 = vector.broadcast %cst_49 : f32 to vector<1x16xf32>
    %76 = arith.mulf %70, %75 : vector<1x16xf32>
    %cst_50 = arith.constant 0.001953125 : f32
    %77 = vector.broadcast %cst_50 : f32 to vector<1x16xf32>
    %78 = arith.mulf %74, %77 : vector<1x16xf32>
    %79 = arith.mulf %76, %76 : vector<1x16xf32>
    %80 = arith.subf %78, %79 : vector<1x16xf32>
    %cst_51 = arith.constant 0.000000e+00 : f32
    %81 = vector.broadcast %cst_51 : f32 to vector<1x16xf32>
    %82 = arith.maximumf %80, %81 : vector<1x16xf32>
    %cst_52 = arith.constant 9.99999974E-6 : f32
    %83 = vector.broadcast %cst_52 : f32 to vector<1x16xf32>
    %84 = arith.addf %82, %83 : vector<1x16xf32>
    %85 = math.rsqrt %84 : vector<1x16xf32>
    %86 = arith.mulf %50, %85 : vector<1x16xf32>
    %87 = arith.mulf %76, %86 : vector<1x16xf32>
    %88 = arith.subf %52, %87 : vector<1x16xf32>
    %89 = vector.broadcast %86 : vector<1x16xf32> to vector<256x16xf32>
    %90 = arith.mulf %60, %89 : vector<256x16xf32>
    %91 = vector.broadcast %88 : vector<1x16xf32> to vector<256x16xf32>
    %92 = arith.addf %90, %91 : vector<256x16xf32>
    %93 = vector.broadcast %86 : vector<1x16xf32> to vector<256x16xf32>
    %94 = arith.mulf %62, %93 : vector<256x16xf32>
    %95 = vector.broadcast %88 : vector<1x16xf32> to vector<256x16xf32>
    %96 = arith.addf %94, %95 : vector<256x16xf32>
    %cst_53 = arith.constant 0.000000e+00 : f32
    %97 = vector.broadcast %cst_53 : f32 to vector<256x16xf32>
    %98 = arith.maximumf %44, %97 : vector<256x16xf32>
    %99 = vector.shape_cast %98 : vector<256x16xf32> to vector<2x16x8x16xf32>
    %cst_54 = arith.constant 0.000000e+00 : f32
    %100 = vector.broadcast %cst_54 : f32 to vector<256x16xf32>
    %101 = arith.maximumf %48, %100 : vector<256x16xf32>
    %102 = vector.shape_cast %101 : vector<256x16xf32> to vector<2x16x8x16xf32>
    %cst_55 = arith.constant 0.000000e+00 : f32
    %103 = vector.broadcast %cst_55 : f32 to vector<256x16xf32>
    %104 = arith.maximumf %48, %103 : vector<256x16xf32>
    %c1_i32 = arith.constant 1 : i32
    %105 = tpu.dynamic_rotate %104 by %c1_i32 dim 0 : vector<256x16xf32>, i32 -> vector<256x16xf32>
    %106 = vector.shape_cast %105 : vector<256x16xf32> to vector<2x16x8x16xf32>
    %c0_i32 = arith.constant 0 : i32
    %107 = vector.broadcast %c0_i32 : i32 to vector<2x16x8x16xi32>
    %108 = arith.cmpi eq, %0, %107 : vector<2x16x8x16xi32>
    %cst_56 = arith.constant 0.000000e+00 : f32
    %109 = vector.broadcast %cst_56 : f32 to vector<2x16x8x16xf32>
    %110 = arith.select %108, %109, %106 : vector<2x16x8x16xi1>, vector<2x16x8x16xf32>
    %c0_57 = arith.constant 0 : index
    %c0_58 = arith.constant 0 : index
    %c0_59 = arith.constant 0 : index
    %c0_60 = arith.constant 0 : index
    %111 = vector.load %arg8[%c0_57, %c0_58, %c0_59, %c0_60] : memref<2x3x16x16xf32, #tpu.memory_space<vmem>>, vector<1x3x16x16xf32>
    %112 = vector.shape_cast %111 : vector<1x3x16x16xf32> to vector<3x16x16xf32>
    %c0_61 = arith.constant 0 : index
    %c0_62 = arith.constant 0 : index
    %c0_63 = arith.constant 0 : index
    %c0_64 = arith.constant 0 : index
    %113 = vector.load %arg9[%c0_61, %c0_62, %c0_63, %c0_64] : memref<2x3x16x16xf32, #tpu.memory_space<vmem>>, vector<1x3x16x16xf32>
    %114 = vector.shape_cast %113 : vector<1x3x16x16xf32> to vector<3x16x16xf32>
    %c0_65 = arith.constant 0 : index
    %c0_66 = arith.constant 0 : index
    %c0_67 = arith.constant 0 : index
    %115 = vector.load %arg10[%c0_65, %c0_66, %c0_67] : memref<2x16x16xf32, #tpu.memory_space<vmem>>, vector<1x16x16xf32>
    %116 = vector.shape_cast %115 : vector<1x16x16xf32> to vector<16x16xf32>
    %c0_68 = arith.constant 0 : index
    %c0_69 = arith.constant 0 : index
    %c0_70 = arith.constant 0 : index
    %c0_71 = arith.constant 0 : index
    %117 = vector.load %arg11[%c0_68, %c0_69, %c0_70, %c0_71] : memref<2x5x1x16xf32, #tpu.memory_space<vmem>>, vector<1x1x1x16xf32>
    %118 = vector.shape_cast %117 : vector<1x1x1x16xf32> to vector<1x16xf32>
    %c0_72 = arith.constant 0 : index
    %c1_73 = arith.constant 1 : index
    %c0_74 = arith.constant 0 : index
    %c0_75 = arith.constant 0 : index
    %119 = vector.load %arg11[%c0_72, %c1_73, %c0_74, %c0_75] : memref<2x5x1x16xf32, #tpu.memory_space<vmem>>, vector<1x1x1x16xf32>
    %120 = vector.shape_cast %119 : vector<1x1x1x16xf32> to vector<1x16xf32>
    %c0_76 = arith.constant 0 : index
    %c2 = arith.constant 2 : index
    %c0_77 = arith.constant 0 : index
    %c0_78 = arith.constant 0 : index
    %121 = vector.load %arg11[%c0_76, %c2, %c0_77, %c0_78] : memref<2x5x1x16xf32, #tpu.memory_space<vmem>>, vector<1x1x1x16xf32>
    %122 = vector.shape_cast %121 : vector<1x1x1x16xf32> to vector<1x16xf32>
    %c0_79 = arith.constant 0 : index
    %c3 = arith.constant 3 : index
    %c0_80 = arith.constant 0 : index
    %c0_81 = arith.constant 0 : index
    %123 = vector.load %arg11[%c0_79, %c3, %c0_80, %c0_81] : memref<2x5x1x16xf32, #tpu.memory_space<vmem>>, vector<1x1x1x16xf32>
    %124 = vector.shape_cast %123 : vector<1x1x1x16xf32> to vector<1x16xf32>
    %c0_82 = arith.constant 0 : index
    %c4 = arith.constant 4 : index
    %c0_83 = arith.constant 0 : index
    %c0_84 = arith.constant 0 : index
    %125 = vector.load %arg11[%c0_82, %c4, %c0_83, %c0_84] : memref<2x5x1x16xf32, #tpu.memory_space<vmem>>, vector<1x1x1x16xf32>
    %126 = vector.shape_cast %125 : vector<1x1x1x16xf32> to vector<1x16xf32>
    %127 = vector.extract_strided_slice %112 {offsets = [0, 0, 0], sizes = [1, 16, 16], strides = [1, 1, 1]} : vector<3x16x16xf32> to vector<1x16x16xf32>
    %128 = vector.shape_cast %127 : vector<1x16x16xf32> to vector<16x16xf32>
    %129 = vector.shape_cast %110 : vector<2x16x8x16xf32> to vector<256x16xf32>
    %cst_85 = arith.constant dense<0.000000e+00> : vector<256x16xf32>
    %130 = tpu.matmul %129, %128, %cst_85 {dimension_numbers = #tpu.dot_dimension_numbers<[1], [0], [0], [1], [0, 0, 1, 1], [], []>} : vector<256x16xf32>, vector<16x16xf32>, vector<256x16xf32> -> vector<256x16xf32>
    %131 = vector.shape_cast %130 : vector<256x16xf32> to vector<2x16x8x16xf32>
    %132 = vector.extract_strided_slice %112 {offsets = [1, 0, 0], sizes = [1, 16, 16], strides = [1, 1, 1]} : vector<3x16x16xf32> to vector<1x16x16xf32>
    %133 = vector.shape_cast %132 : vector<1x16x16xf32> to vector<16x16xf32>
    %134 = vector.shape_cast %99 : vector<2x16x8x16xf32> to vector<256x16xf32>
    %cst_86 = arith.constant dense<0.000000e+00> : vector<256x16xf32>
    %135 = tpu.matmul %134, %133, %cst_86 {dimension_numbers = #tpu.dot_dimension_numbers<[1], [0], [0], [1], [0, 0, 1, 1], [], []>} : vector<256x16xf32>, vector<16x16xf32>, vector<256x16xf32> -> vector<256x16xf32>
    %136 = vector.shape_cast %135 : vector<256x16xf32> to vector<2x16x8x16xf32>
    %137 = arith.addf %131, %136 : vector<2x16x8x16xf32>
    %138 = vector.extract_strided_slice %112 {offsets = [2, 0, 0], sizes = [1, 16, 16], strides = [1, 1, 1]} : vector<3x16x16xf32> to vector<1x16x16xf32>
    %139 = vector.shape_cast %138 : vector<1x16x16xf32> to vector<16x16xf32>
    %140 = vector.shape_cast %102 : vector<2x16x8x16xf32> to vector<256x16xf32>
    %cst_87 = arith.constant dense<0.000000e+00> : vector<256x16xf32>
    %141 = tpu.matmul %140, %139, %cst_87 {dimension_numbers = #tpu.dot_dimension_numbers<[1], [0], [0], [1], [0, 0, 1, 1], [], []>} : vector<256x16xf32>, vector<16x16xf32>, vector<256x16xf32> -> vector<256x16xf32>
    %142 = vector.shape_cast %141 : vector<256x16xf32> to vector<2x16x8x16xf32>
    %143 = arith.addf %137, %142 : vector<2x16x8x16xf32>
    %144 = vector.shape_cast %143 : vector<2x16x8x16xf32> to vector<2x8x2x8x16xf32>
    %145 = vector.extract_strided_slice %144 {offsets = [0, 0, 0, 0, 0], sizes = [2, 8, 1, 8, 16], strides = [1, 1, 1, 1, 1]} : vector<2x8x2x8x16xf32> to vector<2x8x1x8x16xf32>
    %146 = vector.shape_cast %145 : vector<2x8x1x8x16xf32> to vector<2x8x8x16xf32>
    %147 = vector.extract_strided_slice %144 {offsets = [0, 0, 1, 0, 0], sizes = [2, 8, 1, 8, 16], strides = [1, 1, 1, 1, 1]} : vector<2x8x2x8x16xf32> to vector<2x8x1x8x16xf32>
    %148 = vector.shape_cast %147 : vector<2x8x1x8x16xf32> to vector<2x8x8x16xf32>
    %cst_88 = arith.constant 0.000000e+00 : f32
    %149 = vector.broadcast %cst_88 : f32 to vector<2x1x8x16xf32>
    %150 = vector.extract_strided_slice %148 {offsets = [0, 0, 0, 0], sizes = [2, 7, 8, 16], strides = [1, 1, 1, 1]} : vector<2x8x8x16xf32> to vector<2x7x8x16xf32>
    %151 = tpu.concatenate %149, %150 in 1 : vector<2x1x8x16xf32>, vector<2x7x8x16xf32> -> vector<2x8x8x16xf32>
    %152 = vector.extract_strided_slice %114 {offsets = [0, 0, 0], sizes = [1, 16, 16], strides = [1, 1, 1]} : vector<3x16x16xf32> to vector<1x16x16xf32>
    %153 = vector.shape_cast %152 : vector<1x16x16xf32> to vector<16x16xf32>
    %154 = vector.shape_cast %151 : vector<2x8x8x16xf32> to vector<128x16xf32>
    %cst_89 = arith.constant dense<0.000000e+00> : vector<128x16xf32>
    %155 = tpu.matmul %154, %153, %cst_89 {dimension_numbers = #tpu.dot_dimension_numbers<[1], [0], [0], [1], [0, 0, 1, 1], [], []>} : vector<128x16xf32>, vector<16x16xf32>, vector<128x16xf32> -> vector<128x16xf32>
    %156 = vector.shape_cast %155 : vector<128x16xf32> to vector<2x8x8x16xf32>
    %157 = vector.extract_strided_slice %114 {offsets = [1, 0, 0], sizes = [1, 16, 16], strides = [1, 1, 1]} : vector<3x16x16xf32> to vector<1x16x16xf32>
    %158 = vector.shape_cast %157 : vector<1x16x16xf32> to vector<16x16xf32>
    %159 = vector.shape_cast %146 : vector<2x8x8x16xf32> to vector<128x16xf32>
    %cst_90 = arith.constant dense<0.000000e+00> : vector<128x16xf32>
    %160 = tpu.matmul %159, %158, %cst_90 {dimension_numbers = #tpu.dot_dimension_numbers<[1], [0], [0], [1], [0, 0, 1, 1], [], []>} : vector<128x16xf32>, vector<16x16xf32>, vector<128x16xf32> -> vector<128x16xf32>
    %161 = vector.shape_cast %160 : vector<128x16xf32> to vector<2x8x8x16xf32>
    %162 = arith.addf %156, %161 : vector<2x8x8x16xf32>
    %163 = vector.extract_strided_slice %114 {offsets = [2, 0, 0], sizes = [1, 16, 16], strides = [1, 1, 1]} : vector<3x16x16xf32> to vector<1x16x16xf32>
    %164 = vector.shape_cast %163 : vector<1x16x16xf32> to vector<16x16xf32>
    %165 = vector.shape_cast %148 : vector<2x8x8x16xf32> to vector<128x16xf32>
    %cst_91 = arith.constant dense<0.000000e+00> : vector<128x16xf32>
    %166 = tpu.matmul %165, %164, %cst_91 {dimension_numbers = #tpu.dot_dimension_numbers<[1], [0], [0], [1], [0, 0, 1, 1], [], []>} : vector<128x16xf32>, vector<16x16xf32>, vector<128x16xf32> -> vector<128x16xf32>
    %167 = vector.shape_cast %166 : vector<128x16xf32> to vector<2x8x8x16xf32>
    %168 = arith.addf %162, %167 : vector<2x8x8x16xf32>
    %169 = vector.shape_cast %168 : vector<2x8x8x16xf32> to vector<128x16xf32>
    %cst_92 = arith.constant dense<0.000000e+00> : vector<16xf32>
    %170 = vector.multi_reduction <add>, %169, %cst_92 [0] : vector<128x16xf32> to vector<16xf32>
    %171 = vector.shape_cast %170 : vector<16xf32> to vector<1x16xf32>
    %172 = arith.mulf %169, %169 : vector<128x16xf32>
    %cst_93 = arith.constant dense<0.000000e+00> : vector<16xf32>
    %173 = vector.multi_reduction <add>, %172, %cst_93 [0] : vector<128x16xf32> to vector<16xf32>
    %174 = vector.shape_cast %173 : vector<16xf32> to vector<1x16xf32>
    %cst_94 = arith.constant 7.812500e-03 : f32
    %175 = vector.broadcast %cst_94 : f32 to vector<1x16xf32>
    %176 = arith.mulf %171, %175 : vector<1x16xf32>
    %cst_95 = arith.constant 7.812500e-03 : f32
    %177 = vector.broadcast %cst_95 : f32 to vector<1x16xf32>
    %178 = arith.mulf %174, %177 : vector<1x16xf32>
    %179 = arith.mulf %176, %176 : vector<1x16xf32>
    %180 = arith.subf %178, %179 : vector<1x16xf32>
    %cst_96 = arith.constant 0.000000e+00 : f32
    %181 = vector.broadcast %cst_96 : f32 to vector<1x16xf32>
    %182 = arith.maximumf %180, %181 : vector<1x16xf32>
    %cst_97 = arith.constant 9.99999974E-6 : f32
    %183 = vector.broadcast %cst_97 : f32 to vector<1x16xf32>
    %184 = arith.addf %182, %183 : vector<1x16xf32>
    %185 = math.rsqrt %184 : vector<1x16xf32>
    %186 = vector.broadcast %176 : vector<1x16xf32> to vector<128x16xf32>
    %187 = arith.subf %169, %186 : vector<128x16xf32>
    %188 = arith.mulf %185, %118 : vector<1x16xf32>
    %189 = vector.broadcast %188 : vector<1x16xf32> to vector<128x16xf32>
    %190 = arith.mulf %187, %189 : vector<128x16xf32>
    %191 = vector.broadcast %120 : vector<1x16xf32> to vector<128x16xf32>
    %192 = arith.addf %190, %191 : vector<128x16xf32>
    %cst_98 = arith.constant 0.000000e+00 : f32
    %193 = vector.broadcast %cst_98 : f32 to vector<128x16xf32>
    %194 = arith.maximumf %192, %193 : vector<128x16xf32>
    %cst_99 = arith.constant dense<0.000000e+00> : vector<128x16xf32>
    %195 = tpu.matmul %194, %116, %cst_99 {dimension_numbers = #tpu.dot_dimension_numbers<[1], [0], [0], [1], [0, 0, 1, 1], [], []>} : vector<128x16xf32>, vector<16x16xf32>, vector<128x16xf32> -> vector<128x16xf32>
    %196 = vector.broadcast %122 : vector<1x16xf32> to vector<128x16xf32>
    %197 = arith.addf %195, %196 : vector<128x16xf32>
    %cst_100 = arith.constant dense<0.000000e+00> : vector<16xf32>
    %198 = vector.multi_reduction <add>, %197, %cst_100 [0] : vector<128x16xf32> to vector<16xf32>
    %199 = vector.shape_cast %198 : vector<16xf32> to vector<1x16xf32>
    %200 = arith.mulf %197, %197 : vector<128x16xf32>
    %cst_101 = arith.constant dense<0.000000e+00> : vector<16xf32>
    %201 = vector.multi_reduction <add>, %200, %cst_101 [0] : vector<128x16xf32> to vector<16xf32>
    %202 = vector.shape_cast %201 : vector<16xf32> to vector<1x16xf32>
    %cst_102 = arith.constant 7.812500e-03 : f32
    %203 = vector.broadcast %cst_102 : f32 to vector<1x16xf32>
    %204 = arith.mulf %199, %203 : vector<1x16xf32>
    %cst_103 = arith.constant 7.812500e-03 : f32
    %205 = vector.broadcast %cst_103 : f32 to vector<1x16xf32>
    %206 = arith.mulf %202, %205 : vector<1x16xf32>
    %207 = arith.mulf %204, %204 : vector<1x16xf32>
    %208 = arith.subf %206, %207 : vector<1x16xf32>
    %cst_104 = arith.constant 0.000000e+00 : f32
    %209 = vector.broadcast %cst_104 : f32 to vector<1x16xf32>
    %210 = arith.maximumf %208, %209 : vector<1x16xf32>
    %cst_105 = arith.constant 9.99999974E-6 : f32
    %211 = vector.broadcast %cst_105 : f32 to vector<1x16xf32>
    %212 = arith.addf %210, %211 : vector<1x16xf32>
    %213 = math.rsqrt %212 : vector<1x16xf32>
    %214 = vector.broadcast %204 : vector<1x16xf32> to vector<128x16xf32>
    %215 = arith.subf %197, %214 : vector<128x16xf32>
    %216 = arith.mulf %213, %124 : vector<1x16xf32>
    %217 = vector.broadcast %216 : vector<1x16xf32> to vector<128x16xf32>
    %218 = arith.mulf %215, %217 : vector<128x16xf32>
    %219 = vector.broadcast %126 : vector<1x16xf32> to vector<128x16xf32>
    %220 = arith.addf %218, %219 : vector<128x16xf32>
    %c1_106 = arith.constant 1 : index
    %c0_107 = arith.constant 0 : index
    %c0_108 = arith.constant 0 : index
    %c0_109 = arith.constant 0 : index
    %221 = vector.load %arg8[%c1_106, %c0_107, %c0_108, %c0_109] : memref<2x3x16x16xf32, #tpu.memory_space<vmem>>, vector<1x3x16x16xf32>
    %222 = vector.shape_cast %221 : vector<1x3x16x16xf32> to vector<3x16x16xf32>
    %c1_110 = arith.constant 1 : index
    %c0_111 = arith.constant 0 : index
    %c0_112 = arith.constant 0 : index
    %c0_113 = arith.constant 0 : index
    %223 = vector.load %arg9[%c1_110, %c0_111, %c0_112, %c0_113] : memref<2x3x16x16xf32, #tpu.memory_space<vmem>>, vector<1x3x16x16xf32>
    %224 = vector.shape_cast %223 : vector<1x3x16x16xf32> to vector<3x16x16xf32>
    %c1_114 = arith.constant 1 : index
    %c0_115 = arith.constant 0 : index
    %c0_116 = arith.constant 0 : index
    %225 = vector.load %arg10[%c1_114, %c0_115, %c0_116] : memref<2x16x16xf32, #tpu.memory_space<vmem>>, vector<1x16x16xf32>
    %226 = vector.shape_cast %225 : vector<1x16x16xf32> to vector<16x16xf32>
    %c1_117 = arith.constant 1 : index
    %c0_118 = arith.constant 0 : index
    %c0_119 = arith.constant 0 : index
    %c0_120 = arith.constant 0 : index
    %227 = vector.load %arg11[%c1_117, %c0_118, %c0_119, %c0_120] : memref<2x5x1x16xf32, #tpu.memory_space<vmem>>, vector<1x1x1x16xf32>
    %228 = vector.shape_cast %227 : vector<1x1x1x16xf32> to vector<1x16xf32>
    %c1_121 = arith.constant 1 : index
    %c1_122 = arith.constant 1 : index
    %c0_123 = arith.constant 0 : index
    %c0_124 = arith.constant 0 : index
    %229 = vector.load %arg11[%c1_121, %c1_122, %c0_123, %c0_124] : memref<2x5x1x16xf32, #tpu.memory_space<vmem>>, vector<1x1x1x16xf32>
    %230 = vector.shape_cast %229 : vector<1x1x1x16xf32> to vector<1x16xf32>
    %c1_125 = arith.constant 1 : index
    %c2_126 = arith.constant 2 : index
    %c0_127 = arith.constant 0 : index
    %c0_128 = arith.constant 0 : index
    %231 = vector.load %arg11[%c1_125, %c2_126, %c0_127, %c0_128] : memref<2x5x1x16xf32, #tpu.memory_space<vmem>>, vector<1x1x1x16xf32>
    %232 = vector.shape_cast %231 : vector<1x1x1x16xf32> to vector<1x16xf32>
    %c1_129 = arith.constant 1 : index
    %c3_130 = arith.constant 3 : index
    %c0_131 = arith.constant 0 : index
    %c0_132 = arith.constant 0 : index
    %233 = vector.load %arg11[%c1_129, %c3_130, %c0_131, %c0_132] : memref<2x5x1x16xf32, #tpu.memory_space<vmem>>, vector<1x1x1x16xf32>
    %234 = vector.shape_cast %233 : vector<1x1x1x16xf32> to vector<1x16xf32>
    %c1_133 = arith.constant 1 : index
    %c4_134 = arith.constant 4 : index
    %c0_135 = arith.constant 0 : index
    %c0_136 = arith.constant 0 : index
    %235 = vector.load %arg11[%c1_133, %c4_134, %c0_135, %c0_136] : memref<2x5x1x16xf32, #tpu.memory_space<vmem>>, vector<1x1x1x16xf32>
    %236 = vector.shape_cast %235 : vector<1x1x1x16xf32> to vector<1x16xf32>
    %237 = vector.extract_strided_slice %222 {offsets = [0, 0, 0], sizes = [1, 16, 16], strides = [1, 1, 1]} : vector<3x16x16xf32> to vector<1x16x16xf32>
    %238 = vector.shape_cast %237 : vector<1x16x16xf32> to vector<16x16xf32>
    %239 = vector.shape_cast %110 : vector<2x16x8x16xf32> to vector<256x16xf32>
    %cst_137 = arith.constant dense<0.000000e+00> : vector<256x16xf32>
    %240 = tpu.matmul %239, %238, %cst_137 {dimension_numbers = #tpu.dot_dimension_numbers<[1], [0], [0], [1], [0, 0, 1, 1], [], []>} : vector<256x16xf32>, vector<16x16xf32>, vector<256x16xf32> -> vector<256x16xf32>
    %241 = vector.shape_cast %240 : vector<256x16xf32> to vector<2x16x8x16xf32>
    %242 = vector.extract_strided_slice %222 {offsets = [1, 0, 0], sizes = [1, 16, 16], strides = [1, 1, 1]} : vector<3x16x16xf32> to vector<1x16x16xf32>
    %243 = vector.shape_cast %242 : vector<1x16x16xf32> to vector<16x16xf32>
    %244 = vector.shape_cast %99 : vector<2x16x8x16xf32> to vector<256x16xf32>
    %cst_138 = arith.constant dense<0.000000e+00> : vector<256x16xf32>
    %245 = tpu.matmul %244, %243, %cst_138 {dimension_numbers = #tpu.dot_dimension_numbers<[1], [0], [0], [1], [0, 0, 1, 1], [], []>} : vector<256x16xf32>, vector<16x16xf32>, vector<256x16xf32> -> vector<256x16xf32>
    %246 = vector.shape_cast %245 : vector<256x16xf32> to vector<2x16x8x16xf32>
    %247 = arith.addf %241, %246 : vector<2x16x8x16xf32>
    %248 = vector.extract_strided_slice %222 {offsets = [2, 0, 0], sizes = [1, 16, 16], strides = [1, 1, 1]} : vector<3x16x16xf32> to vector<1x16x16xf32>
    %249 = vector.shape_cast %248 : vector<1x16x16xf32> to vector<16x16xf32>
    %250 = vector.shape_cast %102 : vector<2x16x8x16xf32> to vector<256x16xf32>
    %cst_139 = arith.constant dense<0.000000e+00> : vector<256x16xf32>
    %251 = tpu.matmul %250, %249, %cst_139 {dimension_numbers = #tpu.dot_dimension_numbers<[1], [0], [0], [1], [0, 0, 1, 1], [], []>} : vector<256x16xf32>, vector<16x16xf32>, vector<256x16xf32> -> vector<256x16xf32>
    %252 = vector.shape_cast %251 : vector<256x16xf32> to vector<2x16x8x16xf32>
    %253 = arith.addf %247, %252 : vector<2x16x8x16xf32>
    %254 = vector.shape_cast %253 : vector<2x16x8x16xf32> to vector<2x8x2x8x16xf32>
    %255 = vector.extract_strided_slice %254 {offsets = [0, 0, 0, 0, 0], sizes = [2, 8, 1, 8, 16], strides = [1, 1, 1, 1, 1]} : vector<2x8x2x8x16xf32> to vector<2x8x1x8x16xf32>
    %256 = vector.shape_cast %255 : vector<2x8x1x8x16xf32> to vector<2x8x8x16xf32>
    %257 = vector.extract_strided_slice %254 {offsets = [0, 0, 1, 0, 0], sizes = [2, 8, 1, 8, 16], strides = [1, 1, 1, 1, 1]} : vector<2x8x2x8x16xf32> to vector<2x8x1x8x16xf32>
    %258 = vector.shape_cast %257 : vector<2x8x1x8x16xf32> to vector<2x8x8x16xf32>
    %cst_140 = arith.constant 0.000000e+00 : f32
    %259 = vector.broadcast %cst_140 : f32 to vector<2x1x8x16xf32>
    %260 = vector.extract_strided_slice %258 {offsets = [0, 0, 0, 0], sizes = [2, 7, 8, 16], strides = [1, 1, 1, 1]} : vector<2x8x8x16xf32> to vector<2x7x8x16xf32>
    %261 = tpu.concatenate %259, %260 in 1 : vector<2x1x8x16xf32>, vector<2x7x8x16xf32> -> vector<2x8x8x16xf32>
    %262 = vector.extract_strided_slice %224 {offsets = [0, 0, 0], sizes = [1, 16, 16], strides = [1, 1, 1]} : vector<3x16x16xf32> to vector<1x16x16xf32>
    %263 = vector.shape_cast %262 : vector<1x16x16xf32> to vector<16x16xf32>
    %264 = vector.shape_cast %261 : vector<2x8x8x16xf32> to vector<128x16xf32>
    %cst_141 = arith.constant dense<0.000000e+00> : vector<128x16xf32>
    %265 = tpu.matmul %264, %263, %cst_141 {dimension_numbers = #tpu.dot_dimension_numbers<[1], [0], [0], [1], [0, 0, 1, 1], [], []>} : vector<128x16xf32>, vector<16x16xf32>, vector<128x16xf32> -> vector<128x16xf32>
    %266 = vector.shape_cast %265 : vector<128x16xf32> to vector<2x8x8x16xf32>
    %267 = vector.extract_strided_slice %224 {offsets = [1, 0, 0], sizes = [1, 16, 16], strides = [1, 1, 1]} : vector<3x16x16xf32> to vector<1x16x16xf32>
    %268 = vector.shape_cast %267 : vector<1x16x16xf32> to vector<16x16xf32>
    %269 = vector.shape_cast %256 : vector<2x8x8x16xf32> to vector<128x16xf32>
    %cst_142 = arith.constant dense<0.000000e+00> : vector<128x16xf32>
    %270 = tpu.matmul %269, %268, %cst_142 {dimension_numbers = #tpu.dot_dimension_numbers<[1], [0], [0], [1], [0, 0, 1, 1], [], []>} : vector<128x16xf32>, vector<16x16xf32>, vector<128x16xf32> -> vector<128x16xf32>
    %271 = vector.shape_cast %270 : vector<128x16xf32> to vector<2x8x8x16xf32>
    %272 = arith.addf %266, %271 : vector<2x8x8x16xf32>
    %273 = vector.extract_strided_slice %224 {offsets = [2, 0, 0], sizes = [1, 16, 16], strides = [1, 1, 1]} : vector<3x16x16xf32> to vector<1x16x16xf32>
    %274 = vector.shape_cast %273 : vector<1x16x16xf32> to vector<16x16xf32>
    %275 = vector.shape_cast %258 : vector<2x8x8x16xf32> to vector<128x16xf32>
    %cst_143 = arith.constant dense<0.000000e+00> : vector<128x16xf32>
    %276 = tpu.matmul %275, %274, %cst_143 {dimension_numbers = #tpu.dot_dimension_numbers<[1], [0], [0], [1], [0, 0, 1, 1], [], []>} : vector<128x16xf32>, vector<16x16xf32>, vector<128x16xf32> -> vector<128x16xf32>
    %277 = vector.shape_cast %276 : vector<128x16xf32> to vector<2x8x8x16xf32>
    %278 = arith.addf %272, %277 : vector<2x8x8x16xf32>
    %279 = vector.shape_cast %278 : vector<2x8x8x16xf32> to vector<128x16xf32>
    %cst_144 = arith.constant dense<0.000000e+00> : vector<16xf32>
    %280 = vector.multi_reduction <add>, %279, %cst_144 [0] : vector<128x16xf32> to vector<16xf32>
    %281 = vector.shape_cast %280 : vector<16xf32> to vector<1x16xf32>
    %282 = arith.mulf %279, %279 : vector<128x16xf32>
    %cst_145 = arith.constant dense<0.000000e+00> : vector<16xf32>
    %283 = vector.multi_reduction <add>, %282, %cst_145 [0] : vector<128x16xf32> to vector<16xf32>
    %284 = vector.shape_cast %283 : vector<16xf32> to vector<1x16xf32>
    %cst_146 = arith.constant 7.812500e-03 : f32
    %285 = vector.broadcast %cst_146 : f32 to vector<1x16xf32>
    %286 = arith.mulf %281, %285 : vector<1x16xf32>
    %cst_147 = arith.constant 7.812500e-03 : f32
    %287 = vector.broadcast %cst_147 : f32 to vector<1x16xf32>
    %288 = arith.mulf %284, %287 : vector<1x16xf32>
    %289 = arith.mulf %286, %286 : vector<1x16xf32>
    %290 = arith.subf %288, %289 : vector<1x16xf32>
    %cst_148 = arith.constant 0.000000e+00 : f32
    %291 = vector.broadcast %cst_148 : f32 to vector<1x16xf32>
    %292 = arith.maximumf %290, %291 : vector<1x16xf32>
    %cst_149 = arith.constant 9.99999974E-6 : f32
    %293 = vector.broadcast %cst_149 : f32 to vector<1x16xf32>
    %294 = arith.addf %292, %293 : vector<1x16xf32>
    %295 = math.rsqrt %294 : vector<1x16xf32>
    %296 = vector.broadcast %286 : vector<1x16xf32> to vector<128x16xf32>
    %297 = arith.subf %279, %296 : vector<128x16xf32>
    %298 = arith.mulf %295, %228 : vector<1x16xf32>
    %299 = vector.broadcast %298 : vector<1x16xf32> to vector<128x16xf32>
    %300 = arith.mulf %297, %299 : vector<128x16xf32>
    %301 = vector.broadcast %230 : vector<1x16xf32> to vector<128x16xf32>
    %302 = arith.addf %300, %301 : vector<128x16xf32>
    %cst_150 = arith.constant 0.000000e+00 : f32
    %303 = vector.broadcast %cst_150 : f32 to vector<128x16xf32>
    %304 = arith.maximumf %302, %303 : vector<128x16xf32>
    %cst_151 = arith.constant dense<0.000000e+00> : vector<128x16xf32>
    %305 = tpu.matmul %304, %226, %cst_151 {dimension_numbers = #tpu.dot_dimension_numbers<[1], [0], [0], [1], [0, 0, 1, 1], [], []>} : vector<128x16xf32>, vector<16x16xf32>, vector<128x16xf32> -> vector<128x16xf32>
    %306 = vector.broadcast %232 : vector<1x16xf32> to vector<128x16xf32>
    %307 = arith.addf %305, %306 : vector<128x16xf32>
    %cst_152 = arith.constant dense<0.000000e+00> : vector<16xf32>
    %308 = vector.multi_reduction <add>, %307, %cst_152 [0] : vector<128x16xf32> to vector<16xf32>
    %309 = vector.shape_cast %308 : vector<16xf32> to vector<1x16xf32>
    %310 = arith.mulf %307, %307 : vector<128x16xf32>
    %cst_153 = arith.constant dense<0.000000e+00> : vector<16xf32>
    %311 = vector.multi_reduction <add>, %310, %cst_153 [0] : vector<128x16xf32> to vector<16xf32>
    %312 = vector.shape_cast %311 : vector<16xf32> to vector<1x16xf32>
    %cst_154 = arith.constant 7.812500e-03 : f32
    %313 = vector.broadcast %cst_154 : f32 to vector<1x16xf32>
    %314 = arith.mulf %309, %313 : vector<1x16xf32>
    %cst_155 = arith.constant 7.812500e-03 : f32
    %315 = vector.broadcast %cst_155 : f32 to vector<1x16xf32>
    %316 = arith.mulf %312, %315 : vector<1x16xf32>
    %317 = arith.mulf %314, %314 : vector<1x16xf32>
    %318 = arith.subf %316, %317 : vector<1x16xf32>
    %cst_156 = arith.constant 0.000000e+00 : f32
    %319 = vector.broadcast %cst_156 : f32 to vector<1x16xf32>
    %320 = arith.maximumf %318, %319 : vector<1x16xf32>
    %cst_157 = arith.constant 9.99999974E-6 : f32
    %321 = vector.broadcast %cst_157 : f32 to vector<1x16xf32>
    %322 = arith.addf %320, %321 : vector<1x16xf32>
    %323 = math.rsqrt %322 : vector<1x16xf32>
    %324 = vector.broadcast %314 : vector<1x16xf32> to vector<128x16xf32>
    %325 = arith.subf %307, %324 : vector<128x16xf32>
    %326 = arith.mulf %323, %234 : vector<1x16xf32>
    %327 = vector.broadcast %326 : vector<1x16xf32> to vector<128x16xf32>
    %328 = arith.mulf %325, %327 : vector<128x16xf32>
    %329 = vector.broadcast %236 : vector<1x16xf32> to vector<128x16xf32>
    %330 = arith.addf %328, %329 : vector<128x16xf32>
    %331 = vector.shape_cast %92 : vector<256x16xf32> to vector<2x16x8x16xf32>
    %332 = vector.shape_cast %96 : vector<256x16xf32> to vector<2x16x8x16xf32>
    %c1_i32_158 = arith.constant 1 : i32
    %333 = tpu.dynamic_rotate %96 by %c1_i32_158 dim 0 : vector<256x16xf32>, i32 -> vector<256x16xf32>
    %334 = vector.shape_cast %333 : vector<256x16xf32> to vector<2x16x8x16xf32>
    %c0_i32_159 = arith.constant 0 : i32
    %335 = vector.broadcast %c0_i32_159 : i32 to vector<2x16x8x16xi32>
    %336 = arith.cmpi eq, %0, %335 : vector<2x16x8x16xi32>
    %cst_160 = arith.constant -3.40282347E+38 : f32
    %337 = vector.broadcast %cst_160 : f32 to vector<2x16x8x16xf32>
    %338 = arith.select %336, %337, %334 : vector<2x16x8x16xi1>, vector<2x16x8x16xf32>
    %339 = arith.maximumf %338, %331 : vector<2x16x8x16xf32>
    %340 = arith.maximumf %339, %332 : vector<2x16x8x16xf32>
    %341 = vector.shape_cast %340 : vector<2x16x8x16xf32> to vector<2x8x2x8x16xf32>
    %342 = vector.extract_strided_slice %341 {offsets = [0, 0, 0, 0, 0], sizes = [2, 8, 1, 8, 16], strides = [1, 1, 1, 1, 1]} : vector<2x8x2x8x16xf32> to vector<2x8x1x8x16xf32>
    %343 = vector.shape_cast %342 : vector<2x8x1x8x16xf32> to vector<2x8x8x16xf32>
    %344 = vector.extract_strided_slice %341 {offsets = [0, 0, 1, 0, 0], sizes = [2, 8, 1, 8, 16], strides = [1, 1, 1, 1, 1]} : vector<2x8x2x8x16xf32> to vector<2x8x1x8x16xf32>
    %345 = vector.shape_cast %344 : vector<2x8x1x8x16xf32> to vector<2x8x8x16xf32>
    %cst_161 = arith.constant -3.40282347E+38 : f32
    %346 = vector.broadcast %cst_161 : f32 to vector<2x1x8x16xf32>
    %347 = vector.extract_strided_slice %345 {offsets = [0, 0, 0, 0], sizes = [2, 7, 8, 16], strides = [1, 1, 1, 1]} : vector<2x8x8x16xf32> to vector<2x7x8x16xf32>
    %348 = tpu.concatenate %346, %347 in 1 : vector<2x1x8x16xf32>, vector<2x7x8x16xf32> -> vector<2x8x8x16xf32>
    %349 = arith.maximumf %348, %343 : vector<2x8x8x16xf32>
    %350 = arith.maximumf %349, %345 : vector<2x8x8x16xf32>
    %351 = vector.shape_cast %350 : vector<2x8x8x16xf32> to vector<128x16xf32>
    %cst_162 = arith.constant dense<0.000000e+00> : vector<16xf32>
    %352 = vector.multi_reduction <add>, %351, %cst_162 [0] : vector<128x16xf32> to vector<16xf32>
    %353 = vector.shape_cast %352 : vector<16xf32> to vector<1x16xf32>
    %354 = arith.mulf %351, %351 : vector<128x16xf32>
    %cst_163 = arith.constant dense<0.000000e+00> : vector<16xf32>
    %355 = vector.multi_reduction <add>, %354, %cst_163 [0] : vector<128x16xf32> to vector<16xf32>
    %356 = vector.shape_cast %355 : vector<16xf32> to vector<1x16xf32>
    %cst_164 = arith.constant 7.812500e-03 : f32
    %357 = vector.broadcast %cst_164 : f32 to vector<1x16xf32>
    %358 = arith.mulf %353, %357 : vector<1x16xf32>
    %cst_165 = arith.constant 7.812500e-03 : f32
    %359 = vector.broadcast %cst_165 : f32 to vector<1x16xf32>
    %360 = arith.mulf %356, %359 : vector<1x16xf32>
    %361 = arith.mulf %358, %358 : vector<1x16xf32>
    %362 = arith.subf %360, %361 : vector<1x16xf32>
    %cst_166 = arith.constant 0.000000e+00 : f32
    %363 = vector.broadcast %cst_166 : f32 to vector<1x16xf32>
    %364 = arith.maximumf %362, %363 : vector<1x16xf32>
    %cst_167 = arith.constant 9.99999974E-6 : f32
    %365 = vector.broadcast %cst_167 : f32 to vector<1x16xf32>
    %366 = arith.addf %364, %365 : vector<1x16xf32>
    %367 = math.rsqrt %366 : vector<1x16xf32>
    %368 = vector.broadcast %358 : vector<1x16xf32> to vector<128x16xf32>
    %369 = arith.subf %351, %368 : vector<128x16xf32>
    %c0_168 = arith.constant 0 : index
    %c0_169 = arith.constant 0 : index
    %c0_170 = arith.constant 0 : index
    %c0_171 = arith.constant 0 : index
    %370 = vector.load %arg12[%c0_168, %c0_169, %c0_170, %c0_171] : memref<2x2x1x16xf32, #tpu.memory_space<vmem>>, vector<1x1x1x16xf32>
    %371 = vector.shape_cast %370 : vector<1x1x1x16xf32> to vector<1x16xf32>
    %372 = arith.mulf %367, %371 : vector<1x16xf32>
    %373 = vector.broadcast %372 : vector<1x16xf32> to vector<128x16xf32>
    %374 = arith.mulf %369, %373 : vector<128x16xf32>
    %c0_172 = arith.constant 0 : index
    %c1_173 = arith.constant 1 : index
    %c0_174 = arith.constant 0 : index
    %c0_175 = arith.constant 0 : index
    %375 = vector.load %arg12[%c0_172, %c1_173, %c0_174, %c0_175] : memref<2x2x1x16xf32, #tpu.memory_space<vmem>>, vector<1x1x1x16xf32>
    %376 = vector.shape_cast %375 : vector<1x1x1x16xf32> to vector<1x16xf32>
    %377 = vector.broadcast %376 : vector<1x16xf32> to vector<128x16xf32>
    %378 = arith.addf %374, %377 : vector<128x16xf32>
    %379 = vector.broadcast %358 : vector<1x16xf32> to vector<128x16xf32>
    %380 = arith.subf %351, %379 : vector<128x16xf32>
    %c1_176 = arith.constant 1 : index
    %c0_177 = arith.constant 0 : index
    %c0_178 = arith.constant 0 : index
    %c0_179 = arith.constant 0 : index
    %381 = vector.load %arg12[%c1_176, %c0_177, %c0_178, %c0_179] : memref<2x2x1x16xf32, #tpu.memory_space<vmem>>, vector<1x1x1x16xf32>
    %382 = vector.shape_cast %381 : vector<1x1x1x16xf32> to vector<1x16xf32>
    %383 = arith.mulf %367, %382 : vector<1x16xf32>
    %384 = vector.broadcast %383 : vector<1x16xf32> to vector<128x16xf32>
    %385 = arith.mulf %380, %384 : vector<128x16xf32>
    %c1_180 = arith.constant 1 : index
    %c1_181 = arith.constant 1 : index
    %c0_182 = arith.constant 0 : index
    %c0_183 = arith.constant 0 : index
    %386 = vector.load %arg12[%c1_180, %c1_181, %c0_182, %c0_183] : memref<2x2x1x16xf32, #tpu.memory_space<vmem>>, vector<1x1x1x16xf32>
    %387 = vector.shape_cast %386 : vector<1x1x1x16xf32> to vector<1x16xf32>
    %388 = vector.broadcast %387 : vector<1x16xf32> to vector<128x16xf32>
    %389 = arith.addf %385, %388 : vector<128x16xf32>
    %390 = tpu.concatenate %220, %378, %330, %389 in 1 : vector<128x16xf32>, vector<128x16xf32>, vector<128x16xf32>, vector<128x16xf32> -> vector<128x64xf32>
    %391 = vector.shape_cast %390 : vector<128x64xf32> to vector<2x8x8x64xf32>
    %c0_184 = arith.constant 0 : index
    %c0_185 = arith.constant 0 : index
    %c0_186 = arith.constant 0 : index
    %c0_187 = arith.constant 0 : index
    %392 = vector.load %arg13[%c0_184, %c0_185, %c0_186, %c0_187] : memref<2x8x8x64xf32, #tpu.memory_space<vmem>>, vector<2x8x8x64xf32>
    tpu.vector_store %arg13[%c0_184, %c0_185, %c0_186, %c0_187], %391 {strides = array<i32>} : memref<2x8x8x64xf32, #tpu.memory_space<vmem>>, vector<2x8x8x64xf32>,
    return
  }
  func.func @transform_0(%arg0: i32) -> (i32, i32) {
    %c0_i32 = arith.constant 0 : i32
    %c0_i32_0 = arith.constant 0 : i32
    %c0_i32_1 = arith.constant 0 : i32
    return %c0_i32, %c0_i32_0 : i32, i32
  }
  func.func @transform_1(%arg0: i32) -> (i32, i32) {
    %c0_i32 = arith.constant 0 : i32
    %c0_i32_0 = arith.constant 0 : i32
    %c0_i32_1 = arith.constant 0 : i32
    return %c0_i32, %c0_i32_0 : i32, i32
  }
  func.func @transform_2(%arg0: i32) -> (i32, i32) {
    %c0_i32 = arith.constant 0 : i32
    %c0_i32_0 = arith.constant 0 : i32
    %c0_i32_1 = arith.constant 0 : i32
    return %c0_i32, %c0_i32_0 : i32, i32
  }
  func.func @transform_3(%arg0: i32) -> (i32, i32) {
    %c0_i32 = arith.constant 0 : i32
    %c0_i32_0 = arith.constant 0 : i32
    %c0_i32_1 = arith.constant 0 : i32
    return %c0_i32, %c0_i32_0 : i32, i32
  }
  func.func @transform_4(%arg0: i32) -> (i32, i32) {
    %c0_i32 = arith.constant 0 : i32
    %c0_i32_0 = arith.constant 0 : i32
    %c0_i32_1 = arith.constant 0 : i32
    return %c0_i32, %c0_i32_0 : i32, i32
  }
  func.func @transform_5(%arg0: i32) -> (i32, i32) {
    %c0_i32 = arith.constant 0 : i32
    %c0_i32_0 = arith.constant 0 : i32
    %c0_i32_1 = arith.constant 0 : i32
    return %c0_i32, %c0_i32_0 : i32, i32
  }
  func.func @transform_6(%arg0: i32) -> (i32, i32, i32, i32) {
    %c0_i32 = arith.constant 0 : i32
    %c0_i32_0 = arith.constant 0 : i32
    %c0_i32_1 = arith.constant 0 : i32
    %c0_i32_2 = arith.constant 0 : i32
    %c0_i32_3 = arith.constant 0 : i32
    return %c0_i32, %c0_i32_0, %c0_i32_1, %c0_i32_2 : i32, i32, i32, i32
  }
  func.func @transform_7(%arg0: i32) -> (i32, i32, i32, i32) {
    %c0_i32 = arith.constant 0 : i32
    %c0_i32_0 = arith.constant 0 : i32
    %c0_i32_1 = arith.constant 0 : i32
    %c0_i32_2 = arith.constant 0 : i32
    %c0_i32_3 = arith.constant 0 : i32
    return %c0_i32, %c0_i32_0, %c0_i32_1, %c0_i32_2 : i32, i32, i32, i32
  }
  func.func @transform_8(%arg0: i32) -> (i32, i32, i32, i32) {
    %c0_i32 = arith.constant 0 : i32
    %c0_i32_0 = arith.constant 0 : i32
    %c0_i32_1 = arith.constant 0 : i32
    %c0_i32_2 = arith.constant 0 : i32
    %c0_i32_3 = arith.constant 0 : i32
    return %c0_i32, %c0_i32_0, %c0_i32_1, %c0_i32_2 : i32, i32, i32, i32
  }
  func.func @transform_9(%arg0: i32) -> (i32, i32, i32) {
    %c0_i32 = arith.constant 0 : i32
    %c0_i32_0 = arith.constant 0 : i32
    %c0_i32_1 = arith.constant 0 : i32
    %c0_i32_2 = arith.constant 0 : i32
    return %c0_i32, %c0_i32_0, %c0_i32_1 : i32, i32, i32
  }
  func.func @transform_10(%arg0: i32) -> (i32, i32, i32, i32) {
    %c0_i32 = arith.constant 0 : i32
    %c0_i32_0 = arith.constant 0 : i32
    %c0_i32_1 = arith.constant 0 : i32
    %c0_i32_2 = arith.constant 0 : i32
    %c0_i32_3 = arith.constant 0 : i32
    return %c0_i32, %c0_i32_0, %c0_i32_1, %c0_i32_2 : i32, i32, i32, i32
  }
  func.func @transform_11(%arg0: i32) -> (i32, i32, i32, i32) {
    %c0_i32 = arith.constant 0 : i32
    %c0_i32_0 = arith.constant 0 : i32
    %c0_i32_1 = arith.constant 0 : i32
    %c0_i32_2 = arith.constant 0 : i32
    %c0_i32_3 = arith.constant 0 : i32
    return %c0_i32, %c0_i32_0, %c0_i32_1, %c0_i32_2 : i32, i32, i32, i32
  }
  func.func @transform_12(%arg0: i32) -> (i32, i32, i32, i32) {
    %c0_i32 = arith.constant 0 : i32
    %c0_i32_0 = arith.constant 0 : i32
    %c0_i32_1 = arith.constant 0 : i32
    %c0_i32_2 = arith.constant 0 : i32
    %c0_i32_3 = arith.constant 0 : i32
    return %c0_i32, %c0_i32_0, %c0_i32_1, %c0_i32_2 : i32, i32, i32, i32
  }
}

</mosaic_0001>

<llo_original>
// kernel: _lambda_.1
$region0: #{_lambda_.1}
  #allocation0 [shape = 'u32[]', space=smem, size = 0x4, offset = 0x4, fixed_abs, tag = 'smem constant byte address 0x4 - core index']
  #allocation1 [shape = 'u32[144,128]{1,0:T(1,128)}', space=vmem, size = 0x12000, scoped, tag = 'internal scratch']
  %s0 = inlined_call_operand.vmem [shape: f32[256,24], index: 0, kind: input, shape index: {}]
  %s1 = inlined_call_operand.vmem [shape: f32[256,24], index: 1, kind: input, shape index: {}]
  %s2 = inlined_call_operand.vmem [shape: f32[256,32], index: 2, kind: input, shape index: {}]
  %s3 = inlined_call_operand.vmem [shape: f32[256,32], index: 3, kind: input, shape index: {}]
  %s4 = inlined_call_operand.vmem [shape: f32[24,16], index: 4, kind: input, shape index: {}]
  %s5 = inlined_call_operand.vmem [shape: f32[32,16], index: 5, kind: input, shape index: {}]
  %s6 = inlined_call_operand.vmem [shape: f32[2,2,1,16], index: 6, kind: input, shape index: {}]
  %s7 = inlined_call_operand.vmem [shape: f32[2,3,16,16], index: 7, kind: input, shape index: {}]
  %s8 = inlined_call_operand.vmem [shape: f32[2,3,16,16], index: 8, kind: input, shape index: {}]
  %s9 = inlined_call_operand.vmem [shape: f32[2,16,16], index: 9, kind: input, shape index: {}]
  %s10 = inlined_call_operand.vmem [shape: f32[2,5,1,16], index: 10, kind: input, shape index: {}]
  %s11 = inlined_call_operand.vmem [shape: f32[2,2,1,16], index: 11, kind: input, shape index: {}]
  %s12 = inlined_call_operand.hbm [shape: f32[2,8,8,64], index: 12, kind: output, shape index: {}]
  %s13 = sld [smem:[#allocation0]]
  $region58: #{_lambda_.1} parent=0
    _
  %s15 = ssub.s32 1, %s13
  %s16 = scalar_select 0, %s15, %s13
  $region1: #{_lambda_.1} parent=0
    #allocation2 [shape = 'u8[65536]{0}', space=vmem, size = 0x10000, scoped, tag = 'output window, operand 0, single buffered']
    #allocation3 [shape = 's32[1]{0}', space=sflag, size = 0x4, scoped, tag = 'scoped memory for _lambda_.1']
    %17 = vsyncpa [#allocation3], 0
    // Predicated region
    $region2: #{_lambda_.1} parent=1 // pred_check
      _
    $region3: #{_lambda_.1} parent=1 // pred_check_branch
      %19 = sbr.rel (0) target = $region5
    $region4: #{_lambda_.1} parent=1 // pred_region
      _
    $region5: #{_lambda_.1} parent=1 // pred_fallthru
      _
    // Predicated region
    $region6: #{_lambda_.1} parent=1 // pred_check
      _
    $region7: #{_lambda_.1} parent=1 // pred_check_branch
      %21 = sbr.rel (0) target = $region9
    $region8: #{_lambda_.1} parent=1 // pred_region
      _
    $region9: #{_lambda_.1} parent=1 // pred_fallthru
      _
    // Predicated region
    $region10: #{_lambda_.1} parent=1 // pred_check
      _
    $region11: #{_lambda_.1} parent=1 // pred_check_branch
      %23 = sbr.rel (0) target = $region13
    $region12: #{_lambda_.1} parent=1 // pred_region
      _
    $region13: #{_lambda_.1} parent=1 // pred_fallthru
      _
    // Predicated region
    $region14: #{_lambda_.1} parent=1 // pred_check
      _
    $region15: #{_lambda_.1} parent=1 // pred_check_branch
      %25 = sbr.rel (0) target = $region17
    $region16: #{_lambda_.1} parent=1 // pred_region
      _
    $region17: #{_lambda_.1} parent=1 // pred_fallthru
      _
    // Predicated region
    $region18: #{_lambda_.1} parent=1 // pred_check
      _
    $region19: #{_lambda_.1} parent=1 // pred_check_branch
      %27 = sbr.rel (0) target = $region21
    $region20: #{_lambda_.1} parent=1 // pred_region
      _
    $region21: #{_lambda_.1} parent=1 // pred_fallthru
      _
    // Predicated region
    $region22: #{_lambda_.1} parent=1 // pred_check
      _
    $region23: #{_lambda_.1} parent=1 // pred_check_branch
      %29 = sbr.rel (0) target = $region25
    $region24: #{_lambda_.1} parent=1 // pred_region
      _
    $region25: #{_lambda_.1} parent=1 // pred_fallthru
      _
    // Predicated region
    $region26: #{_lambda_.1} parent=1 // pred_check
      _
    $region27: #{_lambda_.1} parent=1 // pred_check_branch
      %31 = sbr.rel (0) target = $region29
    $region28: #{_lambda_.1} parent=1 // pred_region
      _
    $region29: #{_lambda_.1} parent=1 // pred_fallthru
      _
    // Predicated region
    $region30: #{_lambda_.1} parent=1 // pred_check
      _
    $region31: #{_lambda_.1} parent=1 // pred_check_branch
      %33 = sbr.rel (0) target = $region33
    $region32: #{_lambda_.1} parent=1 // pred_region
      _
    $region33: #{_lambda_.1} parent=1 // pred_fallthru
      _
    // Predicated region
    $region34: #{_lambda_.1} parent=1 // pred_check
      _
    $region35: #{_lambda_.1} parent=1 // pred_check_branch
      %35 = sbr.rel (0) target = $region37
    $region36: #{_lambda_.1} parent=1 // pred_region
      _
    $region37: #{_lambda_.1} parent=1 // pred_fallthru
      _
    // Predicated region
    $region38: #{_lambda_.1} parent=1 // pred_check
      _
    $region39: #{_lambda_.1} parent=1 // pred_check_branch
      %37 = sbr.rel (0) target = $region41
    $region40: #{_lambda_.1} parent=1 // pred_region
      _
    $region41: #{_lambda_.1} parent=1 // pred_fallthru
      _
    // Predicated region
    $region42: #{_lambda_.1} parent=1 // pred_check
      _
    $region43: #{_lambda_.1} parent=1 // pred_check_branch
      %39 = sbr.rel (0) target = $region45
    $region44: #{_lambda_.1} parent=1 // pred_region
      _
    $region45: #{_lambda_.1} parent=1 // pred_fallthru
      _
    // Predicated region
    $region46: #{_lambda_.1} parent=1 // pred_check
      _
    $region47: #{_lambda_.1} parent=1 // pred_check_branch
      %41 = sbr.rel (0) target = $region49
    $region48: #{_lambda_.1} parent=1 // pred_region
      _
    $region49: #{_lambda_.1} parent=1 // pred_fallthru
      _
    %v42 = vlaneseq
    %v43 = vshrl.u32 %v42, 7
    %v44 = vld [vmem:[%s6] sm:$0x1]
    %s45 = scalar_lea.vmem %s6, 1
    %v46 = vld [vmem:[%s45] sm:$0x1]
    %v47 = vld [vmem:[%s0] sm:$0xff]
    %v48 = vld [vmem:[%s0 + $0x8] sm:$0xff]
    %v49 = vld [vmem:[%s0 + $0x10] sm:$0xff]
    %v50 = vld [vmem:[%s0 + $0x18] sm:$0xff]
    %v51 = vld [vmem:[%s0 + $0x20] sm:$0xff]
    %v52 = vld [vmem:[%s0 + $0x28] sm:$0xff]
    %v53 = vld [vmem:[%s0 + $0x30] sm:$0xff]
    %v54 = vld [vmem:[%s0 + $0x38] sm:$0xff]
    %v55 = vld [vmem:[%s0 + $0x40] sm:$0xff]
    %v56 = vld [vmem:[%s0 + $0x48] sm:$0xff]
    %v57 = vld [vmem:[%s0 + $0x50] sm:$0xff]
    %v58 = vld [vmem:[%s0 + $0x58] sm:$0xff]
    %v59 = vld [vmem:[%s0 + $0x60] sm:$0xff]
    %v60 = vld [vmem:[%s0 + $0x68] sm:$0xff]
    %v61 = vld [vmem:[%s0 + $0x70] sm:$0xff]
    %v62 = vld [vmem:[%s0 + $0x78] sm:$0xff]
    %v63 = vld [vmem:[%s0 + $0x80] sm:$0xff]
    %v64 = vld [vmem:[%s0 + $0x88] sm:$0xff]
    %v65 = vld [vmem:[%s0 + $0x90] sm:$0xff]
    %v66 = vld [vmem:[%s0 + $0x98] sm:$0xff]
    %v67 = vld [vmem:[%s0 + $0xa0] sm:$0xff]
    %v68 = vld [vmem:[%s0 + $0xa8] sm:$0xff]
    %v69 = vld [vmem:[%s0 + $0xb0] sm:$0xff]
    %v70 = vld [vmem:[%s0 + $0xb8] sm:$0xff]
    %v71 = vld [vmem:[%s0 + $0xc0] sm:$0xff]
    %v72 = vld [vmem:[%s0 + $0xc8] sm:$0xff]
    %v73 = vld [vmem:[%s0 + $0xd0] sm:$0xff]
    %v74 = vld [vmem:[%s0 + $0xd8] sm:$0xff]
    %v75 = vld [vmem:[%s0 + $0xe0] sm:$0xff]
    %v76 = vld [vmem:[%s0 + $0xe8] sm:$0xff]
    %v77 = vld [vmem:[%s0 + $0xf0] sm:$0xff]
    %v78 = vld [vmem:[%s0 + $0xf8] sm:$0xff]
    %v79 = vmax.f32 %v47, 0.0
    %v80 = vmax.f32 %v48, 0.0
    %v81 = vmax.f32 %v49, 0.0
    %v82 = vmax.f32 %v50, 0.0
    %v83 = vmax.f32 %v51, 0.0
    %v84 = vmax.f32 %v52, 0.0
    %v85 = vmax.f32 %v53, 0.0
    %v86 = vmax.f32 %v54, 0.0
    %v87 = vmax.f32 %v55, 0.0
    %v88 = vmax.f32 %v56, 0.0
    %v89 = vmax.f32 %v57, 0.0
    %v90 = vmax.f32 %v58, 0.0
    %v91 = vmax.f32 %v59, 0.0
    %v92 = vmax.f32 %v60, 0.0
    %v93 = vmax.f32 %v61, 0.0
    %v94 = vmax.f32 %v62, 0.0
    %v95 = vmax.f32 %v63, 0.0
    %v96 = vmax.f32 %v64, 0.0
    %v97 = vmax.f32 %v65, 0.0
    %v98 = vmax.f32 %v66, 0.0
    %v99 = vmax.f32 %v67, 0.0
    %v100 = vmax.f32 %v68, 0.0
    %v101 = vmax.f32 %v69, 0.0
    %v102 = vmax.f32 %v70, 0.0
    %v103 = vmax.f32 %v71, 0.0
    %v104 = vmax.f32 %v72, 0.0
    %v105 = vmax.f32 %v73, 0.0
    %v106 = vmax.f32 %v74, 0.0
    %v107 = vmax.f32 %v75, 0.0
    %v108 = vmax.f32 %v76, 0.0
    %v109 = vmax.f32 %v77, 0.0
    %v110 = vmax.f32 %v78, 0.0
    %v111 = vld [vmem:[%s1] sm:$0xff]
    %v112 = vld [vmem:[%s1 + $0x8] sm:$0xff]
    %v113 = vld [vmem:[%s1 + $0x10] sm:$0xff]
    %v114 = vld [vmem:[%s1 + $0x18] sm:$0xff]
    %v115 = vld [vmem:[%s1 + $0x20] sm:$0xff]
    %v116 = vld [vmem:[%s1 + $0x28] sm:$0xff]
    %v117 = vld [vmem:[%s1 + $0x30] sm:$0xff]
    %v118 = vld [vmem:[%s1 + $0x38] sm:$0xff]
    %v119 = vld [vmem:[%s1 + $0x40] sm:$0xff]
    %v120 = vld [vmem:[%s1 + $0x48] sm:$0xff]
    %v121 = vld [vmem:[%s1 + $0x50] sm:$0xff]
    %v122 = vld [vmem:[%s1 + $0x58] sm:$0xff]
    %v123 = vld [vmem:[%s1 + $0x60] sm:$0xff]
    %v124 = vld [vmem:[%s1 + $0x68] sm:$0xff]
    %v125 = vld [vmem:[%s1 + $0x70] sm:$0xff]
    %v126 = vld [vmem:[%s1 + $0x78] sm:$0xff]
    %v127 = vld [vmem:[%s1 + $0x80] sm:$0xff]
    %v128 = vld [vmem:[%s1 + $0x88] sm:$0xff]
    %v129 = vld [vmem:[%s1 + $0x90] sm:$0xff]
    %v130 = vld [vmem:[%s1 + $0x98] sm:$0xff]
    %v131 = vld [vmem:[%s1 + $0xa0] sm:$0xff]
    %v132 = vld [vmem:[%s1 + $0xa8] sm:$0xff]
    %v133 = vld [vmem:[%s1 + $0xb0] sm:$0xff]
    %v134 = vld [vmem:[%s1 + $0xb8] sm:$0xff]
    %v135 = vld [vmem:[%s1 + $0xc0] sm:$0xff]
    %v136 = vld [vmem:[%s1 + $0xc8] sm:$0xff]
    %v137 = vld [vmem:[%s1 + $0xd0] sm:$0xff]
    %v138 = vld [vmem:[%s1 + $0xd8] sm:$0xff]
    %v139 = vld [vmem:[%s1 + $0xe0] sm:$0xff]
    %v140 = vld [vmem:[%s1 + $0xe8] sm:$0xff]
    %v141 = vld [vmem:[%s1 + $0xf0] sm:$0xff]
    %v142 = vld [vmem:[%s1 + $0xf8] sm:$0xff]
    %v143 = vmax.f32 %v111, 0.0
    %v144 = vmax.f32 %v112, 0.0
    %v145 = vmax.f32 %v113, 0.0
    %v146 = vmax.f32 %v114, 0.0
    %v147 = vmax.f32 %v115, 0.0
    %v148 = vmax.f32 %v116, 0.0
    %v149 = vmax.f32 %v117, 0.0
    %v150 = vmax.f32 %v118, 0.0
    %v151 = vmax.f32 %v119, 0.0
    %v152 = vmax.f32 %v120, 0.0
    %v153 = vmax.f32 %v121, 0.0
    %v154 = vmax.f32 %v122, 0.0
    %v155 = vmax.f32 %v123, 0.0
    %v156 = vmax.f32 %v124, 0.0
    %v157 = vmax.f32 %v125, 0.0
    %v158 = vmax.f32 %v126, 0.0
    %v159 = vmax.f32 %v127, 0.0
    %v160 = vmax.f32 %v128, 0.0
    %v161 = vmax.f32 %v129, 0.0
    %v162 = vmax.f32 %v130, 0.0
    %v163 = vmax.f32 %v131, 0.0
    %v164 = vmax.f32 %v132, 0.0
    %v165 = vmax.f32 %v133, 0.0
    %v166 = vmax.f32 %v134, 0.0
    %v167 = vmax.f32 %v135, 0.0
    %v168 = vmax.f32 %v136, 0.0
    %v169 = vmax.f32 %v137, 0.0
    %v170 = vmax.f32 %v138, 0.0
    %v171 = vmax.f32 %v139, 0.0
    %v172 = vmax.f32 %v140, 0.0
    %v173 = vmax.f32 %v141, 0.0
    %v174 = vmax.f32 %v142, 0.0
    %v175 = vld [vmem:[%s4] sm:$0xff]
    %v176 = vld [vmem:[%s4 + $0x8] sm:$0xff]
    %v177 = vld [vmem:[%s4 + $0x10] sm:$0xff]
    %vm178 = vcmask 195584
    %v180 = vsel %vm178, %v79, 0
    %v183 = vsel %vm178, %v80, 0
    %v186 = vsel %vm178, %v81, 0
    %v189 = vsel %vm178, %v82, 0
    %v192 = vsel %vm178, %v83, 0
    %v195 = vsel %vm178, %v84, 0
    %v198 = vsel %vm178, %v85, 0
    %v201 = vsel %vm178, %v86, 0
    %v204 = vsel %vm178, %v87, 0
    %v207 = vsel %vm178, %v88, 0
    %v210 = vsel %vm178, %v89, 0
    %v213 = vsel %vm178, %v90, 0
    %v216 = vsel %vm178, %v91, 0
    %v219 = vsel %vm178, %v92, 0
    %v222 = vsel %vm178, %v93, 0
    %v225 = vsel %vm178, %v94, 0
    %v228 = vsel %vm178, %v95, 0
    %v231 = vsel %vm178, %v96, 0
    %v234 = vsel %vm178, %v97, 0
    %v237 = vsel %vm178, %v98, 0
    %v240 = vsel %vm178, %v99, 0
    %v243 = vsel %vm178, %v100, 0
    %v246 = vsel %vm178, %v101, 0
    %v249 = vsel %vm178, %v102, 0
    %v252 = vsel %vm178, %v103, 0
    %v255 = vsel %vm178, %v104, 0
    %v258 = vsel %vm178, %v105, 0
    %v261 = vsel %vm178, %v106, 0
    %v264 = vsel %vm178, %v107, 0
    %v267 = vsel %vm178, %v108, 0
    %v270 = vsel %vm178, %v109, 0
    %v273 = vsel %vm178, %v110, 0
    %275 = vmatprep.subr.mxu0 0.0
    %276 = vmatpush1.msra.mxu0 %v175
    %277 = vmatprep.subr.mxu0 0.0
    %278 = vmatpush1.msra.mxu0 %v176
    %279 = vmatprep.subr.mxu0 0.0
    %280 = vmatpush1.msra.mxu0 %v177
    %281 = vmatprep.subr.mxu0 0.0
    %282 = vmatpush1.msra.mxu0 0.0
    %283 = vmatprep.subr.mxu0 0.0
    %284 = vmatpush1.msra.mxu0 0.0
    %285 = vmatprep.subr.mxu0 0.0
    %286 = vmatpush1.msra.mxu0 0.0
    %287 = vmatprep.subr.mxu0 0.0
    %288 = vmatpush1.msra.mxu0 0.0
    %289 = vmatprep.subr.mxu0 0.0
    %290 = vmatpush1.msra.mxu0 0.0
    %291 = vmatprep.subr.mxu0 0.0
    %292 = vmatpush1.msra.mxu0 0.0
    %293 = vmatprep.subr.mxu0 0.0
    %294 = vmatpush1.msra.mxu0 0.0
    %295 = vmatprep.subr.mxu0 0.0
    %296 = vmatpush1.msra.mxu0 0.0
    %297 = vmatprep.subr.mxu0 0.0
    %298 = vmatpush1.msra.mxu0 0.0
    %299 = vmatprep.subr.mxu0 0.0
    %300 = vmatpush1.msra.mxu0 0.0
    %301 = vmatprep.subr.mxu0 0.0
    %302 = vmatpush1.msra.mxu0 0.0
    %303 = vmatprep.subr.mxu0 0.0
    %304 = vmatpush1.msra.mxu0 0.0
    %305 = vmatprep.subr.mxu0 0.0
    %306 = vmatpush1.msra.mxu0 0.0
    %307 = vmatprep.subr.mxu0 0.0
    %308 = vmatpush1.msra.mxu0 0.0
    %309 = vmatprep.subr.mxu0 0.0
    %310 = vmatpush1.msra.mxu0 0.0
    %311 = vmatprep.subr.mxu0 0.0
    %312 = vmatpush1.msra.mxu0 0.0
    %313 = vmatprep.subr.mxu0 0.0
    %314 = vmatpush1.msra.mxu0 0.0
    %315 = vmatprep.subr.mxu0 0.0
    %316 = vmatpush1.msra.mxu0 0.0
    %317 = vmatprep.subr.mxu0 0.0
    %318 = vmatpush1.msra.mxu0 0.0
    %319 = vmatprep.subr.mxu0 0.0
    %320 = vmatpush1.msra.mxu0 0.0
    %321 = vmatprep.subr.mxu0 0.0
    %322 = vmatpush1.msra.mxu0 0.0
    %323 = vmatprep.subr.mxu0 0.0
    %324 = vmatpush1.msra.mxu0 0.0
    %325 = vmatprep.subr.mxu0 0.0
    %326 = vmatpush1.msra.mxu0 0.0
    %327 = vmatprep.subr.mxu0 0.0
    %328 = vmatpush1.msra.mxu0 0.0
    %329 = vmatprep.subr.mxu0 0.0
    %330 = vmatpush1.msra.mxu0 0.0
    %331 = vmatprep.subr.mxu0 0.0
    %332 = vmatpush1.msra.mxu0 0.0
    %333 = vmatprep.subr.mxu0 0.0
    %334 = vmatpush1.msra.mxu0 0.0
    %335 = vmatprep.subr.mxu0 0.0
    %336 = vmatpush1.msra.mxu0 0.0
    %337 = vmatprep.subr.mxu0 0.0
    %338 = vmatpush1.msra.mxu0 0.0
    %339 = vmatprep.mubr.f32.mxu0 0.0
    %340 = vmatmul.mubr.f32.gmra.mrb[0].mxu0 %v180
    %v341 = vpop.f32.mrb[0].mxu0
    %v342 = vadd.f32 0.0, %v341
    %v343 = vpop.f32.mrb[0].mxu0
    %344 = vmatprep.mubr.f32.mxu0 0.0
    %345 = vmatmul.mubr.f32.gmra.mrb[0].mxu0 %v183
    %v346 = vpop.f32.mrb[0].mxu0
    %v347 = vadd.f32 0.0, %v346
    %v348 = vpop.f32.mrb[0].mxu0
    %349 = vmatprep.mubr.f32.mxu0 0.0
    %350 = vmatmul.mubr.f32.gmra.mrb[0].mxu0 %v186
    %v351 = vpop.f32.mrb[0].mxu0
    %v352 = vadd.f32 0.0, %v351
    %v353 = vpop.f32.mrb[0].mxu0
    %354 = vmatprep.mubr.f32.mxu0 0.0
    %355 = vmatmul.mubr.f32.gmra.mrb[0].mxu0 %v189
    %v356 = vpop.f32.mrb[0].mxu0
    %v357 = vadd.f32 0.0, %v356
    %v358 = vpop.f32.mrb[0].mxu0
    %359 = vmatprep.mubr.f32.mxu0 0.0
    %360 = vmatmul.mubr.f32.gmra.mrb[0].mxu0 %v192
    %v361 = vpop.f32.mrb[0].mxu0
    %v362 = vadd.f32 0.0, %v361
    %v363 = vpop.f32.mrb[0].mxu0
    %364 = vmatprep.mubr.f32.mxu0 0.0
    %365 = vmatmul.mubr.f32.gmra.mrb[0].mxu0 %v195
    %v366 = vpop.f32.mrb[0].mxu0
    %v367 = vadd.f32 0.0, %v366
    %v368 = vpop.f32.mrb[0].mxu0
    %369 = vmatprep.mubr.f32.mxu0 0.0
    %370 = vmatmul.mubr.f32.gmra.mrb[0].mxu0 %v198
    %v371 = vpop.f32.mrb[0].mxu0
    %v372 = vadd.f32 0.0, %v371
    %v373 = vpop.f32.mrb[0].mxu0
    %374 = vmatprep.mubr.f32.mxu0 0.0
    %375 = vmatmul.mubr.f32.gmra.mrb[0].mxu0 %v201
    %v376 = vpop.f32.mrb[0].mxu0
    %v377 = vadd.f32 0.0, %v376
    %v378 = vpop.f32.mrb[0].mxu0
    %379 = vmatprep.mubr.f32.mxu0 0.0
    %380 = vmatmul.mubr.f32.gmra.mrb[0].mxu0 %v204
    %v381 = vpop.f32.mrb[0].mxu0
    %v382 = vadd.f32 0.0, %v381
    %v383 = vpop.f32.mrb[0].mxu0
    %384 = vmatprep.mubr.f32.mxu0 0.0
    %385 = vmatmul.mubr.f32.gmra.mrb[0].mxu0 %v207
    %v386 = vpop.f32.mrb[0].mxu0
    %v387 = vadd.f32 0.0, %v386
    %v388 = vpop.f32.mrb[0].mxu0
    %389 = vmatprep.mubr.f32.mxu0 0.0
    %390 = vmatmul.mubr.f32.gmra.mrb[0].mxu0 %v210
    %v391 = vpop.f32.mrb[0].mxu0
    %v392 = vadd.f32 0.0, %v391
    %v393 = vpop.f32.mrb[0].mxu0
    %394 = vmatprep.mubr.f32.mxu0 0.0
    %395 = vmatmul.mubr.f32.gmra.mrb[0].mxu0 %v213
    %v396 = vpop.f32.mrb[0].mxu0
    %v397 = vadd.f32 0.0, %v396
    %v398 = vpop.f32.mrb[0].mxu0
    %399 = vmatprep.mubr.f32.mxu0 0.0
    %400 = vmatmul.mubr.f32.gmra.mrb[0].mxu0 %v216
    %v401 = vpop.f32.mrb[0].mxu0
    %v402 = vadd.f32 0.0, %v401
    %v403 = vpop.f32.mrb[0].mxu0
    %404 = vmatprep.mubr.f32.mxu0 0.0
    %405 = vmatmul.mubr.f32.gmra.mrb[0].mxu0 %v219
    %v406 = vpop.f32.mrb[0].mxu0
    %v407 = vadd.f32 0.0, %v406
    %v408 = vpop.f32.mrb[0].mxu0
    %409 = vmatprep.mubr.f32.mxu0 0.0
    %410 = vmatmul.mubr.f32.gmra.mrb[0].mxu0 %v222
    %v411 = vpop.f32.mrb[0].mxu0
    %v412 = vadd.f32 0.0, %v411
    %v413 = vpop.f32.mrb[0].mxu0
    %414 = vmatprep.mubr.f32.mxu0 0.0
    %415 = vmatmul.mubr.f32.gmra.mrb[0].mxu0 %v225
    %v416 = vpop.f32.mrb[0].mxu0
    %v417 = vadd.f32 0.0, %v416
    %v418 = vpop.f32.mrb[0].mxu0
    %419 = vmatprep.mubr.f32.mxu0 0.0
    %420 = vmatmul.mubr.f32.gmra.mrb[0].mxu0 %v228
    %v421 = vpop.f32.mrb[0].mxu0
    %v422 = vadd.f32 0.0, %v421
    %v423 = vpop.f32.mrb[0].mxu0
    %424 = vmatprep.mubr.f32.mxu0 0.0
    %425 = vmatmul.mubr.f32.gmra.mrb[0].mxu0 %v231
    %v426 = vpop.f32.mrb[0].mxu0
    %v427 = vadd.f32 0.0, %v426
    %v428 = vpop.f32.mrb[0].mxu0
    %429 = vmatprep.mubr.f32.mxu0 0.0
    %430 = vmatmul.mubr.f32.gmra.mrb[0].mxu0 %v234
    %v431 = vpop.f32.mrb[0].mxu0
    %v432 = vadd.f32 0.0, %v431
    %v433 = vpop.f32.mrb[0].mxu0
    %434 = vmatprep.mubr.f32.mxu0 0.0
    %435 = vmatmul.mubr.f32.gmra.mrb[0].mxu0 %v237
    %v436 = vpop.f32.mrb[0].mxu0
    %v437 = vadd.f32 0.0, %v436
    %v438 = vpop.f32.mrb[0].mxu0
    %439 = vmatprep.mubr.f32.mxu0 0.0
    %440 = vmatmul.mubr.f32.gmra.mrb[0].mxu0 %v240
    %v441 = vpop.f32.mrb[0].mxu0
    %v442 = vadd.f32 0.0, %v441
    %v443 = vpop.f32.mrb[0].mxu0
    %444 = vmatprep.mubr.f32.mxu0 0.0
    %445 = vmatmul.mubr.f32.gmra.mrb[0].mxu0 %v243
    %v446 = vpop.f32.mrb[0].mxu0
    %v447 = vadd.f32 0.0, %v446
    %v448 = vpop.f32.mrb[0].mxu0
    %449 = vmatprep.mubr.f32.mxu0 0.0
    %450 = vmatmul.mubr.f32.gmra.mrb[0].mxu0 %v246
    %v451 = vpop.f32.mrb[0].mxu0
    %v452 = vadd.f32 0.0, %v451
    %v453 = vpop.f32.mrb[0].mxu0
    %454 = vmatprep.mubr.f32.mxu0 0.0
    %455 = vmatmul.mubr.f32.gmra.mrb[0].mxu0 %v249
    %v456 = vpop.f32.mrb[0].mxu0
    %v457 = vadd.f32 0.0, %v456
    %v458 = vpop.f32.mrb[0].mxu0
    %459 = vmatprep.mubr.f32.mxu0 0.0
    %460 = vmatmul.mubr.f32.gmra.mrb[0].mxu0 %v252
    %v461 = vpop.f32.mrb[0].mxu0
    %v462 = vadd.f32 0.0, %v461
    %v463 = vpop.f32.mrb[0].mxu0
    %464 = vmatprep.mubr.f32.mxu0 0.0
    %465 = vmatmul.mubr.f32.gmra.mrb[0].mxu0 %v255
    %v466 = vpop.f32.mrb[0].mxu0
    %v467 = vadd.f32 0.0, %v466
    %v468 = vpop.f32.mrb[0].mxu0
    %469 = vmatprep.mubr.f32.mxu0 0.0
    %470 = vmatmul.mubr.f32.gmra.mrb[0].mxu0 %v258
    %v471 = vpop.f32.mrb[0].mxu0
    %v472 = vadd.f32 0.0, %v471
    %v473 = vpop.f32.mrb[0].mxu0
    %474 = vmatprep.mubr.f32.mxu0 0.0
    %475 = vmatmul.mubr.f32.gmra.mrb[0].mxu0 %v261
    %v476 = vpop.f32.mrb[0].mxu0
    %v477 = vadd.f32 0.0, %v476
    %v478 = vpop.f32.mrb[0].mxu0
    %479 = vmatprep.mubr.f32.mxu0 0.0
    %480 = vmatmul.mubr.f32.gmra.mrb[0].mxu0 %v264
    %v481 = vpop.f32.mrb[0].mxu0
    %v482 = vadd.f32 0.0, %v481
    %v483 = vpop.f32.mrb[0].mxu0
    %484 = vmatprep.mubr.f32.mxu0 0.0
    %485 = vmatmul.mubr.f32.gmra.mrb[0].mxu0 %v267
    %v486 = vpop.f32.mrb[0].mxu0
    %v487 = vadd.f32 0.0, %v486
    %v488 = vpop.f32.mrb[0].mxu0
    %489 = vmatprep.mubr.f32.mxu0 0.0
    %490 = vmatmul.mubr.f32.gmra.mrb[0].mxu0 %v270
    %v491 = vpop.f32.mrb[0].mxu0
    %v492 = vadd.f32 0.0, %v491
    %v493 = vpop.f32.mrb[0].mxu0
    %494 = vmatprep.mubr.f32.mxu0 0.0
    %495 = vmatmul.mubr.f32.gmra.mrb[0].mxu0 %v273
    %v496 = vpop.f32.mrb[0].mxu0
    %v497 = vadd.f32 0.0, %v496
    %v498 = vpop.f32.mrb[0].mxu0
    %499 = vdwg.mxu0
    %v501 = vsel %vm178, %v143, 0
    %v504 = vsel %vm178, %v144, 0
    %v507 = vsel %vm178, %v145, 0
    %v510 = vsel %vm178, %v146, 0
    %v513 = vsel %vm178, %v147, 0
    %v516 = vsel %vm178, %v148, 0
    %v519 = vsel %vm178, %v149, 0
    %v522 = vsel %vm178, %v150, 0
    %v525 = vsel %vm178, %v151, 0
    %v528 = vsel %vm178, %v152, 0
    %v531 = vsel %vm178, %v153, 0
    %v534 = vsel %vm178, %v154, 0
    %v537 = vsel %vm178, %v155, 0
    %v540 = vsel %vm178, %v156, 0
    %v543 = vsel %vm178, %v157, 0
    %v546 = vsel %vm178, %v158, 0
    %v549 = vsel %vm178, %v159, 0
    %v552 = vsel %vm178, %v160, 0
    %v555 = vsel %vm178, %v161, 0
    %v558 = vsel %vm178, %v162, 0
    %v561 = vsel %vm178, %v163, 0
    %v564 = vsel %vm178, %v164, 0
    %v567 = vsel %vm178, %v165, 0
    %v570 = vsel %vm178, %v166, 0
    %v573 = vsel %vm178, %v167, 0
    %v576 = vsel %vm178, %v168, 0
    %v579 = vsel %vm178, %v169, 0
    %v582 = vsel %vm178, %v170, 0
    %v585 = vsel %vm178, %v171, 0
    %v588 = vsel %vm178, %v172, 0
    %v591 = vsel %vm178, %v173, 0
    %v594 = vsel %vm178, %v174, 0
    %596 = vmatprep.subr.mxu0 0.0
    %597 = vmatpush1.msra.mxu0 %v175
    %598 = vmatprep.subr.mxu0 0.0
    %599 = vmatpush1.msra.mxu0 %v176
    %600 = vmatprep.subr.mxu0 0.0
    %601 = vmatpush1.msra.mxu0 %v177
    %602 = vmatprep.subr.mxu0 0.0
    %603 = vmatpush1.msra.mxu0 0.0
    %604 = vmatprep.subr.mxu0 0.0
    %605 = vmatpush1.msra.mxu0 0.0
    %606 = vmatprep.subr.mxu0 0.0
    %607 = vmatpush1.msra.mxu0 0.0
    %608 = vmatprep.subr.mxu0 0.0
    %609 = vmatpush1.msra.mxu0 0.0
    %610 = vmatprep.subr.mxu0 0.0
    %611 = vmatpush1.msra.mxu0 0.0
    %612 = vmatprep.subr.mxu0 0.0
    %613 = vmatpush1.msra.mxu0 0.0
    %614 = vmatprep.subr.mxu0 0.0
    %615 = vmatpush1.msra.mxu0 0.0
    %616 = vmatprep.subr.mxu0 0.0
    %617 = vmatpush1.msra.mxu0 0.0
    %618 = vmatprep.subr.mxu0 0.0
    %619 = vmatpush1.msra.mxu0 0.0
    %620 = vmatprep.subr.mxu0 0.0
    %621 = vmatpush1.msra.mxu0 0.0
    %622 = vmatprep.subr.mxu0 0.0
    %623 = vmatpush1.msra.mxu0 0.0
    %624 = vmatprep.subr.mxu0 0.0
    %625 = vmatpush1.msra.mxu0 0.0
    %626 = vmatprep.subr.mxu0 0.0
    %627 = vmatpush1.msra.mxu0 0.0
    %628 = vmatprep.subr.mxu0 0.0
    %629 = vmatpush1.msra.mxu0 0.0
    %630 = vmatprep.subr.mxu0 0.0
    %631 = vmatpush1.msra.mxu0 0.0
    %632 = vmatprep.subr.mxu0 0.0
    %633 = vmatpush1.msra.mxu0 0.0
    %634 = vmatprep.subr.mxu0 0.0
    %635 = vmatpush1.msra.mxu0 0.0
    %636 = vmatprep.subr.mxu0 0.0
    %637 = vmatpush1.msra.mxu0 0.0
    %638 = vmatprep.subr.mxu0 0.0
    %639 = vmatpush1.msra.mxu0 0.0
    %640 = vmatprep.subr.mxu0 0.0
    %641 = vmatpush1.msra.mxu0 0.0
    %642 = vmatprep.subr.mxu0 0.0
    %643 = vmatpush1.msra.mxu0 0.0
    %644 = vmatprep.subr.mxu0 0.0
    %645 = vmatpush1.msra.mxu0 0.0
    %646 = vmatprep.subr.mxu0 0.0
    %647 = vmatpush1.msra.mxu0 0.0
    %648 = vmatprep.subr.mxu0 0.0
    %649 = vmatpush1.msra.mxu0 0.0
    %650 = vmatprep.subr.mxu0 0.0
    %651 = vmatpush1.msra.mxu0 0.0
    %652 = vmatprep.subr.mxu0 0.0
    %653 = vmatpush1.msra.mxu0 0.0
    %654 = vmatprep.subr.mxu0 0.0
    %655 = vmatpush1.msra.mxu0 0.0
    %656 = vmatprep.subr.mxu0 0.0
    %657 = vmatpush1.msra.mxu0 0.0
    %658 = vmatprep.subr.mxu0 0.0
    %659 = vmatpush1.msra.mxu0 0.0
    %660 = vmatprep.mubr.f32.mxu0 0.0
    %661 = vmatmul.mubr.f32.gmra.mrb[0].mxu0 %v501
    %v662 = vpop.f32.mrb[0].mxu0
    %v663 = vadd.f32 0.0, %v662
    %v664 = vpop.f32.mrb[0].mxu0
    %665 = vmatprep.mubr.f32.mxu0 0.0
    %666 = vmatmul.mubr.f32.gmra.mrb[0].mxu0 %v504
    %v667 = vpop.f32.mrb[0].mxu0
    %v668 = vadd.f32 0.0, %v667
    %v669 = vpop.f32.mrb[0].mxu0
    %670 = vmatprep.mubr.f32.mxu0 0.0
    %671 = vmatmul.mubr.f32.gmra.mrb[0].mxu0 %v507
    %v672 = vpop.f32.mrb[0].mxu0
    %v673 = vadd.f32 0.0, %v672
    %v674 = vpop.f32.mrb[0].mxu0
    %675 = vmatprep.mubr.f32.mxu0 0.0
    %676 = vmatmul.mubr.f32.gmra.mrb[0].mxu0 %v510
    %v677 = vpop.f32.mrb[0].mxu0
    %v678 = vadd.f32 0.0, %v677
    %v679 = vpop.f32.mrb[0].mxu0
    %680 = vmatprep.mubr.f32.mxu0 0.0
    %681 = vmatmul.mubr.f32.gmra.mrb[0].mxu0 %v513
    %v682 = vpop.f32.mrb[0].mxu0
    %v683 = vadd.f32 0.0, %v682
    %v684 = vpop.f32.mrb[0].mxu0
    %685 = vmatprep.mubr.f32.mxu0 0.0
    %686 = vmatmul.mubr.f32.gmra.mrb[0].mxu0 %v516
    %v687 = vpop.f32.mrb[0].mxu0
    %v688 = vadd.f32 0.0, %v687
    %v689 = vpop.f32.mrb[0].mxu0
    %690 = vmatprep.mubr.f32.mxu0 0.0
    %691 = vmatmul.mubr.f32.gmra.mrb[0].mxu0 %v519
    %v692 = vpop.f32.mrb[0].mxu0
    %v693 = vadd.f32 0.0, %v692
    %v694 = vpop.f32.mrb[0].mxu0
    %695 = vmatprep.mubr.f32.mxu0 0.0
    %696 = vmatmul.mubr.f32.gmra.mrb[0].mxu0 %v522
    %v697 = vpop.f32.mrb[0].mxu0
    %v698 = vadd.f32 0.0, %v697
    %v699 = vpop.f32.mrb[0].mxu0
    %700 = vmatprep.mubr.f32.mxu0 0.0
    %701 = vmatmul.mubr.f32.gmra.mrb[0].mxu0 %v525
    %v702 = vpop.f32.mrb[0].mxu0
    %v703 = vadd.f32 0.0, %v702
    %v704 = vpop.f32.mrb[0].mxu0
    %705 = vmatprep.mubr.f32.mxu0 0.0
    %706 = vmatmul.mubr.f32.gmra.mrb[0].mxu0 %v528
    %v707 = vpop.f32.mrb[0].mxu0
    %v708 = vadd.f32 0.0, %v707
    %v709 = vpop.f32.mrb[0].mxu0
    %710 = vmatprep.mubr.f32.mxu0 0.0
    %711 = vmatmul.mubr.f32.gmra.mrb[0].mxu0 %v531
    %v712 = vpop.f32.mrb[0].mxu0
    %v713 = vadd.f32 0.0, %v712
    %v714 = vpop.f32.mrb[0].mxu0
    %715 = vmatprep.mubr.f32.mxu0 0.0
    %716 = vmatmul.mubr.f32.gmra.mrb[0].mxu0 %v534
    %v717 = vpop.f32.mrb[0].mxu0
    %v718 = vadd.f32 0.0, %v717
    %v719 = vpop.f32.mrb[0].mxu0
    %720 = vmatprep.mubr.f32.mxu0 0.0
    %721 = vmatmul.mubr.f32.gmra.mrb[0].mxu0 %v537
    %v722 = vpop.f32.mrb[0].mxu0
    %v723 = vadd.f32 0.0, %v722
    %v724 = vpop.f32.mrb[0].mxu0
    %725 = vmatprep.mubr.f32.mxu0 0.0
    %726 = vmatmul.mubr.f32.gmra.mrb[0].mxu0 %v540
    %v727 = vpop.f32.mrb[0].mxu0
    %v728 = vadd.f32 0.0, %v727
    %v729 = vpop.f32.mrb[0].mxu0
    %730 = vmatprep.mubr.f32.mxu0 0.0
    %731 = vmatmul.mubr.f32.gmra.mrb[0].mxu0 %v543
    %v732 = vpop.f32.mrb[0].mxu0
    %v733 = vadd.f32 0.0, %v732
    %v734 = vpop.f32.mrb[0].mxu0
    %735 = vmatprep.mubr.f32.mxu0 0.0
    %736 = vmatmul.mubr.f32.gmra.mrb[0].mxu0 %v546
    %v737 = vpop.f32.mrb[0].mxu0
    %v738 = vadd.f32 0.0, %v737
    %v739 = vpop.f32.mrb[0].mxu0
    %740 = vmatprep.mubr.f32.mxu0 0.0
    %741 = vmatmul.mubr.f32.gmra.mrb[0].mxu0 %v549
    %v742 = vpop.f32.mrb[0].mxu0
    %v743 = vadd.f32 0.0, %v742
    %v744 = vpop.f32.mrb[0].mxu0
    %745 = vmatprep.mubr.f32.mxu0 0.0
    %746 = vmatmul.mubr.f32.gmra.mrb[0].mxu0 %v552
    %v747 = vpop.f32.mrb[0].mxu0
    %v748 = vadd.f32 0.0, %v747
    %v749 = vpop.f32.mrb[0].mxu0
    %750 = vmatprep.mubr.f32.mxu0 0.0
    %751 = vmatmul.mubr.f32.gmra.mrb[0].mxu0 %v555
    %v752 = vpop.f32.mrb[0].mxu0
    %v753 = vadd.f32 0.0, %v752
    %v754 = vpop.f32.mrb[0].mxu0
    %755 = vmatprep.mubr.f32.mxu0 0.0
    %756 = vmatmul.mubr.f32.gmra.mrb[0].mxu0 %v558
    %v757 = vpop.f32.mrb[0].mxu0
    %v758 = vadd.f32 0.0, %v757
    %v759 = vpop.f32.mrb[0].mxu0
    %760 = vmatprep.mubr.f32.mxu0 0.0
    %761 = vmatmul.mubr.f32.gmra.mrb[0].mxu0 %v561
    %v762 = vpop.f32.mrb[0].mxu0
    %v763 = vadd.f32 0.0, %v762
    %v764 = vpop.f32.mrb[0].mxu0
    %765 = vmatprep.mubr.f32.mxu0 0.0
    %766 = vmatmul.mubr.f32.gmra.mrb[0].mxu0 %v564
    %v767 = vpop.f32.mrb[0].mxu0
    %v768 = vadd.f32 0.0, %v767
    %v769 = vpop.f32.mrb[0].mxu0
    %770 = vmatprep.mubr.f32.mxu0 0.0
    %771 = vmatmul.mubr.f32.gmra.mrb[0].mxu0 %v567
    %v772 = vpop.f32.mrb[0].mxu0
    %v773 = vadd.f32 0.0, %v772
    %v774 = vpop.f32.mrb[0].mxu0
    %775 = vmatprep.mubr.f32.mxu0 0.0
    %776 = vmatmul.mubr.f32.gmra.mrb[0].mxu0 %v570
    %v777 = vpop.f32.mrb[0].mxu0
    %v778 = vadd.f32 0.0, %v777
    %v779 = vpop.f32.mrb[0].mxu0
    %780 = vmatprep.mubr.f32.mxu0 0.0
    %781 = vmatmul.mubr.f32.gmra.mrb[0].mxu0 %v573
    %v782 = vpop.f32.mrb[0].mxu0
    %v783 = vadd.f32 0.0, %v782
    %v784 = vpop.f32.mrb[0].mxu0
    %785 = vmatprep.mubr.f32.mxu0 0.0
    %786 = vmatmul.mubr.f32.gmra.mrb[0].mxu0 %v576
    %v787 = vpop.f32.mrb[0].mxu0
    %v788 = vadd.f32 0.0, %v787
    %v789 = vpop.f32.mrb[0].mxu0
    %790 = vmatprep.mubr.f32.mxu0 0.0
    %791 = vmatmul.mubr.f32.gmra.mrb[0].mxu0 %v579
    %v792 = vpop.f32.mrb[0].mxu0
    %v793 = vadd.f32 0.0, %v792
    %v794 = vpop.f32.mrb[0].mxu0
    %795 = vmatprep.mubr.f32.mxu0 0.0
    %796 = vmatmul.mubr.f32.gmra.mrb[0].mxu0 %v582
    %v797 = vpop.f32.mrb[0].mxu0
    %v798 = vadd.f32 0.0, %v797
    %v799 = vpop.f32.mrb[0].mxu0
    %800 = vmatprep.mubr.f32.mxu0 0.0
    %801 = vmatmul.mubr.f32.gmra.mrb[0].mxu0 %v585
    %v802 = vpop.f32.mrb[0].mxu0
    %v803 = vadd.f32 0.0, %v802
    %v804 = vpop.f32.mrb[0].mxu0
    %805 = vmatprep.mubr.f32.mxu0 0.0
    %806 = vmatmul.mubr.f32.gmra.mrb[0].mxu0 %v588
    %v807 = vpop.f32.mrb[0].mxu0
    %v808 = vadd.f32 0.0, %v807
    %v809 = vpop.f32.mrb[0].mxu0
    %810 = vmatprep.mubr.f32.mxu0 0.0
    %811 = vmatmul.mubr.f32.gmra.mrb[0].mxu0 %v591
    %v812 = vpop.f32.mrb[0].mxu0
    %v813 = vadd.f32 0.0, %v812
    %v814 = vpop.f32.mrb[0].mxu0
    %815 = vmatprep.mubr.f32.mxu0 0.0
    %816 = vmatmul.mubr.f32.gmra.mrb[0].mxu0 %v594
    %v817 = vpop.f32.mrb[0].mxu0
    %v818 = vadd.f32 0.0, %v817
    %v819 = vpop.f32.mrb[0].mxu0
    %820 = vdwg.mxu0
    %vm821 = vcmask 130048
    %v822 = vsel %vm821, %v342, 0.0
    %v823 = vsel %vm821, %v347, 0.0
    %v824 = vadd.f32 %v822, %v823
    %v825 = vsel %vm821, %v352, 0.0
    %v826 = vadd.f32 %v824, %v825
    %v827 = vsel %vm821, %v357, 0.0
    %v828 = vadd.f32 %v826, %v827
    %v829 = vsel %vm821, %v362, 0.0
    %v830 = vadd.f32 %v828, %v829
    %v831 = vsel %vm821, %v367, 0.0
    %v832 = vadd.f32 %v830, %v831
    %v833 = vsel %vm821, %v372, 0.0
    %v834 = vadd.f32 %v832, %v833
    %v835 = vsel %vm821, %v377, 0.0
    %v836 = vadd.f32 %v834, %v835
    %v837 = vsel %vm821, %v382, 0.0
    %v838 = vadd.f32 %v836, %v837
    %v839 = vsel %vm821, %v387, 0.0
    %v840 = vadd.f32 %v838, %v839
    %v841 = vsel %vm821, %v392, 0.0
    %v842 = vadd.f32 %v840, %v841
    %v843 = vsel %vm821, %v397, 0.0
    %v844 = vadd.f32 %v842, %v843
    %v845 = vsel %vm821, %v402, 0.0
    %v846 = vadd.f32 %v844, %v845
    %v847 = vsel %vm821, %v407, 0.0
    %v848 = vadd.f32 %v846, %v847
    %v849 = vsel %vm821, %v412, 0.0
    %v850 = vadd.f32 %v848, %v849
    %v851 = vsel %vm821, %v417, 0.0
    %v852 = vadd.f32 %v850, %v851
    %v853 = vsel %vm821, %v422, 0.0
    %v854 = vadd.f32 %v852, %v853
    %v855 = vsel %vm821, %v427, 0.0
    %v856 = vadd.f32 %v854, %v855
    %v857 = vsel %vm821, %v432, 0.0
    %v858 = vadd.f32 %v856, %v857
    %v859 = vsel %vm821, %v437, 0.0
    %v860 = vadd.f32 %v858, %v859
    %v861 = vsel %vm821, %v442, 0.0
    %v862 = vadd.f32 %v860, %v861
    %v863 = vsel %vm821, %v447, 0.0
    %v864 = vadd.f32 %v862, %v863
    %v865 = vsel %vm821, %v452, 0.0
    %v866 = vadd.f32 %v864, %v865
    %v867 = vsel %vm821, %v457, 0.0
    %v868 = vadd.f32 %v866, %v867
    %v869 = vsel %vm821, %v462, 0.0
    %v870 = vadd.f32 %v868, %v869
    %v871 = vsel %vm821, %v467, 0.0
    %v872 = vadd.f32 %v870, %v871
    %v873 = vsel %vm821, %v472, 0.0
    %v874 = vadd.f32 %v872, %v873
    %v875 = vsel %vm821, %v477, 0.0
    %v876 = vadd.f32 %v874, %v875
    %v877 = vsel %vm821, %v482, 0.0
    %v878 = vadd.f32 %v876, %v877
    %v879 = vsel %vm821, %v487, 0.0
    %v880 = vadd.f32 %v878, %v879
    %v881 = vsel %vm821, %v492, 0.0
    %v882 = vadd.f32 %v880, %v881
    %v883 = vsel %vm821, %v497, 0.0
    %v884 = vadd.f32 %v882, %v883
    %v885 = vrot.slane %v884, 4
    %v886 = vadd.f32 %v884, %v885
    %v887 = vrot.slane %v886, 2
    %v888 = vadd.f32 %v886, %v887
    %v889 = vrot.slane %v888, 1
    %v890 = vadd.f32 %v888, %v889
    %v891 = vmul.f32 %v342, %v342
    %v892 = vmul.f32 %v347, %v347
    %v893 = vmul.f32 %v352, %v352
    %v894 = vmul.f32 %v357, %v357
    %v895 = vmul.f32 %v362, %v362
    %v896 = vmul.f32 %v367, %v367
    %v897 = vmul.f32 %v372, %v372
    %v898 = vmul.f32 %v377, %v377
    %v899 = vmul.f32 %v382, %v382
    %v900 = vmul.f32 %v387, %v387
    %v901 = vmul.f32 %v392, %v392
    %v902 = vmul.f32 %v397, %v397
    %v903 = vmul.f32 %v402, %v402
    %v904 = vmul.f32 %v407, %v407
    %v905 = vmul.f32 %v412, %v412
    %v906 = vmul.f32 %v417, %v417
    %v907 = vmul.f32 %v422, %v422
    %v908 = vmul.f32 %v427, %v427
    %v909 = vmul.f32 %v432, %v432
    %v910 = vmul.f32 %v437, %v437
    %v911 = vmul.f32 %v442, %v442
    %v912 = vmul.f32 %v447, %v447
    %v913 = vmul.f32 %v452, %v452
    %v914 = vmul.f32 %v457, %v457
    %v915 = vmul.f32 %v462, %v462
    %v916 = vmul.f32 %v467, %v467
    %v917 = vmul.f32 %v472, %v472
    %v918 = vmul.f32 %v477, %v477
    %v919 = vmul.f32 %v482, %v482
    %v920 = vmul.f32 %v487, %v487
    %v921 = vmul.f32 %v492, %v492
    %v922 = vmul.f32 %v497, %v497
    %v923 = vsel %vm821, %v891, 0.0
    %v924 = vsel %vm821, %v892, 0.0
    %v925 = vadd.f32 %v923, %v924
    %v926 = vsel %vm821, %v893, 0.0
    %v927 = vadd.f32 %v925, %v926
    %v928 = vsel %vm821, %v894, 0.0
    %v929 = vadd.f32 %v927, %v928
    %v930 = vsel %vm821, %v895, 0.0
    %v931 = vadd.f32 %v929, %v930
    %v932 = vsel %vm821, %v896, 0.0
    %v933 = vadd.f32 %v931, %v932
    %v934 = vsel %vm821, %v897, 0.0
    %v935 = vadd.f32 %v933, %v934
    %v936 = vsel %vm821, %v898, 0.0
    %v937 = vadd.f32 %v935, %v936
    %v938 = vsel %vm821, %v899, 0.0
    %v939 = vadd.f32 %v937, %v938
    %v940 = vsel %vm821, %v900, 0.0
    %v941 = vadd.f32 %v939, %v940
    %v942 = vsel %vm821, %v901, 0.0
    %v943 = vadd.f32 %v941, %v942
    %v944 = vsel %vm821, %v902, 0.0
    %v945 = vadd.f32 %v943, %v944
    %v946 = vsel %vm821, %v903, 0.0
    %v947 = vadd.f32 %v945, %v946
    %v948 = vsel %vm821, %v904, 0.0
    %v949 = vadd.f32 %v947, %v948
    %v950 = vsel %vm821, %v905, 0.0
    %v951 = vadd.f32 %v949, %v950
    %v952 = vsel %vm821, %v906, 0.0
    %v953 = vadd.f32 %v951, %v952
    %v954 = vsel %vm821, %v907, 0.0
    %v955 = vadd.f32 %v953, %v954
    %v956 = vsel %vm821, %v908, 0.0
    %v957 = vadd.f32 %v955, %v956
    %v958 = vsel %vm821, %v909, 0.0
    %v959 = vadd.f32 %v957, %v958
    %v960 = vsel %vm821, %v910, 0.0
    %v961 = vadd.f32 %v959, %v960
    %v962 = vsel %vm821, %v911, 0.0
    %v963 = vadd.f32 %v961, %v962
    %v964 = vsel %vm821, %v912, 0.0
    %v965 = vadd.f32 %v963, %v964
    %v966 = vsel %vm821, %v913, 0.0
    %v967 = vadd.f32 %v965, %v966
    %v968 = vsel %vm821, %v914, 0.0
    %v969 = vadd.f32 %v967, %v968
    %v970 = vsel %vm821, %v915, 0.0
    %v971 = vadd.f32 %v969, %v970
    %v972 = vsel %vm821, %v916, 0.0
    %v973 = vadd.f32 %v971, %v972
    %v974 = vsel %vm821, %v917, 0.0
    %v975 = vadd.f32 %v973, %v974
    %v976 = vsel %vm821, %v918, 0.0
    %v977 = vadd.f32 %v975, %v976
    %v978 = vsel %vm821, %v919, 0.0
    %v979 = vadd.f32 %v977, %v978
    %v980 = vsel %vm821, %v920, 0.0
    %v981 = vadd.f32 %v979, %v980
    %v982 = vsel %vm821, %v921, 0.0
    %v983 = vadd.f32 %v981, %v982
    %v984 = vsel %vm821, %v922, 0.0
    %v985 = vadd.f32 %v983, %v984
    %v986 = vrot.slane %v985, 4
    %v987 = vadd.f32 %v985, %v986
    %v988 = vrot.slane %v987, 2
    %v989 = vadd.f32 %v987, %v988
    %v990 = vrot.slane %v989, 1
    %v991 = vadd.f32 %v989, %v990
    %v992 = vsel %vm821, %v663, 0.0
    %v993 = vsel %vm821, %v668, 0.0
    %v994 = vadd.f32 %v992, %v993
    %v995 = vsel %vm821, %v673, 0.0
    %v996 = vadd.f32 %v994, %v995
    %v997 = vsel %vm821, %v678, 0.0
    %v998 = vadd.f32 %v996, %v997
    %v999 = vsel %vm821, %v683, 0.0
    %v1000 = vadd.f32 %v998, %v999
    %v1001 = vsel %vm821, %v688, 0.0
    %v1002 = vadd.f32 %v1000, %v1001
    %v1003 = vsel %vm821, %v693, 0.0
    %v1004 = vadd.f32 %v1002, %v1003
    %v1005 = vsel %vm821, %v698, 0.0
    %v1006 = vadd.f32 %v1004, %v1005
    %v1007 = vsel %vm821, %v703, 0.0
    %v1008 = vadd.f32 %v1006, %v1007
    %v1009 = vsel %vm821, %v708, 0.0
    %v1010 = vadd.f32 %v1008, %v1009
    %v1011 = vsel %vm821, %v713, 0.0
    %v1012 = vadd.f32 %v1010, %v1011
    %v1013 = vsel %vm821, %v718, 0.0
    %v1014 = vadd.f32 %v1012, %v1013
    %v1015 = vsel %vm821, %v723, 0.0
    %v1016 = vadd.f32 %v1014, %v1015
    %v1017 = vsel %vm821, %v728, 0.0
    %v1018 = vadd.f32 %v1016, %v1017
    %v1019 = vsel %vm821, %v733, 0.0
    %v1020 = vadd.f32 %v1018, %v1019
    %v1021 = vsel %vm821, %v738, 0.0
    %v1022 = vadd.f32 %v1020, %v1021
    %v1023 = vsel %vm821, %v743, 0.0
    %v1024 = vadd.f32 %v1022, %v1023
    %v1025 = vsel %vm821, %v748, 0.0
    %v1026 = vadd.f32 %v1024, %v1025
    %v1027 = vsel %vm821, %v753, 0.0
    %v1028 = vadd.f32 %v1026, %v1027
    %v1029 = vsel %vm821, %v758, 0.0
    %v1030 = vadd.f32 %v1028, %v1029
    %v1031 = vsel %vm821, %v763, 0.0
    %v1032 = vadd.f32 %v1030, %v1031
    %v1033 = vsel %vm821, %v768, 0.0
    %v1034 = vadd.f32 %v1032, %v1033
    %v1035 = vsel %vm821, %v773, 0.0
    %v1036 = vadd.f32 %v1034, %v1035
    %v1037 = vsel %vm821, %v778, 0.0
    %v1038 = vadd.f32 %v1036, %v1037
    %v1039 = vsel %vm821, %v783, 0.0
    %v1040 = vadd.f32 %v1038, %v1039
    %v1041 = vsel %vm821, %v788, 0.0
    %v1042 = vadd.f32 %v1040, %v1041
    %v1043 = vsel %vm821, %v793, 0.0
    %v1044 = vadd.f32 %v1042, %v1043
    %v1045 = vsel %vm821, %v798, 0.0
    %v1046 = vadd.f32 %v1044, %v1045
    %v1047 = vsel %vm821, %v803, 0.0
    %v1048 = vadd.f32 %v1046, %v1047
    %v1049 = vsel %vm821, %v808, 0.0
    %v1050 = vadd.f32 %v1048, %v1049
    %v1051 = vsel %vm821, %v813, 0.0
    %v1052 = vadd.f32 %v1050, %v1051
    %v1053 = vsel %vm821, %v818, 0.0
    %v1054 = vadd.f32 %v1052, %v1053
    %v1055 = vrot.slane %v1054, 4
    %v1056 = vadd.f32 %v1054, %v1055
    %v1057 = vrot.slane %v1056, 2
    %v1058 = vadd.f32 %v1056, %v1057
    %v1059 = vrot.slane %v1058, 1
    %v1060 = vadd.f32 %v1058, %v1059
    %v1061 = vadd.f32 %v890, %v1060
    %v1062 = vmul.f32 %v663, %v663
    %v1063 = vmul.f32 %v668, %v668
    %v1064 = vmul.f32 %v673, %v673
    %v1065 = vmul.f32 %v678, %v678
    %v1066 = vmul.f32 %v683, %v683
    %v1067 = vmul.f32 %v688, %v688
    %v1068 = vmul.f32 %v693, %v693
    %v1069 = vmul.f32 %v698, %v698
    %v1070 = vmul.f32 %v703, %v703
    %v1071 = vmul.f32 %v708, %v708
    %v1072 = vmul.f32 %v713, %v713
    %v1073 = vmul.f32 %v718, %v718
    %v1074 = vmul.f32 %v723, %v723
    %v1075 = vmul.f32 %v728, %v728
    %v1076 = vmul.f32 %v733, %v733
    %v1077 = vmul.f32 %v738, %v738
    %v1078 = vmul.f32 %v743, %v743
    %v1079 = vmul.f32 %v748, %v748
    %v1080 = vmul.f32 %v753, %v753
    %v1081 = vmul.f32 %v758, %v758
    %v1082 = vmul.f32 %v763, %v763
    %v1083 = vmul.f32 %v768, %v768
    %v1084 = vmul.f32 %v773, %v773
    %v1085 = vmul.f32 %v778, %v778
    %v1086 = vmul.f32 %v783, %v783
    %v1087 = vmul.f32 %v788, %v788
    %v1088 = vmul.f32 %v793, %v793
    %v1089 = vmul.f32 %v798, %v798
    %v1090 = vmul.f32 %v803, %v803
    %v1091 = vmul.f32 %v808, %v808
    %v1092 = vmul.f32 %v813, %v813
    %v1093 = vmul.f32 %v818, %v818
    %v1094 = vsel %vm821, %v1062, 0.0
    %v1095 = vsel %vm821, %v1063, 0.0
    %v1096 = vadd.f32 %v1094, %v1095
    %v1097 = vsel %vm821, %v1064, 0.0
    %v1098 = vadd.f32 %v1096, %v1097
    %v1099 = vsel %vm821, %v1065, 0.0
    %v1100 = vadd.f32 %v1098, %v1099
    %v1101 = vsel %vm821, %v1066, 0.0
    %v1102 = vadd.f32 %v1100, %v1101
    %v1103 = vsel %vm821, %v1067, 0.0
    %v1104 = vadd.f32 %v1102, %v1103
    %v1105 = vsel %vm821, %v1068, 0.0
    %v1106 = vadd.f32 %v1104, %v1105
    %v1107 = vsel %vm821, %v1069, 0.0
    %v1108 = vadd.f32 %v1106, %v1107
    %v1109 = vsel %vm821, %v1070, 0.0
    %v1110 = vadd.f32 %v1108, %v1109
    %v1111 = vsel %vm821, %v1071, 0.0
    %v1112 = vadd.f32 %v1110, %v1111
    %v1113 = vsel %vm821, %v1072, 0.0
    %v1114 = vadd.f32 %v1112, %v1113
    %v1115 = vsel %vm821, %v1073, 0.0
    %v1116 = vadd.f32 %v1114, %v1115
    %v1117 = vsel %vm821, %v1074, 0.0
    %v1118 = vadd.f32 %v1116, %v1117
    %v1119 = vsel %vm821, %v1075, 0.0
    %v1120 = vadd.f32 %v1118, %v1119
    %v1121 = vsel %vm821, %v1076, 0.0
    %v1122 = vadd.f32 %v1120, %v1121
    %v1123 = vsel %vm821, %v1077, 0.0
    %v1124 = vadd.f32 %v1122, %v1123
    %v1125 = vsel %vm821, %v1078, 0.0
    %v1126 = vadd.f32 %v1124, %v1125
    %v1127 = vsel %vm821, %v1079, 0.0
    %v1128 = vadd.f32 %v1126, %v1127
    %v1129 = vsel %vm821, %v1080, 0.0
    %v1130 = vadd.f32 %v1128, %v1129
    %v1131 = vsel %vm821, %v1081, 0.0
    %v1132 = vadd.f32 %v1130, %v1131
    %v1133 = vsel %vm821, %v1082, 0.0
    %v1134 = vadd.f32 %v1132, %v1133
    %v1135 = vsel %vm821, %v1083, 0.0
    %v1136 = vadd.f32 %v1134, %v1135
    %v1137 = vsel %vm821, %v1084, 0.0
    %v1138 = vadd.f32 %v1136, %v1137
    %v1139 = vsel %vm821, %v1085, 0.0
    %v1140 = vadd.f32 %v1138, %v1139
    %v1141 = vsel %vm821, %v1086, 0.0
    %v1142 = vadd.f32 %v1140, %v1141
    %v1143 = vsel %vm821, %v1087, 0.0
    %v1144 = vadd.f32 %v1142, %v1143
    %v1145 = vsel %vm821, %v1088, 0.0
    %v1146 = vadd.f32 %v1144, %v1145
    %v1147 = vsel %vm821, %v1089, 0.0
    %v1148 = vadd.f32 %v1146, %v1147
    %v1149 = vsel %vm821, %v1090, 0.0
    %v1150 = vadd.f32 %v1148, %v1149
    %v1151 = vsel %vm821, %v1091, 0.0
    %v1152 = vadd.f32 %v1150, %v1151
    %v1153 = vsel %vm821, %v1092, 0.0
    %v1154 = vadd.f32 %v1152, %v1153
    %v1155 = vsel %vm821, %v1093, 0.0
    %v1156 = vadd.f32 %v1154, %v1155
    %v1157 = vrot.slane %v1156, 4
    %v1158 = vadd.f32 %v1156, %v1157
    %v1159 = vrot.slane %v1158, 2
    %v1160 = vadd.f32 %v1158, %v1159
    %v1161 = vrot.slane %v1160, 1
    %v1162 = vadd.f32 %v1160, %v1161
    %v1163 = vadd.f32 %v991, %v1162
    %v1164 = vmul.f32 %v1061, 0.001953125
    %v1165 = vmul.f32 %v1163, 0.001953125
    %v1166 = vmul.f32 %v1164, %v1164
    %v1167 = vsub.f32 %v1165, %v1166
    %v1168 = vmax.f32 %v1167, 0.0
    %v1169 = vadd.f32 %v1168, 1e-05
    %v1170 = vrsqrt.pop %v1169
    %v1171 = vmul.f32 %v44, %v1170
    %v1172 = vmul.f32 %v1164, %v1171
    %v1173 = vsub.f32 %v46, %v1172
    %v1175 = vlaneseq
    %v1176 = vshrl.u32 %v1175, 7
    %v1177 = vsub.s32 0, %v1176
    %v1178 = vrot.slane %v1171, %v1177
    %v1180 = vmul.f32 %v342, %v1178
    %v1181 = vmul.f32 %v347, %v1178
    %v1182 = vmul.f32 %v352, %v1178
    %v1183 = vmul.f32 %v357, %v1178
    %v1184 = vmul.f32 %v362, %v1178
    %v1185 = vmul.f32 %v367, %v1178
    %v1186 = vmul.f32 %v372, %v1178
    %v1187 = vmul.f32 %v377, %v1178
    %v1188 = vmul.f32 %v382, %v1178
    %v1189 = vmul.f32 %v387, %v1178
    %v1190 = vmul.f32 %v392, %v1178
    %v1191 = vmul.f32 %v397, %v1178
    %v1192 = vmul.f32 %v402, %v1178
    %v1193 = vmul.f32 %v407, %v1178
    %v1194 = vmul.f32 %v412, %v1178
    %v1195 = vmul.f32 %v417, %v1178
    %v1196 = vmul.f32 %v422, %v1178
    %v1197 = vmul.f32 %v427, %v1178
    %v1198 = vmul.f32 %v432, %v1178
    %v1199 = vmul.f32 %v437, %v1178
    %v1200 = vmul.f32 %v442, %v1178
    %v1201 = vmul.f32 %v447, %v1178
    %v1202 = vmul.f32 %v452, %v1178
    %v1203 = vmul.f32 %v457, %v1178
    %v1204 = vmul.f32 %v462, %v1178
    %v1205 = vmul.f32 %v467, %v1178
    %v1206 = vmul.f32 %v472, %v1178
    %v1207 = vmul.f32 %v477, %v1178
    %v1208 = vmul.f32 %v482, %v1178
    %v1209 = vmul.f32 %v487, %v1178
    %v1210 = vmul.f32 %v492, %v1178
    %v1211 = vmul.f32 %v497, %v1178
    %v1213 = vlaneseq
    %v1214 = vshrl.u32 %v1213, 7
    %v1215 = vsub.s32 0, %v1214
    %v1216 = vrot.slane %v1173, %v1215
    %v1218 = vadd.f32 %v1180, %v1216
    %v1219 = vadd.f32 %v1181, %v1216
    %v1220 = vadd.f32 %v1182, %v1216
    %v1221 = vadd.f32 %v1183, %v1216
    %v1222 = vadd.f32 %v1184, %v1216
    %v1223 = vadd.f32 %v1185, %v1216
    %v1224 = vadd.f32 %v1186, %v1216
    %v1225 = vadd.f32 %v1187, %v1216
    %v1226 = vadd.f32 %v1188, %v1216
    %v1227 = vadd.f32 %v1189, %v1216
    %v1228 = vadd.f32 %v1190, %v1216
    %v1229 = vadd.f32 %v1191, %v1216
    %v1230 = vadd.f32 %v1192, %v1216
    %v1231 = vadd.f32 %v1193, %v1216
    %v1232 = vadd.f32 %v1194, %v1216
    %v1233 = vadd.f32 %v1195, %v1216
    %v1234 = vadd.f32 %v1196, %v1216
    %v1235 = vadd.f32 %v1197, %v1216
    %v1236 = vadd.f32 %v1198, %v1216
    %v1237 = vadd.f32 %v1199, %v1216
    %v1238 = vadd.f32 %v1200, %v1216
    %v1239 = vadd.f32 %v1201, %v1216
    %v1240 = vadd.f32 %v1202, %v1216
    %v1241 = vadd.f32 %v1203, %v1216
    %v1242 = vadd.f32 %v1204, %v1216
    %v1243 = vadd.f32 %v1205, %v1216
    %v1244 = vadd.f32 %v1206, %v1216
    %v1245 = vadd.f32 %v1207, %v1216
    %v1246 = vadd.f32 %v1208, %v1216
    %v1247 = vadd.f32 %v1209, %v1216
    %v1248 = vadd.f32 %v1210, %v1216
    %v1249 = vadd.f32 %v1211, %v1216
    %v1250 = vmul.f32 %v663, %v1178
    %v1251 = vmul.f32 %v668, %v1178
    %v1252 = vmul.f32 %v673, %v1178
    %v1253 = vmul.f32 %v678, %v1178
    %v1254 = vmul.f32 %v683, %v1178
    %v1255 = vmul.f32 %v688, %v1178
    %v1256 = vmul.f32 %v693, %v1178
    %v1257 = vmul.f32 %v698, %v1178
    %v1258 = vmul.f32 %v703, %v1178
    %v1259 = vmul.f32 %v708, %v1178
    %v1260 = vmul.f32 %v713, %v1178
    %v1261 = vmul.f32 %v718, %v1178
    %v1262 = vmul.f32 %v723, %v1178
    %v1263 = vmul.f32 %v728, %v1178
    %v1264 = vmul.f32 %v733, %v1178
    %v1265 = vmul.f32 %v738, %v1178
    %v1266 = vmul.f32 %v743, %v1178
    %v1267 = vmul.f32 %v748, %v1178
    %v1268 = vmul.f32 %v753, %v1178
    %v1269 = vmul.f32 %v758, %v1178
    %v1270 = vmul.f32 %v763, %v1178
    %v1271 = vmul.f32 %v768, %v1178
    %v1272 = vmul.f32 %v773, %v1178
    %v1273 = vmul.f32 %v778, %v1178
    %v1274 = vmul.f32 %v783, %v1178
    %v1275 = vmul.f32 %v788, %v1178
    %v1276 = vmul.f32 %v793, %v1178
    %v1277 = vmul.f32 %v798, %v1178
    %v1278 = vmul.f32 %v803, %v1178
    %v1279 = vmul.f32 %v808, %v1178
    %v1280 = vmul.f32 %v813, %v1178
    %v1281 = vmul.f32 %v818, %v1178
    %v1282 = vadd.f32 %v1250, %v1216
    %v1283 = vadd.f32 %v1251, %v1216
    %v1284 = vadd.f32 %v1252, %v1216
    %v1285 = vadd.f32 %v1253, %v1216
    %v1286 = vadd.f32 %v1254, %v1216
    %v1287 = vadd.f32 %v1255, %v1216
    %v1288 = vadd.f32 %v1256, %v1216
    %v1289 = vadd.f32 %v1257, %v1216
    %v1290 = vadd.f32 %v1258, %v1216
    %v1291 = vadd.f32 %v1259, %v1216
    %v1292 = vadd.f32 %v1260, %v1216
    %v1293 = vadd.f32 %v1261, %v1216
    %v1294 = vadd.f32 %v1262, %v1216
    %v1295 = vadd.f32 %v1263, %v1216
    %v1296 = vadd.f32 %v1264, %v1216
    %v1297 = vadd.f32 %v1265, %v1216
    %v1298 = vadd.f32 %v1266, %v1216
    %v1299 = vadd.f32 %v1267, %v1216
    %v1300 = vadd.f32 %v1268, %v1216
    %v1301 = vadd.f32 %v1269, %v1216
    %v1302 = vadd.f32 %v1270, %v1216
    %v1303 = vadd.f32 %v1271, %v1216
    %v1304 = vadd.f32 %v1272, %v1216
    %v1305 = vadd.f32 %v1273, %v1216
    %v1306 = vadd.f32 %v1274, %v1216
    %v1307 = vadd.f32 %v1275, %v1216
    %v1308 = vadd.f32 %v1276, %v1216
    %v1309 = vadd.f32 %v1277, %v1216
    %v1310 = vadd.f32 %v1278, %v1216
    %v1311 = vadd.f32 %v1279, %v1216
    %v1312 = vadd.f32 %v1280, %v1216
    %v1313 = vadd.f32 %v1281, %v1216
    %s1314 = scalar_lea.vmem %s6, 2
    %v1315 = vld [vmem:[%s1314] sm:$0x1]
    %s1316 = scalar_lea.vmem %s6, 3
    %v1317 = vld [vmem:[%s1316] sm:$0x1]
    %v1318 = vld [vmem:[%s2] sm:$0xff]
    %v1319 = vld [vmem:[%s2 + $0x8] sm:$0xff]
    %v1320 = vld [vmem:[%s2 + $0x10] sm:$0xff]
    %v1321 = vld [vmem:[%s2 + $0x18] sm:$0xff]
    %v1322 = vld [vmem:[%s2 + $0x20] sm:$0xff]
    %v1323 = vld [vmem:[%s2 + $0x28] sm:$0xff]
    %v1324 = vld [vmem:[%s2 + $0x30] sm:$0xff]
    %v1325 = vld [vmem:[%s2 + $0x38] sm:$0xff]
    %v1326 = vld [vmem:[%s2 + $0x40] sm:$0xff]
    %v1327 = vld [vmem:[%s2 + $0x48] sm:$0xff]
    %v1328 = vld [vmem:[%s2 + $0x50] sm:$0xff]
    %v1329 = vld [vmem:[%s2 + $0x58] sm:$0xff]
    %v1330 = vld [vmem:[%s2 + $0x60] sm:$0xff]
    %v1331 = vld [vmem:[%s2 + $0x68] sm:$0xff]
    %v1332 = vld [vmem:[%s2 + $0x70] sm:$0xff]
    %v1333 = vld [vmem:[%s2 + $0x78] sm:$0xff]
    %v1334 = vld [vmem:[%s2 + $0x80] sm:$0xff]
    %v1335 = vld [vmem:[%s2 + $0x88] sm:$0xff]
    %v1336 = vld [vmem:[%s2 + $0x90] sm:$0xff]
    %v1337 = vld [vmem:[%s2 + $0x98] sm:$0xff]
    %v1338 = vld [vmem:[%s2 + $0xa0] sm:$0xff]
    %v1339 = vld [vmem:[%s2 + $0xa8] sm:$0xff]
    %v1340 = vld [vmem:[%s2 + $0xb0] sm:$0xff]
    %v1341 = vld [vmem:[%s2 + $0xb8] sm:$0xff]
    %v1342 = vld [vmem:[%s2 + $0xc0] sm:$0xff]
    %v1343 = vld [vmem:[%s2 + $0xc8] sm:$0xff]
    %v1344 = vld [vmem:[%s2 + $0xd0] sm:$0xff]
    %v1345 = vld [vmem:[%s2 + $0xd8] sm:$0xff]
    %v1346 = vld [vmem:[%s2 + $0xe0] sm:$0xff]
    %v1347 = vld [vmem:[%s2 + $0xe8] sm:$0xff]
    %v1348 = vld [vmem:[%s2 + $0xf0] sm:$0xff]
    %v1349 = vld [vmem:[%s2 + $0xf8] sm:$0xff]
    %v1350 = vmax.f32 %v1318, 0.0
    %v1351 = vmax.f32 %v1319, 0.0
    %v1352 = vmax.f32 %v1320, 0.0
    %v1353 = vmax.f32 %v1321, 0.0
    %v1354 = vmax.f32 %v1322, 0.0
    %v1355 = vmax.f32 %v1323, 0.0
    %v1356 = vmax.f32 %v1324, 0.0
    %v1357 = vmax.f32 %v1325, 0.0
    %v1358 = vmax.f32 %v1326, 0.0
    %v1359 = vmax.f32 %v1327, 0.0
    %v1360 = vmax.f32 %v1328, 0.0
    %v1361 = vmax.f32 %v1329, 0.0
    %v1362 = vmax.f32 %v1330, 0.0
    %v1363 = vmax.f32 %v1331, 0.0
    %v1364 = vmax.f32 %v1332, 0.0
    %v1365 = vmax.f32 %v1333, 0.0
    %v1366 = vmax.f32 %v1334, 0.0
    %v1367 = vmax.f32 %v1335, 0.0
    %v1368 = vmax.f32 %v1336, 0.0
    %v1369 = vmax.f32 %v1337, 0.0
    %v1370 = vmax.f32 %v1338, 0.0
    %v1371 = vmax.f32 %v1339, 0.0
    %v1372 = vmax.f32 %v1340, 0.0
    %v1373 = vmax.f32 %v1341, 0.0
    %v1374 = vmax.f32 %v1342, 0.0
    %v1375 = vmax.f32 %v1343, 0.0
    %v1376 = vmax.f32 %v1344, 0.0
    %v1377 = vmax.f32 %v1345, 0.0
    %v1378 = vmax.f32 %v1346, 0.0
    %v1379 = vmax.f32 %v1347, 0.0
    %v1380 = vmax.f32 %v1348, 0.0
    %v1381 = vmax.f32 %v1349, 0.0
    %v1382 = vld [vmem:[%s3] sm:$0xff]
    %v1383 = vld [vmem:[%s3 + $0x8] sm:$0xff]
    %v1384 = vld [vmem:[%s3 + $0x10] sm:$0xff]
    %v1385 = vld [vmem:[%s3 + $0x18] sm:$0xff]
    %v1386 = vld [vmem:[%s3 + $0x20] sm:$0xff]
    %v1387 = vld [vmem:[%s3 + $0x28] sm:$0xff]
    %v1388 = vld [vmem:[%s3 + $0x30] sm:$0xff]
    %v1389 = vld [vmem:[%s3 + $0x38] sm:$0xff]
    %v1390 = vld [vmem:[%s3 + $0x40] sm:$0xff]
    %v1391 = vld [vmem:[%s3 + $0x48] sm:$0xff]
    %v1392 = vld [vmem:[%s3 + $0x50] sm:$0xff]
    %v1393 = vld [vmem:[%s3 + $0x58] sm:$0xff]
    %v1394 = vld [vmem:[%s3 + $0x60] sm:$0xff]
    %v1395 = vld [vmem:[%s3 + $0x68] sm:$0xff]
    %v1396 = vld [vmem:[%s3 + $0x70] sm:$0xff]
    %v1397 = vld [vmem:[%s3 + $0x78] sm:$0xff]
    %v1398 = vld [vmem:[%s3 + $0x80] sm:$0xff]
    %v1399 = vld [vmem:[%s3 + $0x88] sm:$0xff]
    %v1400 = vld [vmem:[%s3 + $0x90] sm:$0xff]
    %v1401 = vld [vmem:[%s3 + $0x98] sm:$0xff]
    %v1402 = vld [vmem:[%s3 + $0xa0] sm:$0xff]
    %v1403 = vld [vmem:[%s3 + $0xa8] sm:$0xff]
    %v1404 = vld [vmem:[%s3 + $0xb0] sm:$0xff]
    %v1405 = vld [vmem:[%s3 + $0xb8] sm:$0xff]
    %v1406 = vld [vmem:[%s3 + $0xc0] sm:$0xff]
    %v1407 = vld [vmem:[%s3 + $0xc8] sm:$0xff]
    %v1408 = vld [vmem:[%s3 + $0xd0] sm:$0xff]
    %v1409 = vld [vmem:[%s3 + $0xd8] sm:$0xff]
    %v1410 = vld [vmem:[%s3 + $0xe0] sm:$0xff]
    %v1411 = vld [vmem:[%s3 + $0xe8] sm:$0xff]
    %v1412 = vld [vmem:[%s3 + $0xf0] sm:$0xff]
    %v1413 = vld [vmem:[%s3 + $0xf8] sm:$0xff]
    %v1414 = vmax.f32 %v1382, 0.0
    %v1415 = vmax.f32 %v1383, 0.0
    %v1416 = vmax.f32 %v1384, 0.0
    %v1417 = vmax.f32 %v1385, 0.0
    %v1418 = vmax.f32 %v1386, 0.0
    %v1419 = vmax.f32 %v1387, 0.0
    %v1420 = vmax.f32 %v1388, 0.0
    %v1421 = vmax.f32 %v1389, 0.0
    %v1422 = vmax.f32 %v1390, 0.0
    %v1423 = vmax.f32 %v1391, 0.0
    %v1424 = vmax.f32 %v1392, 0.0
    %v1425 = vmax.f32 %v1393, 0.0
    %v1426 = vmax.f32 %v1394, 0.0
    %v1427 = vmax.f32 %v1395, 0.0
    %v1428 = vmax.f32 %v1396, 0.0
    %v1429 = vmax.f32 %v1397, 0.0
    %v1430 = vmax.f32 %v1398, 0.0
    %v1431 = vmax.f32 %v1399, 0.0
    %v1432 = vmax.f32 %v1400, 0.0
    %v1433 = vmax.f32 %v1401, 0.0
    %v1434 = vmax.f32 %v1402, 0.0
    %v1435 = vmax.f32 %v1403, 0.0
    %v1436 = vmax.f32 %v1404, 0.0
    %v1437 = vmax.f32 %v1405, 0.0
    %v1438 = vmax.f32 %v1406, 0.0
    %v1439 = vmax.f32 %v1407, 0.0
    %v1440 = vmax.f32 %v1408, 0.0
    %v1441 = vmax.f32 %v1409, 0.0
    %v1442 = vmax.f32 %v1410, 0.0
    %v1443 = vmax.f32 %v1411, 0.0
    %v1444 = vmax.f32 %v1412, 0.0
    %v1445 = vmax.f32 %v1413, 0.0
    %v1446 = vld [vmem:[%s5] sm:$0xff]
    %v1447 = vld [vmem:[%s5 + $0x8] sm:$0xff]
    %v1448 = vld [vmem:[%s5 + $0x10] sm:$0xff]
    %v1449 = vld [vmem:[%s5 + $0x18] sm:$0xff]
    %vm1450 = vcmask 261120
    %v1452 = vsel %vm1450, %v1350, 0
    %v1455 = vsel %vm1450, %v1351, 0
    %v1458 = vsel %vm1450, %v1352, 0
    %v1461 = vsel %vm1450, %v1353, 0
    %v1464 = vsel %vm1450, %v1354, 0
    %v1467 = vsel %vm1450, %v1355, 0
    %v1470 = vsel %vm1450, %v1356, 0
    %v1473 = vsel %vm1450, %v1357, 0
    %v1476 = vsel %vm1450, %v1358, 0
    %v1479 = vsel %vm1450, %v1359, 0
    %v1482 = vsel %vm1450, %v1360, 0
    %v1485 = vsel %vm1450, %v1361, 0
    %v1488 = vsel %vm1450, %v1362, 0
    %v1491 = vsel %vm1450, %v1363, 0
    %v1494 = vsel %vm1450, %v1364, 0
    %v1497 = vsel %vm1450, %v1365, 0
    %v1500 = vsel %vm1450, %v1366, 0
    %v1503 = vsel %vm1450, %v1367, 0
    %v1506 = vsel %vm1450, %v1368, 0
    %v1509 = vsel %vm1450, %v1369, 0
    %v1512 = vsel %vm1450, %v1370, 0
    %v1515 = vsel %vm1450, %v1371, 0
    %v1518 = vsel %vm1450, %v1372, 0
    %v1521 = vsel %vm1450, %v1373, 0
    %v1524 = vsel %vm1450, %v1374, 0
    %v1527 = vsel %vm1450, %v1375, 0
    %v1530 = vsel %vm1450, %v1376, 0
    %v1533 = vsel %vm1450, %v1377, 0
    %v1536 = vsel %vm1450, %v1378, 0
    %v1539 = vsel %vm1450, %v1379, 0
    %v1542 = vsel %vm1450, %v1380, 0
    %v1545 = vsel %vm1450, %v1381, 0
    %1547 = vmatprep.subr.mxu0 0.0
    %1548 = vmatpush1.msra.mxu0 %v1446
    %1549 = vmatprep.subr.mxu0 0.0
    %1550 = vmatpush1.msra.mxu0 %v1447
    %1551 = vmatprep.subr.mxu0 0.0
    %1552 = vmatpush1.msra.mxu0 %v1448
    %1553 = vmatprep.subr.mxu0 0.0
    %1554 = vmatpush1.msra.mxu0 %v1449
    %1555 = vmatprep.subr.mxu0 0.0
    %1556 = vmatpush1.msra.mxu0 0.0
    %1557 = vmatprep.subr.mxu0 0.0
    %1558 = vmatpush1.msra.mxu0 0.0
    %1559 = vmatprep.subr.mxu0 0.0
    %1560 = vmatpush1.msra.mxu0 0.0
    %1561 = vmatprep.subr.mxu0 0.0
    %1562 = vmatpush1.msra.mxu0 0.0
    %1563 = vmatprep.subr.mxu0 0.0
    %1564 = vmatpush1.msra.mxu0 0.0
    %1565 = vmatprep.subr.mxu0 0.0
    %1566 = vmatpush1.msra.mxu0 0.0
    %1567 = vmatprep.subr.mxu0 0.0
    %1568 = vmatpush1.msra.mxu0 0.0
    %1569 = vmatprep.subr.mxu0 0.0
    %1570 = vmatpush1.msra.mxu0 0.0
    %1571 = vmatprep.subr.mxu0 0.0
    %1572 = vmatpush1.msra.mxu0 0.0
    %1573 = vmatprep.subr.mxu0 0.0
    %1574 = vmatpush1.msra.mxu0 0.0
    %1575 = vmatprep.subr.mxu0 0.0
    %1576 = vmatpush1.msra.mxu0 0.0
    %1577 = vmatprep.subr.mxu0 0.0
    %1578 = vmatpush1.msra.mxu0 0.0
    %1579 = vmatprep.subr.mxu0 0.0
    %1580 = vmatpush1.msra.mxu0 0.0
    %1581 = vmatprep.subr.mxu0 0.0
    %1582 = vmatpush1.msra.mxu0 0.0
    %1583 = vmatprep.subr.mxu0 0.0
    %1584 = vmatpush1.msra.mxu0 0.0
    %1585 = vmatprep.subr.mxu0 0.0
    %1586 = vmatpush1.msra.mxu0 0.0
    %1587 = vmatprep.subr.mxu0 0.0
    %1588 = vmatpush1.msra.mxu0 0.0
    %1589 = vmatprep.subr.mxu0 0.0
    %1590 = vmatpush1.msra.mxu0 0.0
    %1591 = vmatprep.subr.mxu0 0.0
    %1592 = vmatpush1.msra.mxu0 0.0
    %1593 = vmatprep.subr.mxu0 0.0
    %1594 = vmatpush1.msra.mxu0 0.0
    %1595 = vmatprep.subr.mxu0 0.0
    %1596 = vmatpush1.msra.mxu0 0.0
    %1597 = vmatprep.subr.mxu0 0.0
    %1598 = vmatpush1.msra.mxu0 0.0
    %1599 = vmatprep.subr.mxu0 0.0
    %1600 = vmatpush1.msra.mxu0 0.0
    %1601 = vmatprep.subr.mxu0 0.0
    %1602 = vmatpush1.msra.mxu0 0.0
    %1603 = vmatprep.subr.mxu0 0.0
    %1604 = vmatpush1.msra.mxu0 0.0
    %1605 = vmatprep.subr.mxu0 0.0
    %1606 = vmatpush1.msra.mxu0 0.0
    %1607 = vmatprep.subr.mxu0 0.0
    %1608 = vmatpush1.msra.mxu0 0.0
    %1609 = vmatprep.subr.mxu0 0.0
    %1610 = vmatpush1.msra.mxu0 0.0
    %1611 = vmatprep.mubr.f32.mxu0 0.0
    %1612 = vmatmul.mubr.f32.gmra.mrb[0].mxu0 %v1452
    %v1613 = vpop.f32.mrb[0].mxu0
    %v1614 = vadd.f32 0.0, %v1613
    %v1615 = vpop.f32.mrb[0].mxu0
    %1616 = vmatprep.mubr.f32.mxu0 0.0
    %1617 = vmatmul.mubr.f32.gmra.mrb[0].mxu0 %v1455
    %v1618 = vpop.f32.mrb[0].mxu0
    %v1619 = vadd.f32 0.0, %v1618
    %v1620 = vpop.f32.mrb[0].mxu0
    %1621 = vmatprep.mubr.f32.mxu0 0.0
    %1622 = vmatmul.mubr.f32.gmra.mrb[0].mxu0 %v1458
    %v1623 = vpop.f32.mrb[0].mxu0
    %v1624 = vadd.f32 0.0, %v1623
    %v1625 = vpop.f32.mrb[0].mxu0
    %1626 = vmatprep.mubr.f32.mxu0 0.0
    %1627 = vmatmul.mubr.f32.gmra.mrb[0].mxu0 %v1461
    %v1628 = vpop.f32.mrb[0].mxu0
    %v1629 = vadd.f32 0.0, %v1628
    %v1630 = vpop.f32.mrb[0].mxu0
    %1631 = vmatprep.mubr.f32.mxu0 0.0
    %1632 = vmatmul.mubr.f32.gmra.mrb[0].mxu0 %v1464
    %v1633 = vpop.f32.mrb[0].mxu0
    %v1634 = vadd.f32 0.0, %v1633
    %v1635 = vpop.f32.mrb[0].mxu0
    %1636 = vmatprep.mubr.f32.mxu0 0.0
    %1637 = vmatmul.mubr.f32.gmra.mrb[0].mxu0 %v1467
    %v1638 = vpop.f32.mrb[0].mxu0
    %v1639 = vadd.f32 0.0, %v1638
    %v1640 = vpop.f32.mrb[0].mxu0
    %1641 = vmatprep.mubr.f32.mxu0 0.0
    %1642 = vmatmul.mubr.f32.gmra.mrb[0].mxu0 %v1470
    %v1643 = vpop.f32.mrb[0].mxu0
    %v1644 = vadd.f32 0.0, %v1643
    %v1645 = vpop.f32.mrb[0].mxu0
    %1646 = vmatprep.mubr.f32.mxu0 0.0
    %1647 = vmatmul.mubr.f32.gmra.mrb[0].mxu0 %v1473
    %v1648 = vpop.f32.mrb[0].mxu0
    %v1649 = vadd.f32 0.0, %v1648
    %v1650 = vpop.f32.mrb[0].mxu0
    %1651 = vmatprep.mubr.f32.mxu0 0.0
    %1652 = vmatmul.mubr.f32.gmra.mrb[0].mxu0 %v1476
    %v1653 = vpop.f32.mrb[0].mxu0
    %v1654 = vadd.f32 0.0, %v1653
    %v1655 = vpop.f32.mrb[0].mxu0
    %1656 = vmatprep.mubr.f32.mxu0 0.0
    %1657 = vmatmul.mubr.f32.gmra.mrb[0].mxu0 %v1479
    %v1658 = vpop.f32.mrb[0].mxu0
    %v1659 = vadd.f32 0.0, %v1658
    %v1660 = vpop.f32.mrb[0].mxu0
    %1661 = vmatprep.mubr.f32.mxu0 0.0
    %1662 = vmatmul.mubr.f32.gmra.mrb[0].mxu0 %v1482
    %v1663 = vpop.f32.mrb[0].mxu0
    %v1664 = vadd.f32 0.0, %v1663
    %v1665 = vpop.f32.mrb[0].mxu0
    %1666 = vmatprep.mubr.f32.mxu0 0.0
    %1667 = vmatmul.mubr.f32.gmra.mrb[0].mxu0 %v1485
    %v1668 = vpop.f32.mrb[0].mxu0
    %v1669 = vadd.f32 0.0, %v1668
    %v1670 = vpop.f32.mrb[0].mxu0
    %1671 = vmatprep.mubr.f32.mxu0 0.0
    %1672 = vmatmul.mubr.f32.gmra.mrb[0].mxu0 %v1488
    %v1673 = vpop.f32.mrb[0].mxu0
    %v1674 = vadd.f32 0.0, %v1673
    %v1675 = vpop.f32.mrb[0].mxu0
    %1676 = vmatprep.mubr.f32.mxu0 0.0
    %1677 = vmatmul.mubr.f32.gmra.mrb[0].mxu0 %v1491
    %v1678 = vpop.f32.mrb[0].mxu0
    %v1679 = vadd.f32 0.0, %v1678
    %v1680 = vpop.f32.mrb[0].mxu0
    %1681 = vmatprep.mubr.f32.mxu0 0.0
    %1682 = vmatmul.mubr.f32.gmra.mrb[0].mxu0 %v1494
    %v1683 = vpop.f32.mrb[0].mxu0
    %v1684 = vadd.f32 0.0, %v1683
    %v1685 = vpop.f32.mrb[0].mxu0
    %1686 = vmatprep.mubr.f32.mxu0 0.0
    %1687 = vmatmul.mubr.f32.gmra.mrb[0].mxu0 %v1497
    %v1688 = vpop.f32.mrb[0].mxu0
    %v1689 = vadd.f32 0.0, %v1688
    %v1690 = vpop.f32.mrb[0].mxu0
    %1691 = vmatprep.mubr.f32.mxu0 0.0
    %1692 = vmatmul.mubr.f32.gmra.mrb[0].mxu0 %v1500
    %v1693 = vpop.f32.mrb[0].mxu0
    %v1694 = vadd.f32 0.0, %v1693
    %v1695 = vpop.f32.mrb[0].mxu0
    %1696 = vmatprep.mubr.f32.mxu0 0.0
    %1697 = vmatmul.mubr.f32.gmra.mrb[0].mxu0 %v1503
    %v1698 = vpop.f32.mrb[0].mxu0
    %v1699 = vadd.f32 0.0, %v1698
    %v1700 = vpop.f32.mrb[0].mxu0
    %1701 = vmatprep.mubr.f32.mxu0 0.0
    %1702 = vmatmul.mubr.f32.gmra.mrb[0].mxu0 %v1506
    %v1703 = vpop.f32.mrb[0].mxu0
    %v1704 = vadd.f32 0.0, %v1703
    %v1705 = vpop.f32.mrb[0].mxu0
    %1706 = vmatprep.mubr.f32.mxu0 0.0
    %1707 = vmatmul.mubr.f32.gmra.mrb[0].mxu0 %v1509
    %v1708 = vpop.f32.mrb[0].mxu0
    %v1709 = vadd.f32 0.0, %v1708
    %v1710 = vpop.f32.mrb[0].mxu0
    %1711 = vmatprep.mubr.f32.mxu0 0.0
    %1712 = vmatmul.mubr.f32.gmra.mrb[0].mxu0 %v1512
    %v1713 = vpop.f32.mrb[0].mxu0
    %v1714 = vadd.f32 0.0, %v1713
    %v1715 = vpop.f32.mrb[0].mxu0
    %1716 = vmatprep.mubr.f32.mxu0 0.0
    %1717 = vmatmul.mubr.f32.gmra.mrb[0].mxu0 %v1515
    %v1718 = vpop.f32.mrb[0].mxu0
    %v1719 = vadd.f32 0.0, %v1718
    %v1720 = vpop.f32.mrb[0].mxu0
    %1721 = vmatprep.mubr.f32.mxu0 0.0
    %1722 = vmatmul.mubr.f32.gmra.mrb[0].mxu0 %v1518
    %v1723 = vpop.f32.mrb[0].mxu0
    %v1724 = vadd.f32 0.0, %v1723
    %v1725 = vpop.f32.mrb[0].mxu0
    %1726 = vmatprep.mubr.f32.mxu0 0.0
    %1727 = vmatmul.mubr.f32.gmra.mrb[0].mxu0 %v1521
    %v1728 = vpop.f32.mrb[0].mxu0
    %v1729 = vadd.f32 0.0, %v1728
    %v1730 = vpop.f32.mrb[0].mxu0
    %1731 = vmatprep.mubr.f32.mxu0 0.0
    %1732 = vmatmul.mubr.f32.gmra.mrb[0].mxu0 %v1524
    %v1733 = vpop.f32.mrb[0].mxu0
    %v1734 = vadd.f32 0.0, %v1733
    %v1735 = vpop.f32.mrb[0].mxu0
    %1736 = vmatprep.mubr.f32.mxu0 0.0
    %1737 = vmatmul.mubr.f32.gmra.mrb[0].mxu0 %v1527
    %v1738 = vpop.f32.mrb[0].mxu0
    %v1739 = vadd.f32 0.0, %v1738
    %v1740 = vpop.f32.mrb[0].mxu0
    %1741 = vmatprep.mubr.f32.mxu0 0.0
    %1742 = vmatmul.mubr.f32.gmra.mrb[0].mxu0 %v1530
    %v1743 = vpop.f32.mrb[0].mxu0
    %v1744 = vadd.f32 0.0, %v1743
    %v1745 = vpop.f32.mrb[0].mxu0
    %1746 = vmatprep.mubr.f32.mxu0 0.0
    %1747 = vmatmul.mubr.f32.gmra.mrb[0].mxu0 %v1533
    %v1748 = vpop.f32.mrb[0].mxu0
    %v1749 = vadd.f32 0.0, %v1748
    %v1750 = vpop.f32.mrb[0].mxu0
    %1751 = vmatprep.mubr.f32.mxu0 0.0
    %1752 = vmatmul.mubr.f32.gmra.mrb[0].mxu0 %v1536
    %v1753 = vpop.f32.mrb[0].mxu0
    %v1754 = vadd.f32 0.0, %v1753
    %v1755 = vpop.f32.mrb[0].mxu0
    %1756 = vmatprep.mubr.f32.mxu0 0.0
    %1757 = vmatmul.mubr.f32.gmra.mrb[0].mxu0 %v1539
    %v1758 = vpop.f32.mrb[0].mxu0
    %v1759 = vadd.f32 0.0, %v1758
    %v1760 = vpop.f32.mrb[0].mxu0
    %1761 = vmatprep.mubr.f32.mxu0 0.0
    %1762 = vmatmul.mubr.f32.gmra.mrb[0].mxu0 %v1542
    %v1763 = vpop.f32.mrb[0].mxu0
    %v1764 = vadd.f32 0.0, %v1763
    %v1765 = vpop.f32.mrb[0].mxu0
    %1766 = vmatprep.mubr.f32.mxu0 0.0
    %1767 = vmatmul.mubr.f32.gmra.mrb[0].mxu0 %v1545
    %v1768 = vpop.f32.mrb[0].mxu0
    %v1769 = vadd.f32 0.0, %v1768
    %v1770 = vpop.f32.mrb[0].mxu0
    %1771 = vdwg.mxu0
    %v1773 = vsel %vm1450, %v1414, 0
    %v1776 = vsel %vm1450, %v1415, 0
    %v1779 = vsel %vm1450, %v1416, 0
    %v1782 = vsel %vm1450, %v1417, 0
    %v1785 = vsel %vm1450, %v1418, 0
    %v1788 = vsel %vm1450, %v1419, 0
    %v1791 = vsel %vm1450, %v1420, 0
    %v1794 = vsel %vm1450, %v1421, 0
    %v1797 = vsel %vm1450, %v1422, 0
    %v1800 = vsel %vm1450, %v1423, 0
    %v1803 = vsel %vm1450, %v1424, 0
    %v1806 = vsel %vm1450, %v1425, 0
    %v1809 = vsel %vm1450, %v1426, 0
    %v1812 = vsel %vm1450, %v1427, 0
    %v1815 = vsel %vm1450, %v1428, 0
    %v1818 = vsel %vm1450, %v1429, 0
    %v1821 = vsel %vm1450, %v1430, 0
    %v1824 = vsel %vm1450, %v1431, 0
    %v1827 = vsel %vm1450, %v1432, 0
    %v1830 = vsel %vm1450, %v1433, 0
    %v1833 = vsel %vm1450, %v1434, 0
    %v1836 = vsel %vm1450, %v1435, 0
    %v1839 = vsel %vm1450, %v1436, 0
    %v1842 = vsel %vm1450, %v1437, 0
    %v1845 = vsel %vm1450, %v1438, 0
    %v1848 = vsel %vm1450, %v1439, 0
    %v1851 = vsel %vm1450, %v1440, 0
    %v1854 = vsel %vm1450, %v1441, 0
    %v1857 = vsel %vm1450, %v1442, 0
    %v1860 = vsel %vm1450, %v1443, 0
    %v1863 = vsel %vm1450, %v1444, 0
    %v1866 = vsel %vm1450, %v1445, 0
    %1868 = vmatprep.subr.mxu0 0.0
    %1869 = vmatpush1.msra.mxu0 %v1446
    %1870 = vmatprep.subr.mxu0 0.0
    %1871 = vmatpush1.msra.mxu0 %v1447
    %1872 = vmatprep.subr.mxu0 0.0
    %1873 = vmatpush1.msra.mxu0 %v1448
    %1874 = vmatprep.subr.mxu0 0.0
    %1875 = vmatpush1.msra.mxu0 %v1449
    %1876 = vmatprep.subr.mxu0 0.0
    %1877 = vmatpush1.msra.mxu0 0.0
    %1878 = vmatprep.subr.mxu0 0.0
    %1879 = vmatpush1.msra.mxu0 0.0
    %1880 = vmatprep.subr.mxu0 0.0
    %1881 = vmatpush1.msra.mxu0 0.0
    %1882 = vmatprep.subr.mxu0 0.0
    %1883 = vmatpush1.msra.mxu0 0.0
    %1884 = vmatprep.subr.mxu0 0.0
    %1885 = vmatpush1.msra.mxu0 0.0
    %1886 = vmatprep.subr.mxu0 0.0
    %1887 = vmatpush1.msra.mxu0 0.0
    %1888 = vmatprep.subr.mxu0 0.0
    %1889 = vmatpush1.msra.mxu0 0.0
    %1890 = vmatprep.subr.mxu0 0.0
    %1891 = vmatpush1.msra.mxu0 0.0
    %1892 = vmatprep.subr.mxu0 0.0
    %1893 = vmatpush1.msra.mxu0 0.0
    %1894 = vmatprep.subr.mxu0 0.0
    %1895 = vmatpush1.msra.mxu0 0.0
    %1896 = vmatprep.subr.mxu0 0.0
    %1897 = vmatpush1.msra.mxu0 0.0
    %1898 = vmatprep.subr.mxu0 0.0
    %1899 = vmatpush1.msra.mxu0 0.0
    %1900 = vmatprep.subr.mxu0 0.0
    %1901 = vmatpush1.msra.mxu0 0.0
    %1902 = vmatprep.subr.mxu0 0.0
    %1903 = vmatpush1.msra.mxu0 0.0
    %1904 = vmatprep.subr.mxu0 0.0
    %1905 = vmatpush1.msra.mxu0 0.0
    %1906 = vmatprep.subr.mxu0 0.0
    %1907 = vmatpush1.msra.mxu0 0.0
    %1908 = vmatprep.subr.mxu0 0.0
    %1909 = vmatpush1.msra.mxu0 0.0
    %1910 = vmatprep.subr.mxu0 0.0
    %1911 = vmatpush1.msra.mxu0 0.0
    %1912 = vmatprep.subr.mxu0 0.0
    %1913 = vmatpush1.msra.mxu0 0.0
    %1914 = vmatprep.subr.mxu0 0.0
    %1915 = vmatpush1.msra.mxu0 0.0
    %1916 = vmatprep.subr.mxu0 0.0
    %1917 = vmatpush1.msra.mxu0 0.0
    %1918 = vmatprep.subr.mxu0 0.0
    %1919 = vmatpush1.msra.mxu0 0.0
    %1920 = vmatprep.subr.mxu0 0.0
    %1921 = vmatpush1.msra.mxu0 0.0
    %1922 = vmatprep.subr.mxu0 0.0
    %1923 = vmatpush1.msra.mxu0 0.0
    %1924 = vmatprep.subr.mxu0 0.0
    %1925 = vmatpush1.msra.mxu0 0.0
    %1926 = vmatprep.subr.mxu0 0.0
    %1927 = vmatpush1.msra.mxu0 0.0
    %1928 = vmatprep.subr.mxu0 0.0
    %1929 = vmatpush1.msra.mxu0 0.0
    %1930 = vmatprep.subr.mxu0 0.0
    %1931 = vmatpush1.msra.mxu0 0.0
    %1932 = vmatprep.mubr.f32.mxu0 0.0
    %1933 = vmatmul.mubr.f32.gmra.mrb[0].mxu0 %v1773
    %v1934 = vpop.f32.mrb[0].mxu0
    %v1935 = vadd.f32 0.0, %v1934
    %v1936 = vpop.f32.mrb[0].mxu0
    %1937 = vmatprep.mubr.f32.mxu0 0.0
    %1938 = vmatmul.mubr.f32.gmra.mrb[0].mxu0 %v1776
    %v1939 = vpop.f32.mrb[0].mxu0
    %v1940 = vadd.f32 0.0, %v1939
    %v1941 = vpop.f32.mrb[0].mxu0
    %1942 = vmatprep.mubr.f32.mxu0 0.0
    %1943 = vmatmul.mubr.f32.gmra.mrb[0].mxu0 %v1779
    %v1944 = vpop.f32.mrb[0].mxu0
    %v1945 = vadd.f32 0.0, %v1944
    %v1946 = vpop.f32.mrb[0].mxu0
    %1947 = vmatprep.mubr.f32.mxu0 0.0
    %1948 = vmatmul.mubr.f32.gmra.mrb[0].mxu0 %v1782
    %v1949 = vpop.f32.mrb[0].mxu0
    %v1950 = vadd.f32 0.0, %v1949
    %v1951 = vpop.f32.mrb[0].mxu0
    %1952 = vmatprep.mubr.f32.mxu0 0.0
    %1953 = vmatmul.mubr.f32.gmra.mrb[0].mxu0 %v1785
    %v1954 = vpop.f32.mrb[0].mxu0
    %v1955 = vadd.f32 0.0, %v1954
    %v1956 = vpop.f32.mrb[0].mxu0
    %1957 = vmatprep.mubr.f32.mxu0 0.0
    %1958 = vmatmul.mubr.f32.gmra.mrb[0].mxu0 %v1788
    %v1959 = vpop.f32.mrb[0].mxu0
    %v1960 = vadd.f32 0.0, %v1959
    %v1961 = vpop.f32.mrb[0].mxu0
    %1962 = vmatprep.mubr.f32.mxu0 0.0
    %1963 = vmatmul.mubr.f32.gmra.mrb[0].mxu0 %v1791
    %v1964 = vpop.f32.mrb[0].mxu0
    %v1965 = vadd.f32 0.0, %v1964
    %v1966 = vpop.f32.mrb[0].mxu0
    %1967 = vmatprep.mubr.f32.mxu0 0.0
    %1968 = vmatmul.mubr.f32.gmra.mrb[0].mxu0 %v1794
    %v1969 = vpop.f32.mrb[0].mxu0
    %v1970 = vadd.f32 0.0, %v1969
    %v1971 = vpop.f32.mrb[0].mxu0
    %1972 = vmatprep.mubr.f32.mxu0 0.0
    %1973 = vmatmul.mubr.f32.gmra.mrb[0].mxu0 %v1797
    %v1974 = vpop.f32.mrb[0].mxu0
    %v1975 = vadd.f32 0.0, %v1974
    %v1976 = vpop.f32.mrb[0].mxu0
    %1977 = vmatprep.mubr.f32.mxu0 0.0
    %1978 = vmatmul.mubr.f32.gmra.mrb[0].mxu0 %v1800
    %v1979 = vpop.f32.mrb[0].mxu0
    %v1980 = vadd.f32 0.0, %v1979
    %v1981 = vpop.f32.mrb[0].mxu0
    %1982 = vmatprep.mubr.f32.mxu0 0.0
    %1983 = vmatmul.mubr.f32.gmra.mrb[0].mxu0 %v1803
    %v1984 = vpop.f32.mrb[0].mxu0
    %v1985 = vadd.f32 0.0, %v1984
    %v1986 = vpop.f32.mrb[0].mxu0
    %1987 = vmatprep.mubr.f32.mxu0 0.0
    %1988 = vmatmul.mubr.f32.gmra.mrb[0].mxu0 %v1806
    %v1989 = vpop.f32.mrb[0].mxu0
    %v1990 = vadd.f32 0.0, %v1989
    %v1991 = vpop.f32.mrb[0].mxu0
    %1992 = vmatprep.mubr.f32.mxu0 0.0
    %1993 = vmatmul.mubr.f32.gmra.mrb[0].mxu0 %v1809
    %v1994 = vpop.f32.mrb[0].mxu0
    %v1995 = vadd.f32 0.0, %v1994
    %v1996 = vpop.f32.mrb[0].mxu0
    %1997 = vmatprep.mubr.f32.mxu0 0.0
    %1998 = vmatmul.mubr.f32.gmra.mrb[0].mxu0 %v1812
    %v1999 = vpop.f32.mrb[0].mxu0
    %v2000 = vadd.f32 0.0, %v1999
    %v2001 = vpop.f32.mrb[0].mxu0
    %2002 = vmatprep.mubr.f32.mxu0 0.0
    %2003 = vmatmul.mubr.f32.gmra.mrb[0].mxu0 %v1815
    %v2004 = vpop.f32.mrb[0].mxu0
    %v2005 = vadd.f32 0.0, %v2004
    %v2006 = vpop.f32.mrb[0].mxu0
    %2007 = vmatprep.mubr.f32.mxu0 0.0
    %2008 = vmatmul.mubr.f32.gmra.mrb[0].mxu0 %v1818
    %v2009 = vpop.f32.mrb[0].mxu0
    %v2010 = vadd.f32 0.0, %v2009
    %v2011 = vpop.f32.mrb[0].mxu0
    %2012 = vmatprep.mubr.f32.mxu0 0.0
    %2013 = vmatmul.mubr.f32.gmra.mrb[0].mxu0 %v1821
    %v2014 = vpop.f32.mrb[0].mxu0
    %v2015 = vadd.f32 0.0, %v2014
    %v2016 = vpop.f32.mrb[0].mxu0
    %2017 = vmatprep.mubr.f32.mxu0 0.0
    %2018 = vmatmul.mubr.f32.gmra.mrb[0].mxu0 %v1824
    %v2019 = vpop.f32.mrb[0].mxu0
    %v2020 = vadd.f32 0.0, %v2019
    %v2021 = vpop.f32.mrb[0].mxu0
    %2022 = vmatprep.mubr.f32.mxu0 0.0
    %2023 = vmatmul.mubr.f32.gmra.mrb[0].mxu0 %v1827
    %v2024 = vpop.f32.mrb[0].mxu0
    %v2025 = vadd.f32 0.0, %v2024
    %v2026 = vpop.f32.mrb[0].mxu0
    %2027 = vmatprep.mubr.f32.mxu0 0.0
    %2028 = vmatmul.mubr.f32.gmra.mrb[0].mxu0 %v1830
    %v2029 = vpop.f32.mrb[0].mxu0
    %v2030 = vadd.f32 0.0, %v2029
    %v2031 = vpop.f32.mrb[0].mxu0
    %2032 = vmatprep.mubr.f32.mxu0 0.0
    %2033 = vmatmul.mubr.f32.gmra.mrb[0].mxu0 %v1833
    %v2034 = vpop.f32.mrb[0].mxu0
    %v2035 = vadd.f32 0.0, %v2034
    %v2036 = vpop.f32.mrb[0].mxu0
    %2037 = vmatprep.mubr.f32.mxu0 0.0
    %2038 = vmatmul.mubr.f32.gmra.mrb[0].mxu0 %v1836
    %v2039 = vpop.f32.mrb[0].mxu0
    %v2040 = vadd.f32 0.0, %v2039
    %v2041 = vpop.f32.mrb[0].mxu0
    %2042 = vmatprep.mubr.f32.mxu0 0.0
    %2043 = vmatmul.mubr.f32.gmra.mrb[0].mxu0 %v1839
    %v2044 = vpop.f32.mrb[0].mxu0
    %v2045 = vadd.f32 0.0, %v2044
    %v2046 = vpop.f32.mrb[0].mxu0
    %2047 = vmatprep.mubr.f32.mxu0 0.0
    %2048 = vmatmul.mubr.f32.gmra.mrb[0].mxu0 %v1842
    %v2049 = vpop.f32.mrb[0].mxu0
    %v2050 = vadd.f32 0.0, %v2049
    %v2051 = vpop.f32.mrb[0].mxu0
    %2052 = vmatprep.mubr.f32.mxu0 0.0
    %2053 = vmatmul.mubr.f32.gmra.mrb[0].mxu0 %v1845
    %v2054 = vpop.f32.mrb[0].mxu0
    %v2055 = vadd.f32 0.0, %v2054
    %v2056 = vpop.f32.mrb[0].mxu0
    %2057 = vmatprep.mubr.f32.mxu0 0.0
    %2058 = vmatmul.mubr.f32.gmra.mrb[0].mxu0 %v1848
    %v2059 = vpop.f32.mrb[0].mxu0
    %v2060 = vadd.f32 0.0, %v2059
    %v2061 = vpop.f32.mrb[0].mxu0
    %2062 = vmatprep.mubr.f32.mxu0 0.0
    %2063 = vmatmul.mubr.f32.gmra.mrb[0].mxu0 %v1851
    %v2064 = vpop.f32.mrb[0].mxu0
    %v2065 = vadd.f32 0.0, %v2064
    %v2066 = vpop.f32.mrb[0].mxu0
    %2067 = vmatprep.mubr.f32.mxu0 0.0
    %2068 = vmatmul.mubr.f32.gmra.mrb[0].mxu0 %v1854
    %v2069 = vpop.f32.mrb[0].mxu0
    %v2070 = vadd.f32 0.0, %v2069
    %v2071 = vpop.f32.mrb[0].mxu0
    %2072 = vmatprep.mubr.f32.mxu0 0.0
    %2073 = vmatmul.mubr.f32.gmra.mrb[0].mxu0 %v1857
    %v2074 = vpop.f32.mrb[0].mxu0
    %v2075 = vadd.f32 0.0, %v2074
    %v2076 = vpop.f32.mrb[0].mxu0
    %2077 = vmatprep.mubr.f32.mxu0 0.0
    %2078 = vmatmul.mubr.f32.gmra.mrb[0].mxu0 %v1860
    %v2079 = vpop.f32.mrb[0].mxu0
    %v2080 = vadd.f32 0.0, %v2079
    %v2081 = vpop.f32.mrb[0].mxu0
    %2082 = vmatprep.mubr.f32.mxu0 0.0
    %2083 = vmatmul.mubr.f32.gmra.mrb[0].mxu0 %v1863
    %v2084 = vpop.f32.mrb[0].mxu0
    %v2085 = vadd.f32 0.0, %v2084
    %v2086 = vpop.f32.mrb[0].mxu0
    %2087 = vmatprep.mubr.f32.mxu0 0.0
    %2088 = vmatmul.mubr.f32.gmra.mrb[0].mxu0 %v1866
    %v2089 = vpop.f32.mrb[0].mxu0
    %v2090 = vadd.f32 0.0, %v2089
    %v2091 = vpop.f32.mrb[0].mxu0
    %2092 = vdwg.mxu0
    %v2093 = vsel %vm821, %v1614, 0.0
    %v2094 = vsel %vm821, %v1619, 0.0
    %v2095 = vadd.f32 %v2093, %v2094
    %v2096 = vsel %vm821, %v1624, 0.0
    %v2097 = vadd.f32 %v2095, %v2096
    %v2098 = vsel %vm821, %v1629, 0.0
    %v2099 = vadd.f32 %v2097, %v2098
    %v2100 = vsel %vm821, %v1634, 0.0
    %v2101 = vadd.f32 %v2099, %v2100
    %v2102 = vsel %vm821, %v1639, 0.0
    %v2103 = vadd.f32 %v2101, %v2102
    %v2104 = vsel %vm821, %v1644, 0.0
    %v2105 = vadd.f32 %v2103, %v2104
    %v2106 = vsel %vm821, %v1649, 0.0
    %v2107 = vadd.f32 %v2105, %v2106
    %v2108 = vsel %vm821, %v1654, 0.0
    %v2109 = vadd.f32 %v2107, %v2108
    %v2110 = vsel %vm821, %v1659, 0.0
    %v2111 = vadd.f32 %v2109, %v2110
    %v2112 = vsel %vm821, %v1664, 0.0
    %v2113 = vadd.f32 %v2111, %v2112
    %v2114 = vsel %vm821, %v1669, 0.0
    %v2115 = vadd.f32 %v2113, %v2114
    %v2116 = vsel %vm821, %v1674, 0.0
    %v2117 = vadd.f32 %v2115, %v2116
    %v2118 = vsel %vm821, %v1679, 0.0
    %v2119 = vadd.f32 %v2117, %v2118
    %v2120 = vsel %vm821, %v1684, 0.0
    %v2121 = vadd.f32 %v2119, %v2120
    %v2122 = vsel %vm821, %v1689, 0.0
    %v2123 = vadd.f32 %v2121, %v2122
    %v2124 = vsel %vm821, %v1694, 0.0
    %v2125 = vadd.f32 %v2123, %v2124
    %v2126 = vsel %vm821, %v1699, 0.0
    %v2127 = vadd.f32 %v2125, %v2126
    %v2128 = vsel %vm821, %v1704, 0.0
    %v2129 = vadd.f32 %v2127, %v2128
    %v2130 = vsel %vm821, %v1709, 0.0
    %v2131 = vadd.f32 %v2129, %v2130
    %v2132 = vsel %vm821, %v1714, 0.0
    %v2133 = vadd.f32 %v2131, %v2132
    %v2134 = vsel %vm821, %v1719, 0.0
    %v2135 = vadd.f32 %v2133, %v2134
    %v2136 = vsel %vm821, %v1724, 0.0
    %v2137 = vadd.f32 %v2135, %v2136
    %v2138 = vsel %vm821, %v1729, 0.0
    %v2139 = vadd.f32 %v2137, %v2138
    %v2140 = vsel %vm821, %v1734, 0.0
    %v2141 = vadd.f32 %v2139, %v2140
    %v2142 = vsel %vm821, %v1739, 0.0
    %v2143 = vadd.f32 %v2141, %v2142
    %v2144 = vsel %vm821, %v1744, 0.0
    %v2145 = vadd.f32 %v2143, %v2144
    %v2146 = vsel %vm821, %v1749, 0.0
    %v2147 = vadd.f32 %v2145, %v2146
    %v2148 = vsel %vm821, %v1754, 0.0
    %v2149 = vadd.f32 %v2147, %v2148
    %v2150 = vsel %vm821, %v1759, 0.0
    %v2151 = vadd.f32 %v2149, %v2150
    %v2152 = vsel %vm821, %v1764, 0.0
    %v2153 = vadd.f32 %v2151, %v2152
    %v2154 = vsel %vm821, %v1769, 0.0
    %v2155 = vadd.f32 %v2153, %v2154
    %v2156 = vrot.slane %v2155, 4
    %v2157 = vadd.f32 %v2155, %v2156
    %v2158 = vrot.slane %v2157, 2
    %v2159 = vadd.f32 %v2157, %v2158
    %v2160 = vrot.slane %v2159, 1
    %v2161 = vadd.f32 %v2159, %v2160
    %v2162 = vmul.f32 %v1614, %v1614
    %v2163 = vmul.f32 %v1619, %v1619
    %v2164 = vmul.f32 %v1624, %v1624
    %v2165 = vmul.f32 %v1629, %v1629
    %v2166 = vmul.f32 %v1634, %v1634
    %v2167 = vmul.f32 %v1639, %v1639
    %v2168 = vmul.f32 %v1644, %v1644
    %v2169 = vmul.f32 %v1649, %v1649
    %v2170 = vmul.f32 %v1654, %v1654
    %v2171 = vmul.f32 %v1659, %v1659
    %v2172 = vmul.f32 %v1664, %v1664
    %v2173 = vmul.f32 %v1669, %v1669
    %v2174 = vmul.f32 %v1674, %v1674
    %v2175 = vmul.f32 %v1679, %v1679
    %v2176 = vmul.f32 %v1684, %v1684
    %v2177 = vmul.f32 %v1689, %v1689
    %v2178 = vmul.f32 %v1694, %v1694
    %v2179 = vmul.f32 %v1699, %v1699
    %v2180 = vmul.f32 %v1704, %v1704
    %v2181 = vmul.f32 %v1709, %v1709
    %v2182 = vmul.f32 %v1714, %v1714
    %v2183 = vmul.f32 %v1719, %v1719
    %v2184 = vmul.f32 %v1724, %v1724
    %v2185 = vmul.f32 %v1729, %v1729
    %v2186 = vmul.f32 %v1734, %v1734
    %v2187 = vmul.f32 %v1739, %v1739
    %v2188 = vmul.f32 %v1744, %v1744
    %v2189 = vmul.f32 %v1749, %v1749
    %v2190 = vmul.f32 %v1754, %v1754
    %v2191 = vmul.f32 %v1759, %v1759
    %v2192 = vmul.f32 %v1764, %v1764
    %v2193 = vmul.f32 %v1769, %v1769
    %v2194 = vsel %vm821, %v2162, 0.0
    %v2195 = vsel %vm821, %v2163, 0.0
    %v2196 = vadd.f32 %v2194, %v2195
    %v2197 = vsel %vm821, %v2164, 0.0
    %v2198 = vadd.f32 %v2196, %v2197
    %v2199 = vsel %vm821, %v2165, 0.0
    %v2200 = vadd.f32 %v2198, %v2199
    %v2201 = vsel %vm821, %v2166, 0.0
    %v2202 = vadd.f32 %v2200, %v2201
    %v2203 = vsel %vm821, %v2167, 0.0
    %v2204 = vadd.f32 %v2202, %v2203
    %v2205 = vsel %vm821, %v2168, 0.0
    %v2206 = vadd.f32 %v2204, %v2205
    %v2207 = vsel %vm821, %v2169, 0.0
    %v2208 = vadd.f32 %v2206, %v2207
    %v2209 = vsel %vm821, %v2170, 0.0
    %v2210 = vadd.f32 %v2208, %v2209
    %v2211 = vsel %vm821, %v2171, 0.0
    %v2212 = vadd.f32 %v2210, %v2211
    %v2213 = vsel %vm821, %v2172, 0.0
    %v2214 = vadd.f32 %v2212, %v2213
    %v2215 = vsel %vm821, %v2173, 0.0
    %v2216 = vadd.f32 %v2214, %v2215
    %v2217 = vsel %vm821, %v2174, 0.0
    %v2218 = vadd.f32 %v2216, %v2217
    %v2219 = vsel %vm821, %v2175, 0.0
    %v2220 = vadd.f32 %v2218, %v2219
    %v2221 = vsel %vm821, %v2176, 0.0
    %v2222 = vadd.f32 %v2220, %v2221
    %v2223 = vsel %vm821, %v2177, 0.0
    %v2224 = vadd.f32 %v2222, %v2223
    %v2225 = vsel %vm821, %v2178, 0.0
    %v2226 = vadd.f32 %v2224, %v2225
    %v2227 = vsel %vm821, %v2179, 0.0
    %v2228 = vadd.f32 %v2226, %v2227
    %v2229 = vsel %vm821, %v2180, 0.0
    %v2230 = vadd.f32 %v2228, %v2229
    %v2231 = vsel %vm821, %v2181, 0.0
    %v2232 = vadd.f32 %v2230, %v2231
    %v2233 = vsel %vm821, %v2182, 0.0
    %v2234 = vadd.f32 %v2232, %v2233
    %v2235 = vsel %vm821, %v2183, 0.0
    %v2236 = vadd.f32 %v2234, %v2235
    %v2237 = vsel %vm821, %v2184, 0.0
    %v2238 = vadd.f32 %v2236, %v2237
    %v2239 = vsel %vm821, %v2185, 0.0
    %v2240 = vadd.f32 %v2238, %v2239
    %v2241 = vsel %vm821, %v2186, 0.0
    %v2242 = vadd.f32 %v2240, %v2241
    %v2243 = vsel %vm821, %v2187, 0.0
    %v2244 = vadd.f32 %v2242, %v2243
    %v2245 = vsel %vm821, %v2188, 0.0
    %v2246 = vadd.f32 %v2244, %v2245
    %v2247 = vsel %vm821, %v2189, 0.0
    %v2248 = vadd.f32 %v2246, %v2247
    %v2249 = vsel %vm821, %v2190, 0.0
    %v2250 = vadd.f32 %v2248, %v2249
    %v2251 = vsel %vm821, %v2191, 0.0
    %v2252 = vadd.f32 %v2250, %v2251
    %v2253 = vsel %vm821, %v2192, 0.0
    %v2254 = vadd.f32 %v2252, %v2253
    %v2255 = vsel %vm821, %v2193, 0.0
    %v2256 = vadd.f32 %v2254, %v2255
    %v2257 = vrot.slane %v2256, 4
    %v2258 = vadd.f32 %v2256, %v2257
    %v2259 = vrot.slane %v2258, 2
    %v2260 = vadd.f32 %v2258, %v2259
    %v2261 = vrot.slane %v2260, 1
    %v2262 = vadd.f32 %v2260, %v2261
    %v2263 = vsel %vm821, %v1935, 0.0
    %v2264 = vsel %vm821, %v1940, 0.0
    %v2265 = vadd.f32 %v2263, %v2264
    %v2266 = vsel %vm821, %v1945, 0.0
    %v2267 = vadd.f32 %v2265, %v2266
    %v2268 = vsel %vm821, %v1950, 0.0
    %v2269 = vadd.f32 %v2267, %v2268
    %v2270 = vsel %vm821, %v1955, 0.0
    %v2271 = vadd.f32 %v2269, %v2270
    %v2272 = vsel %vm821, %v1960, 0.0
    %v2273 = vadd.f32 %v2271, %v2272
    %v2274 = vsel %vm821, %v1965, 0.0
    %v2275 = vadd.f32 %v2273, %v2274
    %v2276 = vsel %vm821, %v1970, 0.0
    %v2277 = vadd.f32 %v2275, %v2276
    %v2278 = vsel %vm821, %v1975, 0.0
    %v2279 = vadd.f32 %v2277, %v2278
    %v2280 = vsel %vm821, %v1980, 0.0
    %v2281 = vadd.f32 %v2279, %v2280
    %v2282 = vsel %vm821, %v1985, 0.0
    %v2283 = vadd.f32 %v2281, %v2282
    %v2284 = vsel %vm821, %v1990, 0.0
    %v2285 = vadd.f32 %v2283, %v2284
    %v2286 = vsel %vm821, %v1995, 0.0
    %v2287 = vadd.f32 %v2285, %v2286
    %v2288 = vsel %vm821, %v2000, 0.0
    %v2289 = vadd.f32 %v2287, %v2288
    %v2290 = vsel %vm821, %v2005, 0.0
    %v2291 = vadd.f32 %v2289, %v2290
    %v2292 = vsel %vm821, %v2010, 0.0
    %v2293 = vadd.f32 %v2291, %v2292
    %v2294 = vsel %vm821, %v2015, 0.0
    %v2295 = vadd.f32 %v2293, %v2294
    %v2296 = vsel %vm821, %v2020, 0.0
    %v2297 = vadd.f32 %v2295, %v2296
    %v2298 = vsel %vm821, %v2025, 0.0
    %v2299 = vadd.f32 %v2297, %v2298
    %v2300 = vsel %vm821, %v2030, 0.0
    %v2301 = vadd.f32 %v2299, %v2300
    %v2302 = vsel %vm821, %v2035, 0.0
    %v2303 = vadd.f32 %v2301, %v2302
    %v2304 = vsel %vm821, %v2040, 0.0
    %v2305 = vadd.f32 %v2303, %v2304
    %v2306 = vsel %vm821, %v2045, 0.0
    %v2307 = vadd.f32 %v2305, %v2306
    %v2308 = vsel %vm821, %v2050, 0.0
    %v2309 = vadd.f32 %v2307, %v2308
    %v2310 = vsel %vm821, %v2055, 0.0
    %v2311 = vadd.f32 %v2309, %v2310
    %v2312 = vsel %vm821, %v2060, 0.0
    %v2313 = vadd.f32 %v2311, %v2312
    %v2314 = vsel %vm821, %v2065, 0.0
    %v2315 = vadd.f32 %v2313, %v2314
    %v2316 = vsel %vm821, %v2070, 0.0
    %v2317 = vadd.f32 %v2315, %v2316
    %v2318 = vsel %vm821, %v2075, 0.0
    %v2319 = vadd.f32 %v2317, %v2318
    %v2320 = vsel %vm821, %v2080, 0.0
    %v2321 = vadd.f32 %v2319, %v2320
    %v2322 = vsel %vm821, %v2085, 0.0
    %v2323 = vadd.f32 %v2321, %v2322
    %v2324 = vsel %vm821, %v2090, 0.0
    %v2325 = vadd.f32 %v2323, %v2324
    %v2326 = vrot.slane %v2325, 4
    %v2327 = vadd.f32 %v2325, %v2326
    %v2328 = vrot.slane %v2327, 2
    %v2329 = vadd.f32 %v2327, %v2328
    %v2330 = vrot.slane %v2329, 1
    %v2331 = vadd.f32 %v2329, %v2330
    %v2332 = vadd.f32 %v2161, %v2331
    %v2333 = vmul.f32 %v1935, %v1935
    %v2334 = vmul.f32 %v1940, %v1940
    %v2335 = vmul.f32 %v1945, %v1945
    %v2336 = vmul.f32 %v1950, %v1950
    %v2337 = vmul.f32 %v1955, %v1955
    %v2338 = vmul.f32 %v1960, %v1960
    %v2339 = vmul.f32 %v1965, %v1965
    %v2340 = vmul.f32 %v1970, %v1970
    %v2341 = vmul.f32 %v1975, %v1975
    %v2342 = vmul.f32 %v1980, %v1980
    %v2343 = vmul.f32 %v1985, %v1985
    %v2344 = vmul.f32 %v1990, %v1990
    %v2345 = vmul.f32 %v1995, %v1995
    %v2346 = vmul.f32 %v2000, %v2000
    %v2347 = vmul.f32 %v2005, %v2005
    %v2348 = vmul.f32 %v2010, %v2010
    %v2349 = vmul.f32 %v2015, %v2015
    %v2350 = vmul.f32 %v2020, %v2020
    %v2351 = vmul.f32 %v2025, %v2025
    %v2352 = vmul.f32 %v2030, %v2030
    %v2353 = vmul.f32 %v2035, %v2035
    %v2354 = vmul.f32 %v2040, %v2040
    %v2355 = vmul.f32 %v2045, %v2045
    %v2356 = vmul.f32 %v2050, %v2050
    %v2357 = vmul.f32 %v2055, %v2055
    %v2358 = vmul.f32 %v2060, %v2060
    %v2359 = vmul.f32 %v2065, %v2065
    %v2360 = vmul.f32 %v2070, %v2070
    %v2361 = vmul.f32 %v2075, %v2075
    %v2362 = vmul.f32 %v2080, %v2080
    %v2363 = vmul.f32 %v2085, %v2085
    %v2364 = vmul.f32 %v2090, %v2090
    %v2365 = vsel %vm821, %v2333, 0.0
    %v2366 = vsel %vm821, %v2334, 0.0
    %v2367 = vadd.f32 %v2365, %v2366
    %v2368 = vsel %vm821, %v2335, 0.0
    %v2369 = vadd.f32 %v2367, %v2368
    %v2370 = vsel %vm821, %v2336, 0.0
    %v2371 = vadd.f32 %v2369, %v2370
    %v2372 = vsel %vm821, %v2337, 0.0
    %v2373 = vadd.f32 %v2371, %v2372
    %v2374 = vsel %vm821, %v2338, 0.0
    %v2375 = vadd.f32 %v2373, %v2374
    %v2376 = vsel %vm821, %v2339, 0.0
    %v2377 = vadd.f32 %v2375, %v2376
    %v2378 = vsel %vm821, %v2340, 0.0
    %v2379 = vadd.f32 %v2377, %v2378
    %v2380 = vsel %vm821, %v2341, 0.0
    %v2381 = vadd.f32 %v2379, %v2380
    %v2382 = vsel %vm821, %v2342, 0.0
    %v2383 = vadd.f32 %v2381, %v2382
    %v2384 = vsel %vm821, %v2343, 0.0
    %v2385 = vadd.f32 %v2383, %v2384
    %v2386 = vsel %vm821, %v2344, 0.0
    %v2387 = vadd.f32 %v2385, %v2386
    %v2388 = vsel %vm821, %v2345, 0.0
    %v2389 = vadd.f32 %v2387, %v2388
    %v2390 = vsel %vm821, %v2346, 0.0
    %v2391 = vadd.f32 %v2389, %v2390
    %v2392 = vsel %vm821, %v2347, 0.0
    %v2393 = vadd.f32 %v2391, %v2392
    %v2394 = vsel %vm821, %v2348, 0.0
    %v2395 = vadd.f32 %v2393, %v2394
    %v2396 = vsel %vm821, %v2349, 0.0
    %v2397 = vadd.f32 %v2395, %v2396
    %v2398 = vsel %vm821, %v2350, 0.0
    %v2399 = vadd.f32 %v2397, %v2398
    %v2400 = vsel %vm821, %v2351, 0.0
    %v2401 = vadd.f32 %v2399, %v2400
    %v2402 = vsel %vm821, %v2352, 0.0
    %v2403 = vadd.f32 %v2401, %v2402
    %v2404 = vsel %vm821, %v2353, 0.0
    %v2405 = vadd.f32 %v2403, %v2404
    %v2406 = vsel %vm821, %v2354, 0.0
    %v2407 = vadd.f32 %v2405, %v2406
    %v2408 = vsel %vm821, %v2355, 0.0
    %v2409 = vadd.f32 %v2407, %v2408
    %v2410 = vsel %vm821, %v2356, 0.0
    %v2411 = vadd.f32 %v2409, %v2410
    %v2412 = vsel %vm821, %v2357, 0.0
    %v2413 = vadd.f32 %v2411, %v2412
    %v2414 = vsel %vm821, %v2358, 0.0
    %v2415 = vadd.f32 %v2413, %v2414
    %v2416 = vsel %vm821, %v2359, 0.0
    %v2417 = vadd.f32 %v2415, %v2416
    %v2418 = vsel %vm821, %v2360, 0.0
    %v2419 = vadd.f32 %v2417, %v2418
    %v2420 = vsel %vm821, %v2361, 0.0
    %v2421 = vadd.f32 %v2419, %v2420
    %v2422 = vsel %vm821, %v2362, 0.0
    %v2423 = vadd.f32 %v2421, %v2422
    %v2424 = vsel %vm821, %v2363, 0.0
    %v2425 = vadd.f32 %v2423, %v2424
    %v2426 = vsel %vm821, %v2364, 0.0
    %v2427 = vadd.f32 %v2425, %v2426
    %v2428 = vrot.slane %v2427, 4
    %v2429 = vadd.f32 %v2427, %v2428
    %v2430 = vrot.slane %v2429, 2
    %v2431 = vadd.f32 %v2429, %v2430
    %v2432 = vrot.slane %v2431, 1
    %v2433 = vadd.f32 %v2431, %v2432
    %v2434 = vadd.f32 %v2262, %v2433
    %v2435 = vmul.f32 %v2332, 0.001953125
    %v2436 = vmul.f32 %v2434, 0.001953125
    %v2437 = vmul.f32 %v2435, %v2435
    %v2438 = vsub.f32 %v2436, %v2437
    %v2439 = vmax.f32 %v2438, 0.0
    %v2440 = vadd.f32 %v2439, 1e-05
    %v2441 = vrsqrt.pop %v2440
    %v2442 = vmul.f32 %v1315, %v2441
    %v2443 = vmul.f32 %v2435, %v2442
    %v2444 = vsub.f32 %v1317, %v2443
    %v2446 = vlaneseq
    %v2447 = vshrl.u32 %v2446, 7
    %v2448 = vsub.s32 0, %v2447
    %v2449 = vrot.slane %v2442, %v2448
    %v2451 = vmul.f32 %v1614, %v2449
    %v2452 = vmul.f32 %v1619, %v2449
    %v2453 = vmul.f32 %v1624, %v2449
    %v2454 = vmul.f32 %v1629, %v2449
    %v2455 = vmul.f32 %v1634, %v2449
    %v2456 = vmul.f32 %v1639, %v2449
    %v2457 = vmul.f32 %v1644, %v2449
    %v2458 = vmul.f32 %v1649, %v2449
    %v2459 = vmul.f32 %v1654, %v2449
    %v2460 = vmul.f32 %v1659, %v2449
    %v2461 = vmul.f32 %v1664, %v2449
    %v2462 = vmul.f32 %v1669, %v2449
    %v2463 = vmul.f32 %v1674, %v2449
    %v2464 = vmul.f32 %v1679, %v2449
    %v2465 = vmul.f32 %v1684, %v2449
    %v2466 = vmul.f32 %v1689, %v2449
    %v2467 = vmul.f32 %v1694, %v2449
    %v2468 = vmul.f32 %v1699, %v2449
    %v2469 = vmul.f32 %v1704, %v2449
    %v2470 = vmul.f32 %v1709, %v2449
    %v2471 = vmul.f32 %v1714, %v2449
    %v2472 = vmul.f32 %v1719, %v2449
    %v2473 = vmul.f32 %v1724, %v2449
    %v2474 = vmul.f32 %v1729, %v2449
    %v2475 = vmul.f32 %v1734, %v2449
    %v2476 = vmul.f32 %v1739, %v2449
    %v2477 = vmul.f32 %v1744, %v2449
    %v2478 = vmul.f32 %v1749, %v2449
    %v2479 = vmul.f32 %v1754, %v2449
    %v2480 = vmul.f32 %v1759, %v2449
    %v2481 = vmul.f32 %v1764, %v2449
    %v2482 = vmul.f32 %v1769, %v2449
    %v2484 = vlaneseq
    %v2485 = vshrl.u32 %v2484, 7
    %v2486 = vsub.s32 0, %v2485
    %v2487 = vrot.slane %v2444, %v2486
    %v2489 = vadd.f32 %v2451, %v2487
    %v2490 = vadd.f32 %v2452, %v2487
    %v2491 = vadd.f32 %v2453, %v2487
    %v2492 = vadd.f32 %v2454, %v2487
    %v2493 = vadd.f32 %v2455, %v2487
    %v2494 = vadd.f32 %v2456, %v2487
    %v2495 = vadd.f32 %v2457, %v2487
    %v2496 = vadd.f32 %v2458, %v2487
    %v2497 = vadd.f32 %v2459, %v2487
    %v2498 = vadd.f32 %v2460, %v2487
    %v2499 = vadd.f32 %v2461, %v2487
    %v2500 = vadd.f32 %v2462, %v2487
    %v2501 = vadd.f32 %v2463, %v2487
    %v2502 = vadd.f32 %v2464, %v2487
    %v2503 = vadd.f32 %v2465, %v2487
    %v2504 = vadd.f32 %v2466, %v2487
    %v2505 = vadd.f32 %v2467, %v2487
    %v2506 = vadd.f32 %v2468, %v2487
    %v2507 = vadd.f32 %v2469, %v2487
    %v2508 = vadd.f32 %v2470, %v2487
    %v2509 = vadd.f32 %v2471, %v2487
    %v2510 = vadd.f32 %v2472, %v2487
    %v2511 = vadd.f32 %v2473, %v2487
    %v2512 = vadd.f32 %v2474, %v2487
    %v2513 = vadd.f32 %v2475, %v2487
    %v2514 = vadd.f32 %v2476, %v2487
    %v2515 = vadd.f32 %v2477, %v2487
    %v2516 = vadd.f32 %v2478, %v2487
    %v2517 = vadd.f32 %v2479, %v2487
    %v2518 = vadd.f32 %v2480, %v2487
    %v2519 = vadd.f32 %v2481, %v2487
    %v2520 = vadd.f32 %v2482, %v2487
    %v2521 = vmul.f32 %v1935, %v2449
    %v2522 = vmul.f32 %v1940, %v2449
    %v2523 = vmul.f32 %v1945, %v2449
    %v2524 = vmul.f32 %v1950, %v2449
    %v2525 = vmul.f32 %v1955, %v2449
    %v2526 = vmul.f32 %v1960, %v2449
    %v2527 = vmul.f32 %v1965, %v2449
    %v2528 = vmul.f32 %v1970, %v2449
    %v2529 = vmul.f32 %v1975, %v2449
    %v2530 = vmul.f32 %v1980, %v2449
    %v2531 = vmul.f32 %v1985, %v2449
    %v2532 = vmul.f32 %v1990, %v2449
    %v2533 = vmul.f32 %v1995, %v2449
    %v2534 = vmul.f32 %v2000, %v2449
    %v2535 = vmul.f32 %v2005, %v2449
    %v2536 = vmul.f32 %v2010, %v2449
    %v2537 = vmul.f32 %v2015, %v2449
    %v2538 = vmul.f32 %v2020, %v2449
    %v2539 = vmul.f32 %v2025, %v2449
    %v2540 = vmul.f32 %v2030, %v2449
    %v2541 = vmul.f32 %v2035, %v2449
    %v2542 = vmul.f32 %v2040, %v2449
    %v2543 = vmul.f32 %v2045, %v2449
    %v2544 = vmul.f32 %v2050, %v2449
    %v2545 = vmul.f32 %v2055, %v2449
    %v2546 = vmul.f32 %v2060, %v2449
    %v2547 = vmul.f32 %v2065, %v2449
    %v2548 = vmul.f32 %v2070, %v2449
    %v2549 = vmul.f32 %v2075, %v2449
    %v2550 = vmul.f32 %v2080, %v2449
    %v2551 = vmul.f32 %v2085, %v2449
    %v2552 = vmul.f32 %v2090, %v2449
    %v2553 = vadd.f32 %v2521, %v2487
    %v2554 = vadd.f32 %v2522, %v2487
    %v2555 = vadd.f32 %v2523, %v2487
    %v2556 = vadd.f32 %v2524, %v2487
    %v2557 = vadd.f32 %v2525, %v2487
    %v2558 = vadd.f32 %v2526, %v2487
    %v2559 = vadd.f32 %v2527, %v2487
    %v2560 = vadd.f32 %v2528, %v2487
    %v2561 = vadd.f32 %v2529, %v2487
    %v2562 = vadd.f32 %v2530, %v2487
    %v2563 = vadd.f32 %v2531, %v2487
    %v2564 = vadd.f32 %v2532, %v2487
    %v2565 = vadd.f32 %v2533, %v2487
    %v2566 = vadd.f32 %v2534, %v2487
    %v2567 = vadd.f32 %v2535, %v2487
    %v2568 = vadd.f32 %v2536, %v2487
    %v2569 = vadd.f32 %v2537, %v2487
    %v2570 = vadd.f32 %v2538, %v2487
    %v2571 = vadd.f32 %v2539, %v2487
    %v2572 = vadd.f32 %v2540, %v2487
    %v2573 = vadd.f32 %v2541, %v2487
    %v2574 = vadd.f32 %v2542, %v2487
    %v2575 = vadd.f32 %v2543, %v2487
    %v2576 = vadd.f32 %v2544, %v2487
    %v2577 = vadd.f32 %v2545, %v2487
    %v2578 = vadd.f32 %v2546, %v2487
    %v2579 = vadd.f32 %v2547, %v2487
    %v2580 = vadd.f32 %v2548, %v2487
    %v2581 = vadd.f32 %v2549, %v2487
    %v2582 = vadd.f32 %v2550, %v2487
    %v2583 = vadd.f32 %v2551, %v2487
    %v2584 = vadd.f32 %v2552, %v2487
    %v2585 = vmax.f32 %v1218, 0.0
    %v2586 = vmax.f32 %v1219, 0.0
    %v2587 = vmax.f32 %v1220, 0.0
    %v2588 = vmax.f32 %v1221, 0.0
    %v2589 = vmax.f32 %v1222, 0.0
    %v2590 = vmax.f32 %v1223, 0.0
    %v2591 = vmax.f32 %v1224, 0.0
    %v2592 = vmax.f32 %v1225, 0.0
    %v2593 = vmax.f32 %v1226, 0.0
    %v2594 = vmax.f32 %v1227, 0.0
    %v2595 = vmax.f32 %v1228, 0.0
    %v2596 = vmax.f32 %v1229, 0.0
    %v2597 = vmax.f32 %v1230, 0.0
    %v2598 = vmax.f32 %v1231, 0.0
    %v2599 = vmax.f32 %v1232, 0.0
    %v2600 = vmax.f32 %v1233, 0.0
    %v2601 = vmax.f32 %v1234, 0.0
    %v2602 = vmax.f32 %v1235, 0.0
    %v2603 = vmax.f32 %v1236, 0.0
    %v2604 = vmax.f32 %v1237, 0.0
    %v2605 = vmax.f32 %v1238, 0.0
    %v2606 = vmax.f32 %v1239, 0.0
    %v2607 = vmax.f32 %v1240, 0.0
    %v2608 = vmax.f32 %v1241, 0.0
    %v2609 = vmax.f32 %v1242, 0.0
    %v2610 = vmax.f32 %v1243, 0.0
    %v2611 = vmax.f32 %v1244, 0.0
    %v2612 = vmax.f32 %v1245, 0.0
    %v2613 = vmax.f32 %v1246, 0.0
    %v2614 = vmax.f32 %v1247, 0.0
    %v2615 = vmax.f32 %v1248, 0.0
    %v2616 = vmax.f32 %v1249, 0.0
    %v2617 = vmax.f32 %v1282, 0.0
    %v2618 = vmax.f32 %v1283, 0.0
    %v2619 = vmax.f32 %v1284, 0.0
    %v2620 = vmax.f32 %v1285, 0.0
    %v2621 = vmax.f32 %v1286, 0.0
    %v2622 = vmax.f32 %v1287, 0.0
    %v2623 = vmax.f32 %v1288, 0.0
    %v2624 = vmax.f32 %v1289, 0.0
    %v2625 = vmax.f32 %v1290, 0.0
    %v2626 = vmax.f32 %v1291, 0.0
    %v2627 = vmax.f32 %v1292, 0.0
    %v2628 = vmax.f32 %v1293, 0.0
    %v2629 = vmax.f32 %v1294, 0.0
    %v2630 = vmax.f32 %v1295, 0.0
    %v2631 = vmax.f32 %v1296, 0.0
    %v2632 = vmax.f32 %v1297, 0.0
    %v2633 = vmax.f32 %v1298, 0.0
    %v2634 = vmax.f32 %v1299, 0.0
    %v2635 = vmax.f32 %v1300, 0.0
    %v2636 = vmax.f32 %v1301, 0.0
    %v2637 = vmax.f32 %v1302, 0.0
    %v2638 = vmax.f32 %v1303, 0.0
    %v2639 = vmax.f32 %v1304, 0.0
    %v2640 = vmax.f32 %v1305, 0.0
    %v2641 = vmax.f32 %v1306, 0.0
    %v2642 = vmax.f32 %v1307, 0.0
    %v2643 = vmax.f32 %v1308, 0.0
    %v2644 = vmax.f32 %v1309, 0.0
    %v2645 = vmax.f32 %v1310, 0.0
    %v2646 = vmax.f32 %v1311, 0.0
    %v2647 = vmax.f32 %v1312, 0.0
    %v2648 = vmax.f32 %v1313, 0.0
    %v2649 = vrot.slane %v2617, 7
    %v2650 = vrot.slane %v2618, 7
    %v2651 = vrot.slane %v2619, 7
    %v2652 = vrot.slane %v2620, 7
    %v2653 = vrot.slane %v2621, 7
    %v2654 = vrot.slane %v2622, 7
    %v2655 = vrot.slane %v2623, 7
    %v2656 = vrot.slane %v2624, 7
    %v2657 = vrot.slane %v2625, 7
    %v2658 = vrot.slane %v2626, 7
    %v2659 = vrot.slane %v2627, 7
    %v2660 = vrot.slane %v2628, 7
    %v2661 = vrot.slane %v2629, 7
    %v2662 = vrot.slane %v2630, 7
    %v2663 = vrot.slane %v2631, 7
    %v2664 = vrot.slane %v2632, 7
    %v2665 = vrot.slane %v2633, 7
    %v2666 = vrot.slane %v2634, 7
    %v2667 = vrot.slane %v2635, 7
    %v2668 = vrot.slane %v2636, 7
    %v2669 = vrot.slane %v2637, 7
    %v2670 = vrot.slane %v2638, 7
    %v2671 = vrot.slane %v2639, 7
    %v2672 = vrot.slane %v2640, 7
    %v2673 = vrot.slane %v2641, 7
    %v2674 = vrot.slane %v2642, 7
    %v2675 = vrot.slane %v2643, 7
    %v2676 = vrot.slane %v2644, 7
    %v2677 = vrot.slane %v2645, 7
    %v2678 = vrot.slane %v2646, 7
    %v2679 = vrot.slane %v2647, 7
    %v2680 = vrot.slane %v2648, 7
    %vm2681 = vcmp.lt.s32.totalorder %v43, 1
    %v2682 = vsel %vm2681, %v2679, %v2680
    %v2683 = vsel %vm2681, %v2678, %v2679
    %v2684 = vsel %vm2681, %v2677, %v2678
    %v2685 = vsel %vm2681, %v2676, %v2677
    %v2686 = vsel %vm2681, %v2675, %v2676
    %v2687 = vsel %vm2681, %v2674, %v2675
    %v2688 = vsel %vm2681, %v2673, %v2674
    %v2689 = vsel %vm2681, %v2672, %v2673
    %v2690 = vsel %vm2681, %v2671, %v2672
    %v2691 = vsel %vm2681, %v2670, %v2671
    %v2692 = vsel %vm2681, %v2669, %v2670
    %v2693 = vsel %vm2681, %v2668, %v2669
    %v2694 = vsel %vm2681, %v2667, %v2668
    %v2695 = vsel %vm2681, %v2666, %v2667
    %v2696 = vsel %vm2681, %v2665, %v2666
    %v2697 = vsel %vm2681, %v2664, %v2665
    %v2698 = vsel %vm2681, %v2663, %v2664
    %v2699 = vsel %vm2681, %v2662, %v2663
    %v2700 = vsel %vm2681, %v2661, %v2662
    %v2701 = vsel %vm2681, %v2660, %v2661
    %v2702 = vsel %vm2681, %v2659, %v2660
    %v2703 = vsel %vm2681, %v2658, %v2659
    %v2704 = vsel %vm2681, %v2657, %v2658
    %v2705 = vsel %vm2681, %v2656, %v2657
    %v2706 = vsel %vm2681, %v2655, %v2656
    %v2707 = vsel %vm2681, %v2654, %v2655
    %v2708 = vsel %vm2681, %v2653, %v2654
    %v2709 = vsel %vm2681, %v2652, %v2653
    %v2710 = vsel %vm2681, %v2651, %v2652
    %v2711 = vsel %vm2681, %v2650, %v2651
    %v2712 = vsel %vm2681, %v2649, %v2650
    %v2713 = vsel %vm2681, %v2680, %v2649
    %vm2714 = vcmp.eq.s32.totalorder %v43, 0
    %v2715 = vsel %vm2714, 0.0, %v2713
    %v2716 = vsel %vm2714, 0.0, %v2712
    %v2717 = vsel %vm2714, 0.0, %v2711
    %v2718 = vsel %vm2714, 0.0, %v2710
    %v2719 = vsel %vm2714, 0.0, %v2709
    %v2720 = vsel %vm2714, 0.0, %v2708
    %v2721 = vsel %vm2714, 0.0, %v2707
    %v2722 = vsel %vm2714, 0.0, %v2706
    %v2723 = vsel %vm2714, 0.0, %v2705
    %v2724 = vsel %vm2714, 0.0, %v2704
    %v2725 = vsel %vm2714, 0.0, %v2703
    %v2726 = vsel %vm2714, 0.0, %v2702
    %v2727 = vsel %vm2714, 0.0, %v2701
    %v2728 = vsel %vm2714, 0.0, %v2700
    %v2729 = vsel %vm2714, 0.0, %v2699
    %v2730 = vsel %vm2714, 0.0, %v2698
    %v2731 = vsel %vm2714, 0.0, %v2697
    %v2732 = vsel %vm2714, 0.0, %v2696
    %v2733 = vsel %vm2714, 0.0, %v2695
    %v2734 = vsel %vm2714, 0.0, %v2694
    %v2735 = vsel %vm2714, 0.0, %v2693
    %v2736 = vsel %vm2714, 0.0, %v2692
    %v2737 = vsel %vm2714, 0.0, %v2691
    %v2738 = vsel %vm2714, 0.0, %v2690
    %v2739 = vsel %vm2714, 0.0, %v2689
    %v2740 = vsel %vm2714, 0.0, %v2688
    %v2741 = vsel %vm2714, 0.0, %v2687
    %v2742 = vsel %vm2714, 0.0, %v2686
    %v2743 = vsel %vm2714, 0.0, %v2685
    %v2744 = vsel %vm2714, 0.0, %v2684
    %v2745 = vsel %vm2714, 0.0, %v2683
    %v2746 = vsel %vm2714, 0.0, %v2682
    %v2747 = vld [vmem:[%s7] sm:$0xff]
    %v2748 = vld [vmem:[%s7 + $0x8] sm:$0xff]
    %v2749 = vld [vmem:[%s7 + $0x10] sm:$0xff]
    %v2750 = vld [vmem:[%s7 + $0x18] sm:$0xff]
    %v2751 = vld [vmem:[%s7 + $0x20] sm:$0xff]
    %v2752 = vld [vmem:[%s7 + $0x28] sm:$0xff]
    %v2753 = vld [vmem:[%s8] sm:$0xff]
    %v2754 = vld [vmem:[%s8 + $0x8] sm:$0xff]
    %v2755 = vld [vmem:[%s8 + $0x10] sm:$0xff]
    %v2756 = vld [vmem:[%s8 + $0x18] sm:$0xff]
    %v2757 = vld [vmem:[%s8 + $0x20] sm:$0xff]
    %v2758 = vld [vmem:[%s8 + $0x28] sm:$0xff]
    %v2759 = vld [vmem:[%s9] sm:$0xff]
    %v2760 = vld [vmem:[%s9 + $0x8] sm:$0xff]
    %v2761 = vld [vmem:[%s10] sm:$0x1]
    %s2762 = scalar_lea.vmem %s10, 1
    %v2763 = vld [vmem:[%s2762] sm:$0x1]
    %s2764 = scalar_lea.vmem %s10, 2
    %v2765 = vld [vmem:[%s2764] sm:$0x1]
    %s2766 = scalar_lea.vmem %s10, 3
    %v2767 = vld [vmem:[%s2766] sm:$0x1]
    %s2768 = scalar_lea.vmem %s10, 4
    %v2769 = vld [vmem:[%s2768] sm:$0x1]
    %v2771 = vsel %vm821, %v2715, 0
    %v2774 = vsel %vm821, %v2716, 0
    %v2777 = vsel %vm821, %v2717, 0
    %v2780 = vsel %vm821, %v2718, 0
    %v2783 = vsel %vm821, %v2719, 0
    %v2786 = vsel %vm821, %v2720, 0
    %v2789 = vsel %vm821, %v2721, 0
    %v2792 = vsel %vm821, %v2722, 0
    %v2795 = vsel %vm821, %v2723, 0
    %v2798 = vsel %vm821, %v2724, 0
    %v2801 = vsel %vm821, %v2725, 0
    %v2804 = vsel %vm821, %v2726, 0
    %v2807 = vsel %vm821, %v2727, 0
    %v2810 = vsel %vm821, %v2728, 0
    %v2813 = vsel %vm821, %v2729, 0
    %v2816 = vsel %vm821, %v2730, 0
    %v2819 = vsel %vm821, %v2731, 0
    %v2822 = vsel %vm821, %v2732, 0
    %v2825 = vsel %vm821, %v2733, 0
    %v2828 = vsel %vm821, %v2734, 0
    %v2831 = vsel %vm821, %v2735, 0
    %v2834 = vsel %vm821, %v2736, 0
    %v2837 = vsel %vm821, %v2737, 0
    %v2840 = vsel %vm821, %v2738, 0
    %v2843 = vsel %vm821, %v2739, 0
    %v2846 = vsel %vm821, %v2740, 0
    %v2849 = vsel %vm821, %v2741, 0
    %v2852 = vsel %vm821, %v2742, 0
    %v2855 = vsel %vm821, %v2743, 0
    %v2858 = vsel %vm821, %v2744, 0
    %v2861 = vsel %vm821, %v2745, 0
    %v2864 = vsel %vm821, %v2746, 0
    %2866 = vmatprep.subr.mxu0 0.0
    %2867 = vmatpush1.msra.mxu0 %v2747
    %2868 = vmatprep.subr.mxu0 0.0
    %2869 = vmatpush1.msra.mxu0 %v2748
    %2870 = vmatprep.subr.mxu0 0.0
    %2871 = vmatpush1.msra.mxu0 0.0
    %2872 = vmatprep.subr.mxu0 0.0
    %2873 = vmatpush1.msra.mxu0 0.0
    %2874 = vmatprep.subr.mxu0 0.0
    %2875 = vmatpush1.msra.mxu0 0.0
    %2876 = vmatprep.subr.mxu0 0.0
    %2877 = vmatpush1.msra.mxu0 0.0
    %2878 = vmatprep.subr.mxu0 0.0
    %2879 = vmatpush1.msra.mxu0 0.0
    %2880 = vmatprep.subr.mxu0 0.0
    %2881 = vmatpush1.msra.mxu0 0.0
    %2882 = vmatprep.subr.mxu0 0.0
    %2883 = vmatpush1.msra.mxu0 0.0
    %2884 = vmatprep.subr.mxu0 0.0
    %2885 = vmatpush1.msra.mxu0 0.0
    %2886 = vmatprep.subr.mxu0 0.0
    %2887 = vmatpush1.msra.mxu0 0.0
    %2888 = vmatprep.subr.mxu0 0.0
    %2889 = vmatpush1.msra.mxu0 0.0
    %2890 = vmatprep.subr.mxu0 0.0
    %2891 = vmatpush1.msra.mxu0 0.0
    %2892 = vmatprep.subr.mxu0 0.0
    %2893 = vmatpush1.msra.mxu0 0.0
    %2894 = vmatprep.subr.mxu0 0.0
    %2895 = vmatpush1.msra.mxu0 0.0
    %2896 = vmatprep.subr.mxu0 0.0
    %2897 = vmatpush1.msra.mxu0 0.0
    %2898 = vmatprep.subr.mxu0 0.0
    %2899 = vmatpush1.msra.mxu0 0.0
    %2900 = vmatprep.subr.mxu0 0.0
    %2901 = vmatpush1.msra.mxu0 0.0
    %2902 = vmatprep.subr.mxu0 0.0
    %2903 = vmatpush1.msra.mxu0 0.0
    %2904 = vmatprep.subr.mxu0 0.0
    %2905 = vmatpush1.msra.mxu0 0.0
    %2906 = vmatprep.subr.mxu0 0.0
    %2907 = vmatpush1.msra.mxu0 0.0
    %2908 = vmatprep.subr.mxu0 0.0
    %2909 = vmatpush1.msra.mxu0 0.0
    %2910 = vmatprep.subr.mxu0 0.0
    %2911 = vmatpush1.msra.mxu0 0.0
    %2912 = vmatprep.subr.mxu0 0.0
    %2913 = vmatpush1.msra.mxu0 0.0
    %2914 = vmatprep.subr.mxu0 0.0
    %2915 = vmatpush1.msra.mxu0 0.0
    %2916 = vmatprep.subr.mxu0 0.0
    %2917 = vmatpush1.msra.mxu0 0.0
    %2918 = vmatprep.subr.mxu0 0.0
    %2919 = vmatpush1.msra.mxu0 0.0
    %2920 = vmatprep.subr.mxu0 0.0
    %2921 = vmatpush1.msra.mxu0 0.0
    %2922 = vmatprep.subr.mxu0 0.0
    %2923 = vmatpush1.msra.mxu0 0.0
    %2924 = vmatprep.subr.mxu0 0.0
    %2925 = vmatpush1.msra.mxu0 0.0
    %2926 = vmatprep.subr.mxu0 0.0
    %2927 = vmatpush1.msra.mxu0 0.0
    %2928 = vmatprep.subr.mxu0 0.0
    %2929 = vmatpush1.msra.mxu0 0.0
    %2930 = vmatprep.mubr.f32.mxu0 0.0
    %2931 = vmatmul.mubr.f32.gmra.mrb[0].mxu0 %v2771
    %v2932 = vpop.f32.mrb[0].mxu0
    %v2933 = vadd.f32 0.0, %v2932
    %v2934 = vpop.f32.mrb[0].mxu0
    %2935 = vmatprep.mubr.f32.mxu0 0.0
    %2936 = vmatmul.mubr.f32.gmra.mrb[0].mxu0 %v2774
    %v2937 = vpop.f32.mrb[0].mxu0
    %v2938 = vadd.f32 0.0, %v2937
    %v2939 = vpop.f32.mrb[0].mxu0
    %2940 = vmatprep.mubr.f32.mxu0 0.0
    %2941 = vmatmul.mubr.f32.gmra.mrb[0].mxu0 %v2777
    %v2942 = vpop.f32.mrb[0].mxu0
    %v2943 = vadd.f32 0.0, %v2942
    %v2944 = vpop.f32.mrb[0].mxu0
    %2945 = vmatprep.mubr.f32.mxu0 0.0
    %2946 = vmatmul.mubr.f32.gmra.mrb[0].mxu0 %v2780
    %v2947 = vpop.f32.mrb[0].mxu0
    %v2948 = vadd.f32 0.0, %v2947
    %v2949 = vpop.f32.mrb[0].mxu0
    %2950 = vmatprep.mubr.f32.mxu0 0.0
    %2951 = vmatmul.mubr.f32.gmra.mrb[0].mxu0 %v2783
    %v2952 = vpop.f32.mrb[0].mxu0
    %v2953 = vadd.f32 0.0, %v2952
    %v2954 = vpop.f32.mrb[0].mxu0
    %2955 = vmatprep.mubr.f32.mxu0 0.0
    %2956 = vmatmul.mubr.f32.gmra.mrb[0].mxu0 %v2786
    %v2957 = vpop.f32.mrb[0].mxu0
    %v2958 = vadd.f32 0.0, %v2957
    %v2959 = vpop.f32.mrb[0].mxu0
    %2960 = vmatprep.mubr.f32.mxu0 0.0
    %2961 = vmatmul.mubr.f32.gmra.mrb[0].mxu0 %v2789
    %v2962 = vpop.f32.mrb[0].mxu0
    %v2963 = vadd.f32 0.0, %v2962
    %v2964 = vpop.f32.mrb[0].mxu0
    %2965 = vmatprep.mubr.f32.mxu0 0.0
    %2966 = vmatmul.mubr.f32.gmra.mrb[0].mxu0 %v2792
    %v2967 = vpop.f32.mrb[0].mxu0
    %v2968 = vadd.f32 0.0, %v2967
    %v2969 = vpop.f32.mrb[0].mxu0
    %2970 = vmatprep.mubr.f32.mxu0 0.0
    %2971 = vmatmul.mubr.f32.gmra.mrb[0].mxu0 %v2795
    %v2972 = vpop.f32.mrb[0].mxu0
    %v2973 = vadd.f32 0.0, %v2972
    %v2974 = vpop.f32.mrb[0].mxu0
    %2975 = vmatprep.mubr.f32.mxu0 0.0
    %2976 = vmatmul.mubr.f32.gmra.mrb[0].mxu0 %v2798
    %v2977 = vpop.f32.mrb[0].mxu0
    %v2978 = vadd.f32 0.0, %v2977
    %v2979 = vpop.f32.mrb[0].mxu0
    %2980 = vmatprep.mubr.f32.mxu0 0.0
    %2981 = vmatmul.mubr.f32.gmra.mrb[0].mxu0 %v2801
    %v2982 = vpop.f32.mrb[0].mxu0
    %v2983 = vadd.f32 0.0, %v2982
    %v2984 = vpop.f32.mrb[0].mxu0
    %2985 = vmatprep.mubr.f32.mxu0 0.0
    %2986 = vmatmul.mubr.f32.gmra.mrb[0].mxu0 %v2804
    %v2987 = vpop.f32.mrb[0].mxu0
    %v2988 = vadd.f32 0.0, %v2987
    %v2989 = vpop.f32.mrb[0].mxu0
    %2990 = vmatprep.mubr.f32.mxu0 0.0
    %2991 = vmatmul.mubr.f32.gmra.mrb[0].mxu0 %v2807
    %v2992 = vpop.f32.mrb[0].mxu0
    %v2993 = vadd.f32 0.0, %v2992
    %v2994 = vpop.f32.mrb[0].mxu0
    %2995 = vmatprep.mubr.f32.mxu0 0.0
    %2996 = vmatmul.mubr.f32.gmra.mrb[0].mxu0 %v2810
    %v2997 = vpop.f32.mrb[0].mxu0
    %v2998 = vadd.f32 0.0, %v2997
    %v2999 = vpop.f32.mrb[0].mxu0
    %3000 = vmatprep.mubr.f32.mxu0 0.0
    %3001 = vmatmul.mubr.f32.gmra.mrb[0].mxu0 %v2813
    %v3002 = vpop.f32.mrb[0].mxu0
    %v3003 = vadd.f32 0.0, %v3002
    %v3004 = vpop.f32.mrb[0].mxu0
    %3005 = vmatprep.mubr.f32.mxu0 0.0
    %3006 = vmatmul.mubr.f32.gmra.mrb[0].mxu0 %v2816
    %v3007 = vpop.f32.mrb[0].mxu0
    %v3008 = vadd.f32 0.0, %v3007
    %v3009 = vpop.f32.mrb[0].mxu0
    %3010 = vmatprep.mubr.f32.mxu0 0.0
    %3011 = vmatmul.mubr.f32.gmra.mrb[0].mxu0 %v2819
    %v3012 = vpop.f32.mrb[0].mxu0
    %v3013 = vadd.f32 0.0, %v3012
    %v3014 = vpop.f32.mrb[0].mxu0
    %3015 = vmatprep.mubr.f32.mxu0 0.0
    %3016 = vmatmul.mubr.f32.gmra.mrb[0].mxu0 %v2822
    %v3017 = vpop.f32.mrb[0].mxu0
    %v3018 = vadd.f32 0.0, %v3017
    %v3019 = vpop.f32.mrb[0].mxu0
    %3020 = vmatprep.mubr.f32.mxu0 0.0
    %3021 = vmatmul.mubr.f32.gmra.mrb[0].mxu0 %v2825
    %v3022 = vpop.f32.mrb[0].mxu0
    %v3023 = vadd.f32 0.0, %v3022
    %v3024 = vpop.f32.mrb[0].mxu0
    %3025 = vmatprep.mubr.f32.mxu0 0.0
    %3026 = vmatmul.mubr.f32.gmra.mrb[0].mxu0 %v2828
    %v3027 = vpop.f32.mrb[0].mxu0
    %v3028 = vadd.f32 0.0, %v3027
    %v3029 = vpop.f32.mrb[0].mxu0
    %3030 = vmatprep.mubr.f32.mxu0 0.0
    %3031 = vmatmul.mubr.f32.gmra.mrb[0].mxu0 %v2831
    %v3032 = vpop.f32.mrb[0].mxu0
    %v3033 = vadd.f32 0.0, %v3032
    %v3034 = vpop.f32.mrb[0].mxu0
    %3035 = vmatprep.mubr.f32.mxu0 0.0
    %3036 = vmatmul.mubr.f32.gmra.mrb[0].mxu0 %v2834
    %v3037 = vpop.f32.mrb[0].mxu0
    %v3038 = vadd.f32 0.0, %v3037
    %v3039 = vpop.f32.mrb[0].mxu0
    %3040 = vmatprep.mubr.f32.mxu0 0.0
    %3041 = vmatmul.mubr.f32.gmra.mrb[0].mxu0 %v2837
    %v3042 = vpop.f32.mrb[0].mxu0
    %v3043 = vadd.f32 0.0, %v3042
    %v3044 = vpop.f32.mrb[0].mxu0
    %3045 = vmatprep.mubr.f32.mxu0 0.0
    %3046 = vmatmul.mubr.f32.gmra.mrb[0].mxu0 %v2840
    %v3047 = vpop.f32.mrb[0].mxu0
    %v3048 = vadd.f32 0.0, %v3047
    %v3049 = vpop.f32.mrb[0].mxu0
    %3050 = vmatprep.mubr.f32.mxu0 0.0
    %3051 = vmatmul.mubr.f32.gmra.mrb[0].mxu0 %v2843
    %v3052 = vpop.f32.mrb[0].mxu0
    %v3053 = vadd.f32 0.0, %v3052
    %v3054 = vpop.f32.mrb[0].mxu0
    %3055 = vmatprep.mubr.f32.mxu0 0.0
    %3056 = vmatmul.mubr.f32.gmra.mrb[0].mxu0 %v2846
    %v3057 = vpop.f32.mrb[0].mxu0
    %v3058 = vadd.f32 0.0, %v3057
    %v3059 = vpop.f32.mrb[0].mxu0
    %3060 = vmatprep.mubr.f32.mxu0 0.0
    %3061 = vmatmul.mubr.f32.gmra.mrb[0].mxu0 %v2849
    %v3062 = vpop.f32.mrb[0].mxu0
    %v3063 = vadd.f32 0.0, %v3062
    %v3064 = vpop.f32.mrb[0].mxu0
    %3065 = vmatprep.mubr.f32.mxu0 0.0
    %3066 = vmatmul.mubr.f32.gmra.mrb[0].mxu0 %v2852
    %v3067 = vpop.f32.mrb[0].mxu0
    %v3068 = vadd.f32 0.0, %v3067
    %v3069 = vpop.f32.mrb[0].mxu0
    %3070 = vmatprep.mubr.f32.mxu0 0.0
    %3071 = vmatmul.mubr.f32.gmra.mrb[0].mxu0 %v2855
    %v3072 = vpop.f32.mrb[0].mxu0
    %v3073 = vadd.f32 0.0, %v3072
    %v3074 = vpop.f32.mrb[0].mxu0
    %3075 = vmatprep.mubr.f32.mxu0 0.0
    %3076 = vmatmul.mubr.f32.gmra.mrb[0].mxu0 %v2858
    %v3077 = vpop.f32.mrb[0].mxu0
    %v3078 = vadd.f32 0.0, %v3077
    %v3079 = vpop.f32.mrb[0].mxu0
    %3080 = vmatprep.mubr.f32.mxu0 0.0
    %3081 = vmatmul.mubr.f32.gmra.mrb[0].mxu0 %v2861
    %v3082 = vpop.f32.mrb[0].mxu0
    %v3083 = vadd.f32 0.0, %v3082
    %v3084 = vpop.f32.mrb[0].mxu0
    %3085 = vmatprep.mubr.f32.mxu0 0.0
    %3086 = vmatmul.mubr.f32.gmra.mrb[0].mxu0 %v2864
    %v3087 = vpop.f32.mrb[0].mxu0
    %v3088 = vadd.f32 0.0, %v3087
    %v3089 = vpop.f32.mrb[0].mxu0
    %3090 = vdwg.mxu0
    %v3092 = vsel %vm821, %v2585, 0
    %v3095 = vsel %vm821, %v2586, 0
    %v3098 = vsel %vm821, %v2587, 0
    %v3101 = vsel %vm821, %v2588, 0
    %v3104 = vsel %vm821, %v2589, 0
    %v3107 = vsel %vm821, %v2590, 0
    %v3110 = vsel %vm821, %v2591, 0
    %v3113 = vsel %vm821, %v2592, 0
    %v3116 = vsel %vm821, %v2593, 0
    %v3119 = vsel %vm821, %v2594, 0
    %v3122 = vsel %vm821, %v2595, 0
    %v3125 = vsel %vm821, %v2596, 0
    %v3128 = vsel %vm821, %v2597, 0
    %v3131 = vsel %vm821, %v2598, 0
    %v3134 = vsel %vm821, %v2599, 0
    %v3137 = vsel %vm821, %v2600, 0
    %v3140 = vsel %vm821, %v2601, 0
    %v3143 = vsel %vm821, %v2602, 0
    %v3146 = vsel %vm821, %v2603, 0
    %v3149 = vsel %vm821, %v2604, 0
    %v3152 = vsel %vm821, %v2605, 0
    %v3155 = vsel %vm821, %v2606, 0
    %v3158 = vsel %vm821, %v2607, 0
    %v3161 = vsel %vm821, %v2608, 0
    %v3164 = vsel %vm821, %v2609, 0
    %v3167 = vsel %vm821, %v2610, 0
    %v3170 = vsel %vm821, %v2611, 0
    %v3173 = vsel %vm821, %v2612, 0
    %v3176 = vsel %vm821, %v2613, 0
    %v3179 = vsel %vm821, %v2614, 0
    %v3182 = vsel %vm821, %v2615, 0
    %v3185 = vsel %vm821, %v2616, 0
    %3187 = vmatprep.subr.mxu0 0.0
    %3188 = vmatpush1.msra.mxu0 %v2749
    %3189 = vmatprep.subr.mxu0 0.0
    %3190 = vmatpush1.msra.mxu0 %v2750
    %3191 = vmatprep.subr.mxu0 0.0
    %3192 = vmatpush1.msra.mxu0 0.0
    %3193 = vmatprep.subr.mxu0 0.0
    %3194 = vmatpush1.msra.mxu0 0.0
    %3195 = vmatprep.subr.mxu0 0.0
    %3196 = vmatpush1.msra.mxu0 0.0
    %3197 = vmatprep.subr.mxu0 0.0
    %3198 = vmatpush1.msra.mxu0 0.0
    %3199 = vmatprep.subr.mxu0 0.0
    %3200 = vmatpush1.msra.mxu0 0.0
    %3201 = vmatprep.subr.mxu0 0.0
    %3202 = vmatpush1.msra.mxu0 0.0
    %3203 = vmatprep.subr.mxu0 0.0
    %3204 = vmatpush1.msra.mxu0 0.0
    %3205 = vmatprep.subr.mxu0 0.0
    %3206 = vmatpush1.msra.mxu0 0.0
    %3207 = vmatprep.subr.mxu0 0.0
    %3208 = vmatpush1.msra.mxu0 0.0
    %3209 = vmatprep.subr.mxu0 0.0
    %3210 = vmatpush1.msra.mxu0 0.0
    %3211 = vmatprep.subr.mxu0 0.0
    %3212 = vmatpush1.msra.mxu0 0.0
    %3213 = vmatprep.subr.mxu0 0.0
    %3214 = vmatpush1.msra.mxu0 0.0
    %3215 = vmatprep.subr.mxu0 0.0
    %3216 = vmatpush1.msra.mxu0 0.0
    %3217 = vmatprep.subr.mxu0 0.0
    %3218 = vmatpush1.msra.mxu0 0.0
    %3219 = vmatprep.subr.mxu0 0.0
    %3220 = vmatpush1.msra.mxu0 0.0
    %3221 = vmatprep.subr.mxu0 0.0
    %3222 = vmatpush1.msra.mxu0 0.0
    %3223 = vmatprep.subr.mxu0 0.0
    %3224 = vmatpush1.msra.mxu0 0.0
    %3225 = vmatprep.subr.mxu0 0.0
    %3226 = vmatpush1.msra.mxu0 0.0
    %3227 = vmatprep.subr.mxu0 0.0
    %3228 = vmatpush1.msra.mxu0 0.0
    %3229 = vmatprep.subr.mxu0 0.0
    %3230 = vmatpush1.msra.mxu0 0.0
    %3231 = vmatprep.subr.mxu0 0.0
    %3232 = vmatpush1.msra.mxu0 0.0
    %3233 = vmatprep.subr.mxu0 0.0
    %3234 = vmatpush1.msra.mxu0 0.0
    %3235 = vmatprep.subr.mxu0 0.0
    %3236 = vmatpush1.msra.mxu0 0.0
    %3237 = vmatprep.subr.mxu0 0.0
    %3238 = vmatpush1.msra.mxu0 0.0
    %3239 = vmatprep.subr.mxu0 0.0
    %3240 = vmatpush1.msra.mxu0 0.0
    %3241 = vmatprep.subr.mxu0 0.0
    %3242 = vmatpush1.msra.mxu0 0.0
    %3243 = vmatprep.subr.mxu0 0.0
    %3244 = vmatpush1.msra.mxu0 0.0
    %3245 = vmatprep.subr.mxu0 0.0
    %3246 = vmatpush1.msra.mxu0 0.0
    %3247 = vmatprep.subr.mxu0 0.0
    %3248 = vmatpush1.msra.mxu0 0.0
    %3249 = vmatprep.subr.mxu0 0.0
    %3250 = vmatpush1.msra.mxu0 0.0
    %3251 = vmatprep.mubr.f32.mxu0 0.0
    %3252 = vmatmul.mubr.f32.gmra.mrb[0].mxu0 %v3092
    %v3253 = vpop.f32.mrb[0].mxu0
    %v3254 = vadd.f32 0.0, %v3253
    %v3255 = vpop.f32.mrb[0].mxu0
    %3256 = vmatprep.mubr.f32.mxu0 0.0
    %3257 = vmatmul.mubr.f32.gmra.mrb[0].mxu0 %v3095
    %v3258 = vpop.f32.mrb[0].mxu0
    %v3259 = vadd.f32 0.0, %v3258
    %v3260 = vpop.f32.mrb[0].mxu0
    %3261 = vmatprep.mubr.f32.mxu0 0.0
    %3262 = vmatmul.mubr.f32.gmra.mrb[0].mxu0 %v3098
    %v3263 = vpop.f32.mrb[0].mxu0
    %v3264 = vadd.f32 0.0, %v3263
    %v3265 = vpop.f32.mrb[0].mxu0
    %3266 = vmatprep.mubr.f32.mxu0 0.0
    %3267 = vmatmul.mubr.f32.gmra.mrb[0].mxu0 %v3101
    %v3268 = vpop.f32.mrb[0].mxu0
    %v3269 = vadd.f32 0.0, %v3268
    %v3270 = vpop.f32.mrb[0].mxu0
    %3271 = vmatprep.mubr.f32.mxu0 0.0
    %3272 = vmatmul.mubr.f32.gmra.mrb[0].mxu0 %v3104
    %v3273 = vpop.f32.mrb[0].mxu0
    %v3274 = vadd.f32 0.0, %v3273
    %v3275 = vpop.f32.mrb[0].mxu0
    %3276 = vmatprep.mubr.f32.mxu0 0.0
    %3277 = vmatmul.mubr.f32.gmra.mrb[0].mxu0 %v3107
    %v3278 = vpop.f32.mrb[0].mxu0
    %v3279 = vadd.f32 0.0, %v3278
    %v3280 = vpop.f32.mrb[0].mxu0
    %3281 = vmatprep.mubr.f32.mxu0 0.0
    %3282 = vmatmul.mubr.f32.gmra.mrb[0].mxu0 %v3110
    %v3283 = vpop.f32.mrb[0].mxu0
    %v3284 = vadd.f32 0.0, %v3283
    %v3285 = vpop.f32.mrb[0].mxu0
    %3286 = vmatprep.mubr.f32.mxu0 0.0
    %3287 = vmatmul.mubr.f32.gmra.mrb[0].mxu0 %v3113
    %v3288 = vpop.f32.mrb[0].mxu0
    %v3289 = vadd.f32 0.0, %v3288
    %v3290 = vpop.f32.mrb[0].mxu0
    %3291 = vmatprep.mubr.f32.mxu0 0.0
    %3292 = vmatmul.mubr.f32.gmra.mrb[0].mxu0 %v3116
    %v3293 = vpop.f32.mrb[0].mxu0
    %v3294 = vadd.f32 0.0, %v3293
    %v3295 = vpop.f32.mrb[0].mxu0
    %3296 = vmatprep.mubr.f32.mxu0 0.0
    %3297 = vmatmul.mubr.f32.gmra.mrb[0].mxu0 %v3119
    %v3298 = vpop.f32.mrb[0].mxu0
    %v3299 = vadd.f32 0.0, %v3298
    %v3300 = vpop.f32.mrb[0].mxu0
    %3301 = vmatprep.mubr.f32.mxu0 0.0
    %3302 = vmatmul.mubr.f32.gmra.mrb[0].mxu0 %v3122
    %v3303 = vpop.f32.mrb[0].mxu0
    %v3304 = vadd.f32 0.0, %v3303
    %v3305 = vpop.f32.mrb[0].mxu0
    %3306 = vmatprep.mubr.f32.mxu0 0.0
    %3307 = vmatmul.mubr.f32.gmra.mrb[0].mxu0 %v3125
    %v3308 = vpop.f32.mrb[0].mxu0
    %v3309 = vadd.f32 0.0, %v3308
    %v3310 = vpop.f32.mrb[0].mxu0
    %3311 = vmatprep.mubr.f32.mxu0 0.0
    %3312 = vmatmul.mubr.f32.gmra.mrb[0].mxu0 %v3128
    %v3313 = vpop.f32.mrb[0].mxu0
    %v3314 = vadd.f32 0.0, %v3313
    %v3315 = vpop.f32.mrb[0].mxu0
    %3316 = vmatprep.mubr.f32.mxu0 0.0
    %3317 = vmatmul.mubr.f32.gmra.mrb[0].mxu0 %v3131
    %v3318 = vpop.f32.mrb[0].mxu0
    %v3319 = vadd.f32 0.0, %v3318
    %v3320 = vpop.f32.mrb[0].mxu0
    %3321 = vmatprep.mubr.f32.mxu0 0.0
    %3322 = vmatmul.mubr.f32.gmra.mrb[0].mxu0 %v3134
    %v3323 = vpop.f32.mrb[0].mxu0
    %v3324 = vadd.f32 0.0, %v3323
    %v3325 = vpop.f32.mrb[0].mxu0
    %3326 = vmatprep.mubr.f32.mxu0 0.0
    %3327 = vmatmul.mubr.f32.gmra.mrb[0].mxu0 %v3137
    %v3328 = vpop.f32.mrb[0].mxu0
    %v3329 = vadd.f32 0.0, %v3328
    %v3330 = vpop.f32.mrb[0].mxu0
    %3331 = vmatprep.mubr.f32.mxu0 0.0
    %3332 = vmatmul.mubr.f32.gmra.mrb[0].mxu0 %v3140
    %v3333 = vpop.f32.mrb[0].mxu0
    %v3334 = vadd.f32 0.0, %v3333
    %v3335 = vpop.f32.mrb[0].mxu0
    %3336 = vmatprep.mubr.f32.mxu0 0.0
    %3337 = vmatmul.mubr.f32.gmra.mrb[0].mxu0 %v3143
    %v3338 = vpop.f32.mrb[0].mxu0
    %v3339 = vadd.f32 0.0, %v3338
    %v3340 = vpop.f32.mrb[0].mxu0
    %3341 = vmatprep.mubr.f32.mxu0 0.0
    %3342 = vmatmul.mubr.f32.gmra.mrb[0].mxu0 %v3146
    %v3343 = vpop.f32.mrb[0].mxu0
    %v3344 = vadd.f32 0.0, %v3343
    %v3345 = vpop.f32.mrb[0].mxu0
    %3346 = vmatprep.mubr.f32.mxu0 0.0
    %3347 = vmatmul.mubr.f32.gmra.mrb[0].mxu0 %v3149
    %v3348 = vpop.f32.mrb[0].mxu0
    %v3349 = vadd.f32 0.0, %v3348
    %v3350 = vpop.f32.mrb[0].mxu0
    %3351 = vmatprep.mubr.f32.mxu0 0.0
    %3352 = vmatmul.mubr.f32.gmra.mrb[0].mxu0 %v3152
    %v3353 = vpop.f32.mrb[0].mxu0
    %v3354 = vadd.f32 0.0, %v3353
    %v3355 = vpop.f32.mrb[0].mxu0
    %3356 = vmatprep.mubr.f32.mxu0 0.0
    %3357 = vmatmul.mubr.f32.gmra.mrb[0].mxu0 %v3155
    %v3358 = vpop.f32.mrb[0].mxu0
    %v3359 = vadd.f32 0.0, %v3358
    %v3360 = vpop.f32.mrb[0].mxu0
    %3361 = vmatprep.mubr.f32.mxu0 0.0
    %3362 = vmatmul.mubr.f32.gmra.mrb[0].mxu0 %v3158
    %v3363 = vpop.f32.mrb[0].mxu0
    %v3364 = vadd.f32 0.0, %v3363
    %v3365 = vpop.f32.mrb[0].mxu0
    %3366 = vmatprep.mubr.f32.mxu0 0.0
    %3367 = vmatmul.mubr.f32.gmra.mrb[0].mxu0 %v3161
    %v3368 = vpop.f32.mrb[0].mxu0
    %v3369 = vadd.f32 0.0, %v3368
    %v3370 = vpop.f32.mrb[0].mxu0
    %3371 = vmatprep.mubr.f32.mxu0 0.0
    %3372 = vmatmul.mubr.f32.gmra.mrb[0].mxu0 %v3164
    %v3373 = vpop.f32.mrb[0].mxu0
    %v3374 = vadd.f32 0.0, %v3373
    %v3375 = vpop.f32.mrb[0].mxu0
    %3376 = vmatprep.mubr.f32.mxu0 0.0
    %3377 = vmatmul.mubr.f32.gmra.mrb[0].mxu0 %v3167
    %v3378 = vpop.f32.mrb[0].mxu0
    %v3379 = vadd.f32 0.0, %v3378
    %v3380 = vpop.f32.mrb[0].mxu0
    %3381 = vmatprep.mubr.f32.mxu0 0.0
    %3382 = vmatmul.mubr.f32.gmra.mrb[0].mxu0 %v3170
    %v3383 = vpop.f32.mrb[0].mxu0
    %v3384 = vadd.f32 0.0, %v3383
    %v3385 = vpop.f32.mrb[0].mxu0
    %3386 = vmatprep.mubr.f32.mxu0 0.0
    %3387 = vmatmul.mubr.f32.gmra.mrb[0].mxu0 %v3173
    %v3388 = vpop.f32.mrb[0].mxu0
    %v3389 = vadd.f32 0.0, %v3388
    %v3390 = vpop.f32.mrb[0].mxu0
    %3391 = vmatprep.mubr.f32.mxu0 0.0
    %3392 = vmatmul.mubr.f32.gmra.mrb[0].mxu0 %v3176
    %v3393 = vpop.f32.mrb[0].mxu0
    %v3394 = vadd.f32 0.0, %v3393
    %v3395 = vpop.f32.mrb[0].mxu0
    %3396 = vmatprep.mubr.f32.mxu0 0.0
    %3397 = vmatmul.mubr.f32.gmra.mrb[0].mxu0 %v3179
    %v3398 = vpop.f32.mrb[0].mxu0
    %v3399 = vadd.f32 0.0, %v3398
    %v3400 = vpop.f32.mrb[0].mxu0
    %3401 = vmatprep.mubr.f32.mxu0 0.0
    %3402 = vmatmul.mubr.f32.gmra.mrb[0].mxu0 %v3182
    %v3403 = vpop.f32.mrb[0].mxu0
    %v3404 = vadd.f32 0.0, %v3403
    %v3405 = vpop.f32.mrb[0].mxu0
    %3406 = vmatprep.mubr.f32.mxu0 0.0
    %3407 = vmatmul.mubr.f32.gmra.mrb[0].mxu0 %v3185
    %v3408 = vpop.f32.mrb[0].mxu0
    %v3409 = vadd.f32 0.0, %v3408
    %v3410 = vpop.f32.mrb[0].mxu0
    %3411 = vdwg.mxu0
    %v3412 = vadd.f32 %v2933, %v3254
    %v3413 = vadd.f32 %v2938, %v3259
    %v3414 = vadd.f32 %v2943, %v3264
    %v3415 = vadd.f32 %v2948, %v3269
    %v3416 = vadd.f32 %v2953, %v3274
    %v3417 = vadd.f32 %v2958, %v3279
    %v3418 = vadd.f32 %v2963, %v3284
    %v3419 = vadd.f32 %v2968, %v3289
    %v3420 = vadd.f32 %v2973, %v3294
    %v3421 = vadd.f32 %v2978, %v3299
    %v3422 = vadd.f32 %v2983, %v3304
    %v3423 = vadd.f32 %v2988, %v3309
    %v3424 = vadd.f32 %v2993, %v3314
    %v3425 = vadd.f32 %v2998, %v3319
    %v3426 = vadd.f32 %v3003, %v3324
    %v3427 = vadd.f32 %v3008, %v3329
    %v3428 = vadd.f32 %v3013, %v3334
    %v3429 = vadd.f32 %v3018, %v3339
    %v3430 = vadd.f32 %v3023, %v3344
    %v3431 = vadd.f32 %v3028, %v3349
    %v3432 = vadd.f32 %v3033, %v3354
    %v3433 = vadd.f32 %v3038, %v3359
    %v3434 = vadd.f32 %v3043, %v3364
    %v3435 = vadd.f32 %v3048, %v3369
    %v3436 = vadd.f32 %v3053, %v3374
    %v3437 = vadd.f32 %v3058, %v3379
    %v3438 = vadd.f32 %v3063, %v3384
    %v3439 = vadd.f32 %v3068, %v3389
    %v3440 = vadd.f32 %v3073, %v3394
    %v3441 = vadd.f32 %v3078, %v3399
    %v3442 = vadd.f32 %v3083, %v3404
    %v3443 = vadd.f32 %v3088, %v3409
    %v3445 = vsel %vm821, %v2617, 0
    %v3448 = vsel %vm821, %v2618, 0
    %v3451 = vsel %vm821, %v2619, 0
    %v3454 = vsel %vm821, %v2620, 0
    %v3457 = vsel %vm821, %v2621, 0
    %v3460 = vsel %vm821, %v2622, 0
    %v3463 = vsel %vm821, %v2623, 0
    %v3466 = vsel %vm821, %v2624, 0
    %v3469 = vsel %vm821, %v2625, 0
    %v3472 = vsel %vm821, %v2626, 0
    %v3475 = vsel %vm821, %v2627, 0
    %v3478 = vsel %vm821, %v2628, 0
    %v3481 = vsel %vm821, %v2629, 0
    %v3484 = vsel %vm821, %v2630, 0
    %v3487 = vsel %vm821, %v2631, 0
    %v3490 = vsel %vm821, %v2632, 0
    %v3493 = vsel %vm821, %v2633, 0
    %v3496 = vsel %vm821, %v2634, 0
    %v3499 = vsel %vm821, %v2635, 0
    %v3502 = vsel %vm821, %v2636, 0
    %v3505 = vsel %vm821, %v2637, 0
    %v3508 = vsel %vm821, %v2638, 0
    %v3511 = vsel %vm821, %v2639, 0
    %v3514 = vsel %vm821, %v2640, 0
    %v3517 = vsel %vm821, %v2641, 0
    %v3520 = vsel %vm821, %v2642, 0
    %v3523 = vsel %vm821, %v2643, 0
    %v3526 = vsel %vm821, %v2644, 0
    %v3529 = vsel %vm821, %v2645, 0
    %v3532 = vsel %vm821, %v2646, 0
    %v3535 = vsel %vm821, %v2647, 0
    %v3538 = vsel %vm821, %v2648, 0
    %3540 = vmatprep.subr.mxu0 0.0
    %3541 = vmatpush1.msra.mxu0 %v2751
    %3542 = vmatprep.subr.mxu0 0.0
    %3543 = vmatpush1.msra.mxu0 %v2752
    %3544 = vmatprep.subr.mxu0 0.0
    %3545 = vmatpush1.msra.mxu0 0.0
    %3546 = vmatprep.subr.mxu0 0.0
    %3547 = vmatpush1.msra.mxu0 0.0
    %3548 = vmatprep.subr.mxu0 0.0
    %3549 = vmatpush1.msra.mxu0 0.0
    %3550 = vmatprep.subr.mxu0 0.0
    %3551 = vmatpush1.msra.mxu0 0.0
    %3552 = vmatprep.subr.mxu0 0.0
    %3553 = vmatpush1.msra.mxu0 0.0
    %3554 = vmatprep.subr.mxu0 0.0
    %3555 = vmatpush1.msra.mxu0 0.0
    %3556 = vmatprep.subr.mxu0 0.0
    %3557 = vmatpush1.msra.mxu0 0.0
    %3558 = vmatprep.subr.mxu0 0.0
    %3559 = vmatpush1.msra.mxu0 0.0
    %3560 = vmatprep.subr.mxu0 0.0
    %3561 = vmatpush1.msra.mxu0 0.0
    %3562 = vmatprep.subr.mxu0 0.0
    %3563 = vmatpush1.msra.mxu0 0.0
    %3564 = vmatprep.subr.mxu0 0.0
    %3565 = vmatpush1.msra.mxu0 0.0
    %3566 = vmatprep.subr.mxu0 0.0
    %3567 = vmatpush1.msra.mxu0 0.0
    %3568 = vmatprep.subr.mxu0 0.0
    %3569 = vmatpush1.msra.mxu0 0.0
    %3570 = vmatprep.subr.mxu0 0.0
    %3571 = vmatpush1.msra.mxu0 0.0
    %3572 = vmatprep.subr.mxu0 0.0
    %3573 = vmatpush1.msra.mxu0 0.0
    %3574 = vmatprep.subr.mxu0 0.0
    %3575 = vmatpush1.msra.mxu0 0.0
    %3576 = vmatprep.subr.mxu0 0.0
    %3577 = vmatpush1.msra.mxu0 0.0
    %3578 = vmatprep.subr.mxu0 0.0
    %3579 = vmatpush1.msra.mxu0 0.0
    %3580 = vmatprep.subr.mxu0 0.0
    %3581 = vmatpush1.msra.mxu0 0.0
    %3582 = vmatprep.subr.mxu0 0.0
    %3583 = vmatpush1.msra.mxu0 0.0
    %3584 = vmatprep.subr.mxu0 0.0
    %3585 = vmatpush1.msra.mxu0 0.0
    %3586 = vmatprep.subr.mxu0 0.0
    %3587 = vmatpush1.msra.mxu0 0.0
    %3588 = vmatprep.subr.mxu0 0.0
    %3589 = vmatpush1.msra.mxu0 0.0
    %3590 = vmatprep.subr.mxu0 0.0
    %3591 = vmatpush1.msra.mxu0 0.0
    %3592 = vmatprep.subr.mxu0 0.0
    %3593 = vmatpush1.msra.mxu0 0.0
    %3594 = vmatprep.subr.mxu0 0.0
    %3595 = vmatpush1.msra.mxu0 0.0
    %3596 = vmatprep.subr.mxu0 0.0
    %3597 = vmatpush1.msra.mxu0 0.0
    %3598 = vmatprep.subr.mxu0 0.0
    %3599 = vmatpush1.msra.mxu0 0.0
    %3600 = vmatprep.subr.mxu0 0.0
    %3601 = vmatpush1.msra.mxu0 0.0
    %3602 = vmatprep.subr.mxu0 0.0
    %3603 = vmatpush1.msra.mxu0 0.0
    %3604 = vmatprep.mubr.f32.mxu0 0.0
    %3605 = vmatmul.mubr.f32.gmra.mrb[0].mxu0 %v3445
    %v3606 = vpop.f32.mrb[0].mxu0
    %v3607 = vadd.f32 0.0, %v3606
    %v3608 = vpop.f32.mrb[0].mxu0
    %3609 = vmatprep.mubr.f32.mxu0 0.0
    %3610 = vmatmul.mubr.f32.gmra.mrb[0].mxu0 %v3448
    %v3611 = vpop.f32.mrb[0].mxu0
    %v3612 = vadd.f32 0.0, %v3611
    %v3613 = vpop.f32.mrb[0].mxu0
    %3614 = vmatprep.mubr.f32.mxu0 0.0
    %3615 = vmatmul.mubr.f32.gmra.mrb[0].mxu0 %v3451
    %v3616 = vpop.f32.mrb[0].mxu0
    %v3617 = vadd.f32 0.0, %v3616
    %v3618 = vpop.f32.mrb[0].mxu0
    %3619 = vmatprep.mubr.f32.mxu0 0.0
    %3620 = vmatmul.mubr.f32.gmra.mrb[0].mxu0 %v3454
    %v3621 = vpop.f32.mrb[0].mxu0
    %v3622 = vadd.f32 0.0, %v3621
    %v3623 = vpop.f32.mrb[0].mxu0
    %3624 = vmatprep.mubr.f32.mxu0 0.0
    %3625 = vmatmul.mubr.f32.gmra.mrb[0].mxu0 %v3457
    %v3626 = vpop.f32.mrb[0].mxu0
    %v3627 = vadd.f32 0.0, %v3626
    %v3628 = vpop.f32.mrb[0].mxu0
    %3629 = vmatprep.mubr.f32.mxu0 0.0
    %3630 = vmatmul.mubr.f32.gmra.mrb[0].mxu0 %v3460
    %v3631 = vpop.f32.mrb[0].mxu0
    %v3632 = vadd.f32 0.0, %v3631
    %v3633 = vpop.f32.mrb[0].mxu0
    %3634 = vmatprep.mubr.f32.mxu0 0.0
    %3635 = vmatmul.mubr.f32.gmra.mrb[0].mxu0 %v3463
    %v3636 = vpop.f32.mrb[0].mxu0
    %v3637 = vadd.f32 0.0, %v3636
    %v3638 = vpop.f32.mrb[0].mxu0
    %3639 = vmatprep.mubr.f32.mxu0 0.0
    %3640 = vmatmul.mubr.f32.gmra.mrb[0].mxu0 %v3466
    %v3641 = vpop.f32.mrb[0].mxu0
    %v3642 = vadd.f32 0.0, %v3641
    %v3643 = vpop.f32.mrb[0].mxu0
    %3644 = vmatprep.mubr.f32.mxu0 0.0
    %3645 = vmatmul.mubr.f32.gmra.mrb[0].mxu0 %v3469
    %v3646 = vpop.f32.mrb[0].mxu0
    %v3647 = vadd.f32 0.0, %v3646
    %v3648 = vpop.f32.mrb[0].mxu0
    %3649 = vmatprep.mubr.f32.mxu0 0.0
    %3650 = vmatmul.mubr.f32.gmra.mrb[0].mxu0 %v3472
    %v3651 = vpop.f32.mrb[0].mxu0
    %v3652 = vadd.f32 0.0, %v3651
    %v3653 = vpop.f32.mrb[0].mxu0
    %3654 = vmatprep.mubr.f32.mxu0 0.0
    %3655 = vmatmul.mubr.f32.gmra.mrb[0].mxu0 %v3475
    %v3656 = vpop.f32.mrb[0].mxu0
    %v3657 = vadd.f32 0.0, %v3656
    %v3658 = vpop.f32.mrb[0].mxu0
    %3659 = vmatprep.mubr.f32.mxu0 0.0
    %3660 = vmatmul.mubr.f32.gmra.mrb[0].mxu0 %v3478
    %v3661 = vpop.f32.mrb[0].mxu0
    %v3662 = vadd.f32 0.0, %v3661
    %v3663 = vpop.f32.mrb[0].mxu0
    %3664 = vmatprep.mubr.f32.mxu0 0.0
    %3665 = vmatmul.mubr.f32.gmra.mrb[0].mxu0 %v3481
    %v3666 = vpop.f32.mrb[0].mxu0
    %v3667 = vadd.f32 0.0, %v3666
    %v3668 = vpop.f32.mrb[0].mxu0
    %3669 = vmatprep.mubr.f32.mxu0 0.0
    %3670 = vmatmul.mubr.f32.gmra.mrb[0].mxu0 %v3484
    %v3671 = vpop.f32.mrb[0].mxu0
    %v3672 = vadd.f32 0.0, %v3671
    %v3673 = vpop.f32.mrb[0].mxu0
    %3674 = vmatprep.mubr.f32.mxu0 0.0
    %3675 = vmatmul.mubr.f32.gmra.mrb[0].mxu0 %v3487
    %v3676 = vpop.f32.mrb[0].mxu0
    %v3677 = vadd.f32 0.0, %v3676
    %v3678 = vpop.f32.mrb[0].mxu0
    %3679 = vmatprep.mubr.f32.mxu0 0.0
    %3680 = vmatmul.mubr.f32.gmra.mrb[0].mxu0 %v3490
    %v3681 = vpop.f32.mrb[0].mxu0
    %v3682 = vadd.f32 0.0, %v3681
    %v3683 = vpop.f32.mrb[0].mxu0
    %3684 = vmatprep.mubr.f32.mxu0 0.0
    %3685 = vmatmul.mubr.f32.gmra.mrb[0].mxu0 %v3493
    %v3686 = vpop.f32.mrb[0].mxu0
    %v3687 = vadd.f32 0.0, %v3686
    %v3688 = vpop.f32.mrb[0].mxu0
    %3689 = vmatprep.mubr.f32.mxu0 0.0
    %3690 = vmatmul.mubr.f32.gmra.mrb[0].mxu0 %v3496
    %v3691 = vpop.f32.mrb[0].mxu0
    %v3692 = vadd.f32 0.0, %v3691
    %v3693 = vpop.f32.mrb[0].mxu0
    %3694 = vmatprep.mubr.f32.mxu0 0.0
    %3695 = vmatmul.mubr.f32.gmra.mrb[0].mxu0 %v3499
    %v3696 = vpop.f32.mrb[0].mxu0
    %v3697 = vadd.f32 0.0, %v3696
    %v3698 = vpop.f32.mrb[0].mxu0
    %3699 = vmatprep.mubr.f32.mxu0 0.0
    %3700 = vmatmul.mubr.f32.gmra.mrb[0].mxu0 %v3502
    %v3701 = vpop.f32.mrb[0].mxu0
    %v3702 = vadd.f32 0.0, %v3701
    %v3703 = vpop.f32.mrb[0].mxu0
    %3704 = vmatprep.mubr.f32.mxu0 0.0
    %3705 = vmatmul.mubr.f32.gmra.mrb[0].mxu0 %v3505
    %v3706 = vpop.f32.mrb[0].mxu0
    %v3707 = vadd.f32 0.0, %v3706
    %v3708 = vpop.f32.mrb[0].mxu0
    %3709 = vmatprep.mubr.f32.mxu0 0.0
    %3710 = vmatmul.mubr.f32.gmra.mrb[0].mxu0 %v3508
    %v3711 = vpop.f32.mrb[0].mxu0
    %v3712 = vadd.f32 0.0, %v3711
    %v3713 = vpop.f32.mrb[0].mxu0
    %3714 = vmatprep.mubr.f32.mxu0 0.0
    %3715 = vmatmul.mubr.f32.gmra.mrb[0].mxu0 %v3511
    %v3716 = vpop.f32.mrb[0].mxu0
    %v3717 = vadd.f32 0.0, %v3716
    %v3718 = vpop.f32.mrb[0].mxu0
    %3719 = vmatprep.mubr.f32.mxu0 0.0
    %3720 = vmatmul.mubr.f32.gmra.mrb[0].mxu0 %v3514
    %v3721 = vpop.f32.mrb[0].mxu0
    %v3722 = vadd.f32 0.0, %v3721
    %v3723 = vpop.f32.mrb[0].mxu0
    %3724 = vmatprep.mubr.f32.mxu0 0.0
    %3725 = vmatmul.mubr.f32.gmra.mrb[0].mxu0 %v3517
    %v3726 = vpop.f32.mrb[0].mxu0
    %v3727 = vadd.f32 0.0, %v3726
    %v3728 = vpop.f32.mrb[0].mxu0
    %3729 = vmatprep.mubr.f32.mxu0 0.0
    %3730 = vmatmul.mubr.f32.gmra.mrb[0].mxu0 %v3520
    %v3731 = vpop.f32.mrb[0].mxu0
    %v3732 = vadd.f32 0.0, %v3731
    %v3733 = vpop.f32.mrb[0].mxu0
    %3734 = vmatprep.mubr.f32.mxu0 0.0
    %3735 = vmatmul.mubr.f32.gmra.mrb[0].mxu0 %v3523
    %v3736 = vpop.f32.mrb[0].mxu0
    %v3737 = vadd.f32 0.0, %v3736
    %v3738 = vpop.f32.mrb[0].mxu0
    %3739 = vmatprep.mubr.f32.mxu0 0.0
    %3740 = vmatmul.mubr.f32.gmra.mrb[0].mxu0 %v3526
    %v3741 = vpop.f32.mrb[0].mxu0
    %v3742 = vadd.f32 0.0, %v3741
    %v3743 = vpop.f32.mrb[0].mxu0
    %3744 = vmatprep.mubr.f32.mxu0 0.0
    %3745 = vmatmul.mubr.f32.gmra.mrb[0].mxu0 %v3529
    %v3746 = vpop.f32.mrb[0].mxu0
    %v3747 = vadd.f32 0.0, %v3746
    %v3748 = vpop.f32.mrb[0].mxu0
    %3749 = vmatprep.mubr.f32.mxu0 0.0
    %3750 = vmatmul.mubr.f32.gmra.mrb[0].mxu0 %v3532
    %v3751 = vpop.f32.mrb[0].mxu0
    %v3752 = vadd.f32 0.0, %v3751
    %v3753 = vpop.f32.mrb[0].mxu0
    %3754 = vmatprep.mubr.f32.mxu0 0.0
    %3755 = vmatmul.mubr.f32.gmra.mrb[0].mxu0 %v3535
    %v3756 = vpop.f32.mrb[0].mxu0
    %v3757 = vadd.f32 0.0, %v3756
    %v3758 = vpop.f32.mrb[0].mxu0
    %3759 = vmatprep.mubr.f32.mxu0 0.0
    %3760 = vmatmul.mubr.f32.gmra.mrb[0].mxu0 %v3538
    %v3761 = vpop.f32.mrb[0].mxu0
    %v3762 = vadd.f32 0.0, %v3761
    %v3763 = vpop.f32.mrb[0].mxu0
    %3764 = vdwg.mxu0
    %v3765 = vadd.f32 %v3412, %v3607
    %v3766 = vadd.f32 %v3413, %v3612
    %v3767 = vadd.f32 %v3414, %v3617
    %v3768 = vadd.f32 %v3415, %v3622
    %v3769 = vadd.f32 %v3416, %v3627
    %v3770 = vadd.f32 %v3417, %v3632
    %v3771 = vadd.f32 %v3418, %v3637
    %v3772 = vadd.f32 %v3419, %v3642
    %v3773 = vadd.f32 %v3420, %v3647
    %v3774 = vadd.f32 %v3421, %v3652
    %v3775 = vadd.f32 %v3422, %v3657
    %v3776 = vadd.f32 %v3423, %v3662
    %v3777 = vadd.f32 %v3424, %v3667
    %v3778 = vadd.f32 %v3425, %v3672
    %v3779 = vadd.f32 %v3426, %v3677
    %v3780 = vadd.f32 %v3427, %v3682
    %v3781 = vadd.f32 %v3428, %v3687
    %v3782 = vadd.f32 %v3429, %v3692
    %v3783 = vadd.f32 %v3430, %v3697
    %v3784 = vadd.f32 %v3431, %v3702
    %v3785 = vadd.f32 %v3432, %v3707
    %v3786 = vadd.f32 %v3433, %v3712
    %v3787 = vadd.f32 %v3434, %v3717
    %v3788 = vadd.f32 %v3435, %v3722
    %v3789 = vadd.f32 %v3436, %v3727
    %v3790 = vadd.f32 %v3437, %v3732
    %v3791 = vadd.f32 %v3438, %v3737
    %v3792 = vadd.f32 %v3439, %v3742
    %v3793 = vadd.f32 %v3440, %v3747
    %v3794 = vadd.f32 %v3441, %v3752
    %v3795 = vadd.f32 %v3442, %v3757
    %v3796 = vadd.f32 %v3443, %v3762
    %v3798 = vsel %vm821, 0.0, 0
    %v3801 = vsel %vm821, %v3766, 0
    %v3804 = vsel %vm821, %v3768, 0
    %v3807 = vsel %vm821, %v3770, 0
    %v3810 = vsel %vm821, %v3772, 0
    %v3813 = vsel %vm821, %v3774, 0
    %v3816 = vsel %vm821, %v3776, 0
    %v3819 = vsel %vm821, %v3778, 0
    %v3822 = vsel %vm821, %v3782, 0
    %v3825 = vsel %vm821, %v3784, 0
    %v3828 = vsel %vm821, %v3786, 0
    %v3831 = vsel %vm821, %v3788, 0
    %v3834 = vsel %vm821, %v3790, 0
    %v3837 = vsel %vm821, %v3792, 0
    %v3840 = vsel %vm821, %v3794, 0
    %3842 = vmatprep.subr.mxu0 0.0
    %3843 = vmatpush1.msra.mxu0 %v2753
    %3844 = vmatprep.subr.mxu0 0.0
    %3845 = vmatpush1.msra.mxu0 %v2754
    %3846 = vmatprep.subr.mxu0 0.0
    %3847 = vmatpush1.msra.mxu0 0.0
    %3848 = vmatprep.subr.mxu0 0.0
    %3849 = vmatpush1.msra.mxu0 0.0
    %3850 = vmatprep.subr.mxu0 0.0
    %3851 = vmatpush1.msra.mxu0 0.0
    %3852 = vmatprep.subr.mxu0 0.0
    %3853 = vmatpush1.msra.mxu0 0.0
    %3854 = vmatprep.subr.mxu0 0.0
    %3855 = vmatpush1.msra.mxu0 0.0
    %3856 = vmatprep.subr.mxu0 0.0
    %3857 = vmatpush1.msra.mxu0 0.0
    %3858 = vmatprep.subr.mxu0 0.0
    %3859 = vmatpush1.msra.mxu0 0.0
    %3860 = vmatprep.subr.mxu0 0.0
    %3861 = vmatpush1.msra.mxu0 0.0
    %3862 = vmatprep.subr.mxu0 0.0
    %3863 = vmatpush1.msra.mxu0 0.0
    %3864 = vmatprep.subr.mxu0 0.0
    %3865 = vmatpush1.msra.mxu0 0.0
    %3866 = vmatprep.subr.mxu0 0.0
    %3867 = vmatpush1.msra.mxu0 0.0
    %3868 = vmatprep.subr.mxu0 0.0
    %3869 = vmatpush1.msra.mxu0 0.0
    %3870 = vmatprep.subr.mxu0 0.0
    %3871 = vmatpush1.msra.mxu0 0.0
    %3872 = vmatprep.subr.mxu0 0.0
    %3873 = vmatpush1.msra.mxu0 0.0
    %3874 = vmatprep.subr.mxu0 0.0
    %3875 = vmatpush1.msra.mxu0 0.0
    %3876 = vmatprep.subr.mxu0 0.0
    %3877 = vmatpush1.msra.mxu0 0.0
    %3878 = vmatprep.subr.mxu0 0.0
    %3879 = vmatpush1.msra.mxu0 0.0
    %3880 = vmatprep.subr.mxu0 0.0
    %3881 = vmatpush1.msra.mxu0 0.0
    %3882 = vmatprep.subr.mxu0 0.0
    %3883 = vmatpush1.msra.mxu0 0.0
    %3884 = vmatprep.subr.mxu0 0.0
    %3885 = vmatpush1.msra.mxu0 0.0
    %3886 = vmatprep.subr.mxu0 0.0
    %3887 = vmatpush1.msra.mxu0 0.0
    %3888 = vmatprep.subr.mxu0 0.0
    %3889 = vmatpush1.msra.mxu0 0.0
    %3890 = vmatprep.subr.mxu0 0.0
    %3891 = vmatpush1.msra.mxu0 0.0
    %3892 = vmatprep.subr.mxu0 0.0
    %3893 = vmatpush1.msra.mxu0 0.0
    %3894 = vmatprep.subr.mxu0 0.0
    %3895 = vmatpush1.msra.mxu0 0.0
    %3896 = vmatprep.subr.mxu0 0.0
    %3897 = vmatpush1.msra.mxu0 0.0
    %3898 = vmatprep.subr.mxu0 0.0
    %3899 = vmatpush1.msra.mxu0 0.0
    %3900 = vmatprep.subr.mxu0 0.0
    %3901 = vmatpush1.msra.mxu0 0.0
    %3902 = vmatprep.subr.mxu0 0.0
    %3903 = vmatpush1.msra.mxu0 0.0
    %3904 = vmatprep.subr.mxu0 0.0
    %3905 = vmatpush1.msra.mxu0 0.0
    %3906 = vmatprep.mubr.f32.mxu0 0.0
    %3907 = vmatmul.mubr.f32.gmra.mrb[0].mxu0 %v3798
    %v3908 = vpop.f32.mrb[0].mxu0
    %v3909 = vadd.f32 0.0, %v3908
    %v3910 = vpop.f32.mrb[0].mxu0
    %3911 = vmatprep.mubr.f32.mxu0 0.0
    %3912 = vmatmul.mubr.f32.gmra.mrb[0].mxu0 %v3801
    %v3913 = vpop.f32.mrb[0].mxu0
    %v3914 = vadd.f32 0.0, %v3913
    %v3915 = vpop.f32.mrb[0].mxu0
    %3916 = vmatprep.mubr.f32.mxu0 0.0
    %3917 = vmatmul.mubr.f32.gmra.mrb[0].mxu0 %v3804
    %v3918 = vpop.f32.mrb[0].mxu0
    %v3919 = vadd.f32 0.0, %v3918
    %v3920 = vpop.f32.mrb[0].mxu0
    %3921 = vmatprep.mubr.f32.mxu0 0.0
    %3922 = vmatmul.mubr.f32.gmra.mrb[0].mxu0 %v3807
    %v3923 = vpop.f32.mrb[0].mxu0
    %v3924 = vadd.f32 0.0, %v3923
    %v3925 = vpop.f32.mrb[0].mxu0
    %3926 = vmatprep.mubr.f32.mxu0 0.0
    %3927 = vmatmul.mubr.f32.gmra.mrb[0].mxu0 %v3810
    %v3928 = vpop.f32.mrb[0].mxu0
    %v3929 = vadd.f32 0.0, %v3928
    %v3930 = vpop.f32.mrb[0].mxu0
    %3931 = vmatprep.mubr.f32.mxu0 0.0
    %3932 = vmatmul.mubr.f32.gmra.mrb[0].mxu0 %v3813
    %v3933 = vpop.f32.mrb[0].mxu0
    %v3934 = vadd.f32 0.0, %v3933
    %v3935 = vpop.f32.mrb[0].mxu0
    %3936 = vmatprep.mubr.f32.mxu0 0.0
    %3937 = vmatmul.mubr.f32.gmra.mrb[0].mxu0 %v3816
    %v3938 = vpop.f32.mrb[0].mxu0
    %v3939 = vadd.f32 0.0, %v3938
    %v3940 = vpop.f32.mrb[0].mxu0
    %3941 = vmatprep.mubr.f32.mxu0 0.0
    %3942 = vmatmul.mubr.f32.gmra.mrb[0].mxu0 %v3819
    %v3943 = vpop.f32.mrb[0].mxu0
    %v3944 = vadd.f32 0.0, %v3943
    %v3945 = vpop.f32.mrb[0].mxu0
    %3946 = vmatprep.mubr.f32.mxu0 0.0
    %3947 = vmatmul.mubr.f32.gmra.mrb[0].mxu0 %v3798
    %v3948 = vpop.f32.mrb[0].mxu0
    %v3949 = vadd.f32 0.0, %v3948
    %v3950 = vpop.f32.mrb[0].mxu0
    %3951 = vmatprep.mubr.f32.mxu0 0.0
    %3952 = vmatmul.mubr.f32.gmra.mrb[0].mxu0 %v3822
    %v3953 = vpop.f32.mrb[0].mxu0
    %v3954 = vadd.f32 0.0, %v3953
    %v3955 = vpop.f32.mrb[0].mxu0
    %3956 = vmatprep.mubr.f32.mxu0 0.0
    %3957 = vmatmul.mubr.f32.gmra.mrb[0].mxu0 %v3825
    %v3958 = vpop.f32.mrb[0].mxu0
    %v3959 = vadd.f32 0.0, %v3958
    %v3960 = vpop.f32.mrb[0].mxu0
    %3961 = vmatprep.mubr.f32.mxu0 0.0
    %3962 = vmatmul.mubr.f32.gmra.mrb[0].mxu0 %v3828
    %v3963 = vpop.f32.mrb[0].mxu0
    %v3964 = vadd.f32 0.0, %v3963
    %v3965 = vpop.f32.mrb[0].mxu0
    %3966 = vmatprep.mubr.f32.mxu0 0.0
    %3967 = vmatmul.mubr.f32.gmra.mrb[0].mxu0 %v3831
    %v3968 = vpop.f32.mrb[0].mxu0
    %v3969 = vadd.f32 0.0, %v3968
    %v3970 = vpop.f32.mrb[0].mxu0
    %3971 = vmatprep.mubr.f32.mxu0 0.0
    %3972 = vmatmul.mubr.f32.gmra.mrb[0].mxu0 %v3834
    %v3973 = vpop.f32.mrb[0].mxu0
    %v3974 = vadd.f32 0.0, %v3973
    %v3975 = vpop.f32.mrb[0].mxu0
    %3976 = vmatprep.mubr.f32.mxu0 0.0
    %3977 = vmatmul.mubr.f32.gmra.mrb[0].mxu0 %v3837
    %v3978 = vpop.f32.mrb[0].mxu0
    %v3979 = vadd.f32 0.0, %v3978
    %v3980 = vpop.f32.mrb[0].mxu0
    %3981 = vmatprep.mubr.f32.mxu0 0.0
    %3982 = vmatmul.mubr.f32.gmra.mrb[0].mxu0 %v3840
    %v3983 = vpop.f32.mrb[0].mxu0
    %v3984 = vadd.f32 0.0, %v3983
    %v3985 = vpop.f32.mrb[0].mxu0
    %3986 = vdwg.mxu0
    %v3988 = vsel %vm821, %v3765, 0
    %v3991 = vsel %vm821, %v3767, 0
    %v3994 = vsel %vm821, %v3769, 0
    %v3997 = vsel %vm821, %v3771, 0
    %v4000 = vsel %vm821, %v3773, 0
    %v4003 = vsel %vm821, %v3775, 0
    %v4006 = vsel %vm821, %v3777, 0
    %v4009 = vsel %vm821, %v3779, 0
    %v4012 = vsel %vm821, %v3781, 0
    %v4015 = vsel %vm821, %v3783, 0
    %v4018 = vsel %vm821, %v3785, 0
    %v4021 = vsel %vm821, %v3787, 0
    %v4024 = vsel %vm821, %v3789, 0
    %v4027 = vsel %vm821, %v3791, 0
    %v4030 = vsel %vm821, %v3793, 0
    %v4033 = vsel %vm821, %v3795, 0
    %4035 = vmatprep.subr.mxu0 0.0
    %4036 = vmatpush1.msra.mxu0 %v2755
    %4037 = vmatprep.subr.mxu0 0.0
    %4038 = vmatpush1.msra.mxu0 %v2756
    %4039 = vmatprep.subr.mxu0 0.0
    %4040 = vmatpush1.msra.mxu0 0.0
    %4041 = vmatprep.subr.mxu0 0.0
    %4042 = vmatpush1.msra.mxu0 0.0
    %4043 = vmatprep.subr.mxu0 0.0
    %4044 = vmatpush1.msra.mxu0 0.0
    %4045 = vmatprep.subr.mxu0 0.0
    %4046 = vmatpush1.msra.mxu0 0.0
    %4047 = vmatprep.subr.mxu0 0.0
    %4048 = vmatpush1.msra.mxu0 0.0
    %4049 = vmatprep.subr.mxu0 0.0
    %4050 = vmatpush1.msra.mxu0 0.0
    %4051 = vmatprep.subr.mxu0 0.0
    %4052 = vmatpush1.msra.mxu0 0.0
    %4053 = vmatprep.subr.mxu0 0.0
    %4054 = vmatpush1.msra.mxu0 0.0
    %4055 = vmatprep.subr.mxu0 0.0
    %4056 = vmatpush1.msra.mxu0 0.0
    %4057 = vmatprep.subr.mxu0 0.0
    %4058 = vmatpush1.msra.mxu0 0.0
    %4059 = vmatprep.subr.mxu0 0.0
    %4060 = vmatpush1.msra.mxu0 0.0
    %4061 = vmatprep.subr.mxu0 0.0
    %4062 = vmatpush1.msra.mxu0 0.0
    %4063 = vmatprep.subr.mxu0 0.0
    %4064 = vmatpush1.msra.mxu0 0.0
    %4065 = vmatprep.subr.mxu0 0.0
    %4066 = vmatpush1.msra.mxu0 0.0
    %4067 = vmatprep.subr.mxu0 0.0
    %4068 = vmatpush1.msra.mxu0 0.0
    %4069 = vmatprep.subr.mxu0 0.0
    %4070 = vmatpush1.msra.mxu0 0.0
    %4071 = vmatprep.subr.mxu0 0.0
    %4072 = vmatpush1.msra.mxu0 0.0
    %4073 = vmatprep.subr.mxu0 0.0
    %4074 = vmatpush1.msra.mxu0 0.0
    %4075 = vmatprep.subr.mxu0 0.0
    %4076 = vmatpush1.msra.mxu0 0.0
    %4077 = vmatprep.subr.mxu0 0.0
    %4078 = vmatpush1.msra.mxu0 0.0
    %4079 = vmatprep.subr.mxu0 0.0
    %4080 = vmatpush1.msra.mxu0 0.0
    %4081 = vmatprep.subr.mxu0 0.0
    %4082 = vmatpush1.msra.mxu0 0.0
    %4083 = vmatprep.subr.mxu0 0.0
    %4084 = vmatpush1.msra.mxu0 0.0
    %4085 = vmatprep.subr.mxu0 0.0
    %4086 = vmatpush1.msra.mxu0 0.0
    %4087 = vmatprep.subr.mxu0 0.0
    %4088 = vmatpush1.msra.mxu0 0.0
    %4089 = vmatprep.subr.mxu0 0.0
    %4090 = vmatpush1.msra.mxu0 0.0
    %4091 = vmatprep.subr.mxu0 0.0
    %4092 = vmatpush1.msra.mxu0 0.0
    %4093 = vmatprep.subr.mxu0 0.0
    %4094 = vmatpush1.msra.mxu0 0.0
    %4095 = vmatprep.subr.mxu0 0.0
    %4096 = vmatpush1.msra.mxu0 0.0
    %4097 = vmatprep.subr.mxu0 0.0
    %4098 = vmatpush1.msra.mxu0 0.0
    %4099 = vmatprep.mubr.f32.mxu0 0.0
    %4100 = vmatmul.mubr.f32.gmra.mrb[0].mxu0 %v3988
    %v4101 = vpop.f32.mrb[0].mxu0
    %v4102 = vadd.f32 0.0, %v4101
    %v4103 = vpop.f32.mrb[0].mxu0
    %4104 = vmatprep.mubr.f32.mxu0 0.0
    %4105 = vmatmul.mubr.f32.gmra.mrb[0].mxu0 %v3991
    %v4106 = vpop.f32.mrb[0].mxu0
    %v4107 = vadd.f32 0.0, %v4106
    %v4108 = vpop.f32.mrb[0].mxu0
    %4109 = vmatprep.mubr.f32.mxu0 0.0
    %4110 = vmatmul.mubr.f32.gmra.mrb[0].mxu0 %v3994
    %v4111 = vpop.f32.mrb[0].mxu0
    %v4112 = vadd.f32 0.0, %v4111
    %v4113 = vpop.f32.mrb[0].mxu0
    %4114 = vmatprep.mubr.f32.mxu0 0.0
    %4115 = vmatmul.mubr.f32.gmra.mrb[0].mxu0 %v3997
    %v4116 = vpop.f32.mrb[0].mxu0
    %v4117 = vadd.f32 0.0, %v4116
    %v4118 = vpop.f32.mrb[0].mxu0
    %4119 = vmatprep.mubr.f32.mxu0 0.0
    %4120 = vmatmul.mubr.f32.gmra.mrb[0].mxu0 %v4000
    %v4121 = vpop.f32.mrb[0].mxu0
    %v4122 = vadd.f32 0.0, %v4121
    %v4123 = vpop.f32.mrb[0].mxu0
    %4124 = vmatprep.mubr.f32.mxu0 0.0
    %4125 = vmatmul.mubr.f32.gmra.mrb[0].mxu0 %v4003
    %v4126 = vpop.f32.mrb[0].mxu0
    %v4127 = vadd.f32 0.0, %v4126
    %v4128 = vpop.f32.mrb[0].mxu0
    %4129 = vmatprep.mubr.f32.mxu0 0.0
    %4130 = vmatmul.mubr.f32.gmra.mrb[0].mxu0 %v4006
    %v4131 = vpop.f32.mrb[0].mxu0
    %v4132 = vadd.f32 0.0, %v4131
    %v4133 = vpop.f32.mrb[0].mxu0
    %4134 = vmatprep.mubr.f32.mxu0 0.0
    %4135 = vmatmul.mubr.f32.gmra.mrb[0].mxu0 %v4009
    %v4136 = vpop.f32.mrb[0].mxu0
    %v4137 = vadd.f32 0.0, %v4136
    %v4138 = vpop.f32.mrb[0].mxu0
    %4139 = vmatprep.mubr.f32.mxu0 0.0
    %4140 = vmatmul.mubr.f32.gmra.mrb[0].mxu0 %v4012
    %v4141 = vpop.f32.mrb[0].mxu0
    %v4142 = vadd.f32 0.0, %v4141
    %v4143 = vpop.f32.mrb[0].mxu0
    %4144 = vmatprep.mubr.f32.mxu0 0.0
    %4145 = vmatmul.mubr.f32.gmra.mrb[0].mxu0 %v4015
    %v4146 = vpop.f32.mrb[0].mxu0
    %v4147 = vadd.f32 0.0, %v4146
    %v4148 = vpop.f32.mrb[0].mxu0
    %4149 = vmatprep.mubr.f32.mxu0 0.0
    %4150 = vmatmul.mubr.f32.gmra.mrb[0].mxu0 %v4018
    %v4151 = vpop.f32.mrb[0].mxu0
    %v4152 = vadd.f32 0.0, %v4151
    %v4153 = vpop.f32.mrb[0].mxu0
    %4154 = vmatprep.mubr.f32.mxu0 0.0
    %4155 = vmatmul.mubr.f32.gmra.mrb[0].mxu0 %v4021
    %v4156 = vpop.f32.mrb[0].mxu0
    %v4157 = vadd.f32 0.0, %v4156
    %v4158 = vpop.f32.mrb[0].mxu0
    %4159 = vmatprep.mubr.f32.mxu0 0.0
    %4160 = vmatmul.mubr.f32.gmra.mrb[0].mxu0 %v4024
    %v4161 = vpop.f32.mrb[0].mxu0
    %v4162 = vadd.f32 0.0, %v4161
    %v4163 = vpop.f32.mrb[0].mxu0
    %4164 = vmatprep.mubr.f32.mxu0 0.0
    %4165 = vmatmul.mubr.f32.gmra.mrb[0].mxu0 %v4027
    %v4166 = vpop.f32.mrb[0].mxu0
    %v4167 = vadd.f32 0.0, %v4166
    %v4168 = vpop.f32.mrb[0].mxu0
    %4169 = vmatprep.mubr.f32.mxu0 0.0
    %4170 = vmatmul.mubr.f32.gmra.mrb[0].mxu0 %v4030
    %v4171 = vpop.f32.mrb[0].mxu0
    %v4172 = vadd.f32 0.0, %v4171
    %v4173 = vpop.f32.mrb[0].mxu0
    %4174 = vmatprep.mubr.f32.mxu0 0.0
    %4175 = vmatmul.mubr.f32.gmra.mrb[0].mxu0 %v4033
    %v4176 = vpop.f32.mrb[0].mxu0
    %v4177 = vadd.f32 0.0, %v4176
    %v4178 = vpop.f32.mrb[0].mxu0
    %4179 = vdwg.mxu0
    %v4180 = vadd.f32 %v3909, %v4102
    %v4181 = vadd.f32 %v3914, %v4107
    %v4182 = vadd.f32 %v3919, %v4112
    %v4183 = vadd.f32 %v3924, %v4117
    %v4184 = vadd.f32 %v3929, %v4122
    %v4185 = vadd.f32 %v3934, %v4127
    %v4186 = vadd.f32 %v3939, %v4132
    %v4187 = vadd.f32 %v3944, %v4137
    %v4188 = vadd.f32 %v3949, %v4142
    %v4189 = vadd.f32 %v3954, %v4147
    %v4190 = vadd.f32 %v3959, %v4152
    %v4191 = vadd.f32 %v3964, %v4157
    %v4192 = vadd.f32 %v3969, %v4162
    %v4193 = vadd.f32 %v3974, %v4167
    %v4194 = vadd.f32 %v3979, %v4172
    %v4195 = vadd.f32 %v3984, %v4177
    %v4197 = vsel %vm821, %v3780, 0
    %v4200 = vsel %vm821, %v3796, 0
    %4202 = vmatprep.subr.mxu0 0.0
    %4203 = vmatpush1.msra.mxu0 %v2757
    %4204 = vmatprep.subr.mxu0 0.0
    %4205 = vmatpush1.msra.mxu0 %v2758
    %4206 = vmatprep.subr.mxu0 0.0
    %4207 = vmatpush1.msra.mxu0 0.0
    %4208 = vmatprep.subr.mxu0 0.0
    %4209 = vmatpush1.msra.mxu0 0.0
    %4210 = vmatprep.subr.mxu0 0.0
    %4211 = vmatpush1.msra.mxu0 0.0
    %4212 = vmatprep.subr.mxu0 0.0
    %4213 = vmatpush1.msra.mxu0 0.0
    %4214 = vmatprep.subr.mxu0 0.0
    %4215 = vmatpush1.msra.mxu0 0.0
    %4216 = vmatprep.subr.mxu0 0.0
    %4217 = vmatpush1.msra.mxu0 0.0
    %4218 = vmatprep.subr.mxu0 0.0
    %4219 = vmatpush1.msra.mxu0 0.0
    %4220 = vmatprep.subr.mxu0 0.0
    %4221 = vmatpush1.msra.mxu0 0.0
    %4222 = vmatprep.subr.mxu0 0.0
    %4223 = vmatpush1.msra.mxu0 0.0
    %4224 = vmatprep.subr.mxu0 0.0
    %4225 = vmatpush1.msra.mxu0 0.0
    %4226 = vmatprep.subr.mxu0 0.0
    %4227 = vmatpush1.msra.mxu0 0.0
    %4228 = vmatprep.subr.mxu0 0.0
    %4229 = vmatpush1.msra.mxu0 0.0
    %4230 = vmatprep.subr.mxu0 0.0
    %4231 = vmatpush1.msra.mxu0 0.0
    %4232 = vmatprep.subr.mxu0 0.0
    %4233 = vmatpush1.msra.mxu0 0.0
    %4234 = vmatprep.subr.mxu0 0.0
    %4235 = vmatpush1.msra.mxu0 0.0
    %4236 = vmatprep.subr.mxu0 0.0
    %4237 = vmatpush1.msra.mxu0 0.0
    %4238 = vmatprep.subr.mxu0 0.0
    %4239 = vmatpush1.msra.mxu0 0.0
    %4240 = vmatprep.subr.mxu0 0.0
    %4241 = vmatpush1.msra.mxu0 0.0
    %4242 = vmatprep.subr.mxu0 0.0
    %4243 = vmatpush1.msra.mxu0 0.0
    %4244 = vmatprep.subr.mxu0 0.0
    %4245 = vmatpush1.msra.mxu0 0.0
    %4246 = vmatprep.subr.mxu0 0.0
    %4247 = vmatpush1.msra.mxu0 0.0
    %4248 = vmatprep.subr.mxu0 0.0
    %4249 = vmatpush1.msra.mxu0 0.0
    %4250 = vmatprep.subr.mxu0 0.0
    %4251 = vmatpush1.msra.mxu0 0.0
    %4252 = vmatprep.subr.mxu0 0.0
    %4253 = vmatpush1.msra.mxu0 0.0
    %4254 = vmatprep.subr.mxu0 0.0
    %4255 = vmatpush1.msra.mxu0 0.0
    %4256 = vmatprep.subr.mxu0 0.0
    %4257 = vmatpush1.msra.mxu0 0.0
    %4258 = vmatprep.subr.mxu0 0.0
    %4259 = vmatpush1.msra.mxu0 0.0
    %4260 = vmatprep.subr.mxu0 0.0
    %4261 = vmatpush1.msra.mxu0 0.0
    %4262 = vmatprep.subr.mxu0 0.0
    %4263 = vmatpush1.msra.mxu0 0.0
    %4264 = vmatprep.subr.mxu0 0.0
    %4265 = vmatpush1.msra.mxu0 0.0
    %4266 = vmatprep.mubr.f32.mxu0 0.0
    %4267 = vmatmul.mubr.f32.gmra.mrb[0].mxu0 %v3801
    %v4268 = vpop.f32.mrb[0].mxu0
    %v4269 = vadd.f32 0.0, %v4268
    %v4270 = vpop.f32.mrb[0].mxu0
    %4271 = vmatprep.mubr.f32.mxu0 0.0
    %4272 = vmatmul.mubr.f32.gmra.mrb[0].mxu0 %v3804
    %v4273 = vpop.f32.mrb[0].mxu0
    %v4274 = vadd.f32 0.0, %v4273
    %v4275 = vpop.f32.mrb[0].mxu0
    %4276 = vmatprep.mubr.f32.mxu0 0.0
    %4277 = vmatmul.mubr.f32.gmra.mrb[0].mxu0 %v3807
    %v4278 = vpop.f32.mrb[0].mxu0
    %v4279 = vadd.f32 0.0, %v4278
    %v4280 = vpop.f32.mrb[0].mxu0
    %4281 = vmatprep.mubr.f32.mxu0 0.0
    %4282 = vmatmul.mubr.f32.gmra.mrb[0].mxu0 %v3810
    %v4283 = vpop.f32.mrb[0].mxu0
    %v4284 = vadd.f32 0.0, %v4283
    %v4285 = vpop.f32.mrb[0].mxu0
    %4286 = vmatprep.mubr.f32.mxu0 0.0
    %4287 = vmatmul.mubr.f32.gmra.mrb[0].mxu0 %v3813
    %v4288 = vpop.f32.mrb[0].mxu0
    %v4289 = vadd.f32 0.0, %v4288
    %v4290 = vpop.f32.mrb[0].mxu0
    %4291 = vmatprep.mubr.f32.mxu0 0.0
    %4292 = vmatmul.mubr.f32.gmra.mrb[0].mxu0 %v3816
    %v4293 = vpop.f32.mrb[0].mxu0
    %v4294 = vadd.f32 0.0, %v4293
    %v4295 = vpop.f32.mrb[0].mxu0
    %4296 = vmatprep.mubr.f32.mxu0 0.0
    %4297 = vmatmul.mubr.f32.gmra.mrb[0].mxu0 %v3819
    %v4298 = vpop.f32.mrb[0].mxu0
    %v4299 = vadd.f32 0.0, %v4298
    %v4300 = vpop.f32.mrb[0].mxu0
    %4301 = vmatprep.mubr.f32.mxu0 0.0
    %4302 = vmatmul.mubr.f32.gmra.mrb[0].mxu0 %v4197
    %v4303 = vpop.f32.mrb[0].mxu0
    %v4304 = vadd.f32 0.0, %v4303
    %v4305 = vpop.f32.mrb[0].mxu0
    %4306 = vmatprep.mubr.f32.mxu0 0.0
    %4307 = vmatmul.mubr.f32.gmra.mrb[0].mxu0 %v3822
    %v4308 = vpop.f32.mrb[0].mxu0
    %v4309 = vadd.f32 0.0, %v4308
    %v4310 = vpop.f32.mrb[0].mxu0
    %4311 = vmatprep.mubr.f32.mxu0 0.0
    %4312 = vmatmul.mubr.f32.gmra.mrb[0].mxu0 %v3825
    %v4313 = vpop.f32.mrb[0].mxu0
    %v4314 = vadd.f32 0.0, %v4313
    %v4315 = vpop.f32.mrb[0].mxu0
    %4316 = vmatprep.mubr.f32.mxu0 0.0
    %4317 = vmatmul.mubr.f32.gmra.mrb[0].mxu0 %v3828
    %v4318 = vpop.f32.mrb[0].mxu0
    %v4319 = vadd.f32 0.0, %v4318
    %v4320 = vpop.f32.mrb[0].mxu0
    %4321 = vmatprep.mubr.f32.mxu0 0.0
    %4322 = vmatmul.mubr.f32.gmra.mrb[0].mxu0 %v3831
    %v4323 = vpop.f32.mrb[0].mxu0
    %v4324 = vadd.f32 0.0, %v4323
    %v4325 = vpop.f32.mrb[0].mxu0
    %4326 = vmatprep.mubr.f32.mxu0 0.0
    %4327 = vmatmul.mubr.f32.gmra.mrb[0].mxu0 %v3834
    %v4328 = vpop.f32.mrb[0].mxu0
    %v4329 = vadd.f32 0.0, %v4328
    %v4330 = vpop.f32.mrb[0].mxu0
    %4331 = vmatprep.mubr.f32.mxu0 0.0
    %4332 = vmatmul.mubr.f32.gmra.mrb[0].mxu0 %v3837
    %v4333 = vpop.f32.mrb[0].mxu0
    %v4334 = vadd.f32 0.0, %v4333
    %v4335 = vpop.f32.mrb[0].mxu0
    %4336 = vmatprep.mubr.f32.mxu0 0.0
    %4337 = vmatmul.mubr.f32.gmra.mrb[0].mxu0 %v3840
    %v4338 = vpop.f32.mrb[0].mxu0
    %v4339 = vadd.f32 0.0, %v4338
    %v4340 = vpop.f32.mrb[0].mxu0
    %4341 = vmatprep.mubr.f32.mxu0 0.0
    %4342 = vmatmul.mubr.f32.gmra.mrb[0].mxu0 %v4200
    %v4343 = vpop.f32.mrb[0].mxu0
    %v4344 = vadd.f32 0.0, %v4343
    %v4345 = vpop.f32.mrb[0].mxu0
    %4346 = vdwg.mxu0
    %v4347 = vadd.f32 %v4180, %v4269
    %v4348 = vadd.f32 %v4181, %v4274
    %v4349 = vadd.f32 %v4182, %v4279
    %v4350 = vadd.f32 %v4183, %v4284
    %v4351 = vadd.f32 %v4184, %v4289
    %v4352 = vadd.f32 %v4185, %v4294
    %v4353 = vadd.f32 %v4186, %v4299
    %v4354 = vadd.f32 %v4187, %v4304
    %v4355 = vadd.f32 %v4188, %v4309
    %v4356 = vadd.f32 %v4189, %v4314
    %v4357 = vadd.f32 %v4190, %v4319
    %v4358 = vadd.f32 %v4191, %v4324
    %v4359 = vadd.f32 %v4192, %v4329
    %v4360 = vadd.f32 %v4193, %v4334
    %v4361 = vadd.f32 %v4194, %v4339
    %v4362 = vadd.f32 %v4195, %v4344
    %v4363 = vsel %vm821, %v4347, 0.0
    %v4364 = vsel %vm821, %v4348, 0.0
    %v4365 = vadd.f32 %v4363, %v4364
    %v4366 = vsel %vm821, %v4349, 0.0
    %v4367 = vadd.f32 %v4365, %v4366
    %v4368 = vsel %vm821, %v4350, 0.0
    %v4369 = vadd.f32 %v4367, %v4368
    %v4370 = vsel %vm821, %v4351, 0.0
    %v4371 = vadd.f32 %v4369, %v4370
    %v4372 = vsel %vm821, %v4352, 0.0
    %v4373 = vadd.f32 %v4371, %v4372
    %v4374 = vsel %vm821, %v4353, 0.0
    %v4375 = vadd.f32 %v4373, %v4374
    %v4376 = vsel %vm821, %v4354, 0.0
    %v4377 = vadd.f32 %v4375, %v4376
    %v4378 = vsel %vm821, %v4355, 0.0
    %v4379 = vadd.f32 %v4377, %v4378
    %v4380 = vsel %vm821, %v4356, 0.0
    %v4381 = vadd.f32 %v4379, %v4380
    %v4382 = vsel %vm821, %v4357, 0.0
    %v4383 = vadd.f32 %v4381, %v4382
    %v4384 = vsel %vm821, %v4358, 0.0
    %v4385 = vadd.f32 %v4383, %v4384
    %v4386 = vsel %vm821, %v4359, 0.0
    %v4387 = vadd.f32 %v4385, %v4386
    %v4388 = vsel %vm821, %v4360, 0.0
    %v4389 = vadd.f32 %v4387, %v4388
    %v4390 = vsel %vm821, %v4361, 0.0
    %v4391 = vadd.f32 %v4389, %v4390
    %v4392 = vsel %vm821, %v4362, 0.0
    %v4393 = vadd.f32 %v4391, %v4392
    %v4394 = vrot.slane %v4393, 4
    %v4395 = vadd.f32 %v4393, %v4394
    %v4396 = vrot.slane %v4395, 2
    %v4397 = vadd.f32 %v4395, %v4396
    %v4398 = vrot.slane %v4397, 1
    %v4399 = vadd.f32 %v4397, %v4398
    %v4400 = vmul.f32 %v4347, %v4347
    %v4401 = vmul.f32 %v4348, %v4348
    %v4402 = vmul.f32 %v4349, %v4349
    %v4403 = vmul.f32 %v4350, %v4350
    %v4404 = vmul.f32 %v4351, %v4351
    %v4405 = vmul.f32 %v4352, %v4352
    %v4406 = vmul.f32 %v4353, %v4353
    %v4407 = vmul.f32 %v4354, %v4354
    %v4408 = vmul.f32 %v4355, %v4355
    %v4409 = vmul.f32 %v4356, %v4356
    %v4410 = vmul.f32 %v4357, %v4357
    %v4411 = vmul.f32 %v4358, %v4358
    %v4412 = vmul.f32 %v4359, %v4359
    %v4413 = vmul.f32 %v4360, %v4360
    %v4414 = vmul.f32 %v4361, %v4361
    %v4415 = vmul.f32 %v4362, %v4362
    %v4416 = vsel %vm821, %v4400, 0.0
    %v4417 = vsel %vm821, %v4401, 0.0
    %v4418 = vadd.f32 %v4416, %v4417
    %v4419 = vsel %vm821, %v4402, 0.0
    %v4420 = vadd.f32 %v4418, %v4419
    %v4421 = vsel %vm821, %v4403, 0.0
    %v4422 = vadd.f32 %v4420, %v4421
    %v4423 = vsel %vm821, %v4404, 0.0
    %v4424 = vadd.f32 %v4422, %v4423
    %v4425 = vsel %vm821, %v4405, 0.0
    %v4426 = vadd.f32 %v4424, %v4425
    %v4427 = vsel %vm821, %v4406, 0.0
    %v4428 = vadd.f32 %v4426, %v4427
    %v4429 = vsel %vm821, %v4407, 0.0
    %v4430 = vadd.f32 %v4428, %v4429
    %v4431 = vsel %vm821, %v4408, 0.0
    %v4432 = vadd.f32 %v4430, %v4431
    %v4433 = vsel %vm821, %v4409, 0.0
    %v4434 = vadd.f32 %v4432, %v4433
    %v4435 = vsel %vm821, %v4410, 0.0
    %v4436 = vadd.f32 %v4434, %v4435
    %v4437 = vsel %vm821, %v4411, 0.0
    %v4438 = vadd.f32 %v4436, %v4437
    %v4439 = vsel %vm821, %v4412, 0.0
    %v4440 = vadd.f32 %v4438, %v4439
    %v4441 = vsel %vm821, %v4413, 0.0
    %v4442 = vadd.f32 %v4440, %v4441
    %v4443 = vsel %vm821, %v4414, 0.0
    %v4444 = vadd.f32 %v4442, %v4443
    %v4445 = vsel %vm821, %v4415, 0.0
    %v4446 = vadd.f32 %v4444, %v4445
    %v4447 = vrot.slane %v4446, 4
    %v4448 = vadd.f32 %v4446, %v4447
    %v4449 = vrot.slane %v4448, 2
    %v4450 = vadd.f32 %v4448, %v4449
    %v4451 = vrot.slane %v4450, 1
    %v4452 = vadd.f32 %v4450, %v4451
    %v4453 = vmul.f32 %v4399, 0.0078125
    %v4454 = vmul.f32 %v4452, 0.0078125
    %v4455 = vmul.f32 %v4453, %v4453
    %v4456 = vsub.f32 %v4454, %v4455
    %v4457 = vmax.f32 %v4456, 0.0
    %v4458 = vadd.f32 %v4457, 1e-05
    %v4459 = vrsqrt.pop %v4458
    %v4460 = vsub.f32 %v4347, %v4453
    %v4461 = vsub.f32 %v4348, %v4453
    %v4462 = vsub.f32 %v4349, %v4453
    %v4463 = vsub.f32 %v4350, %v4453
    %v4464 = vsub.f32 %v4351, %v4453
    %v4465 = vsub.f32 %v4352, %v4453
    %v4466 = vsub.f32 %v4353, %v4453
    %v4467 = vsub.f32 %v4354, %v4453
    %v4468 = vsub.f32 %v4355, %v4453
    %v4469 = vsub.f32 %v4356, %v4453
    %v4470 = vsub.f32 %v4357, %v4453
    %v4471 = vsub.f32 %v4358, %v4453
    %v4472 = vsub.f32 %v4359, %v4453
    %v4473 = vsub.f32 %v4360, %v4453
    %v4474 = vsub.f32 %v4361, %v4453
    %v4475 = vsub.f32 %v4362, %v4453
    %v4476 = vmul.f32 %v4459, %v2761
    %v4477 = vlaneseq
    %v4478 = vshrl.u32 %v4477, 7
    %v4479 = vsub.s32 0, %v4478
    %v4480 = vrot.slane %v4476, %v4479
    %v4481 = vmul.f32 %v4460, %v4480
    %v4482 = vmul.f32 %v4461, %v4480
    %v4483 = vmul.f32 %v4462, %v4480
    %v4484 = vmul.f32 %v4463, %v4480
    %v4485 = vmul.f32 %v4464, %v4480
    %v4486 = vmul.f32 %v4465, %v4480
    %v4487 = vmul.f32 %v4466, %v4480
    %v4488 = vmul.f32 %v4467, %v4480
    %v4489 = vmul.f32 %v4468, %v4480
    %v4490 = vmul.f32 %v4469, %v4480
    %v4491 = vmul.f32 %v4470, %v4480
    %v4492 = vmul.f32 %v4471, %v4480
    %v4493 = vmul.f32 %v4472, %v4480
    %v4494 = vmul.f32 %v4473, %v4480
    %v4495 = vmul.f32 %v4474, %v4480
    %v4496 = vmul.f32 %v4475, %v4480
    %v4498 = vlaneseq
    %v4499 = vshrl.u32 %v4498, 7
    %v4500 = vsub.s32 0, %v4499
    %v4501 = vrot.slane %v2763, %v4500
    %v4503 = vadd.f32 %v4481, %v4501
    %v4504 = vadd.f32 %v4482, %v4501
    %v4505 = vadd.f32 %v4483, %v4501
    %v4506 = vadd.f32 %v4484, %v4501
    %v4507 = vadd.f32 %v4485, %v4501
    %v4508 = vadd.f32 %v4486, %v4501
    %v4509 = vadd.f32 %v4487, %v4501
    %v4510 = vadd.f32 %v4488, %v4501
    %v4511 = vadd.f32 %v4489, %v4501
    %v4512 = vadd.f32 %v4490, %v4501
    %v4513 = vadd.f32 %v4491, %v4501
    %v4514 = vadd.f32 %v4492, %v4501
    %v4515 = vadd.f32 %v4493, %v4501
    %v4516 = vadd.f32 %v4494, %v4501
    %v4517 = vadd.f32 %v4495, %v4501
    %v4518 = vadd.f32 %v4496, %v4501
    %v4519 = vmax.f32 %v4503, 0.0
    %v4520 = vmax.f32 %v4504, 0.0
    %v4521 = vmax.f32 %v4505, 0.0
    %v4522 = vmax.f32 %v4506, 0.0
    %v4523 = vmax.f32 %v4507, 0.0
    %v4524 = vmax.f32 %v4508, 0.0
    %v4525 = vmax.f32 %v4509, 0.0
    %v4526 = vmax.f32 %v4510, 0.0
    %v4527 = vmax.f32 %v4511, 0.0
    %v4528 = vmax.f32 %v4512, 0.0
    %v4529 = vmax.f32 %v4513, 0.0
    %v4530 = vmax.f32 %v4514, 0.0
    %v4531 = vmax.f32 %v4515, 0.0
    %v4532 = vmax.f32 %v4516, 0.0
    %v4533 = vmax.f32 %v4517, 0.0
    %v4534 = vmax.f32 %v4518, 0.0
    %v4536 = vlaneseq
    %v4537 = vshrl.u32 %v4536, 7
    %v4538 = vsub.s32 0, %v4537
    %v4539 = vrot.slane %v2765, %v4538
    %v4542 = vsel %vm821, %v4519, 0
    %v4545 = vsel %vm821, %v4520, 0
    %v4548 = vsel %vm821, %v4521, 0
    %v4551 = vsel %vm821, %v4522, 0
    %v4554 = vsel %vm821, %v4523, 0
    %v4557 = vsel %vm821, %v4524, 0
    %v4560 = vsel %vm821, %v4525, 0
    %v4563 = vsel %vm821, %v4526, 0
    %v4566 = vsel %vm821, %v4527, 0
    %v4569 = vsel %vm821, %v4528, 0
    %v4572 = vsel %vm821, %v4529, 0
    %v4575 = vsel %vm821, %v4530, 0
    %v4578 = vsel %vm821, %v4531, 0
    %v4581 = vsel %vm821, %v4532, 0
    %v4584 = vsel %vm821, %v4533, 0
    %v4587 = vsel %vm821, %v4534, 0
    %4589 = vmatprep.subr.mxu0 0.0
    %4590 = vmatpush1.msra.mxu0 %v2759
    %4591 = vmatprep.subr.mxu0 0.0
    %4592 = vmatpush1.msra.mxu0 %v2760
    %4593 = vmatprep.subr.mxu0 0.0
    %4594 = vmatpush1.msra.mxu0 0.0
    %4595 = vmatprep.subr.mxu0 0.0
    %4596 = vmatpush1.msra.mxu0 0.0
    %4597 = vmatprep.subr.mxu0 0.0
    %4598 = vmatpush1.msra.mxu0 0.0
    %4599 = vmatprep.subr.mxu0 0.0
    %4600 = vmatpush1.msra.mxu0 0.0
    %4601 = vmatprep.subr.mxu0 0.0
    %4602 = vmatpush1.msra.mxu0 0.0
    %4603 = vmatprep.subr.mxu0 0.0
    %4604 = vmatpush1.msra.mxu0 0.0
    %4605 = vmatprep.subr.mxu0 0.0
    %4606 = vmatpush1.msra.mxu0 0.0
    %4607 = vmatprep.subr.mxu0 0.0
    %4608 = vmatpush1.msra.mxu0 0.0
    %4609 = vmatprep.subr.mxu0 0.0
    %4610 = vmatpush1.msra.mxu0 0.0
    %4611 = vmatprep.subr.mxu0 0.0
    %4612 = vmatpush1.msra.mxu0 0.0
    %4613 = vmatprep.subr.mxu0 0.0
    %4614 = vmatpush1.msra.mxu0 0.0
    %4615 = vmatprep.subr.mxu0 0.0
    %4616 = vmatpush1.msra.mxu0 0.0
    %4617 = vmatprep.subr.mxu0 0.0
    %4618 = vmatpush1.msra.mxu0 0.0
    %4619 = vmatprep.subr.mxu0 0.0
    %4620 = vmatpush1.msra.mxu0 0.0
    %4621 = vmatprep.subr.mxu0 0.0
    %4622 = vmatpush1.msra.mxu0 0.0
    %4623 = vmatprep.subr.mxu0 0.0
    %4624 = vmatpush1.msra.mxu0 0.0
    %4625 = vmatprep.subr.mxu0 0.0
    %4626 = vmatpush1.msra.mxu0 0.0
    %4627 = vmatprep.subr.mxu0 0.0
    %4628 = vmatpush1.msra.mxu0 0.0
    %4629 = vmatprep.subr.mxu0 0.0
    %4630 = vmatpush1.msra.mxu0 0.0
    %4631 = vmatprep.subr.mxu0 0.0
    %4632 = vmatpush1.msra.mxu0 0.0
    %4633 = vmatprep.subr.mxu0 0.0
    %4634 = vmatpush1.msra.mxu0 0.0
    %4635 = vmatprep.subr.mxu0 0.0
    %4636 = vmatpush1.msra.mxu0 0.0
    %4637 = vmatprep.subr.mxu0 0.0
    %4638 = vmatpush1.msra.mxu0 0.0
    %4639 = vmatprep.subr.mxu0 0.0
    %4640 = vmatpush1.msra.mxu0 0.0
    %4641 = vmatprep.subr.mxu0 0.0
    %4642 = vmatpush1.msra.mxu0 0.0
    %4643 = vmatprep.subr.mxu0 0.0
    %4644 = vmatpush1.msra.mxu0 0.0
    %4645 = vmatprep.subr.mxu0 0.0
    %4646 = vmatpush1.msra.mxu0 0.0
    %4647 = vmatprep.subr.mxu0 0.0
    %4648 = vmatpush1.msra.mxu0 0.0
    %4649 = vmatprep.subr.mxu0 0.0
    %4650 = vmatpush1.msra.mxu0 0.0
    %4651 = vmatprep.subr.mxu0 0.0
    %4652 = vmatpush1.msra.mxu0 0.0
    %4653 = vmatprep.mubr.f32.mxu0 0.0
    %4654 = vmatmul.mubr.f32.gmra.mrb[0].mxu0 %v4542
    %v4655 = vpop.f32.mrb[0].mxu0
    %v4656 = vadd.f32 %v4539, %v4655
    %v4657 = vpop.f32.mrb[0].mxu0
    %4658 = vmatprep.mubr.f32.mxu0 0.0
    %4659 = vmatmul.mubr.f32.gmra.mrb[0].mxu0 %v4545
    %v4660 = vpop.f32.mrb[0].mxu0
    %v4661 = vadd.f32 %v4539, %v4660
    %v4662 = vpop.f32.mrb[0].mxu0
    %4663 = vmatprep.mubr.f32.mxu0 0.0
    %4664 = vmatmul.mubr.f32.gmra.mrb[0].mxu0 %v4548
    %v4665 = vpop.f32.mrb[0].mxu0
    %v4666 = vadd.f32 %v4539, %v4665
    %v4667 = vpop.f32.mrb[0].mxu0
    %4668 = vmatprep.mubr.f32.mxu0 0.0
    %4669 = vmatmul.mubr.f32.gmra.mrb[0].mxu0 %v4551
    %v4670 = vpop.f32.mrb[0].mxu0
    %v4671 = vadd.f32 %v4539, %v4670
    %v4672 = vpop.f32.mrb[0].mxu0
    %4673 = vmatprep.mubr.f32.mxu0 0.0
    %4674 = vmatmul.mubr.f32.gmra.mrb[0].mxu0 %v4554
    %v4675 = vpop.f32.mrb[0].mxu0
    %v4676 = vadd.f32 %v4539, %v4675
    %v4677 = vpop.f32.mrb[0].mxu0
    %4678 = vmatprep.mubr.f32.mxu0 0.0
    %4679 = vmatmul.mubr.f32.gmra.mrb[0].mxu0 %v4557
    %v4680 = vpop.f32.mrb[0].mxu0
    %v4681 = vadd.f32 %v4539, %v4680
    %v4682 = vpop.f32.mrb[0].mxu0
    %4683 = vmatprep.mubr.f32.mxu0 0.0
    %4684 = vmatmul.mubr.f32.gmra.mrb[0].mxu0 %v4560
    %v4685 = vpop.f32.mrb[0].mxu0
    %v4686 = vadd.f32 %v4539, %v4685
    %v4687 = vpop.f32.mrb[0].mxu0
    %4688 = vmatprep.mubr.f32.mxu0 0.0
    %4689 = vmatmul.mubr.f32.gmra.mrb[0].mxu0 %v4563
    %v4690 = vpop.f32.mrb[0].mxu0
    %v4691 = vadd.f32 %v4539, %v4690
    %v4692 = vpop.f32.mrb[0].mxu0
    %4693 = vmatprep.mubr.f32.mxu0 0.0
    %4694 = vmatmul.mubr.f32.gmra.mrb[0].mxu0 %v4566
    %v4695 = vpop.f32.mrb[0].mxu0
    %v4696 = vadd.f32 %v4539, %v4695
    %v4697 = vpop.f32.mrb[0].mxu0
    %4698 = vmatprep.mubr.f32.mxu0 0.0
    %4699 = vmatmul.mubr.f32.gmra.mrb[0].mxu0 %v4569
    %v4700 = vpop.f32.mrb[0].mxu0
    %v4701 = vadd.f32 %v4539, %v4700
    %v4702 = vpop.f32.mrb[0].mxu0
    %4703 = vmatprep.mubr.f32.mxu0 0.0
    %4704 = vmatmul.mubr.f32.gmra.mrb[0].mxu0 %v4572
    %v4705 = vpop.f32.mrb[0].mxu0
    %v4706 = vadd.f32 %v4539, %v4705
    %v4707 = vpop.f32.mrb[0].mxu0
    %4708 = vmatprep.mubr.f32.mxu0 0.0
    %4709 = vmatmul.mubr.f32.gmra.mrb[0].mxu0 %v4575
    %v4710 = vpop.f32.mrb[0].mxu0
    %v4711 = vadd.f32 %v4539, %v4710
    %v4712 = vpop.f32.mrb[0].mxu0
    %4713 = vmatprep.mubr.f32.mxu0 0.0
    %4714 = vmatmul.mubr.f32.gmra.mrb[0].mxu0 %v4578
    %v4715 = vpop.f32.mrb[0].mxu0
    %v4716 = vadd.f32 %v4539, %v4715
    %v4717 = vpop.f32.mrb[0].mxu0
    %4718 = vmatprep.mubr.f32.mxu0 0.0
    %4719 = vmatmul.mubr.f32.gmra.mrb[0].mxu0 %v4581
    %v4720 = vpop.f32.mrb[0].mxu0
    %v4721 = vadd.f32 %v4539, %v4720
    %v4722 = vpop.f32.mrb[0].mxu0
    %4723 = vmatprep.mubr.f32.mxu0 0.0
    %4724 = vmatmul.mubr.f32.gmra.mrb[0].mxu0 %v4584
    %v4725 = vpop.f32.mrb[0].mxu0
    %v4726 = vadd.f32 %v4539, %v4725
    %v4727 = vpop.f32.mrb[0].mxu0
    %4728 = vmatprep.mubr.f32.mxu0 0.0
    %4729 = vmatmul.mubr.f32.gmra.mrb[0].mxu0 %v4587
    %v4730 = vpop.f32.mrb[0].mxu0
    %v4731 = vadd.f32 %v4539, %v4730
    %v4732 = vpop.f32.mrb[0].mxu0
    %4733 = vdwg.mxu0
    %v4734 = vsel %vm821, %v4656, 0.0
    %v4735 = vsel %vm821, %v4661, 0.0
    %v4736 = vadd.f32 %v4734, %v4735
    %v4737 = vsel %vm821, %v4666, 0.0
    %v4738 = vadd.f32 %v4736, %v4737
    %v4739 = vsel %vm821, %v4671, 0.0
    %v4740 = vadd.f32 %v4738, %v4739
    %v4741 = vsel %vm821, %v4676, 0.0
    %v4742 = vadd.f32 %v4740, %v4741
    %v4743 = vsel %vm821, %v4681, 0.0
    %v4744 = vadd.f32 %v4742, %v4743
    %v4745 = vsel %vm821, %v4686, 0.0
    %v4746 = vadd.f32 %v4744, %v4745
    %v4747 = vsel %vm821, %v4691, 0.0
    %v4748 = vadd.f32 %v4746, %v4747
    %v4749 = vsel %vm821, %v4696, 0.0
    %v4750 = vadd.f32 %v4748, %v4749
    %v4751 = vsel %vm821, %v4701, 0.0
    %v4752 = vadd.f32 %v4750, %v4751
    %v4753 = vsel %vm821, %v4706, 0.0
    %v4754 = vadd.f32 %v4752, %v4753
    %v4755 = vsel %vm821, %v4711, 0.0
    %v4756 = vadd.f32 %v4754, %v4755
    %v4757 = vsel %vm821, %v4716, 0.0
    %v4758 = vadd.f32 %v4756, %v4757
    %v4759 = vsel %vm821, %v4721, 0.0
    %v4760 = vadd.f32 %v4758, %v4759
    %v4761 = vsel %vm821, %v4726, 0.0
    %v4762 = vadd.f32 %v4760, %v4761
    %v4763 = vsel %vm821, %v4731, 0.0
    %v4764 = vadd.f32 %v4762, %v4763
    %v4765 = vrot.slane %v4764, 4
    %v4766 = vadd.f32 %v4764, %v4765
    %v4767 = vrot.slane %v4766, 2
    %v4768 = vadd.f32 %v4766, %v4767
    %v4769 = vrot.slane %v4768, 1
    %v4770 = vadd.f32 %v4768, %v4769
    %v4771 = vmul.f32 %v4656, %v4656
    %v4772 = vmul.f32 %v4661, %v4661
    %v4773 = vmul.f32 %v4666, %v4666
    %v4774 = vmul.f32 %v4671, %v4671
    %v4775 = vmul.f32 %v4676, %v4676
    %v4776 = vmul.f32 %v4681, %v4681
    %v4777 = vmul.f32 %v4686, %v4686
    %v4778 = vmul.f32 %v4691, %v4691
    %v4779 = vmul.f32 %v4696, %v4696
    %v4780 = vmul.f32 %v4701, %v4701
    %v4781 = vmul.f32 %v4706, %v4706
    %v4782 = vmul.f32 %v4711, %v4711
    %v4783 = vmul.f32 %v4716, %v4716
    %v4784 = vmul.f32 %v4721, %v4721
    %v4785 = vmul.f32 %v4726, %v4726
    %v4786 = vmul.f32 %v4731, %v4731
    %v4787 = vsel %vm821, %v4771, 0.0
    %v4788 = vsel %vm821, %v4772, 0.0
    %v4789 = vadd.f32 %v4787, %v4788
    %v4790 = vsel %vm821, %v4773, 0.0
    %v4791 = vadd.f32 %v4789, %v4790
    %v4792 = vsel %vm821, %v4774, 0.0
    %v4793 = vadd.f32 %v4791, %v4792
    %v4794 = vsel %vm821, %v4775, 0.0
    %v4795 = vadd.f32 %v4793, %v4794
    %v4796 = vsel %vm821, %v4776, 0.0
    %v4797 = vadd.f32 %v4795, %v4796
    %v4798 = vsel %vm821, %v4777, 0.0
    %v4799 = vadd.f32 %v4797, %v4798
    %v4800 = vsel %vm821, %v4778, 0.0
    %v4801 = vadd.f32 %v4799, %v4800
    %v4802 = vsel %vm821, %v4779, 0.0
    %v4803 = vadd.f32 %v4801, %v4802
    %v4804 = vsel %vm821, %v4780, 0.0
    %v4805 = vadd.f32 %v4803, %v4804
    %v4806 = vsel %vm821, %v4781, 0.0
    %v4807 = vadd.f32 %v4805, %v4806
    %v4808 = vsel %vm821, %v4782, 0.0
    %v4809 = vadd.f32 %v4807, %v4808
    %v4810 = vsel %vm821, %v4783, 0.0
    %v4811 = vadd.f32 %v4809, %v4810
    %v4812 = vsel %vm821, %v4784, 0.0
    %v4813 = vadd.f32 %v4811, %v4812
    %v4814 = vsel %vm821, %v4785, 0.0
    %v4815 = vadd.f32 %v4813, %v4814
    %v4816 = vsel %vm821, %v4786, 0.0
    %v4817 = vadd.f32 %v4815, %v4816
    %v4818 = vrot.slane %v4817, 4
    %v4819 = vadd.f32 %v4817, %v4818
    %v4820 = vrot.slane %v4819, 2
    %v4821 = vadd.f32 %v4819, %v4820
    %v4822 = vrot.slane %v4821, 1
    %v4823 = vadd.f32 %v4821, %v4822
    %v4824 = vmul.f32 %v4770, 0.0078125
    %v4825 = vmul.f32 %v4823, 0.0078125
    %v4826 = vmul.f32 %v4824, %v4824
    %v4827 = vsub.f32 %v4825, %v4826
    %v4828 = vmax.f32 %v4827, 0.0
    %v4829 = vadd.f32 %v4828, 1e-05
    %v4830 = vrsqrt.pop %v4829
    %v4831 = vsub.f32 %v4656, %v4824
    %v4832 = vsub.f32 %v4661, %v4824
    %v4833 = vsub.f32 %v4666, %v4824
    %v4834 = vsub.f32 %v4671, %v4824
    %v4835 = vsub.f32 %v4676, %v4824
    %v4836 = vsub.f32 %v4681, %v4824
    %v4837 = vsub.f32 %v4686, %v4824
    %v4838 = vsub.f32 %v4691, %v4824
    %v4839 = vsub.f32 %v4696, %v4824
    %v4840 = vsub.f32 %v4701, %v4824
    %v4841 = vsub.f32 %v4706, %v4824
    %v4842 = vsub.f32 %v4711, %v4824
    %v4843 = vsub.f32 %v4716, %v4824
    %v4844 = vsub.f32 %v4721, %v4824
    %v4845 = vsub.f32 %v4726, %v4824
    %v4846 = vsub.f32 %v4731, %v4824
    %v4847 = vmul.f32 %v4830, %v2767
    %v4848 = vlaneseq
    %v4849 = vshrl.u32 %v4848, 7
    %v4850 = vsub.s32 0, %v4849
    %v4851 = vrot.slane %v4847, %v4850
    %v4852 = vmul.f32 %v4831, %v4851
    %v4853 = vmul.f32 %v4832, %v4851
    %v4854 = vmul.f32 %v4833, %v4851
    %v4855 = vmul.f32 %v4834, %v4851
    %v4856 = vmul.f32 %v4835, %v4851
    %v4857 = vmul.f32 %v4836, %v4851
    %v4858 = vmul.f32 %v4837, %v4851
    %v4859 = vmul.f32 %v4838, %v4851
    %v4860 = vmul.f32 %v4839, %v4851
    %v4861 = vmul.f32 %v4840, %v4851
    %v4862 = vmul.f32 %v4841, %v4851
    %v4863 = vmul.f32 %v4842, %v4851
    %v4864 = vmul.f32 %v4843, %v4851
    %v4865 = vmul.f32 %v4844, %v4851
    %v4866 = vmul.f32 %v4845, %v4851
    %v4867 = vmul.f32 %v4846, %v4851
    %v4869 = vlaneseq
    %v4870 = vshrl.u32 %v4869, 7
    %v4871 = vsub.s32 0, %v4870
    %v4872 = vrot.slane %v2769, %v4871
    %v4874 = vadd.f32 %v4852, %v4872
    %v4875 = vadd.f32 %v4853, %v4872
    %v4876 = vadd.f32 %v4854, %v4872
    %v4877 = vadd.f32 %v4855, %v4872
    %v4878 = vadd.f32 %v4856, %v4872
    %v4879 = vadd.f32 %v4857, %v4872
    %v4880 = vadd.f32 %v4858, %v4872
    %v4881 = vadd.f32 %v4859, %v4872
    %v4882 = vadd.f32 %v4860, %v4872
    %v4883 = vadd.f32 %v4861, %v4872
    %v4884 = vadd.f32 %v4862, %v4872
    %v4885 = vadd.f32 %v4863, %v4872
    %v4886 = vadd.f32 %v4864, %v4872
    %v4887 = vadd.f32 %v4865, %v4872
    %v4888 = vadd.f32 %v4866, %v4872
    %v4889 = vadd.f32 %v4867, %v4872
    %s4890 = scalar_lea.vmem %s7, 48
    %v4891 = vld [vmem:[%s4890] sm:$0xff]
    %v4892 = vld [vmem:[%s4890 + $0x8] sm:$0xff]
    %v4893 = vld [vmem:[%s4890 + $0x10] sm:$0xff]
    %v4894 = vld [vmem:[%s4890 + $0x18] sm:$0xff]
    %v4895 = vld [vmem:[%s4890 + $0x20] sm:$0xff]
    %v4896 = vld [vmem:[%s4890 + $0x28] sm:$0xff]
    %s4897 = scalar_lea.vmem %s8, 48
    %v4898 = vld [vmem:[%s4897] sm:$0xff]
    %v4899 = vld [vmem:[%s4897 + $0x8] sm:$0xff]
    %v4900 = vld [vmem:[%s4897 + $0x10] sm:$0xff]
    %v4901 = vld [vmem:[%s4897 + $0x18] sm:$0xff]
    %v4902 = vld [vmem:[%s4897 + $0x20] sm:$0xff]
    %v4903 = vld [vmem:[%s4897 + $0x28] sm:$0xff]
    %s4904 = scalar_lea.vmem %s9, 16
    %v4905 = vld [vmem:[%s4904] sm:$0xff]
    %v4906 = vld [vmem:[%s4904 + $0x8] sm:$0xff]
    %s4907 = scalar_lea.vmem %s10, 5
    %v4908 = vld [vmem:[%s4907] sm:$0x1]
    %s4909 = scalar_lea.vmem %s10, 6
    %v4910 = vld [vmem:[%s4909] sm:$0x1]
    %s4911 = scalar_lea.vmem %s10, 7
    %v4912 = vld [vmem:[%s4911] sm:$0x1]
    %s4913 = scalar_lea.vmem %s10, 8
    %v4914 = vld [vmem:[%s4913] sm:$0x1]
    %s4915 = scalar_lea.vmem %s10, 9
    %v4916 = vld [vmem:[%s4915] sm:$0x1]
    %4917 = vmatprep.subr.mxu0 0.0
    %4918 = vmatpush1.msra.mxu0 %v4891
    %4919 = vmatprep.subr.mxu0 0.0
    %4920 = vmatpush1.msra.mxu0 %v4892
    %4921 = vmatprep.subr.mxu0 0.0
    %4922 = vmatpush1.msra.mxu0 0.0
    %4923 = vmatprep.subr.mxu0 0.0
    %4924 = vmatpush1.msra.mxu0 0.0
    %4925 = vmatprep.subr.mxu0 0.0
    %4926 = vmatpush1.msra.mxu0 0.0
    %4927 = vmatprep.subr.mxu0 0.0
    %4928 = vmatpush1.msra.mxu0 0.0
    %4929 = vmatprep.subr.mxu0 0.0
    %4930 = vmatpush1.msra.mxu0 0.0
    %4931 = vmatprep.subr.mxu0 0.0
    %4932 = vmatpush1.msra.mxu0 0.0
    %4933 = vmatprep.subr.mxu0 0.0
    %4934 = vmatpush1.msra.mxu0 0.0
    %4935 = vmatprep.subr.mxu0 0.0
    %4936 = vmatpush1.msra.mxu0 0.0
    %4937 = vmatprep.subr.mxu0 0.0
    %4938 = vmatpush1.msra.mxu0 0.0
    %4939 = vmatprep.subr.mxu0 0.0
    %4940 = vmatpush1.msra.mxu0 0.0
    %4941 = vmatprep.subr.mxu0 0.0
    %4942 = vmatpush1.msra.mxu0 0.0
    %4943 = vmatprep.subr.mxu0 0.0
    %4944 = vmatpush1.msra.mxu0 0.0
    %4945 = vmatprep.subr.mxu0 0.0
    %4946 = vmatpush1.msra.mxu0 0.0
    %4947 = vmatprep.subr.mxu0 0.0
    %4948 = vmatpush1.msra.mxu0 0.0
    %4949 = vmatprep.subr.mxu0 0.0
    %4950 = vmatpush1.msra.mxu0 0.0
    %4951 = vmatprep.subr.mxu0 0.0
    %4952 = vmatpush1.msra.mxu0 0.0
    %4953 = vmatprep.subr.mxu0 0.0
    %4954 = vmatpush1.msra.mxu0 0.0
    %4955 = vmatprep.subr.mxu0 0.0
    %4956 = vmatpush1.msra.mxu0 0.0
    %4957 = vmatprep.subr.mxu0 0.0
    %4958 = vmatpush1.msra.mxu0 0.0
    %4959 = vmatprep.subr.mxu0 0.0
    %4960 = vmatpush1.msra.mxu0 0.0
    %4961 = vmatprep.subr.mxu0 0.0
    %4962 = vmatpush1.msra.mxu0 0.0
    %4963 = vmatprep.subr.mxu0 0.0
    %4964 = vmatpush1.msra.mxu0 0.0
    %4965 = vmatprep.subr.mxu0 0.0
    %4966 = vmatpush1.msra.mxu0 0.0
    %4967 = vmatprep.subr.mxu0 0.0
    %4968 = vmatpush1.msra.mxu0 0.0
    %4969 = vmatprep.subr.mxu0 0.0
    %4970 = vmatpush1.msra.mxu0 0.0
    %4971 = vmatprep.subr.mxu0 0.0
    %4972 = vmatpush1.msra.mxu0 0.0
    %4973 = vmatprep.subr.mxu0 0.0
    %4974 = vmatpush1.msra.mxu0 0.0
    %4975 = vmatprep.subr.mxu0 0.0
    %4976 = vmatpush1.msra.mxu0 0.0
    %4977 = vmatprep.subr.mxu0 0.0
    %4978 = vmatpush1.msra.mxu0 0.0
    %4979 = vmatprep.subr.mxu0 0.0
    %4980 = vmatpush1.msra.mxu0 0.0
    %4981 = vmatprep.mubr.f32.mxu0 0.0
    %4982 = vmatmul.mubr.f32.gmra.mrb[0].mxu0 %v2771
    %v4983 = vpop.f32.mrb[0].mxu0
    %v4984 = vadd.f32 0.0, %v4983
    %v4985 = vpop.f32.mrb[0].mxu0
    %4986 = vmatprep.mubr.f32.mxu0 0.0
    %4987 = vmatmul.mubr.f32.gmra.mrb[0].mxu0 %v2774
    %v4988 = vpop.f32.mrb[0].mxu0
    %v4989 = vadd.f32 0.0, %v4988
    %v4990 = vpop.f32.mrb[0].mxu0
    %4991 = vmatprep.mubr.f32.mxu0 0.0
    %4992 = vmatmul.mubr.f32.gmra.mrb[0].mxu0 %v2777
    %v4993 = vpop.f32.mrb[0].mxu0
    %v4994 = vadd.f32 0.0, %v4993
    %v4995 = vpop.f32.mrb[0].mxu0
    %4996 = vmatprep.mubr.f32.mxu0 0.0
    %4997 = vmatmul.mubr.f32.gmra.mrb[0].mxu0 %v2780
    %v4998 = vpop.f32.mrb[0].mxu0
    %v4999 = vadd.f32 0.0, %v4998
    %v5000 = vpop.f32.mrb[0].mxu0
    %5001 = vmatprep.mubr.f32.mxu0 0.0
    %5002 = vmatmul.mubr.f32.gmra.mrb[0].mxu0 %v2783
    %v5003 = vpop.f32.mrb[0].mxu0
    %v5004 = vadd.f32 0.0, %v5003
    %v5005 = vpop.f32.mrb[0].mxu0
    %5006 = vmatprep.mubr.f32.mxu0 0.0
    %5007 = vmatmul.mubr.f32.gmra.mrb[0].mxu0 %v2786
    %v5008 = vpop.f32.mrb[0].mxu0
    %v5009 = vadd.f32 0.0, %v5008
    %v5010 = vpop.f32.mrb[0].mxu0
    %5011 = vmatprep.mubr.f32.mxu0 0.0
    %5012 = vmatmul.mubr.f32.gmra.mrb[0].mxu0 %v2789
    %v5013 = vpop.f32.mrb[0].mxu0
    %v5014 = vadd.f32 0.0, %v5013
    %v5015 = vpop.f32.mrb[0].mxu0
    %5016 = vmatprep.mubr.f32.mxu0 0.0
    %5017 = vmatmul.mubr.f32.gmra.mrb[0].mxu0 %v2792
    %v5018 = vpop.f32.mrb[0].mxu0
    %v5019 = vadd.f32 0.0, %v5018
    %v5020 = vpop.f32.mrb[0].mxu0
    %5021 = vmatprep.mubr.f32.mxu0 0.0
    %5022 = vmatmul.mubr.f32.gmra.mrb[0].mxu0 %v2795
    %v5023 = vpop.f32.mrb[0].mxu0
    %v5024 = vadd.f32 0.0, %v5023
    %v5025 = vpop.f32.mrb[0].mxu0
    %5026 = vmatprep.mubr.f32.mxu0 0.0
    %5027 = vmatmul.mubr.f32.gmra.mrb[0].mxu0 %v2798
    %v5028 = vpop.f32.mrb[0].mxu0
    %v5029 = vadd.f32 0.0, %v5028
    %v5030 = vpop.f32.mrb[0].mxu0
    %5031 = vmatprep.mubr.f32.mxu0 0.0
    %5032 = vmatmul.mubr.f32.gmra.mrb[0].mxu0 %v2801
    %v5033 = vpop.f32.mrb[0].mxu0
    %v5034 = vadd.f32 0.0, %v5033
    %v5035 = vpop.f32.mrb[0].mxu0
    %5036 = vmatprep.mubr.f32.mxu0 0.0
    %5037 = vmatmul.mubr.f32.gmra.mrb[0].mxu0 %v2804
    %v5038 = vpop.f32.mrb[0].mxu0
    %v5039 = vadd.f32 0.0, %v5038
    %v5040 = vpop.f32.mrb[0].mxu0
    %5041 = vmatprep.mubr.f32.mxu0 0.0
    %5042 = vmatmul.mubr.f32.gmra.mrb[0].mxu0 %v2807
    %v5043 = vpop.f32.mrb[0].mxu0
    %v5044 = vadd.f32 0.0, %v5043
    %v5045 = vpop.f32.mrb[0].mxu0
    %5046 = vmatprep.mubr.f32.mxu0 0.0
    %5047 = vmatmul.mubr.f32.gmra.mrb[0].mxu0 %v2810
    %v5048 = vpop.f32.mrb[0].mxu0
    %v5049 = vadd.f32 0.0, %v5048
    %v5050 = vpop.f32.mrb[0].mxu0
    %5051 = vmatprep.mubr.f32.mxu0 0.0
    %5052 = vmatmul.mubr.f32.gmra.mrb[0].mxu0 %v2813
    %v5053 = vpop.f32.mrb[0].mxu0
    %v5054 = vadd.f32 0.0, %v5053
    %v5055 = vpop.f32.mrb[0].mxu0
    %5056 = vmatprep.mubr.f32.mxu0 0.0
    %5057 = vmatmul.mubr.f32.gmra.mrb[0].mxu0 %v2816
    %v5058 = vpop.f32.mrb[0].mxu0
    %v5059 = vadd.f32 0.0, %v5058
    %v5060 = vpop.f32.mrb[0].mxu0
    %5061 = vmatprep.mubr.f32.mxu0 0.0
    %5062 = vmatmul.mubr.f32.gmra.mrb[0].mxu0 %v2819
    %v5063 = vpop.f32.mrb[0].mxu0
    %v5064 = vadd.f32 0.0, %v5063
    %v5065 = vpop.f32.mrb[0].mxu0
    %5066 = vmatprep.mubr.f32.mxu0 0.0
    %5067 = vmatmul.mubr.f32.gmra.mrb[0].mxu0 %v2822
    %v5068 = vpop.f32.mrb[0].mxu0
    %v5069 = vadd.f32 0.0, %v5068
    %v5070 = vpop.f32.mrb[0].mxu0
    %5071 = vmatprep.mubr.f32.mxu0 0.0
    %5072 = vmatmul.mubr.f32.gmra.mrb[0].mxu0 %v2825
    %v5073 = vpop.f32.mrb[0].mxu0
    %v5074 = vadd.f32 0.0, %v5073
    %v5075 = vpop.f32.mrb[0].mxu0
    %5076 = vmatprep.mubr.f32.mxu0 0.0
    %5077 = vmatmul.mubr.f32.gmra.mrb[0].mxu0 %v2828
    %v5078 = vpop.f32.mrb[0].mxu0
    %v5079 = vadd.f32 0.0, %v5078
    %v5080 = vpop.f32.mrb[0].mxu0
    %5081 = vmatprep.mubr.f32.mxu0 0.0
    %5082 = vmatmul.mubr.f32.gmra.mrb[0].mxu0 %v2831
    %v5083 = vpop.f32.mrb[0].mxu0
    %v5084 = vadd.f32 0.0, %v5083
    %v5085 = vpop.f32.mrb[0].mxu0
    %5086 = vmatprep.mubr.f32.mxu0 0.0
    %5087 = vmatmul.mubr.f32.gmra.mrb[0].mxu0 %v2834
    %v5088 = vpop.f32.mrb[0].mxu0
    %v5089 = vadd.f32 0.0, %v5088
    %v5090 = vpop.f32.mrb[0].mxu0
    %5091 = vmatprep.mubr.f32.mxu0 0.0
    %5092 = vmatmul.mubr.f32.gmra.mrb[0].mxu0 %v2837
    %v5093 = vpop.f32.mrb[0].mxu0
    %v5094 = vadd.f32 0.0, %v5093
    %v5095 = vpop.f32.mrb[0].mxu0
    %5096 = vmatprep.mubr.f32.mxu0 0.0
    %5097 = vmatmul.mubr.f32.gmra.mrb[0].mxu0 %v2840
    %v5098 = vpop.f32.mrb[0].mxu0
    %v5099 = vadd.f32 0.0, %v5098
    %v5100 = vpop.f32.mrb[0].mxu0
    %5101 = vmatprep.mubr.f32.mxu0 0.0
    %5102 = vmatmul.mubr.f32.gmra.mrb[0].mxu0 %v2843
    %v5103 = vpop.f32.mrb[0].mxu0
    %v5104 = vadd.f32 0.0, %v5103
    %v5105 = vpop.f32.mrb[0].mxu0
    %5106 = vmatprep.mubr.f32.mxu0 0.0
    %5107 = vmatmul.mubr.f32.gmra.mrb[0].mxu0 %v2846
    %v5108 = vpop.f32.mrb[0].mxu0
    %v5109 = vadd.f32 0.0, %v5108
    %v5110 = vpop.f32.mrb[0].mxu0
    %5111 = vmatprep.mubr.f32.mxu0 0.0
    %5112 = vmatmul.mubr.f32.gmra.mrb[0].mxu0 %v2849
    %v5113 = vpop.f32.mrb[0].mxu0
    %v5114 = vadd.f32 0.0, %v5113
    %v5115 = vpop.f32.mrb[0].mxu0
    %5116 = vmatprep.mubr.f32.mxu0 0.0
    %5117 = vmatmul.mubr.f32.gmra.mrb[0].mxu0 %v2852
    %v5118 = vpop.f32.mrb[0].mxu0
    %v5119 = vadd.f32 0.0, %v5118
    %v5120 = vpop.f32.mrb[0].mxu0
    %5121 = vmatprep.mubr.f32.mxu0 0.0
    %5122 = vmatmul.mubr.f32.gmra.mrb[0].mxu0 %v2855
    %v5123 = vpop.f32.mrb[0].mxu0
    %v5124 = vadd.f32 0.0, %v5123
    %v5125 = vpop.f32.mrb[0].mxu0
    %5126 = vmatprep.mubr.f32.mxu0 0.0
    %5127 = vmatmul.mubr.f32.gmra.mrb[0].mxu0 %v2858
    %v5128 = vpop.f32.mrb[0].mxu0
    %v5129 = vadd.f32 0.0, %v5128
    %v5130 = vpop.f32.mrb[0].mxu0
    %5131 = vmatprep.mubr.f32.mxu0 0.0
    %5132 = vmatmul.mubr.f32.gmra.mrb[0].mxu0 %v2861
    %v5133 = vpop.f32.mrb[0].mxu0
    %v5134 = vadd.f32 0.0, %v5133
    %v5135 = vpop.f32.mrb[0].mxu0
    %5136 = vmatprep.mubr.f32.mxu0 0.0
    %5137 = vmatmul.mubr.f32.gmra.mrb[0].mxu0 %v2864
    %v5138 = vpop.f32.mrb[0].mxu0
    %v5139 = vadd.f32 0.0, %v5138
    %v5140 = vpop.f32.mrb[0].mxu0
    %5141 = vdwg.mxu0
    %5142 = vmatprep.subr.mxu0 0.0
    %5143 = vmatpush1.msra.mxu0 %v4893
    %5144 = vmatprep.subr.mxu0 0.0
    %5145 = vmatpush1.msra.mxu0 %v4894
    %5146 = vmatprep.subr.mxu0 0.0
    %5147 = vmatpush1.msra.mxu0 0.0
    %5148 = vmatprep.subr.mxu0 0.0
    %5149 = vmatpush1.msra.mxu0 0.0
    %5150 = vmatprep.subr.mxu0 0.0
    %5151 = vmatpush1.msra.mxu0 0.0
    %5152 = vmatprep.subr.mxu0 0.0
    %5153 = vmatpush1.msra.mxu0 0.0
    %5154 = vmatprep.subr.mxu0 0.0
    %5155 = vmatpush1.msra.mxu0 0.0
    %5156 = vmatprep.subr.mxu0 0.0
    %5157 = vmatpush1.msra.mxu0 0.0
    %5158 = vmatprep.subr.mxu0 0.0
    %5159 = vmatpush1.msra.mxu0 0.0
    %5160 = vmatprep.subr.mxu0 0.0
    %5161 = vmatpush1.msra.mxu0 0.0
    %5162 = vmatprep.subr.mxu0 0.0
    %5163 = vmatpush1.msra.mxu0 0.0
    %5164 = vmatprep.subr.mxu0 0.0
    %5165 = vmatpush1.msra.mxu0 0.0
    %5166 = vmatprep.subr.mxu0 0.0
    %5167 = vmatpush1.msra.mxu0 0.0
    %5168 = vmatprep.subr.mxu0 0.0
    %5169 = vmatpush1.msra.mxu0 0.0
    %5170 = vmatprep.subr.mxu0 0.0
    %5171 = vmatpush1.msra.mxu0 0.0
    %5172 = vmatprep.subr.mxu0 0.0
    %5173 = vmatpush1.msra.mxu0 0.0
    %5174 = vmatprep.subr.mxu0 0.0
    %5175 = vmatpush1.msra.mxu0 0.0
    %5176 = vmatprep.subr.mxu0 0.0
    %5177 = vmatpush1.msra.mxu0 0.0
    %5178 = vmatprep.subr.mxu0 0.0
    %5179 = vmatpush1.msra.mxu0 0.0
    %5180 = vmatprep.subr.mxu0 0.0
    %5181 = vmatpush1.msra.mxu0 0.0
    %5182 = vmatprep.subr.mxu0 0.0
    %5183 = vmatpush1.msra.mxu0 0.0
    %5184 = vmatprep.subr.mxu0 0.0
    %5185 = vmatpush1.msra.mxu0 0.0
    %5186 = vmatprep.subr.mxu0 0.0
    %5187 = vmatpush1.msra.mxu0 0.0
    %5188 = vmatprep.subr.mxu0 0.0
    %5189 = vmatpush1.msra.mxu0 0.0
    %5190 = vmatprep.subr.mxu0 0.0
    %5191 = vmatpush1.msra.mxu0 0.0
    %5192 = vmatprep.subr.mxu0 0.0
    %5193 = vmatpush1.msra.mxu0 0.0
    %5194 = vmatprep.subr.mxu0 0.0
    %5195 = vmatpush1.msra.mxu0 0.0
    %5196 = vmatprep.subr.mxu0 0.0
    %5197 = vmatpush1.msra.mxu0 0.0
    %5198 = vmatprep.subr.mxu0 0.0
    %5199 = vmatpush1.msra.mxu0 0.0
    %5200 = vmatprep.subr.mxu0 0.0
    %5201 = vmatpush1.msra.mxu0 0.0
    %5202 = vmatprep.subr.mxu0 0.0
    %5203 = vmatpush1.msra.mxu0 0.0
    %5204 = vmatprep.subr.mxu0 0.0
    %5205 = vmatpush1.msra.mxu0 0.0
    %5206 = vmatprep.mubr.f32.mxu0 0.0
    %5207 = vmatmul.mubr.f32.gmra.mrb[0].mxu0 %v3092
    %v5208 = vpop.f32.mrb[0].mxu0
    %v5209 = vadd.f32 0.0, %v5208
    %v5210 = vpop.f32.mrb[0].mxu0
    %5211 = vmatprep.mubr.f32.mxu0 0.0
    %5212 = vmatmul.mubr.f32.gmra.mrb[0].mxu0 %v3095
    %v5213 = vpop.f32.mrb[0].mxu0
    %v5214 = vadd.f32 0.0, %v5213
    %v5215 = vpop.f32.mrb[0].mxu0
    %5216 = vmatprep.mubr.f32.mxu0 0.0
    %5217 = vmatmul.mubr.f32.gmra.mrb[0].mxu0 %v3098
    %v5218 = vpop.f32.mrb[0].mxu0
    %v5219 = vadd.f32 0.0, %v5218
    %v5220 = vpop.f32.mrb[0].mxu0
    %5221 = vmatprep.mubr.f32.mxu0 0.0
    %5222 = vmatmul.mubr.f32.gmra.mrb[0].mxu0 %v3101
    %v5223 = vpop.f32.mrb[0].mxu0
    %v5224 = vadd.f32 0.0, %v5223
    %v5225 = vpop.f32.mrb[0].mxu0
    %5226 = vmatprep.mubr.f32.mxu0 0.0
    %5227 = vmatmul.mubr.f32.gmra.mrb[0].mxu0 %v3104
    %v5228 = vpop.f32.mrb[0].mxu0
    %v5229 = vadd.f32 0.0, %v5228
    %v5230 = vpop.f32.mrb[0].mxu0
    %5231 = vmatprep.mubr.f32.mxu0 0.0
    %5232 = vmatmul.mubr.f32.gmra.mrb[0].mxu0 %v3107
    %v5233 = vpop.f32.mrb[0].mxu0
    %v5234 = vadd.f32 0.0, %v5233
    %v5235 = vpop.f32.mrb[0].mxu0
    %5236 = vmatprep.mubr.f32.mxu0 0.0
    %5237 = vmatmul.mubr.f32.gmra.mrb[0].mxu0 %v3110
    %v5238 = vpop.f32.mrb[0].mxu0
    %v5239 = vadd.f32 0.0, %v5238
    %v5240 = vpop.f32.mrb[0].mxu0
    %5241 = vmatprep.mubr.f32.mxu0 0.0
    %5242 = vmatmul.mubr.f32.gmra.mrb[0].mxu0 %v3113
    %v5243 = vpop.f32.mrb[0].mxu0
    %v5244 = vadd.f32 0.0, %v5243
    %v5245 = vpop.f32.mrb[0].mxu0
    %5246 = vmatprep.mubr.f32.mxu0 0.0
    %5247 = vmatmul.mubr.f32.gmra.mrb[0].mxu0 %v3116
    %v5248 = vpop.f32.mrb[0].mxu0
    %v5249 = vadd.f32 0.0, %v5248
    %v5250 = vpop.f32.mrb[0].mxu0
    %5251 = vmatprep.mubr.f32.mxu0 0.0
    %5252 = vmatmul.mubr.f32.gmra.mrb[0].mxu0 %v3119
    %v5253 = vpop.f32.mrb[0].mxu0
    %v5254 = vadd.f32 0.0, %v5253
    %v5255 = vpop.f32.mrb[0].mxu0
    %5256 = vmatprep.mubr.f32.mxu0 0.0
    %5257 = vmatmul.mubr.f32.gmra.mrb[0].mxu0 %v3122
    %v5258 = vpop.f32.mrb[0].mxu0
    %v5259 = vadd.f32 0.0, %v5258
    %v5260 = vpop.f32.mrb[0].mxu0
    %5261 = vmatprep.mubr.f32.mxu0 0.0
    %5262 = vmatmul.mubr.f32.gmra.mrb[0].mxu0 %v3125
    %v5263 = vpop.f32.mrb[0].mxu0
    %v5264 = vadd.f32 0.0, %v5263
    %v5265 = vpop.f32.mrb[0].mxu0
    %5266 = vmatprep.mubr.f32.mxu0 0.0
    %5267 = vmatmul.mubr.f32.gmra.mrb[0].mxu0 %v3128
    %v5268 = vpop.f32.mrb[0].mxu0
    %v5269 = vadd.f32 0.0, %v5268
    %v5270 = vpop.f32.mrb[0].mxu0
    %5271 = vmatprep.mubr.f32.mxu0 0.0
    %5272 = vmatmul.mubr.f32.gmra.mrb[0].mxu0 %v3131
    %v5273 = vpop.f32.mrb[0].mxu0
    %v5274 = vadd.f32 0.0, %v5273
    %v5275 = vpop.f32.mrb[0].mxu0
    %5276 = vmatprep.mubr.f32.mxu0 0.0
    %5277 = vmatmul.mubr.f32.gmra.mrb[0].mxu0 %v3134
    %v5278 = vpop.f32.mrb[0].mxu0
    %v5279 = vadd.f32 0.0, %v5278
    %v5280 = vpop.f32.mrb[0].mxu0
    %5281 = vmatprep.mubr.f32.mxu0 0.0
    %5282 = vmatmul.mubr.f32.gmra.mrb[0].mxu0 %v3137
    %v5283 = vpop.f32.mrb[0].mxu0
    %v5284 = vadd.f32 0.0, %v5283
    %v5285 = vpop.f32.mrb[0].mxu0
    %5286 = vmatprep.mubr.f32.mxu0 0.0
    %5287 = vmatmul.mubr.f32.gmra.mrb[0].mxu0 %v3140
    %v5288 = vpop.f32.mrb[0].mxu0
    %v5289 = vadd.f32 0.0, %v5288
    %v5290 = vpop.f32.mrb[0].mxu0
    %5291 = vmatprep.mubr.f32.mxu0 0.0
    %5292 = vmatmul.mubr.f32.gmra.mrb[0].mxu0 %v3143
    %v5293 = vpop.f32.mrb[0].mxu0
    %v5294 = vadd.f32 0.0, %v5293
    %v5295 = vpop.f32.mrb[0].mxu0
    %5296 = vmatprep.mubr.f32.mxu0 0.0
    %5297 = vmatmul.mubr.f32.gmra.mrb[0].mxu0 %v3146
    %v5298 = vpop.f32.mrb[0].mxu0
    %v5299 = vadd.f32 0.0, %v5298
    %v5300 = vpop.f32.mrb[0].mxu0
    %5301 = vmatprep.mubr.f32.mxu0 0.0
    %5302 = vmatmul.mubr.f32.gmra.mrb[0].mxu0 %v3149
    %v5303 = vpop.f32.mrb[0].mxu0
    %v5304 = vadd.f32 0.0, %v5303
    %v5305 = vpop.f32.mrb[0].mxu0
    %5306 = vmatprep.mubr.f32.mxu0 0.0
    %5307 = vmatmul.mubr.f32.gmra.mrb[0].mxu0 %v3152
    %v5308 = vpop.f32.mrb[0].mxu0
    %v5309 = vadd.f32 0.0, %v5308
    %v5310 = vpop.f32.mrb[0].mxu0
    %5311 = vmatprep.mubr.f32.mxu0 0.0
    %5312 = vmatmul.mubr.f32.gmra.mrb[0].mxu0 %v3155
    %v5313 = vpop.f32.mrb[0].mxu0
    %v5314 = vadd.f32 0.0, %v5313
    %v5315 = vpop.f32.mrb[0].mxu0
    %5316 = vmatprep.mubr.f32.mxu0 0.0
    %5317 = vmatmul.mubr.f32.gmra.mrb[0].mxu0 %v3158
    %v5318 = vpop.f32.mrb[0].mxu0
    %v5319 = vadd.f32 0.0, %v5318
    %v5320 = vpop.f32.mrb[0].mxu0
    %5321 = vmatprep.mubr.f32.mxu0 0.0
    %5322 = vmatmul.mubr.f32.gmra.mrb[0].mxu0 %v3161
    %v5323 = vpop.f32.mrb[0].mxu0
    %v5324 = vadd.f32 0.0, %v5323
    %v5325 = vpop.f32.mrb[0].mxu0
    %5326 = vmatprep.mubr.f32.mxu0 0.0
    %5327 = vmatmul.mubr.f32.gmra.mrb[0].mxu0 %v3164
    %v5328 = vpop.f32.mrb[0].mxu0
    %v5329 = vadd.f32 0.0, %v5328
    %v5330 = vpop.f32.mrb[0].mxu0
    %5331 = vmatprep.mubr.f32.mxu0 0.0
    %5332 = vmatmul.mubr.f32.gmra.mrb[0].mxu0 %v3167
    %v5333 = vpop.f32.mrb[0].mxu0
    %v5334 = vadd.f32 0.0, %v5333
    %v5335 = vpop.f32.mrb[0].mxu0
    %5336 = vmatprep.mubr.f32.mxu0 0.0
    %5337 = vmatmul.mubr.f32.gmra.mrb[0].mxu0 %v3170
    %v5338 = vpop.f32.mrb[0].mxu0
    %v5339 = vadd.f32 0.0, %v5338
    %v5340 = vpop.f32.mrb[0].mxu0
    %5341 = vmatprep.mubr.f32.mxu0 0.0
    %5342 = vmatmul.mubr.f32.gmra.mrb[0].mxu0 %v3173
    %v5343 = vpop.f32.mrb[0].mxu0
    %v5344 = vadd.f32 0.0, %v5343
    %v5345 = vpop.f32.mrb[0].mxu0
    %5346 = vmatprep.mubr.f32.mxu0 0.0
    %5347 = vmatmul.mubr.f32.gmra.mrb[0].mxu0 %v3176
    %v5348 = vpop.f32.mrb[0].mxu0
    %v5349 = vadd.f32 0.0, %v5348
    %v5350 = vpop.f32.mrb[0].mxu0
    %5351 = vmatprep.mubr.f32.mxu0 0.0
    %5352 = vmatmul.mubr.f32.gmra.mrb[0].mxu0 %v3179
    %v5353 = vpop.f32.mrb[0].mxu0
    %v5354 = vadd.f32 0.0, %v5353
    %v5355 = vpop.f32.mrb[0].mxu0
    %5356 = vmatprep.mubr.f32.mxu0 0.0
    %5357 = vmatmul.mubr.f32.gmra.mrb[0].mxu0 %v3182
    %v5358 = vpop.f32.mrb[0].mxu0
    %v5359 = vadd.f32 0.0, %v5358
    %v5360 = vpop.f32.mrb[0].mxu0
    %5361 = vmatprep.mubr.f32.mxu0 0.0
    %5362 = vmatmul.mubr.f32.gmra.mrb[0].mxu0 %v3185
    %v5363 = vpop.f32.mrb[0].mxu0
    %v5364 = vadd.f32 0.0, %v5363
    %v5365 = vpop.f32.mrb[0].mxu0
    %5366 = vdwg.mxu0
    %v5367 = vadd.f32 %v4984, %v5209
    %v5368 = vadd.f32 %v4989, %v5214
    %v5369 = vadd.f32 %v4994, %v5219
    %v5370 = vadd.f32 %v4999, %v5224
    %v5371 = vadd.f32 %v5004, %v5229
    %v5372 = vadd.f32 %v5009, %v5234
    %v5373 = vadd.f32 %v5014, %v5239
    %v5374 = vadd.f32 %v5019, %v5244
    %v5375 = vadd.f32 %v5024, %v5249
    %v5376 = vadd.f32 %v5029, %v5254
    %v5377 = vadd.f32 %v5034, %v5259
    %v5378 = vadd.f32 %v5039, %v5264
    %v5379 = vadd.f32 %v5044, %v5269
    %v5380 = vadd.f32 %v5049, %v5274
    %v5381 = vadd.f32 %v5054, %v5279
    %v5382 = vadd.f32 %v5059, %v5284
    %v5383 = vadd.f32 %v5064, %v5289
    %v5384 = vadd.f32 %v5069, %v5294
    %v5385 = vadd.f32 %v5074, %v5299
    %v5386 = vadd.f32 %v5079, %v5304
    %v5387 = vadd.f32 %v5084, %v5309
    %v5388 = vadd.f32 %v5089, %v5314
    %v5389 = vadd.f32 %v5094, %v5319
    %v5390 = vadd.f32 %v5099, %v5324
    %v5391 = vadd.f32 %v5104, %v5329
    %v5392 = vadd.f32 %v5109, %v5334
    %v5393 = vadd.f32 %v5114, %v5339
    %v5394 = vadd.f32 %v5119, %v5344
    %v5395 = vadd.f32 %v5124, %v5349
    %v5396 = vadd.f32 %v5129, %v5354
    %v5397 = vadd.f32 %v5134, %v5359
    %v5398 = vadd.f32 %v5139, %v5364
    %5399 = vmatprep.subr.mxu0 0.0
    %5400 = vmatpush1.msra.mxu0 %v4895
    %5401 = vmatprep.subr.mxu0 0.0
    %5402 = vmatpush1.msra.mxu0 %v4896
    %5403 = vmatprep.subr.mxu0 0.0
    %5404 = vmatpush1.msra.mxu0 0.0
    %5405 = vmatprep.subr.mxu0 0.0
    %5406 = vmatpush1.msra.mxu0 0.0
    %5407 = vmatprep.subr.mxu0 0.0
    %5408 = vmatpush1.msra.mxu0 0.0
    %5409 = vmatprep.subr.mxu0 0.0
    %5410 = vmatpush1.msra.mxu0 0.0
    %5411 = vmatprep.subr.mxu0 0.0
    %5412 = vmatpush1.msra.mxu0 0.0
    %5413 = vmatprep.subr.mxu0 0.0
    %5414 = vmatpush1.msra.mxu0 0.0
    %5415 = vmatprep.subr.mxu0 0.0
    %5416 = vmatpush1.msra.mxu0 0.0
    %5417 = vmatprep.subr.mxu0 0.0
    %5418 = vmatpush1.msra.mxu0 0.0
    %5419 = vmatprep.subr.mxu0 0.0
    %5420 = vmatpush1.msra.mxu0 0.0
    %5421 = vmatprep.subr.mxu0 0.0
    %5422 = vmatpush1.msra.mxu0 0.0
    %5423 = vmatprep.subr.mxu0 0.0
    %5424 = vmatpush1.msra.mxu0 0.0
    %5425 = vmatprep.subr.mxu0 0.0
    %5426 = vmatpush1.msra.mxu0 0.0
    %5427 = vmatprep.subr.mxu0 0.0
    %5428 = vmatpush1.msra.mxu0 0.0
    %5429 = vmatprep.subr.mxu0 0.0
    %5430 = vmatpush1.msra.mxu0 0.0
    %5431 = vmatprep.subr.mxu0 0.0
    %5432 = vmatpush1.msra.mxu0 0.0
    %5433 = vmatprep.subr.mxu0 0.0
    %5434 = vmatpush1.msra.mxu0 0.0
    %5435 = vmatprep.subr.mxu0 0.0
    %5436 = vmatpush1.msra.mxu0 0.0
    %5437 = vmatprep.subr.mxu0 0.0
    %5438 = vmatpush1.msra.mxu0 0.0
    %5439 = vmatprep.subr.mxu0 0.0
    %5440 = vmatpush1.msra.mxu0 0.0
    %5441 = vmatprep.subr.mxu0 0.0
    %5442 = vmatpush1.msra.mxu0 0.0
    %5443 = vmatprep.subr.mxu0 0.0
    %5444 = vmatpush1.msra.mxu0 0.0
    %5445 = vmatprep.subr.mxu0 0.0
    %5446 = vmatpush1.msra.mxu0 0.0
    %5447 = vmatprep.subr.mxu0 0.0
    %5448 = vmatpush1.msra.mxu0 0.0
    %5449 = vmatprep.subr.mxu0 0.0
    %5450 = vmatpush1.msra.mxu0 0.0
    %5451 = vmatprep.subr.mxu0 0.0
    %5452 = vmatpush1.msra.mxu0 0.0
    %5453 = vmatprep.subr.mxu0 0.0
    %5454 = vmatpush1.msra.mxu0 0.0
    %5455 = vmatprep.subr.mxu0 0.0
    %5456 = vmatpush1.msra.mxu0 0.0
    %5457 = vmatprep.subr.mxu0 0.0
    %5458 = vmatpush1.msra.mxu0 0.0
    %5459 = vmatprep.subr.mxu0 0.0
    %5460 = vmatpush1.msra.mxu0 0.0
    %5461 = vmatprep.subr.mxu0 0.0
    %5462 = vmatpush1.msra.mxu0 0.0
    %5463 = vmatprep.mubr.f32.mxu0 0.0
    %5464 = vmatmul.mubr.f32.gmra.mrb[0].mxu0 %v3445
    %v5465 = vpop.f32.mrb[0].mxu0
    %v5466 = vadd.f32 0.0, %v5465
    %v5467 = vpop.f32.mrb[0].mxu0
    %5468 = vmatprep.mubr.f32.mxu0 0.0
    %5469 = vmatmul.mubr.f32.gmra.mrb[0].mxu0 %v3448
    %v5470 = vpop.f32.mrb[0].mxu0
    %v5471 = vadd.f32 0.0, %v5470
    %v5472 = vpop.f32.mrb[0].mxu0
    %5473 = vmatprep.mubr.f32.mxu0 0.0
    %5474 = vmatmul.mubr.f32.gmra.mrb[0].mxu0 %v3451
    %v5475 = vpop.f32.mrb[0].mxu0
    %v5476 = vadd.f32 0.0, %v5475
    %v5477 = vpop.f32.mrb[0].mxu0
    %5478 = vmatprep.mubr.f32.mxu0 0.0
    %5479 = vmatmul.mubr.f32.gmra.mrb[0].mxu0 %v3454
    %v5480 = vpop.f32.mrb[0].mxu0
    %v5481 = vadd.f32 0.0, %v5480
    %v5482 = vpop.f32.mrb[0].mxu0
    %5483 = vmatprep.mubr.f32.mxu0 0.0
    %5484 = vmatmul.mubr.f32.gmra.mrb[0].mxu0 %v3457
    %v5485 = vpop.f32.mrb[0].mxu0
    %v5486 = vadd.f32 0.0, %v5485
    %v5487 = vpop.f32.mrb[0].mxu0
    %5488 = vmatprep.mubr.f32.mxu0 0.0
    %5489 = vmatmul.mubr.f32.gmra.mrb[0].mxu0 %v3460
    %v5490 = vpop.f32.mrb[0].mxu0
    %v5491 = vadd.f32 0.0, %v5490
    %v5492 = vpop.f32.mrb[0].mxu0
    %5493 = vmatprep.mubr.f32.mxu0 0.0
    %5494 = vmatmul.mubr.f32.gmra.mrb[0].mxu0 %v3463
    %v5495 = vpop.f32.mrb[0].mxu0
    %v5496 = vadd.f32 0.0, %v5495
    %v5497 = vpop.f32.mrb[0].mxu0
    %5498 = vmatprep.mubr.f32.mxu0 0.0
    %5499 = vmatmul.mubr.f32.gmra.mrb[0].mxu0 %v3466
    %v5500 = vpop.f32.mrb[0].mxu0
    %v5501 = vadd.f32 0.0, %v5500
    %v5502 = vpop.f32.mrb[0].mxu0
    %5503 = vmatprep.mubr.f32.mxu0 0.0
    %5504 = vmatmul.mubr.f32.gmra.mrb[0].mxu0 %v3469
    %v5505 = vpop.f32.mrb[0].mxu0
    %v5506 = vadd.f32 0.0, %v5505
    %v5507 = vpop.f32.mrb[0].mxu0
    %5508 = vmatprep.mubr.f32.mxu0 0.0
    %5509 = vmatmul.mubr.f32.gmra.mrb[0].mxu0 %v3472
    %v5510 = vpop.f32.mrb[0].mxu0
    %v5511 = vadd.f32 0.0, %v5510
    %v5512 = vpop.f32.mrb[0].mxu0
    %5513 = vmatprep.mubr.f32.mxu0 0.0
    %5514 = vmatmul.mubr.f32.gmra.mrb[0].mxu0 %v3475
    %v5515 = vpop.f32.mrb[0].mxu0
    %v5516 = vadd.f32 0.0, %v5515
    %v5517 = vpop.f32.mrb[0].mxu0
    %5518 = vmatprep.mubr.f32.mxu0 0.0
    %5519 = vmatmul.mubr.f32.gmra.mrb[0].mxu0 %v3478
    %v5520 = vpop.f32.mrb[0].mxu0
    %v5521 = vadd.f32 0.0, %v5520
    %v5522 = vpop.f32.mrb[0].mxu0
    %5523 = vmatprep.mubr.f32.mxu0 0.0
    %5524 = vmatmul.mubr.f32.gmra.mrb[0].mxu0 %v3481
    %v5525 = vpop.f32.mrb[0].mxu0
    %v5526 = vadd.f32 0.0, %v5525
    %v5527 = vpop.f32.mrb[0].mxu0
    %5528 = vmatprep.mubr.f32.mxu0 0.0
    %5529 = vmatmul.mubr.f32.gmra.mrb[0].mxu0 %v3484
    %v5530 = vpop.f32.mrb[0].mxu0
    %v5531 = vadd.f32 0.0, %v5530
    %v5532 = vpop.f32.mrb[0].mxu0
    %5533 = vmatprep.mubr.f32.mxu0 0.0
    %5534 = vmatmul.mubr.f32.gmra.mrb[0].mxu0 %v3487
    %v5535 = vpop.f32.mrb[0].mxu0
    %v5536 = vadd.f32 0.0, %v5535
    %v5537 = vpop.f32.mrb[0].mxu0
    %5538 = vmatprep.mubr.f32.mxu0 0.0
    %5539 = vmatmul.mubr.f32.gmra.mrb[0].mxu0 %v3490
    %v5540 = vpop.f32.mrb[0].mxu0
    %v5541 = vadd.f32 0.0, %v5540
    %v5542 = vpop.f32.mrb[0].mxu0
    %5543 = vmatprep.mubr.f32.mxu0 0.0
    %5544 = vmatmul.mubr.f32.gmra.mrb[0].mxu0 %v3493
    %v5545 = vpop.f32.mrb[0].mxu0
    %v5546 = vadd.f32 0.0, %v5545
    %v5547 = vpop.f32.mrb[0].mxu0
    %5548 = vmatprep.mubr.f32.mxu0 0.0
    %5549 = vmatmul.mubr.f32.gmra.mrb[0].mxu0 %v3496
    %v5550 = vpop.f32.mrb[0].mxu0
    %v5551 = vadd.f32 0.0, %v5550
    %v5552 = vpop.f32.mrb[0].mxu0
    %5553 = vmatprep.mubr.f32.mxu0 0.0
    %5554 = vmatmul.mubr.f32.gmra.mrb[0].mxu0 %v3499
    %v5555 = vpop.f32.mrb[0].mxu0
    %v5556 = vadd.f32 0.0, %v5555
    %v5557 = vpop.f32.mrb[0].mxu0
    %5558 = vmatprep.mubr.f32.mxu0 0.0
    %5559 = vmatmul.mubr.f32.gmra.mrb[0].mxu0 %v3502
    %v5560 = vpop.f32.mrb[0].mxu0
    %v5561 = vadd.f32 0.0, %v5560
    %v5562 = vpop.f32.mrb[0].mxu0
    %5563 = vmatprep.mubr.f32.mxu0 0.0
    %5564 = vmatmul.mubr.f32.gmra.mrb[0].mxu0 %v3505
    %v5565 = vpop.f32.mrb[0].mxu0
    %v5566 = vadd.f32 0.0, %v5565
    %v5567 = vpop.f32.mrb[0].mxu0
    %5568 = vmatprep.mubr.f32.mxu0 0.0
    %5569 = vmatmul.mubr.f32.gmra.mrb[0].mxu0 %v3508
    %v5570 = vpop.f32.mrb[0].mxu0
    %v5571 = vadd.f32 0.0, %v5570
    %v5572 = vpop.f32.mrb[0].mxu0
    %5573 = vmatprep.mubr.f32.mxu0 0.0
    %5574 = vmatmul.mubr.f32.gmra.mrb[0].mxu0 %v3511
    %v5575 = vpop.f32.mrb[0].mxu0
    %v5576 = vadd.f32 0.0, %v5575
    %v5577 = vpop.f32.mrb[0].mxu0
    %5578 = vmatprep.mubr.f32.mxu0 0.0
    %5579 = vmatmul.mubr.f32.gmra.mrb[0].mxu0 %v3514
    %v5580 = vpop.f32.mrb[0].mxu0
    %v5581 = vadd.f32 0.0, %v5580
    %v5582 = vpop.f32.mrb[0].mxu0
    %5583 = vmatprep.mubr.f32.mxu0 0.0
    %5584 = vmatmul.mubr.f32.gmra.mrb[0].mxu0 %v3517
    %v5585 = vpop.f32.mrb[0].mxu0
    %v5586 = vadd.f32 0.0, %v5585
    %v5587 = vpop.f32.mrb[0].mxu0
    %5588 = vmatprep.mubr.f32.mxu0 0.0
    %5589 = vmatmul.mubr.f32.gmra.mrb[0].mxu0 %v3520
    %v5590 = vpop.f32.mrb[0].mxu0
    %v5591 = vadd.f32 0.0, %v5590
    %v5592 = vpop.f32.mrb[0].mxu0
    %5593 = vmatprep.mubr.f32.mxu0 0.0
    %5594 = vmatmul.mubr.f32.gmra.mrb[0].mxu0 %v3523
    %v5595 = vpop.f32.mrb[0].mxu0
    %v5596 = vadd.f32 0.0, %v5595
    %v5597 = vpop.f32.mrb[0].mxu0
    %5598 = vmatprep.mubr.f32.mxu0 0.0
    %5599 = vmatmul.mubr.f32.gmra.mrb[0].mxu0 %v3526
    %v5600 = vpop.f32.mrb[0].mxu0
    %v5601 = vadd.f32 0.0, %v5600
    %v5602 = vpop.f32.mrb[0].mxu0
    %5603 = vmatprep.mubr.f32.mxu0 0.0
    %5604 = vmatmul.mubr.f32.gmra.mrb[0].mxu0 %v3529
    %v5605 = vpop.f32.mrb[0].mxu0
    %v5606 = vadd.f32 0.0, %v5605
    %v5607 = vpop.f32.mrb[0].mxu0
    %5608 = vmatprep.mubr.f32.mxu0 0.0
    %5609 = vmatmul.mubr.f32.gmra.mrb[0].mxu0 %v3532
    %v5610 = vpop.f32.mrb[0].mxu0
    %v5611 = vadd.f32 0.0, %v5610
    %v5612 = vpop.f32.mrb[0].mxu0
    %5613 = vmatprep.mubr.f32.mxu0 0.0
    %5614 = vmatmul.mubr.f32.gmra.mrb[0].mxu0 %v3535
    %v5615 = vpop.f32.mrb[0].mxu0
    %v5616 = vadd.f32 0.0, %v5615
    %v5617 = vpop.f32.mrb[0].mxu0
    %5618 = vmatprep.mubr.f32.mxu0 0.0
    %5619 = vmatmul.mubr.f32.gmra.mrb[0].mxu0 %v3538
    %v5620 = vpop.f32.mrb[0].mxu0
    %v5621 = vadd.f32 0.0, %v5620
    %v5622 = vpop.f32.mrb[0].mxu0
    %5623 = vdwg.mxu0
    %v5624 = vadd.f32 %v5367, %v5466
    %v5625 = vadd.f32 %v5368, %v5471
    %v5626 = vadd.f32 %v5369, %v5476
    %v5627 = vadd.f32 %v5370, %v5481
    %v5628 = vadd.f32 %v5371, %v5486
    %v5629 = vadd.f32 %v5372, %v5491
    %v5630 = vadd.f32 %v5373, %v5496
    %v5631 = vadd.f32 %v5374, %v5501
    %v5632 = vadd.f32 %v5375, %v5506
    %v5633 = vadd.f32 %v5376, %v5511
    %v5634 = vadd.f32 %v5377, %v5516
    %v5635 = vadd.f32 %v5378, %v5521
    %v5636 = vadd.f32 %v5379, %v5526
    %v5637 = vadd.f32 %v5380, %v5531
    %v5638 = vadd.f32 %v5381, %v5536
    %v5639 = vadd.f32 %v5382, %v5541
    %v5640 = vadd.f32 %v5383, %v5546
    %v5641 = vadd.f32 %v5384, %v5551
    %v5642 = vadd.f32 %v5385, %v5556
    %v5643 = vadd.f32 %v5386, %v5561
    %v5644 = vadd.f32 %v5387, %v5566
    %v5645 = vadd.f32 %v5388, %v5571
    %v5646 = vadd.f32 %v5389, %v5576
    %v5647 = vadd.f32 %v5390, %v5581
    %v5648 = vadd.f32 %v5391, %v5586
    %v5649 = vadd.f32 %v5392, %v5591
    %v5650 = vadd.f32 %v5393, %v5596
    %v5651 = vadd.f32 %v5394, %v5601
    %v5652 = vadd.f32 %v5395, %v5606
    %v5653 = vadd.f32 %v5396, %v5611
    %v5654 = vadd.f32 %v5397, %v5616
    %v5655 = vadd.f32 %v5398, %v5621
    %v5657 = vsel %vm821, %v5625, 0
    %v5660 = vsel %vm821, %v5627, 0
    %v5663 = vsel %vm821, %v5629, 0
    %v5666 = vsel %vm821, %v5631, 0
    %v5669 = vsel %vm821, %v5633, 0
    %v5672 = vsel %vm821, %v5635, 0
    %v5675 = vsel %vm821, %v5637, 0
    %v5678 = vsel %vm821, %v5641, 0
    %v5681 = vsel %vm821, %v5643, 0
    %v5684 = vsel %vm821, %v5645, 0
    %v5687 = vsel %vm821, %v5647, 0
    %v5690 = vsel %vm821, %v5649, 0
    %v5693 = vsel %vm821, %v5651, 0
    %v5696 = vsel %vm821, %v5653, 0
    %5698 = vmatprep.subr.mxu0 0.0
    %5699 = vmatpush1.msra.mxu0 %v4898
    %5700 = vmatprep.subr.mxu0 0.0
    %5701 = vmatpush1.msra.mxu0 %v4899
    %5702 = vmatprep.subr.mxu0 0.0
    %5703 = vmatpush1.msra.mxu0 0.0
    %5704 = vmatprep.subr.mxu0 0.0
    %5705 = vmatpush1.msra.mxu0 0.0
    %5706 = vmatprep.subr.mxu0 0.0
    %5707 = vmatpush1.msra.mxu0 0.0
    %5708 = vmatprep.subr.mxu0 0.0
    %5709 = vmatpush1.msra.mxu0 0.0
    %5710 = vmatprep.subr.mxu0 0.0
    %5711 = vmatpush1.msra.mxu0 0.0
    %5712 = vmatprep.subr.mxu0 0.0
    %5713 = vmatpush1.msra.mxu0 0.0
    %5714 = vmatprep.subr.mxu0 0.0
    %5715 = vmatpush1.msra.mxu0 0.0
    %5716 = vmatprep.subr.mxu0 0.0
    %5717 = vmatpush1.msra.mxu0 0.0
    %5718 = vmatprep.subr.mxu0 0.0
    %5719 = vmatpush1.msra.mxu0 0.0
    %5720 = vmatprep.subr.mxu0 0.0
    %5721 = vmatpush1.msra.mxu0 0.0
    %5722 = vmatprep.subr.mxu0 0.0
    %5723 = vmatpush1.msra.mxu0 0.0
    %5724 = vmatprep.subr.mxu0 0.0
    %5725 = vmatpush1.msra.mxu0 0.0
    %5726 = vmatprep.subr.mxu0 0.0
    %5727 = vmatpush1.msra.mxu0 0.0
    %5728 = vmatprep.subr.mxu0 0.0
    %5729 = vmatpush1.msra.mxu0 0.0
    %5730 = vmatprep.subr.mxu0 0.0
    %5731 = vmatpush1.msra.mxu0 0.0
    %5732 = vmatprep.subr.mxu0 0.0
    %5733 = vmatpush1.msra.mxu0 0.0
    %5734 = vmatprep.subr.mxu0 0.0
    %5735 = vmatpush1.msra.mxu0 0.0
    %5736 = vmatprep.subr.mxu0 0.0
    %5737 = vmatpush1.msra.mxu0 0.0
    %5738 = vmatprep.subr.mxu0 0.0
    %5739 = vmatpush1.msra.mxu0 0.0
    %5740 = vmatprep.subr.mxu0 0.0
    %5741 = vmatpush1.msra.mxu0 0.0
    %5742 = vmatprep.subr.mxu0 0.0
    %5743 = vmatpush1.msra.mxu0 0.0
    %5744 = vmatprep.subr.mxu0 0.0
    %5745 = vmatpush1.msra.mxu0 0.0
    %5746 = vmatprep.subr.mxu0 0.0
    %5747 = vmatpush1.msra.mxu0 0.0
    %5748 = vmatprep.subr.mxu0 0.0
    %5749 = vmatpush1.msra.mxu0 0.0
    %5750 = vmatprep.subr.mxu0 0.0
    %5751 = vmatpush1.msra.mxu0 0.0
    %5752 = vmatprep.subr.mxu0 0.0
    %5753 = vmatpush1.msra.mxu0 0.0
    %5754 = vmatprep.subr.mxu0 0.0
    %5755 = vmatpush1.msra.mxu0 0.0
    %5756 = vmatprep.subr.mxu0 0.0
    %5757 = vmatpush1.msra.mxu0 0.0
    %5758 = vmatprep.subr.mxu0 0.0
    %5759 = vmatpush1.msra.mxu0 0.0
    %5760 = vmatprep.subr.mxu0 0.0
    %5761 = vmatpush1.msra.mxu0 0.0
    %5762 = vmatprep.mubr.f32.mxu0 0.0
    %5763 = vmatmul.mubr.f32.gmra.mrb[0].mxu0 %v3798
    %v5764 = vpop.f32.mrb[0].mxu0
    %v5765 = vadd.f32 0.0, %v5764
    %v5766 = vpop.f32.mrb[0].mxu0
    %5767 = vmatprep.mubr.f32.mxu0 0.0
    %5768 = vmatmul.mubr.f32.gmra.mrb[0].mxu0 %v5657
    %v5769 = vpop.f32.mrb[0].mxu0
    %v5770 = vadd.f32 0.0, %v5769
    %v5771 = vpop.f32.mrb[0].mxu0
    %5772 = vmatprep.mubr.f32.mxu0 0.0
    %5773 = vmatmul.mubr.f32.gmra.mrb[0].mxu0 %v5660
    %v5774 = vpop.f32.mrb[0].mxu0
    %v5775 = vadd.f32 0.0, %v5774
    %v5776 = vpop.f32.mrb[0].mxu0
    %5777 = vmatprep.mubr.f32.mxu0 0.0
    %5778 = vmatmul.mubr.f32.gmra.mrb[0].mxu0 %v5663
    %v5779 = vpop.f32.mrb[0].mxu0
    %v5780 = vadd.f32 0.0, %v5779
    %v5781 = vpop.f32.mrb[0].mxu0
    %5782 = vmatprep.mubr.f32.mxu0 0.0
    %5783 = vmatmul.mubr.f32.gmra.mrb[0].mxu0 %v5666
    %v5784 = vpop.f32.mrb[0].mxu0
    %v5785 = vadd.f32 0.0, %v5784
    %v5786 = vpop.f32.mrb[0].mxu0
    %5787 = vmatprep.mubr.f32.mxu0 0.0
    %5788 = vmatmul.mubr.f32.gmra.mrb[0].mxu0 %v5669
    %v5789 = vpop.f32.mrb[0].mxu0
    %v5790 = vadd.f32 0.0, %v5789
    %v5791 = vpop.f32.mrb[0].mxu0
    %5792 = vmatprep.mubr.f32.mxu0 0.0
    %5793 = vmatmul.mubr.f32.gmra.mrb[0].mxu0 %v5672
    %v5794 = vpop.f32.mrb[0].mxu0
    %v5795 = vadd.f32 0.0, %v5794
    %v5796 = vpop.f32.mrb[0].mxu0
    %5797 = vmatprep.mubr.f32.mxu0 0.0
    %5798 = vmatmul.mubr.f32.gmra.mrb[0].mxu0 %v5675
    %v5799 = vpop.f32.mrb[0].mxu0
    %v5800 = vadd.f32 0.0, %v5799
    %v5801 = vpop.f32.mrb[0].mxu0
    %5802 = vmatprep.mubr.f32.mxu0 0.0
    %5803 = vmatmul.mubr.f32.gmra.mrb[0].mxu0 %v3798
    %v5804 = vpop.f32.mrb[0].mxu0
    %v5805 = vadd.f32 0.0, %v5804
    %v5806 = vpop.f32.mrb[0].mxu0
    %5807 = vmatprep.mubr.f32.mxu0 0.0
    %5808 = vmatmul.mubr.f32.gmra.mrb[0].mxu0 %v5678
    %v5809 = vpop.f32.mrb[0].mxu0
    %v5810 = vadd.f32 0.0, %v5809
    %v5811 = vpop.f32.mrb[0].mxu0
    %5812 = vmatprep.mubr.f32.mxu0 0.0
    %5813 = vmatmul.mubr.f32.gmra.mrb[0].mxu0 %v5681
    %v5814 = vpop.f32.mrb[0].mxu0
    %v5815 = vadd.f32 0.0, %v5814
    %v5816 = vpop.f32.mrb[0].mxu0
    %5817 = vmatprep.mubr.f32.mxu0 0.0
    %5818 = vmatmul.mubr.f32.gmra.mrb[0].mxu0 %v5684
    %v5819 = vpop.f32.mrb[0].mxu0
    %v5820 = vadd.f32 0.0, %v5819
    %v5821 = vpop.f32.mrb[0].mxu0
    %5822 = vmatprep.mubr.f32.mxu0 0.0
    %5823 = vmatmul.mubr.f32.gmra.mrb[0].mxu0 %v5687
    %v5824 = vpop.f32.mrb[0].mxu0
    %v5825 = vadd.f32 0.0, %v5824
    %v5826 = vpop.f32.mrb[0].mxu0
    %5827 = vmatprep.mubr.f32.mxu0 0.0
    %5828 = vmatmul.mubr.f32.gmra.mrb[0].mxu0 %v5690
    %v5829 = vpop.f32.mrb[0].mxu0
    %v5830 = vadd.f32 0.0, %v5829
    %v5831 = vpop.f32.mrb[0].mxu0
    %5832 = vmatprep.mubr.f32.mxu0 0.0
    %5833 = vmatmul.mubr.f32.gmra.mrb[0].mxu0 %v5693
    %v5834 = vpop.f32.mrb[0].mxu0
    %v5835 = vadd.f32 0.0, %v5834
    %v5836 = vpop.f32.mrb[0].mxu0
    %5837 = vmatprep.mubr.f32.mxu0 0.0
    %5838 = vmatmul.mubr.f32.gmra.mrb[0].mxu0 %v5696
    %v5839 = vpop.f32.mrb[0].mxu0
    %v5840 = vadd.f32 0.0, %v5839
    %v5841 = vpop.f32.mrb[0].mxu0
    %5842 = vdwg.mxu0
    %v5844 = vsel %vm821, %v5624, 0
    %v5847 = vsel %vm821, %v5626, 0
    %v5850 = vsel %vm821, %v5628, 0
    %v5853 = vsel %vm821, %v5630, 0
    %v5856 = vsel %vm821, %v5632, 0
    %v5859 = vsel %vm821, %v5634, 0
    %v5862 = vsel %vm821, %v5636, 0
    %v5865 = vsel %vm821, %v5638, 0
    %v5868 = vsel %vm821, %v5640, 0
    %v5871 = vsel %vm821, %v5642, 0
    %v5874 = vsel %vm821, %v5644, 0
    %v5877 = vsel %vm821, %v5646, 0
    %v5880 = vsel %vm821, %v5648, 0
    %v5883 = vsel %vm821, %v5650, 0
    %v5886 = vsel %vm821, %v5652, 0
    %v5889 = vsel %vm821, %v5654, 0
    %5891 = vmatprep.subr.mxu0 0.0
    %5892 = vmatpush1.msra.mxu0 %v4900
    %5893 = vmatprep.subr.mxu0 0.0
    %5894 = vmatpush1.msra.mxu0 %v4901
    %5895 = vmatprep.subr.mxu0 0.0
    %5896 = vmatpush1.msra.mxu0 0.0
    %5897 = vmatprep.subr.mxu0 0.0
    %5898 = vmatpush1.msra.mxu0 0.0
    %5899 = vmatprep.subr.mxu0 0.0
    %5900 = vmatpush1.msra.mxu0 0.0
    %5901 = vmatprep.subr.mxu0 0.0
    %5902 = vmatpush1.msra.mxu0 0.0
    %5903 = vmatprep.subr.mxu0 0.0
    %5904 = vmatpush1.msra.mxu0 0.0
    %5905 = vmatprep.subr.mxu0 0.0
    %5906 = vmatpush1.msra.mxu0 0.0
    %5907 = vmatprep.subr.mxu0 0.0
    %5908 = vmatpush1.msra.mxu0 0.0
    %5909 = vmatprep.subr.mxu0 0.0
    %5910 = vmatpush1.msra.mxu0 0.0
    %5911 = vmatprep.subr.mxu0 0.0
    %5912 = vmatpush1.msra.mxu0 0.0
    %5913 = vmatprep.subr.mxu0 0.0
    %5914 = vmatpush1.msra.mxu0 0.0
    %5915 = vmatprep.subr.mxu0 0.0
    %5916 = vmatpush1.msra.mxu0 0.0
    %5917 = vmatprep.subr.mxu0 0.0
    %5918 = vmatpush1.msra.mxu0 0.0
    %5919 = vmatprep.subr.mxu0 0.0
    %5920 = vmatpush1.msra.mxu0 0.0
    %5921 = vmatprep.subr.mxu0 0.0
    %5922 = vmatpush1.msra.mxu0 0.0
    %5923 = vmatprep.subr.mxu0 0.0
    %5924 = vmatpush1.msra.mxu0 0.0
    %5925 = vmatprep.subr.mxu0 0.0
    %5926 = vmatpush1.msra.mxu0 0.0
    %5927 = vmatprep.subr.mxu0 0.0
    %5928 = vmatpush1.msra.mxu0 0.0
    %5929 = vmatprep.subr.mxu0 0.0
    %5930 = vmatpush1.msra.mxu0 0.0
    %5931 = vmatprep.subr.mxu0 0.0
    %5932 = vmatpush1.msra.mxu0 0.0
    %5933 = vmatprep.subr.mxu0 0.0
    %5934 = vmatpush1.msra.mxu0 0.0
    %5935 = vmatprep.subr.mxu0 0.0
    %5936 = vmatpush1.msra.mxu0 0.0
    %5937 = vmatprep.subr.mxu0 0.0
    %5938 = vmatpush1.msra.mxu0 0.0
    %5939 = vmatprep.subr.mxu0 0.0
    %5940 = vmatpush1.msra.mxu0 0.0
    %5941 = vmatprep.subr.mxu0 0.0
    %5942 = vmatpush1.msra.mxu0 0.0
    %5943 = vmatprep.subr.mxu0 0.0
    %5944 = vmatpush1.msra.mxu0 0.0
    %5945 = vmatprep.subr.mxu0 0.0
    %5946 = vmatpush1.msra.mxu0 0.0
    %5947 = vmatprep.subr.mxu0 0.0
    %5948 = vmatpush1.msra.mxu0 0.0
    %5949 = vmatprep.subr.mxu0 0.0
    %5950 = vmatpush1.msra.mxu0 0.0
    %5951 = vmatprep.subr.mxu0 0.0
    %5952 = vmatpush1.msra.mxu0 0.0
    %5953 = vmatprep.subr.mxu0 0.0
    %5954 = vmatpush1.msra.mxu0 0.0
    %5955 = vmatprep.mubr.f32.mxu0 0.0
    %5956 = vmatmul.mubr.f32.gmra.mrb[0].mxu0 %v5844
    %v5957 = vpop.f32.mrb[0].mxu0
    %v5958 = vadd.f32 0.0, %v5957
    %v5959 = vpop.f32.mrb[0].mxu0
    %5960 = vmatprep.mubr.f32.mxu0 0.0
    %5961 = vmatmul.mubr.f32.gmra.mrb[0].mxu0 %v5847
    %v5962 = vpop.f32.mrb[0].mxu0
    %v5963 = vadd.f32 0.0, %v5962
    %v5964 = vpop.f32.mrb[0].mxu0
    %5965 = vmatprep.mubr.f32.mxu0 0.0
    %5966 = vmatmul.mubr.f32.gmra.mrb[0].mxu0 %v5850
    %v5967 = vpop.f32.mrb[0].mxu0
    %v5968 = vadd.f32 0.0, %v5967
    %v5969 = vpop.f32.mrb[0].mxu0
    %5970 = vmatprep.mubr.f32.mxu0 0.0
    %5971 = vmatmul.mubr.f32.gmra.mrb[0].mxu0 %v5853
    %v5972 = vpop.f32.mrb[0].mxu0
    %v5973 = vadd.f32 0.0, %v5972
    %v5974 = vpop.f32.mrb[0].mxu0
    %5975 = vmatprep.mubr.f32.mxu0 0.0
    %5976 = vmatmul.mubr.f32.gmra.mrb[0].mxu0 %v5856
    %v5977 = vpop.f32.mrb[0].mxu0
    %v5978 = vadd.f32 0.0, %v5977
    %v5979 = vpop.f32.mrb[0].mxu0
    %5980 = vmatprep.mubr.f32.mxu0 0.0
    %5981 = vmatmul.mubr.f32.gmra.mrb[0].mxu0 %v5859
    %v5982 = vpop.f32.mrb[0].mxu0
    %v5983 = vadd.f32 0.0, %v5982
    %v5984 = vpop.f32.mrb[0].mxu0
    %5985 = vmatprep.mubr.f32.mxu0 0.0
    %5986 = vmatmul.mubr.f32.gmra.mrb[0].mxu0 %v5862
    %v5987 = vpop.f32.mrb[0].mxu0
    %v5988 = vadd.f32 0.0, %v5987
    %v5989 = vpop.f32.mrb[0].mxu0
    %5990 = vmatprep.mubr.f32.mxu0 0.0
    %5991 = vmatmul.mubr.f32.gmra.mrb[0].mxu0 %v5865
    %v5992 = vpop.f32.mrb[0].mxu0
    %v5993 = vadd.f32 0.0, %v5992
    %v5994 = vpop.f32.mrb[0].mxu0
    %5995 = vmatprep.mubr.f32.mxu0 0.0
    %5996 = vmatmul.mubr.f32.gmra.mrb[0].mxu0 %v5868
    %v5997 = vpop.f32.mrb[0].mxu0
    %v5998 = vadd.f32 0.0, %v5997
    %v5999 = vpop.f32.mrb[0].mxu0
    %6000 = vmatprep.mubr.f32.mxu0 0.0
    %6001 = vmatmul.mubr.f32.gmra.mrb[0].mxu0 %v5871
    %v6002 = vpop.f32.mrb[0].mxu0
    %v6003 = vadd.f32 0.0, %v6002
    %v6004 = vpop.f32.mrb[0].mxu0
    %6005 = vmatprep.mubr.f32.mxu0 0.0
    %6006 = vmatmul.mubr.f32.gmra.mrb[0].mxu0 %v5874
    %v6007 = vpop.f32.mrb[0].mxu0
    %v6008 = vadd.f32 0.0, %v6007
    %v6009 = vpop.f32.mrb[0].mxu0
    %6010 = vmatprep.mubr.f32.mxu0 0.0
    %6011 = vmatmul.mubr.f32.gmra.mrb[0].mxu0 %v5877
    %v6012 = vpop.f32.mrb[0].mxu0
    %v6013 = vadd.f32 0.0, %v6012
    %v6014 = vpop.f32.mrb[0].mxu0
    %6015 = vmatprep.mubr.f32.mxu0 0.0
    %6016 = vmatmul.mubr.f32.gmra.mrb[0].mxu0 %v5880
    %v6017 = vpop.f32.mrb[0].mxu0
    %v6018 = vadd.f32 0.0, %v6017
    %v6019 = vpop.f32.mrb[0].mxu0
    %6020 = vmatprep.mubr.f32.mxu0 0.0
    %6021 = vmatmul.mubr.f32.gmra.mrb[0].mxu0 %v5883
    %v6022 = vpop.f32.mrb[0].mxu0
    %v6023 = vadd.f32 0.0, %v6022
    %v6024 = vpop.f32.mrb[0].mxu0
    %6025 = vmatprep.mubr.f32.mxu0 0.0
    %6026 = vmatmul.mubr.f32.gmra.mrb[0].mxu0 %v5886
    %v6027 = vpop.f32.mrb[0].mxu0
    %v6028 = vadd.f32 0.0, %v6027
    %v6029 = vpop.f32.mrb[0].mxu0
    %6030 = vmatprep.mubr.f32.mxu0 0.0
    %6031 = vmatmul.mubr.f32.gmra.mrb[0].mxu0 %v5889
    %v6032 = vpop.f32.mrb[0].mxu0
    %v6033 = vadd.f32 0.0, %v6032
    %v6034 = vpop.f32.mrb[0].mxu0
    %6035 = vdwg.mxu0
    %v6036 = vadd.f32 %v5765, %v5958
    %v6037 = vadd.f32 %v5770, %v5963
    %v6038 = vadd.f32 %v5775, %v5968
    %v6039 = vadd.f32 %v5780, %v5973
    %v6040 = vadd.f32 %v5785, %v5978
    %v6041 = vadd.f32 %v5790, %v5983
    %v6042 = vadd.f32 %v5795, %v5988
    %v6043 = vadd.f32 %v5800, %v5993
    %v6044 = vadd.f32 %v5805, %v5998
    %v6045 = vadd.f32 %v5810, %v6003
    %v6046 = vadd.f32 %v5815, %v6008
    %v6047 = vadd.f32 %v5820, %v6013
    %v6048 = vadd.f32 %v5825, %v6018
    %v6049 = vadd.f32 %v5830, %v6023
    %v6050 = vadd.f32 %v5835, %v6028
    %v6051 = vadd.f32 %v5840, %v6033
    %v6053 = vsel %vm821, %v5639, 0
    %v6056 = vsel %vm821, %v5655, 0
    %6058 = vmatprep.subr.mxu0 0.0
    %6059 = vmatpush1.msra.mxu0 %v4902
    %6060 = vmatprep.subr.mxu0 0.0
    %6061 = vmatpush1.msra.mxu0 %v4903
    %6062 = vmatprep.subr.mxu0 0.0
    %6063 = vmatpush1.msra.mxu0 0.0
    %6064 = vmatprep.subr.mxu0 0.0
    %6065 = vmatpush1.msra.mxu0 0.0
    %6066 = vmatprep.subr.mxu0 0.0
    %6067 = vmatpush1.msra.mxu0 0.0
    %6068 = vmatprep.subr.mxu0 0.0
    %6069 = vmatpush1.msra.mxu0 0.0
    %6070 = vmatprep.subr.mxu0 0.0
    %6071 = vmatpush1.msra.mxu0 0.0
    %6072 = vmatprep.subr.mxu0 0.0
    %6073 = vmatpush1.msra.mxu0 0.0
    %6074 = vmatprep.subr.mxu0 0.0
    %6075 = vmatpush1.msra.mxu0 0.0
    %6076 = vmatprep.subr.mxu0 0.0
    %6077 = vmatpush1.msra.mxu0 0.0
    %6078 = vmatprep.subr.mxu0 0.0
    %6079 = vmatpush1.msra.mxu0 0.0
    %6080 = vmatprep.subr.mxu0 0.0
    %6081 = vmatpush1.msra.mxu0 0.0
    %6082 = vmatprep.subr.mxu0 0.0
    %6083 = vmatpush1.msra.mxu0 0.0
    %6084 = vmatprep.subr.mxu0 0.0
    %6085 = vmatpush1.msra.mxu0 0.0
    %6086 = vmatprep.subr.mxu0 0.0
    %6087 = vmatpush1.msra.mxu0 0.0
    %6088 = vmatprep.subr.mxu0 0.0
    %6089 = vmatpush1.msra.mxu0 0.0
    %6090 = vmatprep.subr.mxu0 0.0
    %6091 = vmatpush1.msra.mxu0 0.0
    %6092 = vmatprep.subr.mxu0 0.0
    %6093 = vmatpush1.msra.mxu0 0.0
    %6094 = vmatprep.subr.mxu0 0.0
    %6095 = vmatpush1.msra.mxu0 0.0
    %6096 = vmatprep.subr.mxu0 0.0
    %6097 = vmatpush1.msra.mxu0 0.0
    %6098 = vmatprep.subr.mxu0 0.0
    %6099 = vmatpush1.msra.mxu0 0.0
    %6100 = vmatprep.subr.mxu0 0.0
    %6101 = vmatpush1.msra.mxu0 0.0
    %6102 = vmatprep.subr.mxu0 0.0
    %6103 = vmatpush1.msra.mxu0 0.0
    %6104 = vmatprep.subr.mxu0 0.0
    %6105 = vmatpush1.msra.mxu0 0.0
    %6106 = vmatprep.subr.mxu0 0.0
    %6107 = vmatpush1.msra.mxu0 0.0
    %6108 = vmatprep.subr.mxu0 0.0
    %6109 = vmatpush1.msra.mxu0 0.0
    %6110 = vmatprep.subr.mxu0 0.0
    %6111 = vmatpush1.msra.mxu0 0.0
    %6112 = vmatprep.subr.mxu0 0.0
    %6113 = vmatpush1.msra.mxu0 0.0
    %6114 = vmatprep.subr.mxu0 0.0
    %6115 = vmatpush1.msra.mxu0 0.0
    %6116 = vmatprep.subr.mxu0 0.0
    %6117 = vmatpush1.msra.mxu0 0.0
    %6118 = vmatprep.subr.mxu0 0.0
    %6119 = vmatpush1.msra.mxu0 0.0
    %6120 = vmatprep.subr.mxu0 0.0
    %6121 = vmatpush1.msra.mxu0 0.0
    %6122 = vmatprep.mubr.f32.mxu0 0.0
    %6123 = vmatmul.mubr.f32.gmra.mrb[0].mxu0 %v5657
    %v6124 = vpop.f32.mrb[0].mxu0
    %v6125 = vadd.f32 0.0, %v6124
    %v6126 = vpop.f32.mrb[0].mxu0
    %6127 = vmatprep.mubr.f32.mxu0 0.0
    %6128 = vmatmul.mubr.f32.gmra.mrb[0].mxu0 %v5660
    %v6129 = vpop.f32.mrb[0].mxu0
    %v6130 = vadd.f32 0.0, %v6129
    %v6131 = vpop.f32.mrb[0].mxu0
    %6132 = vmatprep.mubr.f32.mxu0 0.0
    %6133 = vmatmul.mubr.f32.gmra.mrb[0].mxu0 %v5663
    %v6134 = vpop.f32.mrb[0].mxu0
    %v6135 = vadd.f32 0.0, %v6134
    %v6136 = vpop.f32.mrb[0].mxu0
    %6137 = vmatprep.mubr.f32.mxu0 0.0
    %6138 = vmatmul.mubr.f32.gmra.mrb[0].mxu0 %v5666
    %v6139 = vpop.f32.mrb[0].mxu0
    %v6140 = vadd.f32 0.0, %v6139
    %v6141 = vpop.f32.mrb[0].mxu0
    %6142 = vmatprep.mubr.f32.mxu0 0.0
    %6143 = vmatmul.mubr.f32.gmra.mrb[0].mxu0 %v5669
    %v6144 = vpop.f32.mrb[0].mxu0
    %v6145 = vadd.f32 0.0, %v6144
    %v6146 = vpop.f32.mrb[0].mxu0
    %6147 = vmatprep.mubr.f32.mxu0 0.0
    %6148 = vmatmul.mubr.f32.gmra.mrb[0].mxu0 %v5672
    %v6149 = vpop.f32.mrb[0].mxu0
    %v6150 = vadd.f32 0.0, %v6149
    %v6151 = vpop.f32.mrb[0].mxu0
    %6152 = vmatprep.mubr.f32.mxu0 0.0
    %6153 = vmatmul.mubr.f32.gmra.mrb[0].mxu0 %v5675
    %v6154 = vpop.f32.mrb[0].mxu0
    %v6155 = vadd.f32 0.0, %v6154
    %v6156 = vpop.f32.mrb[0].mxu0
    %6157 = vmatprep.mubr.f32.mxu0 0.0
    %6158 = vmatmul.mubr.f32.gmra.mrb[0].mxu0 %v6053
    %v6159 = vpop.f32.mrb[0].mxu0
    %v6160 = vadd.f32 0.0, %v6159
    %v6161 = vpop.f32.mrb[0].mxu0
    %6162 = vmatprep.mubr.f32.mxu0 0.0
    %6163 = vmatmul.mubr.f32.gmra.mrb[0].mxu0 %v5678
    %v6164 = vpop.f32.mrb[0].mxu0
    %v6165 = vadd.f32 0.0, %v6164
    %v6166 = vpop.f32.mrb[0].mxu0
    %6167 = vmatprep.mubr.f32.mxu0 0.0
    %6168 = vmatmul.mubr.f32.gmra.mrb[0].mxu0 %v5681
    %v6169 = vpop.f32.mrb[0].mxu0
    %v6170 = vadd.f32 0.0, %v6169
    %v6171 = vpop.f32.mrb[0].mxu0
    %6172 = vmatprep.mubr.f32.mxu0 0.0
    %6173 = vmatmul.mubr.f32.gmra.mrb[0].mxu0 %v5684
    %v6174 = vpop.f32.mrb[0].mxu0
    %v6175 = vadd.f32 0.0, %v6174
    %v6176 = vpop.f32.mrb[0].mxu0
    %6177 = vmatprep.mubr.f32.mxu0 0.0
    %6178 = vmatmul.mubr.f32.gmra.mrb[0].mxu0 %v5687
    %v6179 = vpop.f32.mrb[0].mxu0
    %v6180 = vadd.f32 0.0, %v6179
    %v6181 = vpop.f32.mrb[0].mxu0
    %6182 = vmatprep.mubr.f32.mxu0 0.0
    %6183 = vmatmul.mubr.f32.gmra.mrb[0].mxu0 %v5690
    %v6184 = vpop.f32.mrb[0].mxu0
    %v6185 = vadd.f32 0.0, %v6184
    %v6186 = vpop.f32.mrb[0].mxu0
    %6187 = vmatprep.mubr.f32.mxu0 0.0
    %6188 = vmatmul.mubr.f32.gmra.mrb[0].mxu0 %v5693
    %v6189 = vpop.f32.mrb[0].mxu0
    %v6190 = vadd.f32 0.0, %v6189
    %v6191 = vpop.f32.mrb[0].mxu0
    %6192 = vmatprep.mubr.f32.mxu0 0.0
    %6193 = vmatmul.mubr.f32.gmra.mrb[0].mxu0 %v5696
    %v6194 = vpop.f32.mrb[0].mxu0
    %v6195 = vadd.f32 0.0, %v6194
    %v6196 = vpop.f32.mrb[0].mxu0
    %6197 = vmatprep.mubr.f32.mxu0 0.0
    %6198 = vmatmul.mubr.f32.gmra.mrb[0].mxu0 %v6056
    %v6199 = vpop.f32.mrb[0].mxu0
    %v6200 = vadd.f32 0.0, %v6199
    %v6201 = vpop.f32.mrb[0].mxu0
    %6202 = vdwg.mxu0
    %v6203 = vadd.f32 %v6036, %v6125
    %v6204 = vadd.f32 %v6037, %v6130
    %v6205 = vadd.f32 %v6038, %v6135
    %v6206 = vadd.f32 %v6039, %v6140
    %v6207 = vadd.f32 %v6040, %v6145
    %v6208 = vadd.f32 %v6041, %v6150
    %v6209 = vadd.f32 %v6042, %v6155
    %v6210 = vadd.f32 %v6043, %v6160
    %v6211 = vadd.f32 %v6044, %v6165
    %v6212 = vadd.f32 %v6045, %v6170
    %v6213 = vadd.f32 %v6046, %v6175
    %v6214 = vadd.f32 %v6047, %v6180
    %v6215 = vadd.f32 %v6048, %v6185
    %v6216 = vadd.f32 %v6049, %v6190
    %v6217 = vadd.f32 %v6050, %v6195
    %v6218 = vadd.f32 %v6051, %v6200
    %v6219 = vsel %vm821, %v6203, 0.0
    %v6220 = vsel %vm821, %v6204, 0.0
    %v6221 = vadd.f32 %v6219, %v6220
    %v6222 = vsel %vm821, %v6205, 0.0
    %v6223 = vadd.f32 %v6221, %v6222
    %v6224 = vsel %vm821, %v6206, 0.0
    %v6225 = vadd.f32 %v6223, %v6224
    %v6226 = vsel %vm821, %v6207, 0.0
    %v6227 = vadd.f32 %v6225, %v6226
    %v6228 = vsel %vm821, %v6208, 0.0
    %v6229 = vadd.f32 %v6227, %v6228
    %v6230 = vsel %vm821, %v6209, 0.0
    %v6231 = vadd.f32 %v6229, %v6230
    %v6232 = vsel %vm821, %v6210, 0.0
    %v6233 = vadd.f32 %v6231, %v6232
    %v6234 = vsel %vm821, %v6211, 0.0
    %v6235 = vadd.f32 %v6233, %v6234
    %v6236 = vsel %vm821, %v6212, 0.0
    %v6237 = vadd.f32 %v6235, %v6236
    %v6238 = vsel %vm821, %v6213, 0.0
    %v6239 = vadd.f32 %v6237, %v6238
    %v6240 = vsel %vm821, %v6214, 0.0
    %v6241 = vadd.f32 %v6239, %v6240
    %v6242 = vsel %vm821, %v6215, 0.0
    %v6243 = vadd.f32 %v6241, %v6242
    %v6244 = vsel %vm821, %v6216, 0.0
    %v6245 = vadd.f32 %v6243, %v6244
    %v6246 = vsel %vm821, %v6217, 0.0
    %v6247 = vadd.f32 %v6245, %v6246
    %v6248 = vsel %vm821, %v6218, 0.0
    %v6249 = vadd.f32 %v6247, %v6248
    %v6250 = vrot.slane %v6249, 4
    %v6251 = vadd.f32 %v6249, %v6250
    %v6252 = vrot.slane %v6251, 2
    %v6253 = vadd.f32 %v6251, %v6252
    %v6254 = vrot.slane %v6253, 1
    %v6255 = vadd.f32 %v6253, %v6254
    %v6256 = vmul.f32 %v6203, %v6203
    %v6257 = vmul.f32 %v6204, %v6204
    %v6258 = vmul.f32 %v6205, %v6205
    %v6259 = vmul.f32 %v6206, %v6206
    %v6260 = vmul.f32 %v6207, %v6207
    %v6261 = vmul.f32 %v6208, %v6208
    %v6262 = vmul.f32 %v6209, %v6209
    %v6263 = vmul.f32 %v6210, %v6210
    %v6264 = vmul.f32 %v6211, %v6211
    %v6265 = vmul.f32 %v6212, %v6212
    %v6266 = vmul.f32 %v6213, %v6213
    %v6267 = vmul.f32 %v6214, %v6214
    %v6268 = vmul.f32 %v6215, %v6215
    %v6269 = vmul.f32 %v6216, %v6216
    %v6270 = vmul.f32 %v6217, %v6217
    %v6271 = vmul.f32 %v6218, %v6218
    %v6272 = vsel %vm821, %v6256, 0.0
    %v6273 = vsel %vm821, %v6257, 0.0
    %v6274 = vadd.f32 %v6272, %v6273
    %v6275 = vsel %vm821, %v6258, 0.0
    %v6276 = vadd.f32 %v6274, %v6275
    %v6277 = vsel %vm821, %v6259, 0.0
    %v6278 = vadd.f32 %v6276, %v6277
    %v6279 = vsel %vm821, %v6260, 0.0
    %v6280 = vadd.f32 %v6278, %v6279
    %v6281 = vsel %vm821, %v6261, 0.0
    %v6282 = vadd.f32 %v6280, %v6281
    %v6283 = vsel %vm821, %v6262, 0.0
    %v6284 = vadd.f32 %v6282, %v6283
    %v6285 = vsel %vm821, %v6263, 0.0
    %v6286 = vadd.f32 %v6284, %v6285
    %v6287 = vsel %vm821, %v6264, 0.0
    %v6288 = vadd.f32 %v6286, %v6287
    %v6289 = vsel %vm821, %v6265, 0.0
    %v6290 = vadd.f32 %v6288, %v6289
    %v6291 = vsel %vm821, %v6266, 0.0
    %v6292 = vadd.f32 %v6290, %v6291
    %v6293 = vsel %vm821, %v6267, 0.0
    %v6294 = vadd.f32 %v6292, %v6293
    %v6295 = vsel %vm821, %v6268, 0.0
    %v6296 = vadd.f32 %v6294, %v6295
    %v6297 = vsel %vm821, %v6269, 0.0
    %v6298 = vadd.f32 %v6296, %v6297
    %v6299 = vsel %vm821, %v6270, 0.0
    %v6300 = vadd.f32 %v6298, %v6299
    %v6301 = vsel %vm821, %v6271, 0.0
    %v6302 = vadd.f32 %v6300, %v6301
    %v6303 = vrot.slane %v6302, 4
    %v6304 = vadd.f32 %v6302, %v6303
    %v6305 = vrot.slane %v6304, 2
    %v6306 = vadd.f32 %v6304, %v6305
    %v6307 = vrot.slane %v6306, 1
    %v6308 = vadd.f32 %v6306, %v6307
    %v6309 = vmul.f32 %v6255, 0.0078125
    %v6310 = vmul.f32 %v6308, 0.0078125
    %v6311 = vmul.f32 %v6309, %v6309
    %v6312 = vsub.f32 %v6310, %v6311
    %v6313 = vmax.f32 %v6312, 0.0
    %v6314 = vadd.f32 %v6313, 1e-05
    %v6315 = vrsqrt.pop %v6314
    %v6316 = vsub.f32 %v6203, %v6309
    %v6317 = vsub.f32 %v6204, %v6309
    %v6318 = vsub.f32 %v6205, %v6309
    %v6319 = vsub.f32 %v6206, %v6309
    %v6320 = vsub.f32 %v6207, %v6309
    %v6321 = vsub.f32 %v6208, %v6309
    %v6322 = vsub.f32 %v6209, %v6309
    %v6323 = vsub.f32 %v6210, %v6309
    %v6324 = vsub.f32 %v6211, %v6309
    %v6325 = vsub.f32 %v6212, %v6309
    %v6326 = vsub.f32 %v6213, %v6309
    %v6327 = vsub.f32 %v6214, %v6309
    %v6328 = vsub.f32 %v6215, %v6309
    %v6329 = vsub.f32 %v6216, %v6309
    %v6330 = vsub.f32 %v6217, %v6309
    %v6331 = vsub.f32 %v6218, %v6309
    %v6332 = vmul.f32 %v6315, %v4908
    %v6333 = vlaneseq
    %v6334 = vshrl.u32 %v6333, 7
    %v6335 = vsub.s32 0, %v6334
    %v6336 = vrot.slane %v6332, %v6335
    %v6337 = vmul.f32 %v6316, %v6336
    %v6338 = vmul.f32 %v6317, %v6336
    %v6339 = vmul.f32 %v6318, %v6336
    %v6340 = vmul.f32 %v6319, %v6336
    %v6341 = vmul.f32 %v6320, %v6336
    %v6342 = vmul.f32 %v6321, %v6336
    %v6343 = vmul.f32 %v6322, %v6336
    %v6344 = vmul.f32 %v6323, %v6336
    %v6345 = vmul.f32 %v6324, %v6336
    %v6346 = vmul.f32 %v6325, %v6336
    %v6347 = vmul.f32 %v6326, %v6336
    %v6348 = vmul.f32 %v6327, %v6336
    %v6349 = vmul.f32 %v6328, %v6336
    %v6350 = vmul.f32 %v6329, %v6336
    %v6351 = vmul.f32 %v6330, %v6336
    %v6352 = vmul.f32 %v6331, %v6336
    %v6354 = vlaneseq
    %v6355 = vshrl.u32 %v6354, 7
    %v6356 = vsub.s32 0, %v6355
    %v6357 = vrot.slane %v4910, %v6356
    %v6359 = vadd.f32 %v6337, %v6357
    %v6360 = vadd.f32 %v6338, %v6357
    %v6361 = vadd.f32 %v6339, %v6357
    %v6362 = vadd.f32 %v6340, %v6357
    %v6363 = vadd.f32 %v6341, %v6357
    %v6364 = vadd.f32 %v6342, %v6357
    %v6365 = vadd.f32 %v6343, %v6357
    %v6366 = vadd.f32 %v6344, %v6357
    %v6367 = vadd.f32 %v6345, %v6357
    %v6368 = vadd.f32 %v6346, %v6357
    %v6369 = vadd.f32 %v6347, %v6357
    %v6370 = vadd.f32 %v6348, %v6357
    %v6371 = vadd.f32 %v6349, %v6357
    %v6372 = vadd.f32 %v6350, %v6357
    %v6373 = vadd.f32 %v6351, %v6357
    %v6374 = vadd.f32 %v6352, %v6357
    %v6375 = vmax.f32 %v6359, 0.0
    %v6376 = vmax.f32 %v6360, 0.0
    %v6377 = vmax.f32 %v6361, 0.0
    %v6378 = vmax.f32 %v6362, 0.0
    %v6379 = vmax.f32 %v6363, 0.0
    %v6380 = vmax.f32 %v6364, 0.0
    %v6381 = vmax.f32 %v6365, 0.0
    %v6382 = vmax.f32 %v6366, 0.0
    %v6383 = vmax.f32 %v6367, 0.0
    %v6384 = vmax.f32 %v6368, 0.0
    %v6385 = vmax.f32 %v6369, 0.0
    %v6386 = vmax.f32 %v6370, 0.0
    %v6387 = vmax.f32 %v6371, 0.0
    %v6388 = vmax.f32 %v6372, 0.0
    %v6389 = vmax.f32 %v6373, 0.0
    %v6390 = vmax.f32 %v6374, 0.0
    %v6392 = vlaneseq
    %v6393 = vshrl.u32 %v6392, 7
    %v6394 = vsub.s32 0, %v6393
    %v6395 = vrot.slane %v4912, %v6394
    %v6398 = vsel %vm821, %v6375, 0
    %v6401 = vsel %vm821, %v6376, 0
    %v6404 = vsel %vm821, %v6377, 0
    %v6407 = vsel %vm821, %v6378, 0
    %v6410 = vsel %vm821, %v6379, 0
    %v6413 = vsel %vm821, %v6380, 0
    %v6416 = vsel %vm821, %v6381, 0
    %v6419 = vsel %vm821, %v6382, 0
    %v6422 = vsel %vm821, %v6383, 0
    %v6425 = vsel %vm821, %v6384, 0
    %v6428 = vsel %vm821, %v6385, 0
    %v6431 = vsel %vm821, %v6386, 0
    %v6434 = vsel %vm821, %v6387, 0
    %v6437 = vsel %vm821, %v6388, 0
    %v6440 = vsel %vm821, %v6389, 0
    %v6443 = vsel %vm821, %v6390, 0
    %6445 = vmatprep.subr.mxu0 0.0
    %6446 = vmatpush1.msra.mxu0 %v4905
    %6447 = vmatprep.subr.mxu0 0.0
    %6448 = vmatpush1.msra.mxu0 %v4906
    %6449 = vmatprep.subr.mxu0 0.0
    %6450 = vmatpush1.msra.mxu0 0.0
    %6451 = vmatprep.subr.mxu0 0.0
    %6452 = vmatpush1.msra.mxu0 0.0
    %6453 = vmatprep.subr.mxu0 0.0
    %6454 = vmatpush1.msra.mxu0 0.0
    %6455 = vmatprep.subr.mxu0 0.0
    %6456 = vmatpush1.msra.mxu0 0.0
    %6457 = vmatprep.subr.mxu0 0.0
    %6458 = vmatpush1.msra.mxu0 0.0
    %6459 = vmatprep.subr.mxu0 0.0
    %6460 = vmatpush1.msra.mxu0 0.0
    %6461 = vmatprep.subr.mxu0 0.0
    %6462 = vmatpush1.msra.mxu0 0.0
    %6463 = vmatprep.subr.mxu0 0.0
    %6464 = vmatpush1.msra.mxu0 0.0
    %6465 = vmatprep.subr.mxu0 0.0
    %6466 = vmatpush1.msra.mxu0 0.0
    %6467 = vmatprep.subr.mxu0 0.0
    %6468 = vmatpush1.msra.mxu0 0.0
    %6469 = vmatprep.subr.mxu0 0.0
    %6470 = vmatpush1.msra.mxu0 0.0
    %6471 = vmatprep.subr.mxu0 0.0
    %6472 = vmatpush1.msra.mxu0 0.0
    %6473 = vmatprep.subr.mxu0 0.0
    %6474 = vmatpush1.msra.mxu0 0.0
    %6475 = vmatprep.subr.mxu0 0.0
    %6476 = vmatpush1.msra.mxu0 0.0
    %6477 = vmatprep.subr.mxu0 0.0
    %6478 = vmatpush1.msra.mxu0 0.0
    %6479 = vmatprep.subr.mxu0 0.0
    %6480 = vmatpush1.msra.mxu0 0.0
    %6481 = vmatprep.subr.mxu0 0.0
    %6482 = vmatpush1.msra.mxu0 0.0
    %6483 = vmatprep.subr.mxu0 0.0
    %6484 = vmatpush1.msra.mxu0 0.0
    %6485 = vmatprep.subr.mxu0 0.0
    %6486 = vmatpush1.msra.mxu0 0.0
    %6487 = vmatprep.subr.mxu0 0.0
    %6488 = vmatpush1.msra.mxu0 0.0
    %6489 = vmatprep.subr.mxu0 0.0
    %6490 = vmatpush1.msra.mxu0 0.0
    %6491 = vmatprep.subr.mxu0 0.0
    %6492 = vmatpush1.msra.mxu0 0.0
    %6493 = vmatprep.subr.mxu0 0.0
    %6494 = vmatpush1.msra.mxu0 0.0
    %6495 = vmatprep.subr.mxu0 0.0
    %6496 = vmatpush1.msra.mxu0 0.0
    %6497 = vmatprep.subr.mxu0 0.0
    %6498 = vmatpush1.msra.mxu0 0.0
    %6499 = vmatprep.subr.mxu0 0.0
    %6500 = vmatpush1.msra.mxu0 0.0
    %6501 = vmatprep.subr.mxu0 0.0
    %6502 = vmatpush1.msra.mxu0 0.0
    %6503 = vmatprep.subr.mxu0 0.0
    %6504 = vmatpush1.msra.mxu0 0.0
    %6505 = vmatprep.subr.mxu0 0.0
    %6506 = vmatpush1.msra.mxu0 0.0
    %6507 = vmatprep.subr.mxu0 0.0
    %6508 = vmatpush1.msra.mxu0 0.0
    %6509 = vmatprep.mubr.f32.mxu0 0.0
    %6510 = vmatmul.mubr.f32.gmra.mrb[0].mxu0 %v6398
    %v6511 = vpop.f32.mrb[0].mxu0
    %v6512 = vadd.f32 %v6395, %v6511
    %v6513 = vpop.f32.mrb[0].mxu0
    %6514 = vmatprep.mubr.f32.mxu0 0.0
    %6515 = vmatmul.mubr.f32.gmra.mrb[0].mxu0 %v6401
    %v6516 = vpop.f32.mrb[0].mxu0
    %v6517 = vadd.f32 %v6395, %v6516
    %v6518 = vpop.f32.mrb[0].mxu0
    %6519 = vmatprep.mubr.f32.mxu0 0.0
    %6520 = vmatmul.mubr.f32.gmra.mrb[0].mxu0 %v6404
    %v6521 = vpop.f32.mrb[0].mxu0
    %v6522 = vadd.f32 %v6395, %v6521
    %v6523 = vpop.f32.mrb[0].mxu0
    %6524 = vmatprep.mubr.f32.mxu0 0.0
    %6525 = vmatmul.mubr.f32.gmra.mrb[0].mxu0 %v6407
    %v6526 = vpop.f32.mrb[0].mxu0
    %v6527 = vadd.f32 %v6395, %v6526
    %v6528 = vpop.f32.mrb[0].mxu0
    %6529 = vmatprep.mubr.f32.mxu0 0.0
    %6530 = vmatmul.mubr.f32.gmra.mrb[0].mxu0 %v6410
    %v6531 = vpop.f32.mrb[0].mxu0
    %v6532 = vadd.f32 %v6395, %v6531
    %v6533 = vpop.f32.mrb[0].mxu0
    %6534 = vmatprep.mubr.f32.mxu0 0.0
    %6535 = vmatmul.mubr.f32.gmra.mrb[0].mxu0 %v6413
    %v6536 = vpop.f32.mrb[0].mxu0
    %v6537 = vadd.f32 %v6395, %v6536
    %v6538 = vpop.f32.mrb[0].mxu0
    %6539 = vmatprep.mubr.f32.mxu0 0.0
    %6540 = vmatmul.mubr.f32.gmra.mrb[0].mxu0 %v6416
    %v6541 = vpop.f32.mrb[0].mxu0
    %v6542 = vadd.f32 %v6395, %v6541
    %v6543 = vpop.f32.mrb[0].mxu0
    %6544 = vmatprep.mubr.f32.mxu0 0.0
    %6545 = vmatmul.mubr.f32.gmra.mrb[0].mxu0 %v6419
    %v6546 = vpop.f32.mrb[0].mxu0
    %v6547 = vadd.f32 %v6395, %v6546
    %v6548 = vpop.f32.mrb[0].mxu0
    %6549 = vmatprep.mubr.f32.mxu0 0.0
    %6550 = vmatmul.mubr.f32.gmra.mrb[0].mxu0 %v6422
    %v6551 = vpop.f32.mrb[0].mxu0
    %v6552 = vadd.f32 %v6395, %v6551
    %v6553 = vpop.f32.mrb[0].mxu0
    %6554 = vmatprep.mubr.f32.mxu0 0.0
    %6555 = vmatmul.mubr.f32.gmra.mrb[0].mxu0 %v6425
    %v6556 = vpop.f32.mrb[0].mxu0
    %v6557 = vadd.f32 %v6395, %v6556
    %v6558 = vpop.f32.mrb[0].mxu0
    %6559 = vmatprep.mubr.f32.mxu0 0.0
    %6560 = vmatmul.mubr.f32.gmra.mrb[0].mxu0 %v6428
    %v6561 = vpop.f32.mrb[0].mxu0
    %v6562 = vadd.f32 %v6395, %v6561
    %v6563 = vpop.f32.mrb[0].mxu0
    %6564 = vmatprep.mubr.f32.mxu0 0.0
    %6565 = vmatmul.mubr.f32.gmra.mrb[0].mxu0 %v6431
    %v6566 = vpop.f32.mrb[0].mxu0
    %v6567 = vadd.f32 %v6395, %v6566
    %v6568 = vpop.f32.mrb[0].mxu0
    %6569 = vmatprep.mubr.f32.mxu0 0.0
    %6570 = vmatmul.mubr.f32.gmra.mrb[0].mxu0 %v6434
    %v6571 = vpop.f32.mrb[0].mxu0
    %v6572 = vadd.f32 %v6395, %v6571
    %v6573 = vpop.f32.mrb[0].mxu0
    %6574 = vmatprep.mubr.f32.mxu0 0.0
    %6575 = vmatmul.mubr.f32.gmra.mrb[0].mxu0 %v6437
    %v6576 = vpop.f32.mrb[0].mxu0
    %v6577 = vadd.f32 %v6395, %v6576
    %v6578 = vpop.f32.mrb[0].mxu0
    %6579 = vmatprep.mubr.f32.mxu0 0.0
    %6580 = vmatmul.mubr.f32.gmra.mrb[0].mxu0 %v6440
    %v6581 = vpop.f32.mrb[0].mxu0
    %v6582 = vadd.f32 %v6395, %v6581
    %v6583 = vpop.f32.mrb[0].mxu0
    %6584 = vmatprep.mubr.f32.mxu0 0.0
    %6585 = vmatmul.mubr.f32.gmra.mrb[0].mxu0 %v6443
    %v6586 = vpop.f32.mrb[0].mxu0
    %v6587 = vadd.f32 %v6395, %v6586
    %v6588 = vpop.f32.mrb[0].mxu0
    %6589 = vdwg.mxu0
    %v6590 = vsel %vm821, %v6512, 0.0
    %v6591 = vsel %vm821, %v6517, 0.0
    %v6592 = vadd.f32 %v6590, %v6591
    %v6593 = vsel %vm821, %v6522, 0.0
    %v6594 = vadd.f32 %v6592, %v6593
    %v6595 = vsel %vm821, %v6527, 0.0
    %v6596 = vadd.f32 %v6594, %v6595
    %v6597 = vsel %vm821, %v6532, 0.0
    %v6598 = vadd.f32 %v6596, %v6597
    %v6599 = vsel %vm821, %v6537, 0.0
    %v6600 = vadd.f32 %v6598, %v6599
    %v6601 = vsel %vm821, %v6542, 0.0
    %v6602 = vadd.f32 %v6600, %v6601
    %v6603 = vsel %vm821, %v6547, 0.0
    %v6604 = vadd.f32 %v6602, %v6603
    %v6605 = vsel %vm821, %v6552, 0.0
    %v6606 = vadd.f32 %v6604, %v6605
    %v6607 = vsel %vm821, %v6557, 0.0
    %v6608 = vadd.f32 %v6606, %v6607
    %v6609 = vsel %vm821, %v6562, 0.0
    %v6610 = vadd.f32 %v6608, %v6609
    %v6611 = vsel %vm821, %v6567, 0.0
    %v6612 = vadd.f32 %v6610, %v6611
    %v6613 = vsel %vm821, %v6572, 0.0
    %v6614 = vadd.f32 %v6612, %v6613
    %v6615 = vsel %vm821, %v6577, 0.0
    %v6616 = vadd.f32 %v6614, %v6615
    %v6617 = vsel %vm821, %v6582, 0.0
    %v6618 = vadd.f32 %v6616, %v6617
    %v6619 = vsel %vm821, %v6587, 0.0
    %v6620 = vadd.f32 %v6618, %v6619
    %v6621 = vrot.slane %v6620, 4
    %v6622 = vadd.f32 %v6620, %v6621
    %v6623 = vrot.slane %v6622, 2
    %v6624 = vadd.f32 %v6622, %v6623
    %v6625 = vrot.slane %v6624, 1
    %v6626 = vadd.f32 %v6624, %v6625
    %v6627 = vmul.f32 %v6512, %v6512
    %v6628 = vmul.f32 %v6517, %v6517
    %v6629 = vmul.f32 %v6522, %v6522
    %v6630 = vmul.f32 %v6527, %v6527
    %v6631 = vmul.f32 %v6532, %v6532
    %v6632 = vmul.f32 %v6537, %v6537
    %v6633 = vmul.f32 %v6542, %v6542
    %v6634 = vmul.f32 %v6547, %v6547
    %v6635 = vmul.f32 %v6552, %v6552
    %v6636 = vmul.f32 %v6557, %v6557
    %v6637 = vmul.f32 %v6562, %v6562
    %v6638 = vmul.f32 %v6567, %v6567
    %v6639 = vmul.f32 %v6572, %v6572
    %v6640 = vmul.f32 %v6577, %v6577
    %v6641 = vmul.f32 %v6582, %v6582
    %v6642 = vmul.f32 %v6587, %v6587
    %v6643 = vsel %vm821, %v6627, 0.0
    %v6644 = vsel %vm821, %v6628, 0.0
    %v6645 = vadd.f32 %v6643, %v6644
    %v6646 = vsel %vm821, %v6629, 0.0
    %v6647 = vadd.f32 %v6645, %v6646
    %v6648 = vsel %vm821, %v6630, 0.0
    %v6649 = vadd.f32 %v6647, %v6648
    %v6650 = vsel %vm821, %v6631, 0.0
    %v6651 = vadd.f32 %v6649, %v6650
    %v6652 = vsel %vm821, %v6632, 0.0
    %v6653 = vadd.f32 %v6651, %v6652
    %v6654 = vsel %vm821, %v6633, 0.0
    %v6655 = vadd.f32 %v6653, %v6654
    %v6656 = vsel %vm821, %v6634, 0.0
    %v6657 = vadd.f32 %v6655, %v6656
    %v6658 = vsel %vm821, %v6635, 0.0
    %v6659 = vadd.f32 %v6657, %v6658
    %v6660 = vsel %vm821, %v6636, 0.0
    %v6661 = vadd.f32 %v6659, %v6660
    %v6662 = vsel %vm821, %v6637, 0.0
    %v6663 = vadd.f32 %v6661, %v6662
    %v6664 = vsel %vm821, %v6638, 0.0
    %v6665 = vadd.f32 %v6663, %v6664
    %v6666 = vsel %vm821, %v6639, 0.0
    %v6667 = vadd.f32 %v6665, %v6666
    %v6668 = vsel %vm821, %v6640, 0.0
    %v6669 = vadd.f32 %v6667, %v6668
    %v6670 = vsel %vm821, %v6641, 0.0
    %v6671 = vadd.f32 %v6669, %v6670
    %v6672 = vsel %vm821, %v6642, 0.0
    %v6673 = vadd.f32 %v6671, %v6672
    %v6674 = vrot.slane %v6673, 4
    %v6675 = vadd.f32 %v6673, %v6674
    %v6676 = vrot.slane %v6675, 2
    %v6677 = vadd.f32 %v6675, %v6676
    %v6678 = vrot.slane %v6677, 1
    %v6679 = vadd.f32 %v6677, %v6678
    %v6680 = vmul.f32 %v6626, 0.0078125
    %v6681 = vmul.f32 %v6679, 0.0078125
    %v6682 = vmul.f32 %v6680, %v6680
    %v6683 = vsub.f32 %v6681, %v6682
    %v6684 = vmax.f32 %v6683, 0.0
    %v6685 = vadd.f32 %v6684, 1e-05
    %v6686 = vrsqrt.pop %v6685
    %v6687 = vsub.f32 %v6512, %v6680
    %v6688 = vsub.f32 %v6517, %v6680
    %v6689 = vsub.f32 %v6522, %v6680
    %v6690 = vsub.f32 %v6527, %v6680
    %v6691 = vsub.f32 %v6532, %v6680
    %v6692 = vsub.f32 %v6537, %v6680
    %v6693 = vsub.f32 %v6542, %v6680
    %v6694 = vsub.f32 %v6547, %v6680
    %v6695 = vsub.f32 %v6552, %v6680
    %v6696 = vsub.f32 %v6557, %v6680
    %v6697 = vsub.f32 %v6562, %v6680
    %v6698 = vsub.f32 %v6567, %v6680
    %v6699 = vsub.f32 %v6572, %v6680
    %v6700 = vsub.f32 %v6577, %v6680
    %v6701 = vsub.f32 %v6582, %v6680
    %v6702 = vsub.f32 %v6587, %v6680
    %v6703 = vmul.f32 %v6686, %v4914
    %v6704 = vlaneseq
    %v6705 = vshrl.u32 %v6704, 7
    %v6706 = vsub.s32 0, %v6705
    %v6707 = vrot.slane %v6703, %v6706
    %v6708 = vmul.f32 %v6687, %v6707
    %v6709 = vmul.f32 %v6688, %v6707
    %v6710 = vmul.f32 %v6689, %v6707
    %v6711 = vmul.f32 %v6690, %v6707
    %v6712 = vmul.f32 %v6691, %v6707
    %v6713 = vmul.f32 %v6692, %v6707
    %v6714 = vmul.f32 %v6693, %v6707
    %v6715 = vmul.f32 %v6694, %v6707
    %v6716 = vmul.f32 %v6695, %v6707
    %v6717 = vmul.f32 %v6696, %v6707
    %v6718 = vmul.f32 %v6697, %v6707
    %v6719 = vmul.f32 %v6698, %v6707
    %v6720 = vmul.f32 %v6699, %v6707
    %v6721 = vmul.f32 %v6700, %v6707
    %v6722 = vmul.f32 %v6701, %v6707
    %v6723 = vmul.f32 %v6702, %v6707
    %v6725 = vlaneseq
    %v6726 = vshrl.u32 %v6725, 7
    %v6727 = vsub.s32 0, %v6726
    %v6728 = vrot.slane %v4916, %v6727
    %v6730 = vadd.f32 %v6708, %v6728
    %v6731 = vadd.f32 %v6709, %v6728
    %v6732 = vadd.f32 %v6710, %v6728
    %v6733 = vadd.f32 %v6711, %v6728
    %v6734 = vadd.f32 %v6712, %v6728
    %v6735 = vadd.f32 %v6713, %v6728
    %v6736 = vadd.f32 %v6714, %v6728
    %v6737 = vadd.f32 %v6715, %v6728
    %v6738 = vadd.f32 %v6716, %v6728
    %v6739 = vadd.f32 %v6717, %v6728
    %v6740 = vadd.f32 %v6718, %v6728
    %v6741 = vadd.f32 %v6719, %v6728
    %v6742 = vadd.f32 %v6720, %v6728
    %v6743 = vadd.f32 %v6721, %v6728
    %v6744 = vadd.f32 %v6722, %v6728
    %v6745 = vadd.f32 %v6723, %v6728
    %v6746 = vrot.slane %v2553, 7
    %v6747 = vrot.slane %v2554, 7
    %v6748 = vrot.slane %v2555, 7
    %v6749 = vrot.slane %v2556, 7
    %v6750 = vrot.slane %v2557, 7
    %v6751 = vrot.slane %v2558, 7
    %v6752 = vrot.slane %v2559, 7
    %v6753 = vrot.slane %v2560, 7
    %v6754 = vrot.slane %v2561, 7
    %v6755 = vrot.slane %v2562, 7
    %v6756 = vrot.slane %v2563, 7
    %v6757 = vrot.slane %v2564, 7
    %v6758 = vrot.slane %v2565, 7
    %v6759 = vrot.slane %v2566, 7
    %v6760 = vrot.slane %v2567, 7
    %v6761 = vrot.slane %v2568, 7
    %v6762 = vrot.slane %v2569, 7
    %v6763 = vrot.slane %v2570, 7
    %v6764 = vrot.slane %v2571, 7
    %v6765 = vrot.slane %v2572, 7
    %v6766 = vrot.slane %v2573, 7
    %v6767 = vrot.slane %v2574, 7
    %v6768 = vrot.slane %v2575, 7
    %v6769 = vrot.slane %v2576, 7
    %v6770 = vrot.slane %v2577, 7
    %v6771 = vrot.slane %v2578, 7
    %v6772 = vrot.slane %v2579, 7
    %v6773 = vrot.slane %v2580, 7
    %v6774 = vrot.slane %v2581, 7
    %v6775 = vrot.slane %v2582, 7
    %v6776 = vrot.slane %v2583, 7
    %v6777 = vrot.slane %v2584, 7
    %v6778 = vsel %vm2681, %v6776, %v6777
    %v6779 = vsel %vm2681, %v6775, %v6776
    %v6780 = vsel %vm2681, %v6774, %v6775
    %v6781 = vsel %vm2681, %v6773, %v6774
    %v6782 = vsel %vm2681, %v6772, %v6773
    %v6783 = vsel %vm2681, %v6771, %v6772
    %v6784 = vsel %vm2681, %v6770, %v6771
    %v6785 = vsel %vm2681, %v6769, %v6770
    %v6786 = vsel %vm2681, %v6768, %v6769
    %v6787 = vsel %vm2681, %v6767, %v6768
    %v6788 = vsel %vm2681, %v6766, %v6767
    %v6789 = vsel %vm2681, %v6765, %v6766
    %v6790 = vsel %vm2681, %v6764, %v6765
    %v6791 = vsel %vm2681, %v6763, %v6764
    %v6792 = vsel %vm2681, %v6762, %v6763
    %v6793 = vsel %vm2681, %v6761, %v6762
    %v6794 = vsel %vm2681, %v6760, %v6761
    %v6795 = vsel %vm2681, %v6759, %v6760
    %v6796 = vsel %vm2681, %v6758, %v6759
    %v6797 = vsel %vm2681, %v6757, %v6758
    %v6798 = vsel %vm2681, %v6756, %v6757
    %v6799 = vsel %vm2681, %v6755, %v6756
    %v6800 = vsel %vm2681, %v6754, %v6755
    %v6801 = vsel %vm2681, %v6753, %v6754
    %v6802 = vsel %vm2681, %v6752, %v6753
    %v6803 = vsel %vm2681, %v6751, %v6752
    %v6804 = vsel %vm2681, %v6750, %v6751
    %v6805 = vsel %vm2681, %v6749, %v6750
    %v6806 = vsel %vm2681, %v6748, %v6749
    %v6807 = vsel %vm2681, %v6747, %v6748
    %v6808 = vsel %vm2681, %v6746, %v6747
    %v6809 = vsel %vm2681, %v6777, %v6746
    %v6810 = vsel %vm2714, -3.4028235e+38, %v6809
    %v6811 = vsel %vm2714, -3.4028235e+38, %v6808
    %v6812 = vsel %vm2714, -3.4028235e+38, %v6807
    %v6813 = vsel %vm2714, -3.4028235e+38, %v6806
    %v6814 = vsel %vm2714, -3.4028235e+38, %v6805
    %v6815 = vsel %vm2714, -3.4028235e+38, %v6804
    %v6816 = vsel %vm2714, -3.4028235e+38, %v6803
    %v6817 = vsel %vm2714, -3.4028235e+38, %v6802
    %v6818 = vsel %vm2714, -3.4028235e+38, %v6801
    %v6819 = vsel %vm2714, -3.4028235e+38, %v6800
    %v6820 = vsel %vm2714, -3.4028235e+38, %v6799
    %v6821 = vsel %vm2714, -3.4028235e+38, %v6798
    %v6822 = vsel %vm2714, -3.4028235e+38, %v6797
    %v6823 = vsel %vm2714, -3.4028235e+38, %v6796
    %v6824 = vsel %vm2714, -3.4028235e+38, %v6795
    %v6825 = vsel %vm2714, -3.4028235e+38, %v6794
    %v6826 = vsel %vm2714, -3.4028235e+38, %v6793
    %v6827 = vsel %vm2714, -3.4028235e+38, %v6792
    %v6828 = vsel %vm2714, -3.4028235e+38, %v6791
    %v6829 = vsel %vm2714, -3.4028235e+38, %v6790
    %v6830 = vsel %vm2714, -3.4028235e+38, %v6789
    %v6831 = vsel %vm2714, -3.4028235e+38, %v6788
    %v6832 = vsel %vm2714, -3.4028235e+38, %v6787
    %v6833 = vsel %vm2714, -3.4028235e+38, %v6786
    %v6834 = vsel %vm2714, -3.4028235e+38, %v6785
    %v6835 = vsel %vm2714, -3.4028235e+38, %v6784
    %v6836 = vsel %vm2714, -3.4028235e+38, %v6783
    %v6837 = vsel %vm2714, -3.4028235e+38, %v6782
    %v6838 = vsel %vm2714, -3.4028235e+38, %v6781
    %v6839 = vsel %vm2714, -3.4028235e+38, %v6780
    %v6840 = vsel %vm2714, -3.4028235e+38, %v6779
    %v6841 = vsel %vm2714, -3.4028235e+38, %v6778
    %v6842 = vmax.f32 %v6810, %v2489
    %v6843 = vmax.f32 %v6811, %v2490
    %v6844 = vmax.f32 %v6812, %v2491
    %v6845 = vmax.f32 %v6813, %v2492
    %v6846 = vmax.f32 %v6814, %v2493
    %v6847 = vmax.f32 %v6815, %v2494
    %v6848 = vmax.f32 %v6816, %v2495
    %v6849 = vmax.f32 %v6817, %v2496
    %v6850 = vmax.f32 %v6818, %v2497
    %v6851 = vmax.f32 %v6819, %v2498
    %v6852 = vmax.f32 %v6820, %v2499
    %v6853 = vmax.f32 %v6821, %v2500
    %v6854 = vmax.f32 %v6822, %v2501
    %v6855 = vmax.f32 %v6823, %v2502
    %v6856 = vmax.f32 %v6824, %v2503
    %v6857 = vmax.f32 %v6825, %v2504
    %v6858 = vmax.f32 %v6826, %v2505
    %v6859 = vmax.f32 %v6827, %v2506
    %v6860 = vmax.f32 %v6828, %v2507
    %v6861 = vmax.f32 %v6829, %v2508
    %v6862 = vmax.f32 %v6830, %v2509
    %v6863 = vmax.f32 %v6831, %v2510
    %v6864 = vmax.f32 %v6832, %v2511
    %v6865 = vmax.f32 %v6833, %v2512
    %v6866 = vmax.f32 %v6834, %v2513
    %v6867 = vmax.f32 %v6835, %v2514
    %v6868 = vmax.f32 %v6836, %v2515
    %v6869 = vmax.f32 %v6837, %v2516
    %v6870 = vmax.f32 %v6838, %v2517
    %v6871 = vmax.f32 %v6839, %v2518
    %v6872 = vmax.f32 %v6840, %v2519
    %v6873 = vmax.f32 %v6841, %v2520
    %v6874 = vmax.f32 %v6842, %v2553
    %v6875 = vmax.f32 %v6843, %v2554
    %v6876 = vmax.f32 %v6844, %v2555
    %v6877 = vmax.f32 %v6845, %v2556
    %v6878 = vmax.f32 %v6846, %v2557
    %v6879 = vmax.f32 %v6847, %v2558
    %v6880 = vmax.f32 %v6848, %v2559
    %v6881 = vmax.f32 %v6849, %v2560
    %v6882 = vmax.f32 %v6850, %v2561
    %v6883 = vmax.f32 %v6851, %v2562
    %v6884 = vmax.f32 %v6852, %v2563
    %v6885 = vmax.f32 %v6853, %v2564
    %v6886 = vmax.f32 %v6854, %v2565
    %v6887 = vmax.f32 %v6855, %v2566
    %v6888 = vmax.f32 %v6856, %v2567
    %v6889 = vmax.f32 %v6857, %v2568
    %v6890 = vmax.f32 %v6858, %v2569
    %v6891 = vmax.f32 %v6859, %v2570
    %v6892 = vmax.f32 %v6860, %v2571
    %v6893 = vmax.f32 %v6861, %v2572
    %v6894 = vmax.f32 %v6862, %v2573
    %v6895 = vmax.f32 %v6863, %v2574
    %v6896 = vmax.f32 %v6864, %v2575
    %v6897 = vmax.f32 %v6865, %v2576
    %v6898 = vmax.f32 %v6866, %v2577
    %v6899 = vmax.f32 %v6867, %v2578
    %v6900 = vmax.f32 %v6868, %v2579
    %v6901 = vmax.f32 %v6869, %v2580
    %v6902 = vmax.f32 %v6870, %v2581
    %v6903 = vmax.f32 %v6871, %v2582
    %v6904 = vmax.f32 %v6872, %v2583
    %v6905 = vmax.f32 %v6873, %v2584
    %v6906 = vmax.f32 %v6874, -3.4028235e+38
    %v6907 = vmax.f32 %v6875, %v6876
    %v6908 = vmax.f32 %v6877, %v6878
    %v6909 = vmax.f32 %v6879, %v6880
    %v6910 = vmax.f32 %v6881, %v6882
    %v6911 = vmax.f32 %v6883, %v6884
    %v6912 = vmax.f32 %v6885, %v6886
    %v6913 = vmax.f32 %v6887, %v6888
    %v6914 = vmax.f32 %v6890, -3.4028235e+38
    %v6915 = vmax.f32 %v6891, %v6892
    %v6916 = vmax.f32 %v6893, %v6894
    %v6917 = vmax.f32 %v6895, %v6896
    %v6918 = vmax.f32 %v6897, %v6898
    %v6919 = vmax.f32 %v6899, %v6900
    %v6920 = vmax.f32 %v6901, %v6902
    %v6921 = vmax.f32 %v6903, %v6904
    %v6922 = vmax.f32 %v6906, %v6875
    %v6923 = vmax.f32 %v6907, %v6877
    %v6924 = vmax.f32 %v6908, %v6879
    %v6925 = vmax.f32 %v6909, %v6881
    %v6926 = vmax.f32 %v6910, %v6883
    %v6927 = vmax.f32 %v6911, %v6885
    %v6928 = vmax.f32 %v6912, %v6887
    %v6929 = vmax.f32 %v6913, %v6889
    %v6930 = vmax.f32 %v6914, %v6891
    %v6931 = vmax.f32 %v6915, %v6893
    %v6932 = vmax.f32 %v6916, %v6895
    %v6933 = vmax.f32 %v6917, %v6897
    %v6934 = vmax.f32 %v6918, %v6899
    %v6935 = vmax.f32 %v6919, %v6901
    %v6936 = vmax.f32 %v6920, %v6903
    %v6937 = vmax.f32 %v6921, %v6905
    %v6938 = vsel %vm821, %v6922, 0.0
    %v6939 = vsel %vm821, %v6923, 0.0
    %v6940 = vadd.f32 %v6938, %v6939
    %v6941 = vsel %vm821, %v6924, 0.0
    %v6942 = vadd.f32 %v6940, %v6941
    %v6943 = vsel %vm821, %v6925, 0.0
    %v6944 = vadd.f32 %v6942, %v6943
    %v6945 = vsel %vm821, %v6926, 0.0
    %v6946 = vadd.f32 %v6944, %v6945
    %v6947 = vsel %vm821, %v6927, 0.0
    %v6948 = vadd.f32 %v6946, %v6947
    %v6949 = vsel %vm821, %v6928, 0.0
    %v6950 = vadd.f32 %v6948, %v6949
    %v6951 = vsel %vm821, %v6929, 0.0
    %v6952 = vadd.f32 %v6950, %v6951
    %v6953 = vsel %vm821, %v6930, 0.0
    %v6954 = vadd.f32 %v6952, %v6953
    %v6955 = vsel %vm821, %v6931, 0.0
    %v6956 = vadd.f32 %v6954, %v6955
    %v6957 = vsel %vm821, %v6932, 0.0
    %v6958 = vadd.f32 %v6956, %v6957
    %v6959 = vsel %vm821, %v6933, 0.0
    %v6960 = vadd.f32 %v6958, %v6959
    %v6961 = vsel %vm821, %v6934, 0.0
    %v6962 = vadd.f32 %v6960, %v6961
    %v6963 = vsel %vm821, %v6935, 0.0
    %v6964 = vadd.f32 %v6962, %v6963
    %v6965 = vsel %vm821, %v6936, 0.0
    %v6966 = vadd.f32 %v6964, %v6965
    %v6967 = vsel %vm821, %v6937, 0.0
    %v6968 = vadd.f32 %v6966, %v6967
    %v6969 = vrot.slane %v6968, 4
    %v6970 = vadd.f32 %v6968, %v6969
    %v6971 = vrot.slane %v6970, 2
    %v6972 = vadd.f32 %v6970, %v6971
    %v6973 = vrot.slane %v6972, 1
    %v6974 = vadd.f32 %v6972, %v6973
    %v6975 = vmul.f32 %v6922, %v6922
    %v6976 = vmul.f32 %v6923, %v6923
    %v6977 = vmul.f32 %v6924, %v6924
    %v6978 = vmul.f32 %v6925, %v6925
    %v6979 = vmul.f32 %v6926, %v6926
    %v6980 = vmul.f32 %v6927, %v6927
    %v6981 = vmul.f32 %v6928, %v6928
    %v6982 = vmul.f32 %v6929, %v6929
    %v6983 = vmul.f32 %v6930, %v6930
    %v6984 = vmul.f32 %v6931, %v6931
    %v6985 = vmul.f32 %v6932, %v6932
    %v6986 = vmul.f32 %v6933, %v6933
    %v6987 = vmul.f32 %v6934, %v6934
    %v6988 = vmul.f32 %v6935, %v6935
    %v6989 = vmul.f32 %v6936, %v6936
    %v6990 = vmul.f32 %v6937, %v6937
    %v6991 = vsel %vm821, %v6975, 0.0
    %v6992 = vsel %vm821, %v6976, 0.0
    %v6993 = vadd.f32 %v6991, %v6992
    %v6994 = vsel %vm821, %v6977, 0.0
    %v6995 = vadd.f32 %v6993, %v6994
    %v6996 = vsel %vm821, %v6978, 0.0
    %v6997 = vadd.f32 %v6995, %v6996
    %v6998 = vsel %vm821, %v6979, 0.0
    %v6999 = vadd.f32 %v6997, %v6998
    %v7000 = vsel %vm821, %v6980, 0.0
    %v7001 = vadd.f32 %v6999, %v7000
    %v7002 = vsel %vm821, %v6981, 0.0
    %v7003 = vadd.f32 %v7001, %v7002
    %v7004 = vsel %vm821, %v6982, 0.0
    %v7005 = vadd.f32 %v7003, %v7004
    %v7006 = vsel %vm821, %v6983, 0.0
    %v7007 = vadd.f32 %v7005, %v7006
    %v7008 = vsel %vm821, %v6984, 0.0
    %v7009 = vadd.f32 %v7007, %v7008
    %v7010 = vsel %vm821, %v6985, 0.0
    %v7011 = vadd.f32 %v7009, %v7010
    %v7012 = vsel %vm821, %v6986, 0.0
    %v7013 = vadd.f32 %v7011, %v7012
    %v7014 = vsel %vm821, %v6987, 0.0
    %v7015 = vadd.f32 %v7013, %v7014
    %v7016 = vsel %vm821, %v6988, 0.0
    %v7017 = vadd.f32 %v7015, %v7016
    %v7018 = vsel %vm821, %v6989, 0.0
    %v7019 = vadd.f32 %v7017, %v7018
    %v7020 = vsel %vm821, %v6990, 0.0
    %v7021 = vadd.f32 %v7019, %v7020
    %v7022 = vrot.slane %v7021, 4
    %v7023 = vadd.f32 %v7021, %v7022
    %v7024 = vrot.slane %v7023, 2
    %v7025 = vadd.f32 %v7023, %v7024
    %v7026 = vrot.slane %v7025, 1
    %v7027 = vadd.f32 %v7025, %v7026
    %v7028 = vmul.f32 %v6974, 0.0078125
    %v7029 = vmul.f32 %v7027, 0.0078125
    %v7030 = vmul.f32 %v7028, %v7028
    %v7031 = vsub.f32 %v7029, %v7030
    %v7032 = vmax.f32 %v7031, 0.0
    %v7033 = vadd.f32 %v7032, 1e-05
    %v7034 = vrsqrt.pop %v7033
    %v7035 = vsub.f32 %v6922, %v7028
    %v7036 = vsub.f32 %v6923, %v7028
    %v7037 = vsub.f32 %v6924, %v7028
    %v7038 = vsub.f32 %v6925, %v7028
    %v7039 = vsub.f32 %v6926, %v7028
    %v7040 = vsub.f32 %v6927, %v7028
    %v7041 = vsub.f32 %v6928, %v7028
    %v7042 = vsub.f32 %v6929, %v7028
    %v7043 = vsub.f32 %v6930, %v7028
    %v7044 = vsub.f32 %v6931, %v7028
    %v7045 = vsub.f32 %v6932, %v7028
    %v7046 = vsub.f32 %v6933, %v7028
    %v7047 = vsub.f32 %v6934, %v7028
    %v7048 = vsub.f32 %v6935, %v7028
    %v7049 = vsub.f32 %v6936, %v7028
    %v7050 = vsub.f32 %v6937, %v7028
    %v7051 = vld [vmem:[%s11] sm:$0x1]
    %v7052 = vmul.f32 %v7034, %v7051
    %v7053 = vlaneseq
    %v7054 = vshrl.u32 %v7053, 7
    %v7055 = vsub.s32 0, %v7054
    %v7056 = vrot.slane %v7052, %v7055
    %v7057 = vmul.f32 %v7035, %v7056
    %v7058 = vmul.f32 %v7036, %v7056
    %v7059 = vmul.f32 %v7037, %v7056
    %v7060 = vmul.f32 %v7038, %v7056
    %v7061 = vmul.f32 %v7039, %v7056
    %v7062 = vmul.f32 %v7040, %v7056
    %v7063 = vmul.f32 %v7041, %v7056
    %v7064 = vmul.f32 %v7042, %v7056
    %v7065 = vmul.f32 %v7043, %v7056
    %v7066 = vmul.f32 %v7044, %v7056
    %v7067 = vmul.f32 %v7045, %v7056
    %v7068 = vmul.f32 %v7046, %v7056
    %v7069 = vmul.f32 %v7047, %v7056
    %v7070 = vmul.f32 %v7048, %v7056
    %v7071 = vmul.f32 %v7049, %v7056
    %v7072 = vmul.f32 %v7050, %v7056
    %s7073 = scalar_lea.vmem %s11, 1
    %v7074 = vld [vmem:[%s7073] sm:$0x1]
    %v7076 = vlaneseq
    %v7077 = vshrl.u32 %v7076, 7
    %v7078 = vsub.s32 0, %v7077
    %v7079 = vrot.slane %v7074, %v7078
    %v7081 = vadd.f32 %v7057, %v7079
    %v7082 = vadd.f32 %v7058, %v7079
    %v7083 = vadd.f32 %v7059, %v7079
    %v7084 = vadd.f32 %v7060, %v7079
    %v7085 = vadd.f32 %v7061, %v7079
    %v7086 = vadd.f32 %v7062, %v7079
    %v7087 = vadd.f32 %v7063, %v7079
    %v7088 = vadd.f32 %v7064, %v7079
    %v7089 = vadd.f32 %v7065, %v7079
    %v7090 = vadd.f32 %v7066, %v7079
    %v7091 = vadd.f32 %v7067, %v7079
    %v7092 = vadd.f32 %v7068, %v7079
    %v7093 = vadd.f32 %v7069, %v7079
    %v7094 = vadd.f32 %v7070, %v7079
    %v7095 = vadd.f32 %v7071, %v7079
    %v7096 = vadd.f32 %v7072, %v7079
    %s7097 = scalar_lea.vmem %s11, 2
    %v7098 = vld [vmem:[%s7097] sm:$0x1]
    %v7099 = vmul.f32 %v7034, %v7098
    %v7100 = vlaneseq
    %v7101 = vshrl.u32 %v7100, 7
    %v7102 = vsub.s32 0, %v7101
    %v7103 = vrot.slane %v7099, %v7102
    %v7104 = vmul.f32 %v7035, %v7103
    %v7105 = vmul.f32 %v7036, %v7103
    %v7106 = vmul.f32 %v7037, %v7103
    %v7107 = vmul.f32 %v7038, %v7103
    %v7108 = vmul.f32 %v7039, %v7103
    %v7109 = vmul.f32 %v7040, %v7103
    %v7110 = vmul.f32 %v7041, %v7103
    %v7111 = vmul.f32 %v7042, %v7103
    %v7112 = vmul.f32 %v7043, %v7103
    %v7113 = vmul.f32 %v7044, %v7103
    %v7114 = vmul.f32 %v7045, %v7103
    %v7115 = vmul.f32 %v7046, %v7103
    %v7116 = vmul.f32 %v7047, %v7103
    %v7117 = vmul.f32 %v7048, %v7103
    %v7118 = vmul.f32 %v7049, %v7103
    %v7119 = vmul.f32 %v7050, %v7103
    %s7120 = scalar_lea.vmem %s11, 3
    %v7121 = vld [vmem:[%s7120] sm:$0x1]
    %v7123 = vlaneseq
    %v7124 = vshrl.u32 %v7123, 7
    %v7125 = vsub.s32 0, %v7124
    %v7126 = vrot.slane %v7121, %v7125
    %v7128 = vadd.f32 %v7104, %v7126
    %v7129 = vadd.f32 %v7105, %v7126
    %v7130 = vadd.f32 %v7106, %v7126
    %v7131 = vadd.f32 %v7107, %v7126
    %v7132 = vadd.f32 %v7108, %v7126
    %v7133 = vadd.f32 %v7109, %v7126
    %v7134 = vadd.f32 %v7110, %v7126
    %v7135 = vadd.f32 %v7111, %v7126
    %v7136 = vadd.f32 %v7112, %v7126
    %v7137 = vadd.f32 %v7113, %v7126
    %v7138 = vadd.f32 %v7114, %v7126
    %v7139 = vadd.f32 %v7115, %v7126
    %v7140 = vadd.f32 %v7116, %v7126
    %v7141 = vadd.f32 %v7117, %v7126
    %v7142 = vadd.f32 %v7118, %v7126
    %v7143 = vadd.f32 %v7119, %v7126
    %7160 = vrot.lane.b32.xlu0 %v7081, 16
    %v7161 = vpop.permute.xlu0 %7160
    %7162 = vrot.lane.b32.xlu0 %v7082, 16
    %v7163 = vpop.permute.xlu0 %7162
    %7164 = vrot.lane.b32.xlu0 %v7083, 16
    %v7165 = vpop.permute.xlu0 %7164
    %7166 = vrot.lane.b32.xlu0 %v7084, 16
    %v7167 = vpop.permute.xlu0 %7166
    %7168 = vrot.lane.b32.xlu0 %v7085, 16
    %v7169 = vpop.permute.xlu0 %7168
    %7170 = vrot.lane.b32.xlu0 %v7086, 16
    %v7171 = vpop.permute.xlu0 %7170
    %7172 = vrot.lane.b32.xlu0 %v7087, 16
    %v7173 = vpop.permute.xlu0 %7172
    %7174 = vrot.lane.b32.xlu0 %v7088, 16
    %v7175 = vpop.permute.xlu0 %7174
    %7176 = vrot.lane.b32.xlu0 %v7089, 16
    %v7177 = vpop.permute.xlu0 %7176
    %7178 = vrot.lane.b32.xlu0 %v7090, 16
    %v7179 = vpop.permute.xlu0 %7178
    %7180 = vrot.lane.b32.xlu0 %v7091, 16
    %v7181 = vpop.permute.xlu0 %7180
    %7182 = vrot.lane.b32.xlu0 %v7092, 16
    %v7183 = vpop.permute.xlu0 %7182
    %7184 = vrot.lane.b32.xlu0 %v7093, 16
    %v7185 = vpop.permute.xlu0 %7184
    %7186 = vrot.lane.b32.xlu0 %v7094, 16
    %v7187 = vpop.permute.xlu0 %7186
    %7188 = vrot.lane.b32.xlu0 %v7095, 16
    %v7189 = vpop.permute.xlu0 %7188
    %7190 = vrot.lane.b32.xlu0 %v7096, 16
    %v7191 = vpop.permute.xlu0 %7190
    %7224 = vrot.lane.b32.xlu0 %v6730, 32
    %v7225 = vpop.permute.xlu0 %7224
    %7226 = vrot.lane.b32.xlu0 %v6731, 32
    %v7227 = vpop.permute.xlu0 %7226
    %7228 = vrot.lane.b32.xlu0 %v6732, 32
    %v7229 = vpop.permute.xlu0 %7228
    %7230 = vrot.lane.b32.xlu0 %v6733, 32
    %v7231 = vpop.permute.xlu0 %7230
    %7232 = vrot.lane.b32.xlu0 %v6734, 32
    %v7233 = vpop.permute.xlu0 %7232
    %7234 = vrot.lane.b32.xlu0 %v6735, 32
    %v7235 = vpop.permute.xlu0 %7234
    %7236 = vrot.lane.b32.xlu0 %v6736, 32
    %v7237 = vpop.permute.xlu0 %7236
    %7238 = vrot.lane.b32.xlu0 %v6737, 32
    %v7239 = vpop.permute.xlu0 %7238
    %7240 = vrot.lane.b32.xlu0 %v6738, 32
    %v7241 = vpop.permute.xlu0 %7240
    %7242 = vrot.lane.b32.xlu0 %v6739, 32
    %v7243 = vpop.permute.xlu0 %7242
    %7244 = vrot.lane.b32.xlu0 %v6740, 32
    %v7245 = vpop.permute.xlu0 %7244
    %7246 = vrot.lane.b32.xlu0 %v6741, 32
    %v7247 = vpop.permute.xlu0 %7246
    %7248 = vrot.lane.b32.xlu0 %v6742, 32
    %v7249 = vpop.permute.xlu0 %7248
    %7250 = vrot.lane.b32.xlu0 %v6743, 32
    %v7251 = vpop.permute.xlu0 %7250
    %7252 = vrot.lane.b32.xlu0 %v6744, 32
    %v7253 = vpop.permute.xlu0 %7252
    %7254 = vrot.lane.b32.xlu0 %v6745, 32
    %v7255 = vpop.permute.xlu0 %7254
    %7288 = vrot.lane.b32.xlu0 %v7128, 48
    %v7289 = vpop.permute.xlu0 %7288
    %7290 = vrot.lane.b32.xlu0 %v7129, 48
    %v7291 = vpop.permute.xlu0 %7290
    %7292 = vrot.lane.b32.xlu0 %v7130, 48
    %v7293 = vpop.permute.xlu0 %7292
    %7294 = vrot.lane.b32.xlu0 %v7131, 48
    %v7295 = vpop.permute.xlu0 %7294
    %7296 = vrot.lane.b32.xlu0 %v7132, 48
    %v7297 = vpop.permute.xlu0 %7296
    %7298 = vrot.lane.b32.xlu0 %v7133, 48
    %v7299 = vpop.permute.xlu0 %7298
    %7300 = vrot.lane.b32.xlu0 %v7134, 48
    %v7301 = vpop.permute.xlu0 %7300
    %7302 = vrot.lane.b32.xlu0 %v7135, 48
    %v7303 = vpop.permute.xlu0 %7302
    %7304 = vrot.lane.b32.xlu0 %v7136, 48
    %v7305 = vpop.permute.xlu0 %7304
    %7306 = vrot.lane.b32.xlu0 %v7137, 48
    %v7307 = vpop.permute.xlu0 %7306
    %7308 = vrot.lane.b32.xlu0 %v7138, 48
    %v7309 = vpop.permute.xlu0 %7308
    %7310 = vrot.lane.b32.xlu0 %v7139, 48
    %v7311 = vpop.permute.xlu0 %7310
    %7312 = vrot.lane.b32.xlu0 %v7140, 48
    %v7313 = vpop.permute.xlu0 %7312
    %7314 = vrot.lane.b32.xlu0 %v7141, 48
    %v7315 = vpop.permute.xlu0 %7314
    %7316 = vrot.lane.b32.xlu0 %v7142, 48
    %v7317 = vpop.permute.xlu0 %7316
    %7318 = vrot.lane.b32.xlu0 %v7143, 48
    %v7319 = vpop.permute.xlu0 %7318
    %v7336 = vsel %vm821, %v4874, %v7161
    %v7337 = vsel %vm821, %v4875, %v7163
    %v7338 = vsel %vm821, %v4876, %v7165
    %v7339 = vsel %vm821, %v4877, %v7167
    %v7340 = vsel %vm821, %v4878, %v7169
    %v7341 = vsel %vm821, %v4879, %v7171
    %v7342 = vsel %vm821, %v4880, %v7173
    %v7343 = vsel %vm821, %v4881, %v7175
    %v7344 = vsel %vm821, %v4882, %v7177
    %v7345 = vsel %vm821, %v4883, %v7179
    %v7346 = vsel %vm821, %v4884, %v7181
    %v7347 = vsel %vm821, %v4885, %v7183
    %v7348 = vsel %vm821, %v4886, %v7185
    %v7349 = vsel %vm821, %v4887, %v7187
    %v7350 = vsel %vm821, %v4888, %v7189
    %v7351 = vsel %vm821, %v4889, %v7191
    %v7352 = vsel %vm1450, %v7336, %v7225
    %v7353 = vsel %vm1450, %v7337, %v7227
    %v7354 = vsel %vm1450, %v7338, %v7229
    %v7355 = vsel %vm1450, %v7339, %v7231
    %v7356 = vsel %vm1450, %v7340, %v7233
    %v7357 = vsel %vm1450, %v7341, %v7235
    %v7358 = vsel %vm1450, %v7342, %v7237
    %v7359 = vsel %vm1450, %v7343, %v7239
    %v7360 = vsel %vm1450, %v7344, %v7241
    %v7361 = vsel %vm1450, %v7345, %v7243
    %v7362 = vsel %vm1450, %v7346, %v7245
    %v7363 = vsel %vm1450, %v7347, %v7247
    %v7364 = vsel %vm1450, %v7348, %v7249
    %v7365 = vsel %vm1450, %v7349, %v7251
    %v7366 = vsel %vm1450, %v7350, %v7253
    %v7367 = vsel %vm1450, %v7351, %v7255
    %vm7368 = vcmask 392192
    %v7369 = vsel %vm7368, %v7352, %v7289
    %v7370 = vsel %vm7368, %v7353, %v7291
    %v7371 = vsel %vm7368, %v7354, %v7293
    %v7372 = vsel %vm7368, %v7355, %v7295
    %v7373 = vsel %vm7368, %v7356, %v7297
    %v7374 = vsel %vm7368, %v7357, %v7299
    %v7375 = vsel %vm7368, %v7358, %v7301
    %v7376 = vsel %vm7368, %v7359, %v7303
    %v7377 = vsel %vm7368, %v7360, %v7305
    %v7378 = vsel %vm7368, %v7361, %v7307
    %v7379 = vsel %vm7368, %v7362, %v7309
    %v7380 = vsel %vm7368, %v7363, %v7311
    %v7381 = vsel %vm7368, %v7364, %v7313
    %v7382 = vsel %vm7368, %v7365, %v7315
    %v7383 = vsel %vm7368, %v7366, %v7317
    %v7384 = vsel %vm7368, %v7367, %v7319
    %vm7385 = vcmask 523264
    %7386 = vst.msk [vmem:[#allocation2] sm:$0xff] %vm7385, %v7369
    %7387 = vst.msk [vmem:[#allocation2 + $0x8] sm:$0xff] %vm7385, %v7370
    %7388 = vst.msk [vmem:[#allocation2 + $0x10] sm:$0xff] %vm7385, %v7371
    %7389 = vst.msk [vmem:[#allocation2 + $0x18] sm:$0xff] %vm7385, %v7372
    %7390 = vst.msk [vmem:[#allocation2 + $0x20] sm:$0xff] %vm7385, %v7373
    %7391 = vst.msk [vmem:[#allocation2 + $0x28] sm:$0xff] %vm7385, %v7374
    %7392 = vst.msk [vmem:[#allocation2 + $0x30] sm:$0xff] %vm7385, %v7375
    %7393 = vst.msk [vmem:[#allocation2 + $0x38] sm:$0xff] %vm7385, %v7376
    %7394 = vst.msk [vmem:[#allocation2 + $0x40] sm:$0xff] %vm7385, %v7377
    %7395 = vst.msk [vmem:[#allocation2 + $0x48] sm:$0xff] %vm7385, %v7378
    %7396 = vst.msk [vmem:[#allocation2 + $0x50] sm:$0xff] %vm7385, %v7379
    %7397 = vst.msk [vmem:[#allocation2 + $0x58] sm:$0xff] %vm7385, %v7380
    %7398 = vst.msk [vmem:[#allocation2 + $0x60] sm:$0xff] %vm7385, %v7381
    %7399 = vst.msk [vmem:[#allocation2 + $0x68] sm:$0xff] %vm7385, %v7382
    %7400 = vst.msk [vmem:[#allocation2 + $0x70] sm:$0xff] %vm7385, %v7383
    %7401 = vst.msk [vmem:[#allocation2 + $0x78] sm:$0xff] %vm7385, %v7384
    // Predicated region
    $region50: #{_lambda_.1} parent=1 // pred_check
      _
    $region51: #{_lambda_.1} parent=1 // pred_check_branch
      %7403 = sbr.rel (0) target = $region53
    $region52: #{_lambda_.1} parent=1 // pred_region
      %s7405 = ssub.s32 2048, 2048
      %7406 = vsyncadd [#allocation3], %s7405
      %s7407 = sshll.u32 [#allocation2], 4
      %s7408 = int_to_ptr.vmem [resolvable:$true] %s7407
      %7413 = dma.vmem_to_hbm [thread:$0]  %s7408, 2048, %s12, [#allocation3], 128, 128, 8
    $region53: #{_lambda_.1} parent=1 // pred_fallthru
      _
    // Predicated region
    $region54: #{_lambda_.1} parent=1 // pred_check
      _
    $region55: #{_lambda_.1} parent=1 // pred_check_branch
      %7415 = sbr.rel (0) target = $region57
    $region56: #{_lambda_.1} parent=1 // pred_region
      %7416 = dma.done [#allocation3], 2048
    $region57: #{_lambda_.1} parent=1 // pred_fallthru
      _
    %7417 = vsyncpa [#allocation3], 1

</llo_original>
